<compile_context>
chip_gen: v5e
topology: v5e:2x2
jax: 0.10.0
libtpu: 0.0.40
codegen_flags: <defaults>
</compile_context>

<pallas_src>
import functools

import jax
import jax.numpy as jnp
import numpy as np
from jax.experimental import pallas as pl
from jax.experimental.pallas import tpu as pltpu

_S = 3           # stride of both transposed convs
_K = 5           # kernel size of both transposed convs
_P1 = (2, 2)     # layer-1 padding
_P2 = (1, 0)     # layer-2 padding
_OUT_LANES = 128  # lane-dense padded output width (cropped in the wrapper)


# ----------------------------------------------------------------------------
# Wrapper-side packing helpers (runtime weights -> packed lane layout, plus the
# static 0/1 interleave matrices built with numpy at trace time).
# ----------------------------------------------------------------------------
def _pack_weight_rows(w, wq):
    """w: (cin, cout, 5, 5) -> rows (cin*2*2*3, 3*cout*wq).

    Row index ((ci*2 + mh)*2 + mw)*3 + rh, lane (co*3 + rw)*wq + qw holds
    w[ci, co, rh + 3*mh, rw + 3*mw] (0 if that kernel tap does not exist),
    replicated over qw, matching the packed accumulator lane layout.
    """
    cin, cout, K, _ = w.shape
    idx = np.zeros((cin, 2, 2, _S, cout, _S), np.int32)
    msk = np.zeros((cin, 2, 2, _S, cout, _S), np.float32)
    for ci in range(cin):
        for mh in range(2):
            for mw in range(2):
                for rh in range(_S):
                    kh = rh + _S * mh
                    for co in range(cout):
                        for rw in range(_S):
                            kw = rw + _S * mw
                            if kh < K and kw < K:
                                idx[ci, mh, mw, rh, co, rw] = ((ci * cout + co) * K + kh) * K + kw
                                msk[ci, mh, mw, rh, co, rw] = 1.0
    vals = w.reshape(-1)[idx.reshape(-1)] * jnp.asarray(msk.reshape(-1))
    vals = vals.reshape(cin * 2 * 2 * _S, cout * _S)
    return jnp.repeat(vals, wq, axis=1).astype(jnp.float32)


def _col_spread(cout, wq, cols_per_co, total_cols, offset, lo, hi):
    """0/1 matrix (3*cout*wq, total_cols): lane (co*3+rw)*wq+qw -> column
    co*cols_per_co + (3*qw + rw + offset), kept only if lo <= col_in_frame <= hi."""
    m = np.zeros((_S * cout * wq, total_cols), np.float32)
    for co in range(cout):
        for rw in range(_S):
            for qw in range(wq):
                c = _S * qw + rw + offset
                if lo <= c <= hi:
                    m[(co * _S + rw) * wq + qw, co * cols_per_co + c] = 1.0
    return m


def _row_spread(hq, nrows, offset, lo, hi):
    """0/1 matrices (3, nrows, hq): for row phase rh, qh -> row 3*qh + rh + offset."""
    m = np.zeros((_S, nrows, hq), np.float32)
    for rh in range(_S):
        for qh in range(hq):
            r = _S * qh + rh + offset
            if lo <= r <= hi:
                m[rh, r, qh] = 1.0
    return m


# ----------------------------------------------------------------------------
# Fused kernel
# ----------------------------------------------------------------------------
def _decoder_kernel(x_ref, w1r_ref, b1r_ref, w2r_ref, b2r_ref,
                    s1_ref, r1_ref, s2_ref, r2_ref, o_ref,
                    xp_ref, h1p_ref, *, n, h0, w0, c_in, c_mid, c_out):
    hq1, wq1 = h0 + 1, w0 + 1                       # layer-1 per-phase grid (9, 9)
    h1 = (h0 - 1) * _S - 2 * _P1[0] + _K            # 22
    w1 = (w0 - 1) * _S - 2 * _P1[1] + _K            # 22
    hq2, wq2 = h1 + 1, w1 + 1                       # layer-2 per-phase grid (23, 23)
    fw = w1 + 2                                     # padded frame width per channel (24)
    L1 = _S * c_mid * wq1                           # 81 packed lanes
    L2 = _S * c_out * wq2                           # 69 packed lanes

    s1 = s1_ref[...]                                # (L1, c_mid*fw)
    s2 = s2_ref[...]                                # (L2, c_out*128)
    b1row = b1r_ref[...]                            # (1, L1)
    b2row = b2r_ref[...]                            # (1, L2)

    # zero the padded-input scratch once; only the interior changes per batch.
    xp_ref[...] = jnp.zeros_like(xp_ref)

    def accumulate(read_slice, w_ref, cin, reps, hq, wq, L):
        """Packed polyphase accumulation: one FMA per (ci, mh, mw, rh)."""
        acc = [jnp.zeros((hq, L), jnp.float32) for _ in range(_S)]
        for ci in range(cin):
            for mh in range(2):
                for mw in range(2):
                    xs = read_slice(ci, mh, mw)                       # (hq, wq)
                    xs_t = jnp.concatenate([xs] * reps, axis=-1)      # (hq, L)
                    base = ((ci * 2 + mh) * 2 + mw) * _S
                    for rh in range(_S):
                        if rh + _S * mh >= _K:                        # tap does not exist
                            continue
                        wrow = w_ref[base + rh:base + rh + 1, :]      # (1, L)
                        acc[rh] = acc[rh] + xs_t * wrow
        return acc

    for b in range(n):
        xp_ref[:, 1:1 + h0, 1:1 + w0] = x_ref[b]

        # ---- layer 1: ConvTranspose2d(c_in, c_mid, s=3, k=5, p=(2,2)) + tanh ----
        def slice1(ci, mh, mw):
            return xp_ref[ci, 1 - mh:1 - mh + hq1, 1 - mw:1 - mw + wq1]

        acc1 = accumulate(slice1, w1r_ref, c_in, _S * c_mid, hq1, wq1, L1)
        pre = None
        for rh in range(_S):
            t = jnp.tanh(acc1[rh] + b1row)                            # (hq1, L1)
            c = jnp.dot(r1_ref[rh], t, preferred_element_type=jnp.float32)  # (h1+2, L1)
            pre = c if pre is None else pre + c
        # column interleave into the 1-px padded frame (channels side-by-side in lanes)
        h1p_ref[...] = jnp.dot(pre, s1, preferred_element_type=jnp.float32)  # (h1+2, c_mid*fw)

        # ---- layer 2: ConvTranspose2d(c_mid, c_out, s=3, k=5, p=(1,0)) ----
        def slice2(ci, mh, mw):
            c0 = ci * fw + 1 - mw
            return h1p_ref[1 - mh:1 - mh + hq2, c0:c0 + wq2]

        acc2 = accumulate(slice2, w2r_ref, c_mid, _S * c_out, hq2, wq2, L2)
        pre2 = None
        for rh in range(_S):
            c = jnp.dot(r2_ref[rh], acc2[rh] + b2row,
                        preferred_element_type=jnp.float32)           # (h2, L2)
            pre2 = c if pre2 is None else pre2 + c
        out_blk = jnp.dot(pre2, s2, preferred_element_type=jnp.float32)  # (h2, c_out*128)
        for co in range(c_out):
            o_ref[b, co, :, :] = out_blk[:, co * _OUT_LANES:(co + 1) * _OUT_LANES]


# ----------------------------------------------------------------------------
# Wrapper
# ----------------------------------------------------------------------------
def decoder_pallas(x, params):
    w1, b1, w2, b2 = params
    n, c_in, h0, w0 = x.shape
    c_mid = w1.shape[1]
    c_out = w2.shape[1]
    hq1, wq1 = h0 + 1, w0 + 1
    h1 = (h0 - 1) * _S - 2 * _P1[0] + _K
    w1d = (w0 - 1) * _S - 2 * _P1[1] + _K
    hq2, wq2 = h1 + 1, w1d + 1
    h2 = (h1 - 1) * _S - 2 * _P2[0] + _K
    w2d = (w1d - 1) * _S - 2 * _P2[1] + _K
    fw = w1d + 2
    assert w2d <= _OUT_LANES

    # runtime weights/biases packed into the (co, rw, qw) lane layout (tiny XLA ops)
    w1rows = _pack_weight_rows(w1.astype(jnp.float32), wq1)
    w2rows = _pack_weight_rows(w2.astype(jnp.float32), wq2)
    b1row = jnp.repeat(b1.astype(jnp.float32), _S * wq1)[None, :]
    b2row = jnp.repeat(b2.astype(jnp.float32), _S * wq2)[None, :]

    # static 0/1 interleave matrices (numpy at trace time)
    s1 = jnp.asarray(_col_spread(c_mid, wq1, fw, c_mid * fw, 1 - _P1[1], 1, w1d))
    r1 = jnp.asarray(_row_spread(hq1, h1 + 2, 1 - _P1[0], 1, h1))
    s2 = jnp.asarray(_col_spread(c_out, wq2, _OUT_LANES, c_out * _OUT_LANES,
                                 -_P2[1], 0, w2d - 1))
    r2 = jnp.asarray(_row_spread(hq2, h2, -_P2[0], 0, h2 - 1))

    kern = functools.partial(_decoder_kernel, n=n, h0=h0, w0=w0,
                             c_in=c_in, c_mid=c_mid, c_out=c_out)
    in_specs = [pl.BlockSpec(memory_space=pltpu.MemorySpace.VMEM) for _ in range(9)]

    out = pl.pallas_call(
        kern,
        out_shape=jax.ShapeDtypeStruct((n, c_out, h2, _OUT_LANES), jnp.float32),
        in_specs=in_specs,
        out_specs=pl.BlockSpec(memory_space=pltpu.MemorySpace.VMEM),
        scratch_shapes=[
            pltpu.VMEM((c_in, h0 + 2, w0 + 2), jnp.float32),   # padded input
            pltpu.VMEM((h1 + 2, c_mid * fw), jnp.float32),     # padded tanh(layer-1) frame
        ],
    )(x.astype(jnp.float32), w1rows, b1row, w2rows, b2row, s1, r1, s2, r2)
    return out[..., :w2d]                                      # crop lane padding


@jax.jit
def decoder_forward(x, params):
    return decoder_pallas(x, params)


def init_decoder_params(key):
    """Deterministic synthetic parameters matching the module's shapes."""
    k1, k2, k3, k4 = jax.random.split(key, 4)
    bound1 = 1.0 / jnp.sqrt(6 * 5 * 5)
    w1 = jax.random.uniform(k1, (6, 3, 5, 5), jnp.float32, -bound1, bound1)
    b1 = jax.random.uniform(k2, (3,), jnp.float32, -bound1, bound1)
    bound2 = 1.0 / jnp.sqrt(3 * 5 * 5)
    w2 = jax.random.uniform(k3, (3, 1, 5, 5), jnp.float32, -bound2, bound2)
    b2 = jax.random.uniform(k4, (1,), jnp.float32, -bound2, bound2)
    return (w1, b1, w2, b2)


def _reference_decoder(x, params):
    """Pure-JAX reference: transposed conv == correlation over the lhs-dilated
    input with the (Cout,Cin)-transposed, spatially flipped kernel."""
    w1, b1, w2, b2 = params

    def convt(x, w, b, stride, padding):
        k = w.shape[-1]
        w_t = jnp.transpose(w, (1, 0, 2, 3))[:, :, ::-1, ::-1]
        pad = [(k - 1 - padding[0], k - 1 - padding[0]),
               (k - 1 - padding[1], k - 1 - padding[1])]
        out = jax.lax.conv_general_dilated(
            x, w_t, window_strides=(1, 1), padding=pad,
            lhs_dilation=stride, rhs_dilation=(1, 1),
            dimension_numbers=("NCHW", "OIHW", "NCHW"),
            precision=jax.lax.Precision.HIGHEST)
        return out + b[None, :, None, None]

    h = jnp.tanh(convt(x, w1, b1, (3, 3), (2, 2)))
    return convt(h, w2, b2, (3, 3), (1, 0))


if __name__ == "__main__":
    key = jax.random.PRNGKey(0)
    kx, kp = jax.random.split(key)
    # small NCHW input with the 6 channels the decoder expects
    x = jax.random.normal(kx, (2, 6, 8, 8), jnp.float32)
    params = init_decoder_params(kp)

    out = jax.block_until_ready(decoder_forward(x, params))

    # layer1: (8-1)*3 - 4 + 5 = 22 -> (2,3,22,22)
    # layer2: H = (22-1)*3 - 2 + 5 = 66, W = (22-1)*3 - 0 + 5 = 68 -> (2,1,66,68)
    assert out.shape == (2, 1, 66, 68), out.shape
    assert bool(jnp.all(jnp.isfinite(out)))

    ref = _reference_decoder(x, params)
    err = float(jnp.max(jnp.abs(out - ref)))
    # residual is dominated by the TPU EUP tanh approximation vs HIGHEST-precision XLA
    assert err < 2e-3, f"max abs error vs reference = {err}"
    print("KERNEL_OK")
</pallas_src>

<mosaic_0001>
module attributes {stable_mosaic.version = 11 : i64} {
  func.func @_decoder_kernel(%arg0: memref<2x6x8x8xf32, #tpu.memory_space<vmem>>, %arg1: memref<72x81xf32, #tpu.memory_space<vmem>>, %arg2: memref<1x81xf32, #tpu.memory_space<vmem>>, %arg3: memref<36x69xf32, #tpu.memory_space<vmem>>, %arg4: memref<1x69xf32, #tpu.memory_space<vmem>>, %arg5: memref<81x72xf32, #tpu.memory_space<vmem>>, %arg6: memref<3x24x9xf32, #tpu.memory_space<vmem>>, %arg7: memref<69x128xf32, #tpu.memory_space<vmem>>, %arg8: memref<3x66x23xf32, #tpu.memory_space<vmem>>, %arg9: memref<2x1x66x128xf32, #tpu.memory_space<vmem>>, %arg10: memref<6x10x10xf32, #tpu.memory_space<vmem>>, %arg11: memref<24x72xf32, #tpu.memory_space<vmem>>) attributes {dimension_semantics = [], scalar_prefetch = 0 : i64, scratch_operands = 2 : i64, tpu.core_type = #tpu.core_type<tc>} {
    %c0 = arith.constant 0 : index
    %c0_0 = arith.constant 0 : index
    %0 = vector.load %arg5[%c0, %c0_0] : memref<81x72xf32, #tpu.memory_space<vmem>>, vector<81x72xf32>
    %c0_1 = arith.constant 0 : index
    %c0_2 = arith.constant 0 : index
    %1 = vector.load %arg7[%c0_1, %c0_2] : memref<69x128xf32, #tpu.memory_space<vmem>>, vector<69x128xf32>
    %c0_3 = arith.constant 0 : index
    %c0_4 = arith.constant 0 : index
    %2 = vector.load %arg2[%c0_3, %c0_4] : memref<1x81xf32, #tpu.memory_space<vmem>>, vector<1x81xf32>
    %c0_5 = arith.constant 0 : index
    %c0_6 = arith.constant 0 : index
    %3 = vector.load %arg4[%c0_5, %c0_6] : memref<1x69xf32, #tpu.memory_space<vmem>>, vector<1x69xf32>
    %cst = arith.constant 0.000000e+00 : f32
    %4 = vector.broadcast %cst : f32 to vector<6x10x10xf32>
    %c0_7 = arith.constant 0 : index
    %c0_8 = arith.constant 0 : index
    %c0_9 = arith.constant 0 : index
    %5 = vector.load %arg10[%c0_7, %c0_8, %c0_9] : memref<6x10x10xf32, #tpu.memory_space<vmem>>, vector<6x10x10xf32>
    tpu.vector_store %arg10[%c0_7, %c0_8, %c0_9], %4 {strides = array<i32>} : memref<6x10x10xf32, #tpu.memory_space<vmem>>, vector<6x10x10xf32>,
    %c0_10 = arith.constant 0 : index
    %c0_11 = arith.constant 0 : index
    %c0_12 = arith.constant 0 : index
    %c0_13 = arith.constant 0 : index
    %6 = vector.load %arg0[%c0_10, %c0_11, %c0_12, %c0_13] : memref<2x6x8x8xf32, #tpu.memory_space<vmem>>, vector<1x6x8x8xf32>
    %7 = vector.shape_cast %6 : vector<1x6x8x8xf32> to vector<6x8x8xf32>
    %c0_14 = arith.constant 0 : index
    %c1 = arith.constant 1 : index
    %c1_15 = arith.constant 1 : index
    %8 = vector.load %arg10[%c0_14, %c1, %c1_15] : memref<6x10x10xf32, #tpu.memory_space<vmem>>, vector<6x8x8xf32>
    tpu.vector_store %arg10[%c0_14, %c1, %c1_15], %7 {strides = array<i32>} : memref<6x10x10xf32, #tpu.memory_space<vmem>>, vector<6x8x8xf32>,
    %cst_16 = arith.constant 0.000000e+00 : f32
    %9 = vector.broadcast %cst_16 : f32 to vector<9x81xf32>
    %cst_17 = arith.constant 0.000000e+00 : f32
    %10 = vector.broadcast %cst_17 : f32 to vector<9x81xf32>
    %cst_18 = arith.constant 0.000000e+00 : f32
    %11 = vector.broadcast %cst_18 : f32 to vector<9x81xf32>
    %c0_19 = arith.constant 0 : index
    %c1_20 = arith.constant 1 : index
    %c1_21 = arith.constant 1 : index
    %12 = vector.load %arg10[%c0_19, %c1_20, %c1_21] : memref<6x10x10xf32, #tpu.memory_space<vmem>>, vector<1x9x9xf32>
    %13 = vector.shape_cast %12 : vector<1x9x9xf32> to vector<9x9xf32>
    %14 = tpu.concatenate %13, %13, %13, %13, %13, %13, %13, %13, %13 in 1 : vector<9x9xf32>, vector<9x9xf32>, vector<9x9xf32>, vector<9x9xf32>, vector<9x9xf32>, vector<9x9xf32>, vector<9x9xf32>, vector<9x9xf32>, vector<9x9xf32> -> vector<9x81xf32>
    %c0_22 = arith.constant 0 : index
    %c0_23 = arith.constant 0 : index
    %15 = vector.load %arg1[%c0_22, %c0_23] : memref<72x81xf32, #tpu.memory_space<vmem>>, vector<1x81xf32>
    %16 = vector.broadcast %15 : vector<1x81xf32> to vector<9x81xf32>
    %17 = arith.mulf %14, %16 : vector<9x81xf32>
    %18 = arith.addf %9, %17 : vector<9x81xf32>
    %c1_24 = arith.constant 1 : index
    %c0_25 = arith.constant 0 : index
    %19 = vector.load %arg1[%c1_24, %c0_25] : memref<72x81xf32, #tpu.memory_space<vmem>>, vector<1x81xf32>
    %20 = vector.broadcast %19 : vector<1x81xf32> to vector<9x81xf32>
    %21 = arith.mulf %14, %20 : vector<9x81xf32>
    %22 = arith.addf %10, %21 : vector<9x81xf32>
    %c2 = arith.constant 2 : index
    %c0_26 = arith.constant 0 : index
    %23 = vector.load %arg1[%c2, %c0_26] : memref<72x81xf32, #tpu.memory_space<vmem>>, vector<1x81xf32>
    %24 = vector.broadcast %23 : vector<1x81xf32> to vector<9x81xf32>
    %25 = arith.mulf %14, %24 : vector<9x81xf32>
    %26 = arith.addf %11, %25 : vector<9x81xf32>
    %c0_27 = arith.constant 0 : index
    %c1_28 = arith.constant 1 : index
    %c0_29 = arith.constant 0 : index
    %27 = vector.load %arg10[%c0_27, %c1_28, %c0_29] : memref<6x10x10xf32, #tpu.memory_space<vmem>>, vector<1x9x9xf32>
    %28 = vector.shape_cast %27 : vector<1x9x9xf32> to vector<9x9xf32>
    %29 = tpu.concatenate %28, %28, %28, %28, %28, %28, %28, %28, %28 in 1 : vector<9x9xf32>, vector<9x9xf32>, vector<9x9xf32>, vector<9x9xf32>, vector<9x9xf32>, vector<9x9xf32>, vector<9x9xf32>, vector<9x9xf32>, vector<9x9xf32> -> vector<9x81xf32>
    %c3 = arith.constant 3 : index
    %c0_30 = arith.constant 0 : index
    %30 = vector.load %arg1[%c3, %c0_30] : memref<72x81xf32, #tpu.memory_space<vmem>>, vector<1x81xf32>
    %31 = vector.broadcast %30 : vector<1x81xf32> to vector<9x81xf32>
    %32 = arith.mulf %29, %31 : vector<9x81xf32>
    %33 = arith.addf %18, %32 : vector<9x81xf32>
    %c4 = arith.constant 4 : index
    %c0_31 = arith.constant 0 : index
    %34 = vector.load %arg1[%c4, %c0_31] : memref<72x81xf32, #tpu.memory_space<vmem>>, vector<1x81xf32>
    %35 = vector.broadcast %34 : vector<1x81xf32> to vector<9x81xf32>
    %36 = arith.mulf %29, %35 : vector<9x81xf32>
    %37 = arith.addf %22, %36 : vector<9x81xf32>
    %c5 = arith.constant 5 : index
    %c0_32 = arith.constant 0 : index
    %38 = vector.load %arg1[%c5, %c0_32] : memref<72x81xf32, #tpu.memory_space<vmem>>, vector<1x81xf32>
    %39 = vector.broadcast %38 : vector<1x81xf32> to vector<9x81xf32>
    %40 = arith.mulf %29, %39 : vector<9x81xf32>
    %41 = arith.addf %26, %40 : vector<9x81xf32>
    %c0_33 = arith.constant 0 : index
    %c0_34 = arith.constant 0 : index
    %c1_35 = arith.constant 1 : index
    %42 = vector.load %arg10[%c0_33, %c0_34, %c1_35] : memref<6x10x10xf32, #tpu.memory_space<vmem>>, vector<1x9x9xf32>
    %43 = vector.shape_cast %42 : vector<1x9x9xf32> to vector<9x9xf32>
    %44 = tpu.concatenate %43, %43, %43, %43, %43, %43, %43, %43, %43 in 1 : vector<9x9xf32>, vector<9x9xf32>, vector<9x9xf32>, vector<9x9xf32>, vector<9x9xf32>, vector<9x9xf32>, vector<9x9xf32>, vector<9x9xf32>, vector<9x9xf32> -> vector<9x81xf32>
    %c6 = arith.constant 6 : index
    %c0_36 = arith.constant 0 : index
    %45 = vector.load %arg1[%c6, %c0_36] : memref<72x81xf32, #tpu.memory_space<vmem>>, vector<1x81xf32>
    %46 = vector.broadcast %45 : vector<1x81xf32> to vector<9x81xf32>
    %47 = arith.mulf %44, %46 : vector<9x81xf32>
    %48 = arith.addf %33, %47 : vector<9x81xf32>
    %c7 = arith.constant 7 : index
    %c0_37 = arith.constant 0 : index
    %49 = vector.load %arg1[%c7, %c0_37] : memref<72x81xf32, #tpu.memory_space<vmem>>, vector<1x81xf32>
    %50 = vector.broadcast %49 : vector<1x81xf32> to vector<9x81xf32>
    %51 = arith.mulf %44, %50 : vector<9x81xf32>
    %52 = arith.addf %37, %51 : vector<9x81xf32>
    %c0_38 = arith.constant 0 : index
    %c0_39 = arith.constant 0 : index
    %c0_40 = arith.constant 0 : index
    %53 = vector.load %arg10[%c0_38, %c0_39, %c0_40] : memref<6x10x10xf32, #tpu.memory_space<vmem>>, vector<1x9x9xf32>
    %54 = vector.shape_cast %53 : vector<1x9x9xf32> to vector<9x9xf32>
    %55 = tpu.concatenate %54, %54, %54, %54, %54, %54, %54, %54, %54 in 1 : vector<9x9xf32>, vector<9x9xf32>, vector<9x9xf32>, vector<9x9xf32>, vector<9x9xf32>, vector<9x9xf32>, vector<9x9xf32>, vector<9x9xf32>, vector<9x9xf32> -> vector<9x81xf32>
    %c9 = arith.constant 9 : index
    %c0_41 = arith.constant 0 : index
    %56 = vector.load %arg1[%c9, %c0_41] : memref<72x81xf32, #tpu.memory_space<vmem>>, vector<1x81xf32>
    %57 = vector.broadcast %56 : vector<1x81xf32> to vector<9x81xf32>
    %58 = arith.mulf %55, %57 : vector<9x81xf32>
    %59 = arith.addf %48, %58 : vector<9x81xf32>
    %c10 = arith.constant 10 : index
    %c0_42 = arith.constant 0 : index
    %60 = vector.load %arg1[%c10, %c0_42] : memref<72x81xf32, #tpu.memory_space<vmem>>, vector<1x81xf32>
    %61 = vector.broadcast %60 : vector<1x81xf32> to vector<9x81xf32>
    %62 = arith.mulf %55, %61 : vector<9x81xf32>
    %63 = arith.addf %52, %62 : vector<9x81xf32>
    %c1_43 = arith.constant 1 : index
    %c1_44 = arith.constant 1 : index
    %c1_45 = arith.constant 1 : index
    %64 = vector.load %arg10[%c1_43, %c1_44, %c1_45] : memref<6x10x10xf32, #tpu.memory_space<vmem>>, vector<1x9x9xf32>
    %65 = vector.shape_cast %64 : vector<1x9x9xf32> to vector<9x9xf32>
    %66 = tpu.concatenate %65, %65, %65, %65, %65, %65, %65, %65, %65 in 1 : vector<9x9xf32>, vector<9x9xf32>, vector<9x9xf32>, vector<9x9xf32>, vector<9x9xf32>, vector<9x9xf32>, vector<9x9xf32>, vector<9x9xf32>, vector<9x9xf32> -> vector<9x81xf32>
    %c12 = arith.constant 12 : index
    %c0_46 = arith.constant 0 : index
    %67 = vector.load %arg1[%c12, %c0_46] : memref<72x81xf32, #tpu.memory_space<vmem>>, vector<1x81xf32>
    %68 = vector.broadcast %67 : vector<1x81xf32> to vector<9x81xf32>
    %69 = arith.mulf %66, %68 : vector<9x81xf32>
    %70 = arith.addf %59, %69 : vector<9x81xf32>
    %c13 = arith.constant 13 : index
    %c0_47 = arith.constant 0 : index
    %71 = vector.load %arg1[%c13, %c0_47] : memref<72x81xf32, #tpu.memory_space<vmem>>, vector<1x81xf32>
    %72 = vector.broadcast %71 : vector<1x81xf32> to vector<9x81xf32>
    %73 = arith.mulf %66, %72 : vector<9x81xf32>
    %74 = arith.addf %63, %73 : vector<9x81xf32>
    %c14 = arith.constant 14 : index
    %c0_48 = arith.constant 0 : index
    %75 = vector.load %arg1[%c14, %c0_48] : memref<72x81xf32, #tpu.memory_space<vmem>>, vector<1x81xf32>
    %76 = vector.broadcast %75 : vector<1x81xf32> to vector<9x81xf32>
    %77 = arith.mulf %66, %76 : vector<9x81xf32>
    %78 = arith.addf %41, %77 : vector<9x81xf32>
    %c1_49 = arith.constant 1 : index
    %c1_50 = arith.constant 1 : index
    %c0_51 = arith.constant 0 : index
    %79 = vector.load %arg10[%c1_49, %c1_50, %c0_51] : memref<6x10x10xf32, #tpu.memory_space<vmem>>, vector<1x9x9xf32>
    %80 = vector.shape_cast %79 : vector<1x9x9xf32> to vector<9x9xf32>
    %81 = tpu.concatenate %80, %80, %80, %80, %80, %80, %80, %80, %80 in 1 : vector<9x9xf32>, vector<9x9xf32>, vector<9x9xf32>, vector<9x9xf32>, vector<9x9xf32>, vector<9x9xf32>, vector<9x9xf32>, vector<9x9xf32>, vector<9x9xf32> -> vector<9x81xf32>
    %c15 = arith.constant 15 : index
    %c0_52 = arith.constant 0 : index
    %82 = vector.load %arg1[%c15, %c0_52] : memref<72x81xf32, #tpu.memory_space<vmem>>, vector<1x81xf32>
    %83 = vector.broadcast %82 : vector<1x81xf32> to vector<9x81xf32>
    %84 = arith.mulf %81, %83 : vector<9x81xf32>
    %85 = arith.addf %70, %84 : vector<9x81xf32>
    %c16 = arith.constant 16 : index
    %c0_53 = arith.constant 0 : index
    %86 = vector.load %arg1[%c16, %c0_53] : memref<72x81xf32, #tpu.memory_space<vmem>>, vector<1x81xf32>
    %87 = vector.broadcast %86 : vector<1x81xf32> to vector<9x81xf32>
    %88 = arith.mulf %81, %87 : vector<9x81xf32>
    %89 = arith.addf %74, %88 : vector<9x81xf32>
    %c17 = arith.constant 17 : index
    %c0_54 = arith.constant 0 : index
    %90 = vector.load %arg1[%c17, %c0_54] : memref<72x81xf32, #tpu.memory_space<vmem>>, vector<1x81xf32>
    %91 = vector.broadcast %90 : vector<1x81xf32> to vector<9x81xf32>
    %92 = arith.mulf %81, %91 : vector<9x81xf32>
    %93 = arith.addf %78, %92 : vector<9x81xf32>
    %c1_55 = arith.constant 1 : index
    %c0_56 = arith.constant 0 : index
    %c1_57 = arith.constant 1 : index
    %94 = vector.load %arg10[%c1_55, %c0_56, %c1_57] : memref<6x10x10xf32, #tpu.memory_space<vmem>>, vector<1x9x9xf32>
    %95 = vector.shape_cast %94 : vector<1x9x9xf32> to vector<9x9xf32>
    %96 = tpu.concatenate %95, %95, %95, %95, %95, %95, %95, %95, %95 in 1 : vector<9x9xf32>, vector<9x9xf32>, vector<9x9xf32>, vector<9x9xf32>, vector<9x9xf32>, vector<9x9xf32>, vector<9x9xf32>, vector<9x9xf32>, vector<9x9xf32> -> vector<9x81xf32>
    %c18 = arith.constant 18 : index
    %c0_58 = arith.constant 0 : index
    %97 = vector.load %arg1[%c18, %c0_58] : memref<72x81xf32, #tpu.memory_space<vmem>>, vector<1x81xf32>
    %98 = vector.broadcast %97 : vector<1x81xf32> to vector<9x81xf32>
    %99 = arith.mulf %96, %98 : vector<9x81xf32>
    %100 = arith.addf %85, %99 : vector<9x81xf32>
    %c19 = arith.constant 19 : index
    %c0_59 = arith.constant 0 : index
    %101 = vector.load %arg1[%c19, %c0_59] : memref<72x81xf32, #tpu.memory_space<vmem>>, vector<1x81xf32>
    %102 = vector.broadcast %101 : vector<1x81xf32> to vector<9x81xf32>
    %103 = arith.mulf %96, %102 : vector<9x81xf32>
    %104 = arith.addf %89, %103 : vector<9x81xf32>
    %c1_60 = arith.constant 1 : index
    %c0_61 = arith.constant 0 : index
    %c0_62 = arith.constant 0 : index
    %105 = vector.load %arg10[%c1_60, %c0_61, %c0_62] : memref<6x10x10xf32, #tpu.memory_space<vmem>>, vector<1x9x9xf32>
    %106 = vector.shape_cast %105 : vector<1x9x9xf32> to vector<9x9xf32>
    %107 = tpu.concatenate %106, %106, %106, %106, %106, %106, %106, %106, %106 in 1 : vector<9x9xf32>, vector<9x9xf32>, vector<9x9xf32>, vector<9x9xf32>, vector<9x9xf32>, vector<9x9xf32>, vector<9x9xf32>, vector<9x9xf32>, vector<9x9xf32> -> vector<9x81xf32>
    %c21 = arith.constant 21 : index
    %c0_63 = arith.constant 0 : index
    %108 = vector.load %arg1[%c21, %c0_63] : memref<72x81xf32, #tpu.memory_space<vmem>>, vector<1x81xf32>
    %109 = vector.broadcast %108 : vector<1x81xf32> to vector<9x81xf32>
    %110 = arith.mulf %107, %109 : vector<9x81xf32>
    %111 = arith.addf %100, %110 : vector<9x81xf32>
    %c22 = arith.constant 22 : index
    %c0_64 = arith.constant 0 : index
    %112 = vector.load %arg1[%c22, %c0_64] : memref<72x81xf32, #tpu.memory_space<vmem>>, vector<1x81xf32>
    %113 = vector.broadcast %112 : vector<1x81xf32> to vector<9x81xf32>
    %114 = arith.mulf %107, %113 : vector<9x81xf32>
    %115 = arith.addf %104, %114 : vector<9x81xf32>
    %c2_65 = arith.constant 2 : index
    %c1_66 = arith.constant 1 : index
    %c1_67 = arith.constant 1 : index
    %116 = vector.load %arg10[%c2_65, %c1_66, %c1_67] : memref<6x10x10xf32, #tpu.memory_space<vmem>>, vector<1x9x9xf32>
    %117 = vector.shape_cast %116 : vector<1x9x9xf32> to vector<9x9xf32>
    %118 = tpu.concatenate %117, %117, %117, %117, %117, %117, %117, %117, %117 in 1 : vector<9x9xf32>, vector<9x9xf32>, vector<9x9xf32>, vector<9x9xf32>, vector<9x9xf32>, vector<9x9xf32>, vector<9x9xf32>, vector<9x9xf32>, vector<9x9xf32> -> vector<9x81xf32>
    %c24 = arith.constant 24 : index
    %c0_68 = arith.constant 0 : index
    %119 = vector.load %arg1[%c24, %c0_68] : memref<72x81xf32, #tpu.memory_space<vmem>>, vector<1x81xf32>
    %120 = vector.broadcast %119 : vector<1x81xf32> to vector<9x81xf32>
    %121 = arith.mulf %118, %120 : vector<9x81xf32>
    %122 = arith.addf %111, %121 : vector<9x81xf32>
    %c25 = arith.constant 25 : index
    %c0_69 = arith.constant 0 : index
    %123 = vector.load %arg1[%c25, %c0_69] : memref<72x81xf32, #tpu.memory_space<vmem>>, vector<1x81xf32>
    %124 = vector.broadcast %123 : vector<1x81xf32> to vector<9x81xf32>
    %125 = arith.mulf %118, %124 : vector<9x81xf32>
    %126 = arith.addf %115, %125 : vector<9x81xf32>
    %c26 = arith.constant 26 : index
    %c0_70 = arith.constant 0 : index
    %127 = vector.load %arg1[%c26, %c0_70] : memref<72x81xf32, #tpu.memory_space<vmem>>, vector<1x81xf32>
    %128 = vector.broadcast %127 : vector<1x81xf32> to vector<9x81xf32>
    %129 = arith.mulf %118, %128 : vector<9x81xf32>
    %130 = arith.addf %93, %129 : vector<9x81xf32>
    %c2_71 = arith.constant 2 : index
    %c1_72 = arith.constant 1 : index
    %c0_73 = arith.constant 0 : index
    %131 = vector.load %arg10[%c2_71, %c1_72, %c0_73] : memref<6x10x10xf32, #tpu.memory_space<vmem>>, vector<1x9x9xf32>
    %132 = vector.shape_cast %131 : vector<1x9x9xf32> to vector<9x9xf32>
    %133 = tpu.concatenate %132, %132, %132, %132, %132, %132, %132, %132, %132 in 1 : vector<9x9xf32>, vector<9x9xf32>, vector<9x9xf32>, vector<9x9xf32>, vector<9x9xf32>, vector<9x9xf32>, vector<9x9xf32>, vector<9x9xf32>, vector<9x9xf32> -> vector<9x81xf32>
    %c27 = arith.constant 27 : index
    %c0_74 = arith.constant 0 : index
    %134 = vector.load %arg1[%c27, %c0_74] : memref<72x81xf32, #tpu.memory_space<vmem>>, vector<1x81xf32>
    %135 = vector.broadcast %134 : vector<1x81xf32> to vector<9x81xf32>
    %136 = arith.mulf %133, %135 : vector<9x81xf32>
    %137 = arith.addf %122, %136 : vector<9x81xf32>
    %c28 = arith.constant 28 : index
    %c0_75 = arith.constant 0 : index
    %138 = vector.load %arg1[%c28, %c0_75] : memref<72x81xf32, #tpu.memory_space<vmem>>, vector<1x81xf32>
    %139 = vector.broadcast %138 : vector<1x81xf32> to vector<9x81xf32>
    %140 = arith.mulf %133, %139 : vector<9x81xf32>
    %141 = arith.addf %126, %140 : vector<9x81xf32>
    %c29 = arith.constant 29 : index
    %c0_76 = arith.constant 0 : index
    %142 = vector.load %arg1[%c29, %c0_76] : memref<72x81xf32, #tpu.memory_space<vmem>>, vector<1x81xf32>
    %143 = vector.broadcast %142 : vector<1x81xf32> to vector<9x81xf32>
    %144 = arith.mulf %133, %143 : vector<9x81xf32>
    %145 = arith.addf %130, %144 : vector<9x81xf32>
    %c2_77 = arith.constant 2 : index
    %c0_78 = arith.constant 0 : index
    %c1_79 = arith.constant 1 : index
    %146 = vector.load %arg10[%c2_77, %c0_78, %c1_79] : memref<6x10x10xf32, #tpu.memory_space<vmem>>, vector<1x9x9xf32>
    %147 = vector.shape_cast %146 : vector<1x9x9xf32> to vector<9x9xf32>
    %148 = tpu.concatenate %147, %147, %147, %147, %147, %147, %147, %147, %147 in 1 : vector<9x9xf32>, vector<9x9xf32>, vector<9x9xf32>, vector<9x9xf32>, vector<9x9xf32>, vector<9x9xf32>, vector<9x9xf32>, vector<9x9xf32>, vector<9x9xf32> -> vector<9x81xf32>
    %c30 = arith.constant 30 : index
    %c0_80 = arith.constant 0 : index
    %149 = vector.load %arg1[%c30, %c0_80] : memref<72x81xf32, #tpu.memory_space<vmem>>, vector<1x81xf32>
    %150 = vector.broadcast %149 : vector<1x81xf32> to vector<9x81xf32>
    %151 = arith.mulf %148, %150 : vector<9x81xf32>
    %152 = arith.addf %137, %151 : vector<9x81xf32>
    %c31 = arith.constant 31 : index
    %c0_81 = arith.constant 0 : index
    %153 = vector.load %arg1[%c31, %c0_81] : memref<72x81xf32, #tpu.memory_space<vmem>>, vector<1x81xf32>
    %154 = vector.broadcast %153 : vector<1x81xf32> to vector<9x81xf32>
    %155 = arith.mulf %148, %154 : vector<9x81xf32>
    %156 = arith.addf %141, %155 : vector<9x81xf32>
    %c2_82 = arith.constant 2 : index
    %c0_83 = arith.constant 0 : index
    %c0_84 = arith.constant 0 : index
    %157 = vector.load %arg10[%c2_82, %c0_83, %c0_84] : memref<6x10x10xf32, #tpu.memory_space<vmem>>, vector<1x9x9xf32>
    %158 = vector.shape_cast %157 : vector<1x9x9xf32> to vector<9x9xf32>
    %159 = tpu.concatenate %158, %158, %158, %158, %158, %158, %158, %158, %158 in 1 : vector<9x9xf32>, vector<9x9xf32>, vector<9x9xf32>, vector<9x9xf32>, vector<9x9xf32>, vector<9x9xf32>, vector<9x9xf32>, vector<9x9xf32>, vector<9x9xf32> -> vector<9x81xf32>
    %c33 = arith.constant 33 : index
    %c0_85 = arith.constant 0 : index
    %160 = vector.load %arg1[%c33, %c0_85] : memref<72x81xf32, #tpu.memory_space<vmem>>, vector<1x81xf32>
    %161 = vector.broadcast %160 : vector<1x81xf32> to vector<9x81xf32>
    %162 = arith.mulf %159, %161 : vector<9x81xf32>
    %163 = arith.addf %152, %162 : vector<9x81xf32>
    %c34 = arith.constant 34 : index
    %c0_86 = arith.constant 0 : index
    %164 = vector.load %arg1[%c34, %c0_86] : memref<72x81xf32, #tpu.memory_space<vmem>>, vector<1x81xf32>
    %165 = vector.broadcast %164 : vector<1x81xf32> to vector<9x81xf32>
    %166 = arith.mulf %159, %165 : vector<9x81xf32>
    %167 = arith.addf %156, %166 : vector<9x81xf32>
    %c3_87 = arith.constant 3 : index
    %c1_88 = arith.constant 1 : index
    %c1_89 = arith.constant 1 : index
    %168 = vector.load %arg10[%c3_87, %c1_88, %c1_89] : memref<6x10x10xf32, #tpu.memory_space<vmem>>, vector<1x9x9xf32>
    %169 = vector.shape_cast %168 : vector<1x9x9xf32> to vector<9x9xf32>
    %170 = tpu.concatenate %169, %169, %169, %169, %169, %169, %169, %169, %169 in 1 : vector<9x9xf32>, vector<9x9xf32>, vector<9x9xf32>, vector<9x9xf32>, vector<9x9xf32>, vector<9x9xf32>, vector<9x9xf32>, vector<9x9xf32>, vector<9x9xf32> -> vector<9x81xf32>
    %c36 = arith.constant 36 : index
    %c0_90 = arith.constant 0 : index
    %171 = vector.load %arg1[%c36, %c0_90] : memref<72x81xf32, #tpu.memory_space<vmem>>, vector<1x81xf32>
    %172 = vector.broadcast %171 : vector<1x81xf32> to vector<9x81xf32>
    %173 = arith.mulf %170, %172 : vector<9x81xf32>
    %174 = arith.addf %163, %173 : vector<9x81xf32>
    %c37 = arith.constant 37 : index
    %c0_91 = arith.constant 0 : index
    %175 = vector.load %arg1[%c37, %c0_91] : memref<72x81xf32, #tpu.memory_space<vmem>>, vector<1x81xf32>
    %176 = vector.broadcast %175 : vector<1x81xf32> to vector<9x81xf32>
    %177 = arith.mulf %170, %176 : vector<9x81xf32>
    %178 = arith.addf %167, %177 : vector<9x81xf32>
    %c38 = arith.constant 38 : index
    %c0_92 = arith.constant 0 : index
    %179 = vector.load %arg1[%c38, %c0_92] : memref<72x81xf32, #tpu.memory_space<vmem>>, vector<1x81xf32>
    %180 = vector.broadcast %179 : vector<1x81xf32> to vector<9x81xf32>
    %181 = arith.mulf %170, %180 : vector<9x81xf32>
    %182 = arith.addf %145, %181 : vector<9x81xf32>
    %c3_93 = arith.constant 3 : index
    %c1_94 = arith.constant 1 : index
    %c0_95 = arith.constant 0 : index
    %183 = vector.load %arg10[%c3_93, %c1_94, %c0_95] : memref<6x10x10xf32, #tpu.memory_space<vmem>>, vector<1x9x9xf32>
    %184 = vector.shape_cast %183 : vector<1x9x9xf32> to vector<9x9xf32>
    %185 = tpu.concatenate %184, %184, %184, %184, %184, %184, %184, %184, %184 in 1 : vector<9x9xf32>, vector<9x9xf32>, vector<9x9xf32>, vector<9x9xf32>, vector<9x9xf32>, vector<9x9xf32>, vector<9x9xf32>, vector<9x9xf32>, vector<9x9xf32> -> vector<9x81xf32>
    %c39 = arith.constant 39 : index
    %c0_96 = arith.constant 0 : index
    %186 = vector.load %arg1[%c39, %c0_96] : memref<72x81xf32, #tpu.memory_space<vmem>>, vector<1x81xf32>
    %187 = vector.broadcast %186 : vector<1x81xf32> to vector<9x81xf32>
    %188 = arith.mulf %185, %187 : vector<9x81xf32>
    %189 = arith.addf %174, %188 : vector<9x81xf32>
    %c40 = arith.constant 40 : index
    %c0_97 = arith.constant 0 : index
    %190 = vector.load %arg1[%c40, %c0_97] : memref<72x81xf32, #tpu.memory_space<vmem>>, vector<1x81xf32>
    %191 = vector.broadcast %190 : vector<1x81xf32> to vector<9x81xf32>
    %192 = arith.mulf %185, %191 : vector<9x81xf32>
    %193 = arith.addf %178, %192 : vector<9x81xf32>
    %c41 = arith.constant 41 : index
    %c0_98 = arith.constant 0 : index
    %194 = vector.load %arg1[%c41, %c0_98] : memref<72x81xf32, #tpu.memory_space<vmem>>, vector<1x81xf32>
    %195 = vector.broadcast %194 : vector<1x81xf32> to vector<9x81xf32>
    %196 = arith.mulf %185, %195 : vector<9x81xf32>
    %197 = arith.addf %182, %196 : vector<9x81xf32>
    %c3_99 = arith.constant 3 : index
    %c0_100 = arith.constant 0 : index
    %c1_101 = arith.constant 1 : index
    %198 = vector.load %arg10[%c3_99, %c0_100, %c1_101] : memref<6x10x10xf32, #tpu.memory_space<vmem>>, vector<1x9x9xf32>
    %199 = vector.shape_cast %198 : vector<1x9x9xf32> to vector<9x9xf32>
    %200 = tpu.concatenate %199, %199, %199, %199, %199, %199, %199, %199, %199 in 1 : vector<9x9xf32>, vector<9x9xf32>, vector<9x9xf32>, vector<9x9xf32>, vector<9x9xf32>, vector<9x9xf32>, vector<9x9xf32>, vector<9x9xf32>, vector<9x9xf32> -> vector<9x81xf32>
    %c42 = arith.constant 42 : index
    %c0_102 = arith.constant 0 : index
    %201 = vector.load %arg1[%c42, %c0_102] : memref<72x81xf32, #tpu.memory_space<vmem>>, vector<1x81xf32>
    %202 = vector.broadcast %201 : vector<1x81xf32> to vector<9x81xf32>
    %203 = arith.mulf %200, %202 : vector<9x81xf32>
    %204 = arith.addf %189, %203 : vector<9x81xf32>
    %c43 = arith.constant 43 : index
    %c0_103 = arith.constant 0 : index
    %205 = vector.load %arg1[%c43, %c0_103] : memref<72x81xf32, #tpu.memory_space<vmem>>, vector<1x81xf32>
    %206 = vector.broadcast %205 : vector<1x81xf32> to vector<9x81xf32>
    %207 = arith.mulf %200, %206 : vector<9x81xf32>
    %208 = arith.addf %193, %207 : vector<9x81xf32>
    %c3_104 = arith.constant 3 : index
    %c0_105 = arith.constant 0 : index
    %c0_106 = arith.constant 0 : index
    %209 = vector.load %arg10[%c3_104, %c0_105, %c0_106] : memref<6x10x10xf32, #tpu.memory_space<vmem>>, vector<1x9x9xf32>
    %210 = vector.shape_cast %209 : vector<1x9x9xf32> to vector<9x9xf32>
    %211 = tpu.concatenate %210, %210, %210, %210, %210, %210, %210, %210, %210 in 1 : vector<9x9xf32>, vector<9x9xf32>, vector<9x9xf32>, vector<9x9xf32>, vector<9x9xf32>, vector<9x9xf32>, vector<9x9xf32>, vector<9x9xf32>, vector<9x9xf32> -> vector<9x81xf32>
    %c45 = arith.constant 45 : index
    %c0_107 = arith.constant 0 : index
    %212 = vector.load %arg1[%c45, %c0_107] : memref<72x81xf32, #tpu.memory_space<vmem>>, vector<1x81xf32>
    %213 = vector.broadcast %212 : vector<1x81xf32> to vector<9x81xf32>
    %214 = arith.mulf %211, %213 : vector<9x81xf32>
    %215 = arith.addf %204, %214 : vector<9x81xf32>
    %c46 = arith.constant 46 : index
    %c0_108 = arith.constant 0 : index
    %216 = vector.load %arg1[%c46, %c0_108] : memref<72x81xf32, #tpu.memory_space<vmem>>, vector<1x81xf32>
    %217 = vector.broadcast %216 : vector<1x81xf32> to vector<9x81xf32>
    %218 = arith.mulf %211, %217 : vector<9x81xf32>
    %219 = arith.addf %208, %218 : vector<9x81xf32>
    %c4_109 = arith.constant 4 : index
    %c1_110 = arith.constant 1 : index
    %c1_111 = arith.constant 1 : index
    %220 = vector.load %arg10[%c4_109, %c1_110, %c1_111] : memref<6x10x10xf32, #tpu.memory_space<vmem>>, vector<1x9x9xf32>
    %221 = vector.shape_cast %220 : vector<1x9x9xf32> to vector<9x9xf32>
    %222 = tpu.concatenate %221, %221, %221, %221, %221, %221, %221, %221, %221 in 1 : vector<9x9xf32>, vector<9x9xf32>, vector<9x9xf32>, vector<9x9xf32>, vector<9x9xf32>, vector<9x9xf32>, vector<9x9xf32>, vector<9x9xf32>, vector<9x9xf32> -> vector<9x81xf32>
    %c48 = arith.constant 48 : index
    %c0_112 = arith.constant 0 : index
    %223 = vector.load %arg1[%c48, %c0_112] : memref<72x81xf32, #tpu.memory_space<vmem>>, vector<1x81xf32>
    %224 = vector.broadcast %223 : vector<1x81xf32> to vector<9x81xf32>
    %225 = arith.mulf %222, %224 : vector<9x81xf32>
    %226 = arith.addf %215, %225 : vector<9x81xf32>
    %c49 = arith.constant 49 : index
    %c0_113 = arith.constant 0 : index
    %227 = vector.load %arg1[%c49, %c0_113] : memref<72x81xf32, #tpu.memory_space<vmem>>, vector<1x81xf32>
    %228 = vector.broadcast %227 : vector<1x81xf32> to vector<9x81xf32>
    %229 = arith.mulf %222, %228 : vector<9x81xf32>
    %230 = arith.addf %219, %229 : vector<9x81xf32>
    %c50 = arith.constant 50 : index
    %c0_114 = arith.constant 0 : index
    %231 = vector.load %arg1[%c50, %c0_114] : memref<72x81xf32, #tpu.memory_space<vmem>>, vector<1x81xf32>
    %232 = vector.broadcast %231 : vector<1x81xf32> to vector<9x81xf32>
    %233 = arith.mulf %222, %232 : vector<9x81xf32>
    %234 = arith.addf %197, %233 : vector<9x81xf32>
    %c4_115 = arith.constant 4 : index
    %c1_116 = arith.constant 1 : index
    %c0_117 = arith.constant 0 : index
    %235 = vector.load %arg10[%c4_115, %c1_116, %c0_117] : memref<6x10x10xf32, #tpu.memory_space<vmem>>, vector<1x9x9xf32>
    %236 = vector.shape_cast %235 : vector<1x9x9xf32> to vector<9x9xf32>
    %237 = tpu.concatenate %236, %236, %236, %236, %236, %236, %236, %236, %236 in 1 : vector<9x9xf32>, vector<9x9xf32>, vector<9x9xf32>, vector<9x9xf32>, vector<9x9xf32>, vector<9x9xf32>, vector<9x9xf32>, vector<9x9xf32>, vector<9x9xf32> -> vector<9x81xf32>
    %c51 = arith.constant 51 : index
    %c0_118 = arith.constant 0 : index
    %238 = vector.load %arg1[%c51, %c0_118] : memref<72x81xf32, #tpu.memory_space<vmem>>, vector<1x81xf32>
    %239 = vector.broadcast %238 : vector<1x81xf32> to vector<9x81xf32>
    %240 = arith.mulf %237, %239 : vector<9x81xf32>
    %241 = arith.addf %226, %240 : vector<9x81xf32>
    %c52 = arith.constant 52 : index
    %c0_119 = arith.constant 0 : index
    %242 = vector.load %arg1[%c52, %c0_119] : memref<72x81xf32, #tpu.memory_space<vmem>>, vector<1x81xf32>
    %243 = vector.broadcast %242 : vector<1x81xf32> to vector<9x81xf32>
    %244 = arith.mulf %237, %243 : vector<9x81xf32>
    %245 = arith.addf %230, %244 : vector<9x81xf32>
    %c53 = arith.constant 53 : index
    %c0_120 = arith.constant 0 : index
    %246 = vector.load %arg1[%c53, %c0_120] : memref<72x81xf32, #tpu.memory_space<vmem>>, vector<1x81xf32>
    %247 = vector.broadcast %246 : vector<1x81xf32> to vector<9x81xf32>
    %248 = arith.mulf %237, %247 : vector<9x81xf32>
    %249 = arith.addf %234, %248 : vector<9x81xf32>
    %c4_121 = arith.constant 4 : index
    %c0_122 = arith.constant 0 : index
    %c1_123 = arith.constant 1 : index
    %250 = vector.load %arg10[%c4_121, %c0_122, %c1_123] : memref<6x10x10xf32, #tpu.memory_space<vmem>>, vector<1x9x9xf32>
    %251 = vector.shape_cast %250 : vector<1x9x9xf32> to vector<9x9xf32>
    %252 = tpu.concatenate %251, %251, %251, %251, %251, %251, %251, %251, %251 in 1 : vector<9x9xf32>, vector<9x9xf32>, vector<9x9xf32>, vector<9x9xf32>, vector<9x9xf32>, vector<9x9xf32>, vector<9x9xf32>, vector<9x9xf32>, vector<9x9xf32> -> vector<9x81xf32>
    %c54 = arith.constant 54 : index
    %c0_124 = arith.constant 0 : index
    %253 = vector.load %arg1[%c54, %c0_124] : memref<72x81xf32, #tpu.memory_space<vmem>>, vector<1x81xf32>
    %254 = vector.broadcast %253 : vector<1x81xf32> to vector<9x81xf32>
    %255 = arith.mulf %252, %254 : vector<9x81xf32>
    %256 = arith.addf %241, %255 : vector<9x81xf32>
    %c55 = arith.constant 55 : index
    %c0_125 = arith.constant 0 : index
    %257 = vector.load %arg1[%c55, %c0_125] : memref<72x81xf32, #tpu.memory_space<vmem>>, vector<1x81xf32>
    %258 = vector.broadcast %257 : vector<1x81xf32> to vector<9x81xf32>
    %259 = arith.mulf %252, %258 : vector<9x81xf32>
    %260 = arith.addf %245, %259 : vector<9x81xf32>
    %c4_126 = arith.constant 4 : index
    %c0_127 = arith.constant 0 : index
    %c0_128 = arith.constant 0 : index
    %261 = vector.load %arg10[%c4_126, %c0_127, %c0_128] : memref<6x10x10xf32, #tpu.memory_space<vmem>>, vector<1x9x9xf32>
    %262 = vector.shape_cast %261 : vector<1x9x9xf32> to vector<9x9xf32>
    %263 = tpu.concatenate %262, %262, %262, %262, %262, %262, %262, %262, %262 in 1 : vector<9x9xf32>, vector<9x9xf32>, vector<9x9xf32>, vector<9x9xf32>, vector<9x9xf32>, vector<9x9xf32>, vector<9x9xf32>, vector<9x9xf32>, vector<9x9xf32> -> vector<9x81xf32>
    %c57 = arith.constant 57 : index
    %c0_129 = arith.constant 0 : index
    %264 = vector.load %arg1[%c57, %c0_129] : memref<72x81xf32, #tpu.memory_space<vmem>>, vector<1x81xf32>
    %265 = vector.broadcast %264 : vector<1x81xf32> to vector<9x81xf32>
    %266 = arith.mulf %263, %265 : vector<9x81xf32>
    %267 = arith.addf %256, %266 : vector<9x81xf32>
    %c58 = arith.constant 58 : index
    %c0_130 = arith.constant 0 : index
    %268 = vector.load %arg1[%c58, %c0_130] : memref<72x81xf32, #tpu.memory_space<vmem>>, vector<1x81xf32>
    %269 = vector.broadcast %268 : vector<1x81xf32> to vector<9x81xf32>
    %270 = arith.mulf %263, %269 : vector<9x81xf32>
    %271 = arith.addf %260, %270 : vector<9x81xf32>
    %c5_131 = arith.constant 5 : index
    %c1_132 = arith.constant 1 : index
    %c1_133 = arith.constant 1 : index
    %272 = vector.load %arg10[%c5_131, %c1_132, %c1_133] : memref<6x10x10xf32, #tpu.memory_space<vmem>>, vector<1x9x9xf32>
    %273 = vector.shape_cast %272 : vector<1x9x9xf32> to vector<9x9xf32>
    %274 = tpu.concatenate %273, %273, %273, %273, %273, %273, %273, %273, %273 in 1 : vector<9x9xf32>, vector<9x9xf32>, vector<9x9xf32>, vector<9x9xf32>, vector<9x9xf32>, vector<9x9xf32>, vector<9x9xf32>, vector<9x9xf32>, vector<9x9xf32> -> vector<9x81xf32>
    %c60 = arith.constant 60 : index
    %c0_134 = arith.constant 0 : index
    %275 = vector.load %arg1[%c60, %c0_134] : memref<72x81xf32, #tpu.memory_space<vmem>>, vector<1x81xf32>
    %276 = vector.broadcast %275 : vector<1x81xf32> to vector<9x81xf32>
    %277 = arith.mulf %274, %276 : vector<9x81xf32>
    %278 = arith.addf %267, %277 : vector<9x81xf32>
    %c61 = arith.constant 61 : index
    %c0_135 = arith.constant 0 : index
    %279 = vector.load %arg1[%c61, %c0_135] : memref<72x81xf32, #tpu.memory_space<vmem>>, vector<1x81xf32>
    %280 = vector.broadcast %279 : vector<1x81xf32> to vector<9x81xf32>
    %281 = arith.mulf %274, %280 : vector<9x81xf32>
    %282 = arith.addf %271, %281 : vector<9x81xf32>
    %c62 = arith.constant 62 : index
    %c0_136 = arith.constant 0 : index
    %283 = vector.load %arg1[%c62, %c0_136] : memref<72x81xf32, #tpu.memory_space<vmem>>, vector<1x81xf32>
    %284 = vector.broadcast %283 : vector<1x81xf32> to vector<9x81xf32>
    %285 = arith.mulf %274, %284 : vector<9x81xf32>
    %286 = arith.addf %249, %285 : vector<9x81xf32>
    %c5_137 = arith.constant 5 : index
    %c1_138 = arith.constant 1 : index
    %c0_139 = arith.constant 0 : index
    %287 = vector.load %arg10[%c5_137, %c1_138, %c0_139] : memref<6x10x10xf32, #tpu.memory_space<vmem>>, vector<1x9x9xf32>
    %288 = vector.shape_cast %287 : vector<1x9x9xf32> to vector<9x9xf32>
    %289 = tpu.concatenate %288, %288, %288, %288, %288, %288, %288, %288, %288 in 1 : vector<9x9xf32>, vector<9x9xf32>, vector<9x9xf32>, vector<9x9xf32>, vector<9x9xf32>, vector<9x9xf32>, vector<9x9xf32>, vector<9x9xf32>, vector<9x9xf32> -> vector<9x81xf32>
    %c63 = arith.constant 63 : index
    %c0_140 = arith.constant 0 : index
    %290 = vector.load %arg1[%c63, %c0_140] : memref<72x81xf32, #tpu.memory_space<vmem>>, vector<1x81xf32>
    %291 = vector.broadcast %290 : vector<1x81xf32> to vector<9x81xf32>
    %292 = arith.mulf %289, %291 : vector<9x81xf32>
    %293 = arith.addf %278, %292 : vector<9x81xf32>
    %c64 = arith.constant 64 : index
    %c0_141 = arith.constant 0 : index
    %294 = vector.load %arg1[%c64, %c0_141] : memref<72x81xf32, #tpu.memory_space<vmem>>, vector<1x81xf32>
    %295 = vector.broadcast %294 : vector<1x81xf32> to vector<9x81xf32>
    %296 = arith.mulf %289, %295 : vector<9x81xf32>
    %297 = arith.addf %282, %296 : vector<9x81xf32>
    %c65 = arith.constant 65 : index
    %c0_142 = arith.constant 0 : index
    %298 = vector.load %arg1[%c65, %c0_142] : memref<72x81xf32, #tpu.memory_space<vmem>>, vector<1x81xf32>
    %299 = vector.broadcast %298 : vector<1x81xf32> to vector<9x81xf32>
    %300 = arith.mulf %289, %299 : vector<9x81xf32>
    %301 = arith.addf %286, %300 : vector<9x81xf32>
    %c5_143 = arith.constant 5 : index
    %c0_144 = arith.constant 0 : index
    %c1_145 = arith.constant 1 : index
    %302 = vector.load %arg10[%c5_143, %c0_144, %c1_145] : memref<6x10x10xf32, #tpu.memory_space<vmem>>, vector<1x9x9xf32>
    %303 = vector.shape_cast %302 : vector<1x9x9xf32> to vector<9x9xf32>
    %304 = tpu.concatenate %303, %303, %303, %303, %303, %303, %303, %303, %303 in 1 : vector<9x9xf32>, vector<9x9xf32>, vector<9x9xf32>, vector<9x9xf32>, vector<9x9xf32>, vector<9x9xf32>, vector<9x9xf32>, vector<9x9xf32>, vector<9x9xf32> -> vector<9x81xf32>
    %c66 = arith.constant 66 : index
    %c0_146 = arith.constant 0 : index
    %305 = vector.load %arg1[%c66, %c0_146] : memref<72x81xf32, #tpu.memory_space<vmem>>, vector<1x81xf32>
    %306 = vector.broadcast %305 : vector<1x81xf32> to vector<9x81xf32>
    %307 = arith.mulf %304, %306 : vector<9x81xf32>
    %308 = arith.addf %293, %307 : vector<9x81xf32>
    %c67 = arith.constant 67 : index
    %c0_147 = arith.constant 0 : index
    %309 = vector.load %arg1[%c67, %c0_147] : memref<72x81xf32, #tpu.memory_space<vmem>>, vector<1x81xf32>
    %310 = vector.broadcast %309 : vector<1x81xf32> to vector<9x81xf32>
    %311 = arith.mulf %304, %310 : vector<9x81xf32>
    %312 = arith.addf %297, %311 : vector<9x81xf32>
    %c5_148 = arith.constant 5 : index
    %c0_149 = arith.constant 0 : index
    %c0_150 = arith.constant 0 : index
    %313 = vector.load %arg10[%c5_148, %c0_149, %c0_150] : memref<6x10x10xf32, #tpu.memory_space<vmem>>, vector<1x9x9xf32>
    %314 = vector.shape_cast %313 : vector<1x9x9xf32> to vector<9x9xf32>
    %315 = tpu.concatenate %314, %314, %314, %314, %314, %314, %314, %314, %314 in 1 : vector<9x9xf32>, vector<9x9xf32>, vector<9x9xf32>, vector<9x9xf32>, vector<9x9xf32>, vector<9x9xf32>, vector<9x9xf32>, vector<9x9xf32>, vector<9x9xf32> -> vector<9x81xf32>
    %c69 = arith.constant 69 : index
    %c0_151 = arith.constant 0 : index
    %316 = vector.load %arg1[%c69, %c0_151] : memref<72x81xf32, #tpu.memory_space<vmem>>, vector<1x81xf32>
    %317 = vector.broadcast %316 : vector<1x81xf32> to vector<9x81xf32>
    %318 = arith.mulf %315, %317 : vector<9x81xf32>
    %319 = arith.addf %308, %318 : vector<9x81xf32>
    %c70 = arith.constant 70 : index
    %c0_152 = arith.constant 0 : index
    %320 = vector.load %arg1[%c70, %c0_152] : memref<72x81xf32, #tpu.memory_space<vmem>>, vector<1x81xf32>
    %321 = vector.broadcast %320 : vector<1x81xf32> to vector<9x81xf32>
    %322 = arith.mulf %315, %321 : vector<9x81xf32>
    %323 = arith.addf %312, %322 : vector<9x81xf32>
    %324 = vector.broadcast %2 : vector<1x81xf32> to vector<9x81xf32>
    %325 = arith.addf %319, %324 : vector<9x81xf32>
    %326 = math.tanh %325 : vector<9x81xf32>
    %c0_153 = arith.constant 0 : index
    %c0_154 = arith.constant 0 : index
    %c0_155 = arith.constant 0 : index
    %327 = vector.load %arg6[%c0_153, %c0_154, %c0_155] : memref<3x24x9xf32, #tpu.memory_space<vmem>>, vector<1x24x9xf32>
    %328 = vector.shape_cast %327 : vector<1x24x9xf32> to vector<24x9xf32>
    %cst_156 = arith.constant dense<0.000000e+00> : vector<24x81xf32>
    %329 = tpu.matmul %328, %326, %cst_156 {dimension_numbers = #tpu.dot_dimension_numbers<[1], [0], [0], [1], [0, 0, 1, 1], [], []>} : vector<24x9xf32>, vector<9x81xf32>, vector<24x81xf32> -> vector<24x81xf32>
    %330 = vector.broadcast %2 : vector<1x81xf32> to vector<9x81xf32>
    %331 = arith.addf %323, %330 : vector<9x81xf32>
    %332 = math.tanh %331 : vector<9x81xf32>
    %c1_157 = arith.constant 1 : index
    %c0_158 = arith.constant 0 : index
    %c0_159 = arith.constant 0 : index
    %333 = vector.load %arg6[%c1_157, %c0_158, %c0_159] : memref<3x24x9xf32, #tpu.memory_space<vmem>>, vector<1x24x9xf32>
    %334 = vector.shape_cast %333 : vector<1x24x9xf32> to vector<24x9xf32>
    %cst_160 = arith.constant dense<0.000000e+00> : vector<24x81xf32>
    %335 = tpu.matmul %334, %332, %cst_160 {dimension_numbers = #tpu.dot_dimension_numbers<[1], [0], [0], [1], [0, 0, 1, 1], [], []>} : vector<24x9xf32>, vector<9x81xf32>, vector<24x81xf32> -> vector<24x81xf32>
    %336 = arith.addf %329, %335 : vector<24x81xf32>
    %337 = vector.broadcast %2 : vector<1x81xf32> to vector<9x81xf32>
    %338 = arith.addf %301, %337 : vector<9x81xf32>
    %339 = math.tanh %338 : vector<9x81xf32>
    %c2_161 = arith.constant 2 : index
    %c0_162 = arith.constant 0 : index
    %c0_163 = arith.constant 0 : index
    %340 = vector.load %arg6[%c2_161, %c0_162, %c0_163] : memref<3x24x9xf32, #tpu.memory_space<vmem>>, vector<1x24x9xf32>
    %341 = vector.shape_cast %340 : vector<1x24x9xf32> to vector<24x9xf32>
    %cst_164 = arith.constant dense<0.000000e+00> : vector<24x81xf32>
    %342 = tpu.matmul %341, %339, %cst_164 {dimension_numbers = #tpu.dot_dimension_numbers<[1], [0], [0], [1], [0, 0, 1, 1], [], []>} : vector<24x9xf32>, vector<9x81xf32>, vector<24x81xf32> -> vector<24x81xf32>
    %343 = arith.addf %336, %342 : vector<24x81xf32>
    %cst_165 = arith.constant dense<0.000000e+00> : vector<24x72xf32>
    %344 = tpu.matmul %343, %0, %cst_165 {dimension_numbers = #tpu.dot_dimension_numbers<[1], [0], [0], [1], [0, 0, 1, 1], [], []>} : vector<24x81xf32>, vector<81x72xf32>, vector<24x72xf32> -> vector<24x72xf32>
    %c0_166 = arith.constant 0 : index
    %c0_167 = arith.constant 0 : index
    %345 = vector.load %arg11[%c0_166, %c0_167] : memref<24x72xf32, #tpu.memory_space<vmem>>, vector<24x72xf32>
    tpu.vector_store %arg11[%c0_166, %c0_167], %344 {strides = array<i32>} : memref<24x72xf32, #tpu.memory_space<vmem>>, vector<24x72xf32>,
    %cst_168 = arith.constant 0.000000e+00 : f32
    %346 = vector.broadcast %cst_168 : f32 to vector<23x69xf32>
    %cst_169 = arith.constant 0.000000e+00 : f32
    %347 = vector.broadcast %cst_169 : f32 to vector<23x69xf32>
    %cst_170 = arith.constant 0.000000e+00 : f32
    %348 = vector.broadcast %cst_170 : f32 to vector<23x69xf32>
    %c1_171 = arith.constant 1 : index
    %c1_172 = arith.constant 1 : index
    %349 = vector.load %arg11[%c1_171, %c1_172] : memref<24x72xf32, #tpu.memory_space<vmem>>, vector<23x23xf32>
    %350 = tpu.concatenate %349, %349, %349 in 1 : vector<23x23xf32>, vector<23x23xf32>, vector<23x23xf32> -> vector<23x69xf32>
    %c0_173 = arith.constant 0 : index
    %c0_174 = arith.constant 0 : index
    %351 = vector.load %arg3[%c0_173, %c0_174] : memref<36x69xf32, #tpu.memory_space<vmem>>, vector<1x69xf32>
    %352 = vector.broadcast %351 : vector<1x69xf32> to vector<23x69xf32>
    %353 = arith.mulf %350, %352 : vector<23x69xf32>
    %354 = arith.addf %346, %353 : vector<23x69xf32>
    %c1_175 = arith.constant 1 : index
    %c0_176 = arith.constant 0 : index
    %355 = vector.load %arg3[%c1_175, %c0_176] : memref<36x69xf32, #tpu.memory_space<vmem>>, vector<1x69xf32>
    %356 = vector.broadcast %355 : vector<1x69xf32> to vector<23x69xf32>
    %357 = arith.mulf %350, %356 : vector<23x69xf32>
    %358 = arith.addf %347, %357 : vector<23x69xf32>
    %c2_177 = arith.constant 2 : index
    %c0_178 = arith.constant 0 : index
    %359 = vector.load %arg3[%c2_177, %c0_178] : memref<36x69xf32, #tpu.memory_space<vmem>>, vector<1x69xf32>
    %360 = vector.broadcast %359 : vector<1x69xf32> to vector<23x69xf32>
    %361 = arith.mulf %350, %360 : vector<23x69xf32>
    %362 = arith.addf %348, %361 : vector<23x69xf32>
    %c1_179 = arith.constant 1 : index
    %c0_180 = arith.constant 0 : index
    %363 = vector.load %arg11[%c1_179, %c0_180] : memref<24x72xf32, #tpu.memory_space<vmem>>, vector<23x23xf32>
    %364 = tpu.concatenate %363, %363, %363 in 1 : vector<23x23xf32>, vector<23x23xf32>, vector<23x23xf32> -> vector<23x69xf32>
    %c3_181 = arith.constant 3 : index
    %c0_182 = arith.constant 0 : index
    %365 = vector.load %arg3[%c3_181, %c0_182] : memref<36x69xf32, #tpu.memory_space<vmem>>, vector<1x69xf32>
    %366 = vector.broadcast %365 : vector<1x69xf32> to vector<23x69xf32>
    %367 = arith.mulf %364, %366 : vector<23x69xf32>
    %368 = arith.addf %354, %367 : vector<23x69xf32>
    %c4_183 = arith.constant 4 : index
    %c0_184 = arith.constant 0 : index
    %369 = vector.load %arg3[%c4_183, %c0_184] : memref<36x69xf32, #tpu.memory_space<vmem>>, vector<1x69xf32>
    %370 = vector.broadcast %369 : vector<1x69xf32> to vector<23x69xf32>
    %371 = arith.mulf %364, %370 : vector<23x69xf32>
    %372 = arith.addf %358, %371 : vector<23x69xf32>
    %c5_185 = arith.constant 5 : index
    %c0_186 = arith.constant 0 : index
    %373 = vector.load %arg3[%c5_185, %c0_186] : memref<36x69xf32, #tpu.memory_space<vmem>>, vector<1x69xf32>
    %374 = vector.broadcast %373 : vector<1x69xf32> to vector<23x69xf32>
    %375 = arith.mulf %364, %374 : vector<23x69xf32>
    %376 = arith.addf %362, %375 : vector<23x69xf32>
    %c0_187 = arith.constant 0 : index
    %c1_188 = arith.constant 1 : index
    %377 = vector.load %arg11[%c0_187, %c1_188] : memref<24x72xf32, #tpu.memory_space<vmem>>, vector<23x23xf32>
    %378 = tpu.concatenate %377, %377, %377 in 1 : vector<23x23xf32>, vector<23x23xf32>, vector<23x23xf32> -> vector<23x69xf32>
    %c6_189 = arith.constant 6 : index
    %c0_190 = arith.constant 0 : index
    %379 = vector.load %arg3[%c6_189, %c0_190] : memref<36x69xf32, #tpu.memory_space<vmem>>, vector<1x69xf32>
    %380 = vector.broadcast %379 : vector<1x69xf32> to vector<23x69xf32>
    %381 = arith.mulf %378, %380 : vector<23x69xf32>
    %382 = arith.addf %368, %381 : vector<23x69xf32>
    %c7_191 = arith.constant 7 : index
    %c0_192 = arith.constant 0 : index
    %383 = vector.load %arg3[%c7_191, %c0_192] : memref<36x69xf32, #tpu.memory_space<vmem>>, vector<1x69xf32>
    %384 = vector.broadcast %383 : vector<1x69xf32> to vector<23x69xf32>
    %385 = arith.mulf %378, %384 : vector<23x69xf32>
    %386 = arith.addf %372, %385 : vector<23x69xf32>
    %c0_193 = arith.constant 0 : index
    %c0_194 = arith.constant 0 : index
    %387 = vector.load %arg11[%c0_193, %c0_194] : memref<24x72xf32, #tpu.memory_space<vmem>>, vector<23x23xf32>
    %388 = tpu.concatenate %387, %387, %387 in 1 : vector<23x23xf32>, vector<23x23xf32>, vector<23x23xf32> -> vector<23x69xf32>
    %c9_195 = arith.constant 9 : index
    %c0_196 = arith.constant 0 : index
    %389 = vector.load %arg3[%c9_195, %c0_196] : memref<36x69xf32, #tpu.memory_space<vmem>>, vector<1x69xf32>
    %390 = vector.broadcast %389 : vector<1x69xf32> to vector<23x69xf32>
    %391 = arith.mulf %388, %390 : vector<23x69xf32>
    %392 = arith.addf %382, %391 : vector<23x69xf32>
    %c10_197 = arith.constant 10 : index
    %c0_198 = arith.constant 0 : index
    %393 = vector.load %arg3[%c10_197, %c0_198] : memref<36x69xf32, #tpu.memory_space<vmem>>, vector<1x69xf32>
    %394 = vector.broadcast %393 : vector<1x69xf32> to vector<23x69xf32>
    %395 = arith.mulf %388, %394 : vector<23x69xf32>
    %396 = arith.addf %386, %395 : vector<23x69xf32>
    %c1_199 = arith.constant 1 : index
    %c25_200 = arith.constant 25 : index
    %397 = vector.load %arg11[%c1_199, %c25_200] : memref<24x72xf32, #tpu.memory_space<vmem>>, vector<23x23xf32>
    %398 = tpu.concatenate %397, %397, %397 in 1 : vector<23x23xf32>, vector<23x23xf32>, vector<23x23xf32> -> vector<23x69xf32>
    %c12_201 = arith.constant 12 : index
    %c0_202 = arith.constant 0 : index
    %399 = vector.load %arg3[%c12_201, %c0_202] : memref<36x69xf32, #tpu.memory_space<vmem>>, vector<1x69xf32>
    %400 = vector.broadcast %399 : vector<1x69xf32> to vector<23x69xf32>
    %401 = arith.mulf %398, %400 : vector<23x69xf32>
    %402 = arith.addf %392, %401 : vector<23x69xf32>
    %c13_203 = arith.constant 13 : index
    %c0_204 = arith.constant 0 : index
    %403 = vector.load %arg3[%c13_203, %c0_204] : memref<36x69xf32, #tpu.memory_space<vmem>>, vector<1x69xf32>
    %404 = vector.broadcast %403 : vector<1x69xf32> to vector<23x69xf32>
    %405 = arith.mulf %398, %404 : vector<23x69xf32>
    %406 = arith.addf %396, %405 : vector<23x69xf32>
    %c14_205 = arith.constant 14 : index
    %c0_206 = arith.constant 0 : index
    %407 = vector.load %arg3[%c14_205, %c0_206] : memref<36x69xf32, #tpu.memory_space<vmem>>, vector<1x69xf32>
    %408 = vector.broadcast %407 : vector<1x69xf32> to vector<23x69xf32>
    %409 = arith.mulf %398, %408 : vector<23x69xf32>
    %410 = arith.addf %376, %409 : vector<23x69xf32>
    %c1_207 = arith.constant 1 : index
    %c24_208 = arith.constant 24 : index
    %411 = vector.load %arg11[%c1_207, %c24_208] : memref<24x72xf32, #tpu.memory_space<vmem>>, vector<23x23xf32>
    %412 = tpu.concatenate %411, %411, %411 in 1 : vector<23x23xf32>, vector<23x23xf32>, vector<23x23xf32> -> vector<23x69xf32>
    %c15_209 = arith.constant 15 : index
    %c0_210 = arith.constant 0 : index
    %413 = vector.load %arg3[%c15_209, %c0_210] : memref<36x69xf32, #tpu.memory_space<vmem>>, vector<1x69xf32>
    %414 = vector.broadcast %413 : vector<1x69xf32> to vector<23x69xf32>
    %415 = arith.mulf %412, %414 : vector<23x69xf32>
    %416 = arith.addf %402, %415 : vector<23x69xf32>
    %c16_211 = arith.constant 16 : index
    %c0_212 = arith.constant 0 : index
    %417 = vector.load %arg3[%c16_211, %c0_212] : memref<36x69xf32, #tpu.memory_space<vmem>>, vector<1x69xf32>
    %418 = vector.broadcast %417 : vector<1x69xf32> to vector<23x69xf32>
    %419 = arith.mulf %412, %418 : vector<23x69xf32>
    %420 = arith.addf %406, %419 : vector<23x69xf32>
    %c17_213 = arith.constant 17 : index
    %c0_214 = arith.constant 0 : index
    %421 = vector.load %arg3[%c17_213, %c0_214] : memref<36x69xf32, #tpu.memory_space<vmem>>, vector<1x69xf32>
    %422 = vector.broadcast %421 : vector<1x69xf32> to vector<23x69xf32>
    %423 = arith.mulf %412, %422 : vector<23x69xf32>
    %424 = arith.addf %410, %423 : vector<23x69xf32>
    %c0_215 = arith.constant 0 : index
    %c25_216 = arith.constant 25 : index
    %425 = vector.load %arg11[%c0_215, %c25_216] : memref<24x72xf32, #tpu.memory_space<vmem>>, vector<23x23xf32>
    %426 = tpu.concatenate %425, %425, %425 in 1 : vector<23x23xf32>, vector<23x23xf32>, vector<23x23xf32> -> vector<23x69xf32>
    %c18_217 = arith.constant 18 : index
    %c0_218 = arith.constant 0 : index
    %427 = vector.load %arg3[%c18_217, %c0_218] : memref<36x69xf32, #tpu.memory_space<vmem>>, vector<1x69xf32>
    %428 = vector.broadcast %427 : vector<1x69xf32> to vector<23x69xf32>
    %429 = arith.mulf %426, %428 : vector<23x69xf32>
    %430 = arith.addf %416, %429 : vector<23x69xf32>
    %c19_219 = arith.constant 19 : index
    %c0_220 = arith.constant 0 : index
    %431 = vector.load %arg3[%c19_219, %c0_220] : memref<36x69xf32, #tpu.memory_space<vmem>>, vector<1x69xf32>
    %432 = vector.broadcast %431 : vector<1x69xf32> to vector<23x69xf32>
    %433 = arith.mulf %426, %432 : vector<23x69xf32>
    %434 = arith.addf %420, %433 : vector<23x69xf32>
    %c0_221 = arith.constant 0 : index
    %c24_222 = arith.constant 24 : index
    %435 = vector.load %arg11[%c0_221, %c24_222] : memref<24x72xf32, #tpu.memory_space<vmem>>, vector<23x23xf32>
    %436 = tpu.concatenate %435, %435, %435 in 1 : vector<23x23xf32>, vector<23x23xf32>, vector<23x23xf32> -> vector<23x69xf32>
    %c21_223 = arith.constant 21 : index
    %c0_224 = arith.constant 0 : index
    %437 = vector.load %arg3[%c21_223, %c0_224] : memref<36x69xf32, #tpu.memory_space<vmem>>, vector<1x69xf32>
    %438 = vector.broadcast %437 : vector<1x69xf32> to vector<23x69xf32>
    %439 = arith.mulf %436, %438 : vector<23x69xf32>
    %440 = arith.addf %430, %439 : vector<23x69xf32>
    %c22_225 = arith.constant 22 : index
    %c0_226 = arith.constant 0 : index
    %441 = vector.load %arg3[%c22_225, %c0_226] : memref<36x69xf32, #tpu.memory_space<vmem>>, vector<1x69xf32>
    %442 = vector.broadcast %441 : vector<1x69xf32> to vector<23x69xf32>
    %443 = arith.mulf %436, %442 : vector<23x69xf32>
    %444 = arith.addf %434, %443 : vector<23x69xf32>
    %c1_227 = arith.constant 1 : index
    %c49_228 = arith.constant 49 : index
    %445 = vector.load %arg11[%c1_227, %c49_228] : memref<24x72xf32, #tpu.memory_space<vmem>>, vector<23x23xf32>
    %446 = tpu.concatenate %445, %445, %445 in 1 : vector<23x23xf32>, vector<23x23xf32>, vector<23x23xf32> -> vector<23x69xf32>
    %c24_229 = arith.constant 24 : index
    %c0_230 = arith.constant 0 : index
    %447 = vector.load %arg3[%c24_229, %c0_230] : memref<36x69xf32, #tpu.memory_space<vmem>>, vector<1x69xf32>
    %448 = vector.broadcast %447 : vector<1x69xf32> to vector<23x69xf32>
    %449 = arith.mulf %446, %448 : vector<23x69xf32>
    %450 = arith.addf %440, %449 : vector<23x69xf32>
    %c25_231 = arith.constant 25 : index
    %c0_232 = arith.constant 0 : index
    %451 = vector.load %arg3[%c25_231, %c0_232] : memref<36x69xf32, #tpu.memory_space<vmem>>, vector<1x69xf32>
    %452 = vector.broadcast %451 : vector<1x69xf32> to vector<23x69xf32>
    %453 = arith.mulf %446, %452 : vector<23x69xf32>
    %454 = arith.addf %444, %453 : vector<23x69xf32>
    %c26_233 = arith.constant 26 : index
    %c0_234 = arith.constant 0 : index
    %455 = vector.load %arg3[%c26_233, %c0_234] : memref<36x69xf32, #tpu.memory_space<vmem>>, vector<1x69xf32>
    %456 = vector.broadcast %455 : vector<1x69xf32> to vector<23x69xf32>
    %457 = arith.mulf %446, %456 : vector<23x69xf32>
    %458 = arith.addf %424, %457 : vector<23x69xf32>
    %c1_235 = arith.constant 1 : index
    %c48_236 = arith.constant 48 : index
    %459 = vector.load %arg11[%c1_235, %c48_236] : memref<24x72xf32, #tpu.memory_space<vmem>>, vector<23x23xf32>
    %460 = tpu.concatenate %459, %459, %459 in 1 : vector<23x23xf32>, vector<23x23xf32>, vector<23x23xf32> -> vector<23x69xf32>
    %c27_237 = arith.constant 27 : index
    %c0_238 = arith.constant 0 : index
    %461 = vector.load %arg3[%c27_237, %c0_238] : memref<36x69xf32, #tpu.memory_space<vmem>>, vector<1x69xf32>
    %462 = vector.broadcast %461 : vector<1x69xf32> to vector<23x69xf32>
    %463 = arith.mulf %460, %462 : vector<23x69xf32>
    %464 = arith.addf %450, %463 : vector<23x69xf32>
    %c28_239 = arith.constant 28 : index
    %c0_240 = arith.constant 0 : index
    %465 = vector.load %arg3[%c28_239, %c0_240] : memref<36x69xf32, #tpu.memory_space<vmem>>, vector<1x69xf32>
    %466 = vector.broadcast %465 : vector<1x69xf32> to vector<23x69xf32>
    %467 = arith.mulf %460, %466 : vector<23x69xf32>
    %468 = arith.addf %454, %467 : vector<23x69xf32>
    %c29_241 = arith.constant 29 : index
    %c0_242 = arith.constant 0 : index
    %469 = vector.load %arg3[%c29_241, %c0_242] : memref<36x69xf32, #tpu.memory_space<vmem>>, vector<1x69xf32>
    %470 = vector.broadcast %469 : vector<1x69xf32> to vector<23x69xf32>
    %471 = arith.mulf %460, %470 : vector<23x69xf32>
    %472 = arith.addf %458, %471 : vector<23x69xf32>
    %c0_243 = arith.constant 0 : index
    %c49_244 = arith.constant 49 : index
    %473 = vector.load %arg11[%c0_243, %c49_244] : memref<24x72xf32, #tpu.memory_space<vmem>>, vector<23x23xf32>
    %474 = tpu.concatenate %473, %473, %473 in 1 : vector<23x23xf32>, vector<23x23xf32>, vector<23x23xf32> -> vector<23x69xf32>
    %c30_245 = arith.constant 30 : index
    %c0_246 = arith.constant 0 : index
    %475 = vector.load %arg3[%c30_245, %c0_246] : memref<36x69xf32, #tpu.memory_space<vmem>>, vector<1x69xf32>
    %476 = vector.broadcast %475 : vector<1x69xf32> to vector<23x69xf32>
    %477 = arith.mulf %474, %476 : vector<23x69xf32>
    %478 = arith.addf %464, %477 : vector<23x69xf32>
    %c31_247 = arith.constant 31 : index
    %c0_248 = arith.constant 0 : index
    %479 = vector.load %arg3[%c31_247, %c0_248] : memref<36x69xf32, #tpu.memory_space<vmem>>, vector<1x69xf32>
    %480 = vector.broadcast %479 : vector<1x69xf32> to vector<23x69xf32>
    %481 = arith.mulf %474, %480 : vector<23x69xf32>
    %482 = arith.addf %468, %481 : vector<23x69xf32>
    %c0_249 = arith.constant 0 : index
    %c48_250 = arith.constant 48 : index
    %483 = vector.load %arg11[%c0_249, %c48_250] : memref<24x72xf32, #tpu.memory_space<vmem>>, vector<23x23xf32>
    %484 = tpu.concatenate %483, %483, %483 in 1 : vector<23x23xf32>, vector<23x23xf32>, vector<23x23xf32> -> vector<23x69xf32>
    %c33_251 = arith.constant 33 : index
    %c0_252 = arith.constant 0 : index
    %485 = vector.load %arg3[%c33_251, %c0_252] : memref<36x69xf32, #tpu.memory_space<vmem>>, vector<1x69xf32>
    %486 = vector.broadcast %485 : vector<1x69xf32> to vector<23x69xf32>
    %487 = arith.mulf %484, %486 : vector<23x69xf32>
    %488 = arith.addf %478, %487 : vector<23x69xf32>
    %c34_253 = arith.constant 34 : index
    %c0_254 = arith.constant 0 : index
    %489 = vector.load %arg3[%c34_253, %c0_254] : memref<36x69xf32, #tpu.memory_space<vmem>>, vector<1x69xf32>
    %490 = vector.broadcast %489 : vector<1x69xf32> to vector<23x69xf32>
    %491 = arith.mulf %484, %490 : vector<23x69xf32>
    %492 = arith.addf %482, %491 : vector<23x69xf32>
    %c0_255 = arith.constant 0 : index
    %c0_256 = arith.constant 0 : index
    %c0_257 = arith.constant 0 : index
    %493 = vector.load %arg8[%c0_255, %c0_256, %c0_257] : memref<3x66x23xf32, #tpu.memory_space<vmem>>, vector<1x66x23xf32>
    %494 = vector.shape_cast %493 : vector<1x66x23xf32> to vector<66x23xf32>
    %495 = vector.broadcast %3 : vector<1x69xf32> to vector<23x69xf32>
    %496 = arith.addf %488, %495 : vector<23x69xf32>
    %cst_258 = arith.constant dense<0.000000e+00> : vector<66x69xf32>
    %497 = tpu.matmul %494, %496, %cst_258 {dimension_numbers = #tpu.dot_dimension_numbers<[1], [0], [0], [1], [0, 0, 1, 1], [], []>} : vector<66x23xf32>, vector<23x69xf32>, vector<66x69xf32> -> vector<66x69xf32>
    %c1_259 = arith.constant 1 : index
    %c0_260 = arith.constant 0 : index
    %c0_261 = arith.constant 0 : index
    %498 = vector.load %arg8[%c1_259, %c0_260, %c0_261] : memref<3x66x23xf32, #tpu.memory_space<vmem>>, vector<1x66x23xf32>
    %499 = vector.shape_cast %498 : vector<1x66x23xf32> to vector<66x23xf32>
    %500 = vector.broadcast %3 : vector<1x69xf32> to vector<23x69xf32>
    %501 = arith.addf %492, %500 : vector<23x69xf32>
    %cst_262 = arith.constant dense<0.000000e+00> : vector<66x69xf32>
    %502 = tpu.matmul %499, %501, %cst_262 {dimension_numbers = #tpu.dot_dimension_numbers<[1], [0], [0], [1], [0, 0, 1, 1], [], []>} : vector<66x23xf32>, vector<23x69xf32>, vector<66x69xf32> -> vector<66x69xf32>
    %503 = arith.addf %497, %502 : vector<66x69xf32>
    %c2_263 = arith.constant 2 : index
    %c0_264 = arith.constant 0 : index
    %c0_265 = arith.constant 0 : index
    %504 = vector.load %arg8[%c2_263, %c0_264, %c0_265] : memref<3x66x23xf32, #tpu.memory_space<vmem>>, vector<1x66x23xf32>
    %505 = vector.shape_cast %504 : vector<1x66x23xf32> to vector<66x23xf32>
    %506 = vector.broadcast %3 : vector<1x69xf32> to vector<23x69xf32>
    %507 = arith.addf %472, %506 : vector<23x69xf32>
    %cst_266 = arith.constant dense<0.000000e+00> : vector<66x69xf32>
    %508 = tpu.matmul %505, %507, %cst_266 {dimension_numbers = #tpu.dot_dimension_numbers<[1], [0], [0], [1], [0, 0, 1, 1], [], []>} : vector<66x23xf32>, vector<23x69xf32>, vector<66x69xf32> -> vector<66x69xf32>
    %509 = arith.addf %503, %508 : vector<66x69xf32>
    %cst_267 = arith.constant dense<0.000000e+00> : vector<66x128xf32>
    %510 = tpu.matmul %509, %1, %cst_267 {dimension_numbers = #tpu.dot_dimension_numbers<[1], [0], [0], [1], [0, 0, 1, 1], [], []>} : vector<66x69xf32>, vector<69x128xf32>, vector<66x128xf32> -> vector<66x128xf32>
    %c0_268 = arith.constant 0 : index
    %c0_269 = arith.constant 0 : index
    %c0_270 = arith.constant 0 : index
    %c0_271 = arith.constant 0 : index
    %511 = vector.load %arg9[%c0_268, %c0_269, %c0_270, %c0_271] : memref<2x1x66x128xf32, #tpu.memory_space<vmem>>, vector<1x1x66x128xf32>
    %512 = vector.shape_cast %511 : vector<1x1x66x128xf32> to vector<66x128xf32>
    %513 = vector.shape_cast %510 : vector<66x128xf32> to vector<1x1x66x128xf32>
    tpu.vector_store %arg9[%c0_268, %c0_269, %c0_270, %c0_271], %513 {strides = array<i32>} : memref<2x1x66x128xf32, #tpu.memory_space<vmem>>, vector<1x1x66x128xf32>,
    %c1_272 = arith.constant 1 : index
    %c0_273 = arith.constant 0 : index
    %c0_274 = arith.constant 0 : index
    %c0_275 = arith.constant 0 : index
    %514 = vector.load %arg0[%c1_272, %c0_273, %c0_274, %c0_275] : memref<2x6x8x8xf32, #tpu.memory_space<vmem>>, vector<1x6x8x8xf32>
    %515 = vector.shape_cast %514 : vector<1x6x8x8xf32> to vector<6x8x8xf32>
    %c0_276 = arith.constant 0 : index
    %c1_277 = arith.constant 1 : index
    %c1_278 = arith.constant 1 : index
    %516 = vector.load %arg10[%c0_276, %c1_277, %c1_278] : memref<6x10x10xf32, #tpu.memory_space<vmem>>, vector<6x8x8xf32>
    tpu.vector_store %arg10[%c0_276, %c1_277, %c1_278], %515 {strides = array<i32>} : memref<6x10x10xf32, #tpu.memory_space<vmem>>, vector<6x8x8xf32>,
    %cst_279 = arith.constant 0.000000e+00 : f32
    %517 = vector.broadcast %cst_279 : f32 to vector<9x81xf32>
    %cst_280 = arith.constant 0.000000e+00 : f32
    %518 = vector.broadcast %cst_280 : f32 to vector<9x81xf32>
    %cst_281 = arith.constant 0.000000e+00 : f32
    %519 = vector.broadcast %cst_281 : f32 to vector<9x81xf32>
    %c0_282 = arith.constant 0 : index
    %c1_283 = arith.constant 1 : index
    %c1_284 = arith.constant 1 : index
    %520 = vector.load %arg10[%c0_282, %c1_283, %c1_284] : memref<6x10x10xf32, #tpu.memory_space<vmem>>, vector<1x9x9xf32>
    %521 = vector.shape_cast %520 : vector<1x9x9xf32> to vector<9x9xf32>
    %522 = tpu.concatenate %521, %521, %521, %521, %521, %521, %521, %521, %521 in 1 : vector<9x9xf32>, vector<9x9xf32>, vector<9x9xf32>, vector<9x9xf32>, vector<9x9xf32>, vector<9x9xf32>, vector<9x9xf32>, vector<9x9xf32>, vector<9x9xf32> -> vector<9x81xf32>
    %c0_285 = arith.constant 0 : index
    %c0_286 = arith.constant 0 : index
    %523 = vector.load %arg1[%c0_285, %c0_286] : memref<72x81xf32, #tpu.memory_space<vmem>>, vector<1x81xf32>
    %524 = vector.broadcast %523 : vector<1x81xf32> to vector<9x81xf32>
    %525 = arith.mulf %522, %524 : vector<9x81xf32>
    %526 = arith.addf %517, %525 : vector<9x81xf32>
    %c1_287 = arith.constant 1 : index
    %c0_288 = arith.constant 0 : index
    %527 = vector.load %arg1[%c1_287, %c0_288] : memref<72x81xf32, #tpu.memory_space<vmem>>, vector<1x81xf32>
    %528 = vector.broadcast %527 : vector<1x81xf32> to vector<9x81xf32>
    %529 = arith.mulf %522, %528 : vector<9x81xf32>
    %530 = arith.addf %518, %529 : vector<9x81xf32>
    %c2_289 = arith.constant 2 : index
    %c0_290 = arith.constant 0 : index
    %531 = vector.load %arg1[%c2_289, %c0_290] : memref<72x81xf32, #tpu.memory_space<vmem>>, vector<1x81xf32>
    %532 = vector.broadcast %531 : vector<1x81xf32> to vector<9x81xf32>
    %533 = arith.mulf %522, %532 : vector<9x81xf32>
    %534 = arith.addf %519, %533 : vector<9x81xf32>
    %c0_291 = arith.constant 0 : index
    %c1_292 = arith.constant 1 : index
    %c0_293 = arith.constant 0 : index
    %535 = vector.load %arg10[%c0_291, %c1_292, %c0_293] : memref<6x10x10xf32, #tpu.memory_space<vmem>>, vector<1x9x9xf32>
    %536 = vector.shape_cast %535 : vector<1x9x9xf32> to vector<9x9xf32>
    %537 = tpu.concatenate %536, %536, %536, %536, %536, %536, %536, %536, %536 in 1 : vector<9x9xf32>, vector<9x9xf32>, vector<9x9xf32>, vector<9x9xf32>, vector<9x9xf32>, vector<9x9xf32>, vector<9x9xf32>, vector<9x9xf32>, vector<9x9xf32> -> vector<9x81xf32>
    %c3_294 = arith.constant 3 : index
    %c0_295 = arith.constant 0 : index
    %538 = vector.load %arg1[%c3_294, %c0_295] : memref<72x81xf32, #tpu.memory_space<vmem>>, vector<1x81xf32>
    %539 = vector.broadcast %538 : vector<1x81xf32> to vector<9x81xf32>
    %540 = arith.mulf %537, %539 : vector<9x81xf32>
    %541 = arith.addf %526, %540 : vector<9x81xf32>
    %c4_296 = arith.constant 4 : index
    %c0_297 = arith.constant 0 : index
    %542 = vector.load %arg1[%c4_296, %c0_297] : memref<72x81xf32, #tpu.memory_space<vmem>>, vector<1x81xf32>
    %543 = vector.broadcast %542 : vector<1x81xf32> to vector<9x81xf32>
    %544 = arith.mulf %537, %543 : vector<9x81xf32>
    %545 = arith.addf %530, %544 : vector<9x81xf32>
    %c5_298 = arith.constant 5 : index
    %c0_299 = arith.constant 0 : index
    %546 = vector.load %arg1[%c5_298, %c0_299] : memref<72x81xf32, #tpu.memory_space<vmem>>, vector<1x81xf32>
    %547 = vector.broadcast %546 : vector<1x81xf32> to vector<9x81xf32>
    %548 = arith.mulf %537, %547 : vector<9x81xf32>
    %549 = arith.addf %534, %548 : vector<9x81xf32>
    %c0_300 = arith.constant 0 : index
    %c0_301 = arith.constant 0 : index
    %c1_302 = arith.constant 1 : index
    %550 = vector.load %arg10[%c0_300, %c0_301, %c1_302] : memref<6x10x10xf32, #tpu.memory_space<vmem>>, vector<1x9x9xf32>
    %551 = vector.shape_cast %550 : vector<1x9x9xf32> to vector<9x9xf32>
    %552 = tpu.concatenate %551, %551, %551, %551, %551, %551, %551, %551, %551 in 1 : vector<9x9xf32>, vector<9x9xf32>, vector<9x9xf32>, vector<9x9xf32>, vector<9x9xf32>, vector<9x9xf32>, vector<9x9xf32>, vector<9x9xf32>, vector<9x9xf32> -> vector<9x81xf32>
    %c6_303 = arith.constant 6 : index
    %c0_304 = arith.constant 0 : index
    %553 = vector.load %arg1[%c6_303, %c0_304] : memref<72x81xf32, #tpu.memory_space<vmem>>, vector<1x81xf32>
    %554 = vector.broadcast %553 : vector<1x81xf32> to vector<9x81xf32>
    %555 = arith.mulf %552, %554 : vector<9x81xf32>
    %556 = arith.addf %541, %555 : vector<9x81xf32>
    %c7_305 = arith.constant 7 : index
    %c0_306 = arith.constant 0 : index
    %557 = vector.load %arg1[%c7_305, %c0_306] : memref<72x81xf32, #tpu.memory_space<vmem>>, vector<1x81xf32>
    %558 = vector.broadcast %557 : vector<1x81xf32> to vector<9x81xf32>
    %559 = arith.mulf %552, %558 : vector<9x81xf32>
    %560 = arith.addf %545, %559 : vector<9x81xf32>
    %c0_307 = arith.constant 0 : index
    %c0_308 = arith.constant 0 : index
    %c0_309 = arith.constant 0 : index
    %561 = vector.load %arg10[%c0_307, %c0_308, %c0_309] : memref<6x10x10xf32, #tpu.memory_space<vmem>>, vector<1x9x9xf32>
    %562 = vector.shape_cast %561 : vector<1x9x9xf32> to vector<9x9xf32>
    %563 = tpu.concatenate %562, %562, %562, %562, %562, %562, %562, %562, %562 in 1 : vector<9x9xf32>, vector<9x9xf32>, vector<9x9xf32>, vector<9x9xf32>, vector<9x9xf32>, vector<9x9xf32>, vector<9x9xf32>, vector<9x9xf32>, vector<9x9xf32> -> vector<9x81xf32>
    %c9_310 = arith.constant 9 : index
    %c0_311 = arith.constant 0 : index
    %564 = vector.load %arg1[%c9_310, %c0_311] : memref<72x81xf32, #tpu.memory_space<vmem>>, vector<1x81xf32>
    %565 = vector.broadcast %564 : vector<1x81xf32> to vector<9x81xf32>
    %566 = arith.mulf %563, %565 : vector<9x81xf32>
    %567 = arith.addf %556, %566 : vector<9x81xf32>
    %c10_312 = arith.constant 10 : index
    %c0_313 = arith.constant 0 : index
    %568 = vector.load %arg1[%c10_312, %c0_313] : memref<72x81xf32, #tpu.memory_space<vmem>>, vector<1x81xf32>
    %569 = vector.broadcast %568 : vector<1x81xf32> to vector<9x81xf32>
    %570 = arith.mulf %563, %569 : vector<9x81xf32>
    %571 = arith.addf %560, %570 : vector<9x81xf32>
    %c1_314 = arith.constant 1 : index
    %c1_315 = arith.constant 1 : index
    %c1_316 = arith.constant 1 : index
    %572 = vector.load %arg10[%c1_314, %c1_315, %c1_316] : memref<6x10x10xf32, #tpu.memory_space<vmem>>, vector<1x9x9xf32>
    %573 = vector.shape_cast %572 : vector<1x9x9xf32> to vector<9x9xf32>
    %574 = tpu.concatenate %573, %573, %573, %573, %573, %573, %573, %573, %573 in 1 : vector<9x9xf32>, vector<9x9xf32>, vector<9x9xf32>, vector<9x9xf32>, vector<9x9xf32>, vector<9x9xf32>, vector<9x9xf32>, vector<9x9xf32>, vector<9x9xf32> -> vector<9x81xf32>
    %c12_317 = arith.constant 12 : index
    %c0_318 = arith.constant 0 : index
    %575 = vector.load %arg1[%c12_317, %c0_318] : memref<72x81xf32, #tpu.memory_space<vmem>>, vector<1x81xf32>
    %576 = vector.broadcast %575 : vector<1x81xf32> to vector<9x81xf32>
    %577 = arith.mulf %574, %576 : vector<9x81xf32>
    %578 = arith.addf %567, %577 : vector<9x81xf32>
    %c13_319 = arith.constant 13 : index
    %c0_320 = arith.constant 0 : index
    %579 = vector.load %arg1[%c13_319, %c0_320] : memref<72x81xf32, #tpu.memory_space<vmem>>, vector<1x81xf32>
    %580 = vector.broadcast %579 : vector<1x81xf32> to vector<9x81xf32>
    %581 = arith.mulf %574, %580 : vector<9x81xf32>
    %582 = arith.addf %571, %581 : vector<9x81xf32>
    %c14_321 = arith.constant 14 : index
    %c0_322 = arith.constant 0 : index
    %583 = vector.load %arg1[%c14_321, %c0_322] : memref<72x81xf32, #tpu.memory_space<vmem>>, vector<1x81xf32>
    %584 = vector.broadcast %583 : vector<1x81xf32> to vector<9x81xf32>
    %585 = arith.mulf %574, %584 : vector<9x81xf32>
    %586 = arith.addf %549, %585 : vector<9x81xf32>
    %c1_323 = arith.constant 1 : index
    %c1_324 = arith.constant 1 : index
    %c0_325 = arith.constant 0 : index
    %587 = vector.load %arg10[%c1_323, %c1_324, %c0_325] : memref<6x10x10xf32, #tpu.memory_space<vmem>>, vector<1x9x9xf32>
    %588 = vector.shape_cast %587 : vector<1x9x9xf32> to vector<9x9xf32>
    %589 = tpu.concatenate %588, %588, %588, %588, %588, %588, %588, %588, %588 in 1 : vector<9x9xf32>, vector<9x9xf32>, vector<9x9xf32>, vector<9x9xf32>, vector<9x9xf32>, vector<9x9xf32>, vector<9x9xf32>, vector<9x9xf32>, vector<9x9xf32> -> vector<9x81xf32>
    %c15_326 = arith.constant 15 : index
    %c0_327 = arith.constant 0 : index
    %590 = vector.load %arg1[%c15_326, %c0_327] : memref<72x81xf32, #tpu.memory_space<vmem>>, vector<1x81xf32>
    %591 = vector.broadcast %590 : vector<1x81xf32> to vector<9x81xf32>
    %592 = arith.mulf %589, %591 : vector<9x81xf32>
    %593 = arith.addf %578, %592 : vector<9x81xf32>
    %c16_328 = arith.constant 16 : index
    %c0_329 = arith.constant 0 : index
    %594 = vector.load %arg1[%c16_328, %c0_329] : memref<72x81xf32, #tpu.memory_space<vmem>>, vector<1x81xf32>
    %595 = vector.broadcast %594 : vector<1x81xf32> to vector<9x81xf32>
    %596 = arith.mulf %589, %595 : vector<9x81xf32>
    %597 = arith.addf %582, %596 : vector<9x81xf32>
    %c17_330 = arith.constant 17 : index
    %c0_331 = arith.constant 0 : index
    %598 = vector.load %arg1[%c17_330, %c0_331] : memref<72x81xf32, #tpu.memory_space<vmem>>, vector<1x81xf32>
    %599 = vector.broadcast %598 : vector<1x81xf32> to vector<9x81xf32>
    %600 = arith.mulf %589, %599 : vector<9x81xf32>
    %601 = arith.addf %586, %600 : vector<9x81xf32>
    %c1_332 = arith.constant 1 : index
    %c0_333 = arith.constant 0 : index
    %c1_334 = arith.constant 1 : index
    %602 = vector.load %arg10[%c1_332, %c0_333, %c1_334] : memref<6x10x10xf32, #tpu.memory_space<vmem>>, vector<1x9x9xf32>
    %603 = vector.shape_cast %602 : vector<1x9x9xf32> to vector<9x9xf32>
    %604 = tpu.concatenate %603, %603, %603, %603, %603, %603, %603, %603, %603 in 1 : vector<9x9xf32>, vector<9x9xf32>, vector<9x9xf32>, vector<9x9xf32>, vector<9x9xf32>, vector<9x9xf32>, vector<9x9xf32>, vector<9x9xf32>, vector<9x9xf32> -> vector<9x81xf32>
    %c18_335 = arith.constant 18 : index
    %c0_336 = arith.constant 0 : index
    %605 = vector.load %arg1[%c18_335, %c0_336] : memref<72x81xf32, #tpu.memory_space<vmem>>, vector<1x81xf32>
    %606 = vector.broadcast %605 : vector<1x81xf32> to vector<9x81xf32>
    %607 = arith.mulf %604, %606 : vector<9x81xf32>
    %608 = arith.addf %593, %607 : vector<9x81xf32>
    %c19_337 = arith.constant 19 : index
    %c0_338 = arith.constant 0 : index
    %609 = vector.load %arg1[%c19_337, %c0_338] : memref<72x81xf32, #tpu.memory_space<vmem>>, vector<1x81xf32>
    %610 = vector.broadcast %609 : vector<1x81xf32> to vector<9x81xf32>
    %611 = arith.mulf %604, %610 : vector<9x81xf32>
    %612 = arith.addf %597, %611 : vector<9x81xf32>
    %c1_339 = arith.constant 1 : index
    %c0_340 = arith.constant 0 : index
    %c0_341 = arith.constant 0 : index
    %613 = vector.load %arg10[%c1_339, %c0_340, %c0_341] : memref<6x10x10xf32, #tpu.memory_space<vmem>>, vector<1x9x9xf32>
    %614 = vector.shape_cast %613 : vector<1x9x9xf32> to vector<9x9xf32>
    %615 = tpu.concatenate %614, %614, %614, %614, %614, %614, %614, %614, %614 in 1 : vector<9x9xf32>, vector<9x9xf32>, vector<9x9xf32>, vector<9x9xf32>, vector<9x9xf32>, vector<9x9xf32>, vector<9x9xf32>, vector<9x9xf32>, vector<9x9xf32> -> vector<9x81xf32>
    %c21_342 = arith.constant 21 : index
    %c0_343 = arith.constant 0 : index
    %616 = vector.load %arg1[%c21_342, %c0_343] : memref<72x81xf32, #tpu.memory_space<vmem>>, vector<1x81xf32>
    %617 = vector.broadcast %616 : vector<1x81xf32> to vector<9x81xf32>
    %618 = arith.mulf %615, %617 : vector<9x81xf32>
    %619 = arith.addf %608, %618 : vector<9x81xf32>
    %c22_344 = arith.constant 22 : index
    %c0_345 = arith.constant 0 : index
    %620 = vector.load %arg1[%c22_344, %c0_345] : memref<72x81xf32, #tpu.memory_space<vmem>>, vector<1x81xf32>
    %621 = vector.broadcast %620 : vector<1x81xf32> to vector<9x81xf32>
    %622 = arith.mulf %615, %621 : vector<9x81xf32>
    %623 = arith.addf %612, %622 : vector<9x81xf32>
    %c2_346 = arith.constant 2 : index
    %c1_347 = arith.constant 1 : index
    %c1_348 = arith.constant 1 : index
    %624 = vector.load %arg10[%c2_346, %c1_347, %c1_348] : memref<6x10x10xf32, #tpu.memory_space<vmem>>, vector<1x9x9xf32>
    %625 = vector.shape_cast %624 : vector<1x9x9xf32> to vector<9x9xf32>
    %626 = tpu.concatenate %625, %625, %625, %625, %625, %625, %625, %625, %625 in 1 : vector<9x9xf32>, vector<9x9xf32>, vector<9x9xf32>, vector<9x9xf32>, vector<9x9xf32>, vector<9x9xf32>, vector<9x9xf32>, vector<9x9xf32>, vector<9x9xf32> -> vector<9x81xf32>
    %c24_349 = arith.constant 24 : index
    %c0_350 = arith.constant 0 : index
    %627 = vector.load %arg1[%c24_349, %c0_350] : memref<72x81xf32, #tpu.memory_space<vmem>>, vector<1x81xf32>
    %628 = vector.broadcast %627 : vector<1x81xf32> to vector<9x81xf32>
    %629 = arith.mulf %626, %628 : vector<9x81xf32>
    %630 = arith.addf %619, %629 : vector<9x81xf32>
    %c25_351 = arith.constant 25 : index
    %c0_352 = arith.constant 0 : index
    %631 = vector.load %arg1[%c25_351, %c0_352] : memref<72x81xf32, #tpu.memory_space<vmem>>, vector<1x81xf32>
    %632 = vector.broadcast %631 : vector<1x81xf32> to vector<9x81xf32>
    %633 = arith.mulf %626, %632 : vector<9x81xf32>
    %634 = arith.addf %623, %633 : vector<9x81xf32>
    %c26_353 = arith.constant 26 : index
    %c0_354 = arith.constant 0 : index
    %635 = vector.load %arg1[%c26_353, %c0_354] : memref<72x81xf32, #tpu.memory_space<vmem>>, vector<1x81xf32>
    %636 = vector.broadcast %635 : vector<1x81xf32> to vector<9x81xf32>
    %637 = arith.mulf %626, %636 : vector<9x81xf32>
    %638 = arith.addf %601, %637 : vector<9x81xf32>
    %c2_355 = arith.constant 2 : index
    %c1_356 = arith.constant 1 : index
    %c0_357 = arith.constant 0 : index
    %639 = vector.load %arg10[%c2_355, %c1_356, %c0_357] : memref<6x10x10xf32, #tpu.memory_space<vmem>>, vector<1x9x9xf32>
    %640 = vector.shape_cast %639 : vector<1x9x9xf32> to vector<9x9xf32>
    %641 = tpu.concatenate %640, %640, %640, %640, %640, %640, %640, %640, %640 in 1 : vector<9x9xf32>, vector<9x9xf32>, vector<9x9xf32>, vector<9x9xf32>, vector<9x9xf32>, vector<9x9xf32>, vector<9x9xf32>, vector<9x9xf32>, vector<9x9xf32> -> vector<9x81xf32>
    %c27_358 = arith.constant 27 : index
    %c0_359 = arith.constant 0 : index
    %642 = vector.load %arg1[%c27_358, %c0_359] : memref<72x81xf32, #tpu.memory_space<vmem>>, vector<1x81xf32>
    %643 = vector.broadcast %642 : vector<1x81xf32> to vector<9x81xf32>
    %644 = arith.mulf %641, %643 : vector<9x81xf32>
    %645 = arith.addf %630, %644 : vector<9x81xf32>
    %c28_360 = arith.constant 28 : index
    %c0_361 = arith.constant 0 : index
    %646 = vector.load %arg1[%c28_360, %c0_361] : memref<72x81xf32, #tpu.memory_space<vmem>>, vector<1x81xf32>
    %647 = vector.broadcast %646 : vector<1x81xf32> to vector<9x81xf32>
    %648 = arith.mulf %641, %647 : vector<9x81xf32>
    %649 = arith.addf %634, %648 : vector<9x81xf32>
    %c29_362 = arith.constant 29 : index
    %c0_363 = arith.constant 0 : index
    %650 = vector.load %arg1[%c29_362, %c0_363] : memref<72x81xf32, #tpu.memory_space<vmem>>, vector<1x81xf32>
    %651 = vector.broadcast %650 : vector<1x81xf32> to vector<9x81xf32>
    %652 = arith.mulf %641, %651 : vector<9x81xf32>
    %653 = arith.addf %638, %652 : vector<9x81xf32>
    %c2_364 = arith.constant 2 : index
    %c0_365 = arith.constant 0 : index
    %c1_366 = arith.constant 1 : index
    %654 = vector.load %arg10[%c2_364, %c0_365, %c1_366] : memref<6x10x10xf32, #tpu.memory_space<vmem>>, vector<1x9x9xf32>
    %655 = vector.shape_cast %654 : vector<1x9x9xf32> to vector<9x9xf32>
    %656 = tpu.concatenate %655, %655, %655, %655, %655, %655, %655, %655, %655 in 1 : vector<9x9xf32>, vector<9x9xf32>, vector<9x9xf32>, vector<9x9xf32>, vector<9x9xf32>, vector<9x9xf32>, vector<9x9xf32>, vector<9x9xf32>, vector<9x9xf32> -> vector<9x81xf32>
    %c30_367 = arith.constant 30 : index
    %c0_368 = arith.constant 0 : index
    %657 = vector.load %arg1[%c30_367, %c0_368] : memref<72x81xf32, #tpu.memory_space<vmem>>, vector<1x81xf32>
    %658 = vector.broadcast %657 : vector<1x81xf32> to vector<9x81xf32>
    %659 = arith.mulf %656, %658 : vector<9x81xf32>
    %660 = arith.addf %645, %659 : vector<9x81xf32>
    %c31_369 = arith.constant 31 : index
    %c0_370 = arith.constant 0 : index
    %661 = vector.load %arg1[%c31_369, %c0_370] : memref<72x81xf32, #tpu.memory_space<vmem>>, vector<1x81xf32>
    %662 = vector.broadcast %661 : vector<1x81xf32> to vector<9x81xf32>
    %663 = arith.mulf %656, %662 : vector<9x81xf32>
    %664 = arith.addf %649, %663 : vector<9x81xf32>
    %c2_371 = arith.constant 2 : index
    %c0_372 = arith.constant 0 : index
    %c0_373 = arith.constant 0 : index
    %665 = vector.load %arg10[%c2_371, %c0_372, %c0_373] : memref<6x10x10xf32, #tpu.memory_space<vmem>>, vector<1x9x9xf32>
    %666 = vector.shape_cast %665 : vector<1x9x9xf32> to vector<9x9xf32>
    %667 = tpu.concatenate %666, %666, %666, %666, %666, %666, %666, %666, %666 in 1 : vector<9x9xf32>, vector<9x9xf32>, vector<9x9xf32>, vector<9x9xf32>, vector<9x9xf32>, vector<9x9xf32>, vector<9x9xf32>, vector<9x9xf32>, vector<9x9xf32> -> vector<9x81xf32>
    %c33_374 = arith.constant 33 : index
    %c0_375 = arith.constant 0 : index
    %668 = vector.load %arg1[%c33_374, %c0_375] : memref<72x81xf32, #tpu.memory_space<vmem>>, vector<1x81xf32>
    %669 = vector.broadcast %668 : vector<1x81xf32> to vector<9x81xf32>
    %670 = arith.mulf %667, %669 : vector<9x81xf32>
    %671 = arith.addf %660, %670 : vector<9x81xf32>
    %c34_376 = arith.constant 34 : index
    %c0_377 = arith.constant 0 : index
    %672 = vector.load %arg1[%c34_376, %c0_377] : memref<72x81xf32, #tpu.memory_space<vmem>>, vector<1x81xf32>
    %673 = vector.broadcast %672 : vector<1x81xf32> to vector<9x81xf32>
    %674 = arith.mulf %667, %673 : vector<9x81xf32>
    %675 = arith.addf %664, %674 : vector<9x81xf32>
    %c3_378 = arith.constant 3 : index
    %c1_379 = arith.constant 1 : index
    %c1_380 = arith.constant 1 : index
    %676 = vector.load %arg10[%c3_378, %c1_379, %c1_380] : memref<6x10x10xf32, #tpu.memory_space<vmem>>, vector<1x9x9xf32>
    %677 = vector.shape_cast %676 : vector<1x9x9xf32> to vector<9x9xf32>
    %678 = tpu.concatenate %677, %677, %677, %677, %677, %677, %677, %677, %677 in 1 : vector<9x9xf32>, vector<9x9xf32>, vector<9x9xf32>, vector<9x9xf32>, vector<9x9xf32>, vector<9x9xf32>, vector<9x9xf32>, vector<9x9xf32>, vector<9x9xf32> -> vector<9x81xf32>
    %c36_381 = arith.constant 36 : index
    %c0_382 = arith.constant 0 : index
    %679 = vector.load %arg1[%c36_381, %c0_382] : memref<72x81xf32, #tpu.memory_space<vmem>>, vector<1x81xf32>
    %680 = vector.broadcast %679 : vector<1x81xf32> to vector<9x81xf32>
    %681 = arith.mulf %678, %680 : vector<9x81xf32>
    %682 = arith.addf %671, %681 : vector<9x81xf32>
    %c37_383 = arith.constant 37 : index
    %c0_384 = arith.constant 0 : index
    %683 = vector.load %arg1[%c37_383, %c0_384] : memref<72x81xf32, #tpu.memory_space<vmem>>, vector<1x81xf32>
    %684 = vector.broadcast %683 : vector<1x81xf32> to vector<9x81xf32>
    %685 = arith.mulf %678, %684 : vector<9x81xf32>
    %686 = arith.addf %675, %685 : vector<9x81xf32>
    %c38_385 = arith.constant 38 : index
    %c0_386 = arith.constant 0 : index
    %687 = vector.load %arg1[%c38_385, %c0_386] : memref<72x81xf32, #tpu.memory_space<vmem>>, vector<1x81xf32>
    %688 = vector.broadcast %687 : vector<1x81xf32> to vector<9x81xf32>
    %689 = arith.mulf %678, %688 : vector<9x81xf32>
    %690 = arith.addf %653, %689 : vector<9x81xf32>
    %c3_387 = arith.constant 3 : index
    %c1_388 = arith.constant 1 : index
    %c0_389 = arith.constant 0 : index
    %691 = vector.load %arg10[%c3_387, %c1_388, %c0_389] : memref<6x10x10xf32, #tpu.memory_space<vmem>>, vector<1x9x9xf32>
    %692 = vector.shape_cast %691 : vector<1x9x9xf32> to vector<9x9xf32>
    %693 = tpu.concatenate %692, %692, %692, %692, %692, %692, %692, %692, %692 in 1 : vector<9x9xf32>, vector<9x9xf32>, vector<9x9xf32>, vector<9x9xf32>, vector<9x9xf32>, vector<9x9xf32>, vector<9x9xf32>, vector<9x9xf32>, vector<9x9xf32> -> vector<9x81xf32>
    %c39_390 = arith.constant 39 : index
    %c0_391 = arith.constant 0 : index
    %694 = vector.load %arg1[%c39_390, %c0_391] : memref<72x81xf32, #tpu.memory_space<vmem>>, vector<1x81xf32>
    %695 = vector.broadcast %694 : vector<1x81xf32> to vector<9x81xf32>
    %696 = arith.mulf %693, %695 : vector<9x81xf32>
    %697 = arith.addf %682, %696 : vector<9x81xf32>
    %c40_392 = arith.constant 40 : index
    %c0_393 = arith.constant 0 : index
    %698 = vector.load %arg1[%c40_392, %c0_393] : memref<72x81xf32, #tpu.memory_space<vmem>>, vector<1x81xf32>
    %699 = vector.broadcast %698 : vector<1x81xf32> to vector<9x81xf32>
    %700 = arith.mulf %693, %699 : vector<9x81xf32>
    %701 = arith.addf %686, %700 : vector<9x81xf32>
    %c41_394 = arith.constant 41 : index
    %c0_395 = arith.constant 0 : index
    %702 = vector.load %arg1[%c41_394, %c0_395] : memref<72x81xf32, #tpu.memory_space<vmem>>, vector<1x81xf32>
    %703 = vector.broadcast %702 : vector<1x81xf32> to vector<9x81xf32>
    %704 = arith.mulf %693, %703 : vector<9x81xf32>
    %705 = arith.addf %690, %704 : vector<9x81xf32>
    %c3_396 = arith.constant 3 : index
    %c0_397 = arith.constant 0 : index
    %c1_398 = arith.constant 1 : index
    %706 = vector.load %arg10[%c3_396, %c0_397, %c1_398] : memref<6x10x10xf32, #tpu.memory_space<vmem>>, vector<1x9x9xf32>
    %707 = vector.shape_cast %706 : vector<1x9x9xf32> to vector<9x9xf32>
    %708 = tpu.concatenate %707, %707, %707, %707, %707, %707, %707, %707, %707 in 1 : vector<9x9xf32>, vector<9x9xf32>, vector<9x9xf32>, vector<9x9xf32>, vector<9x9xf32>, vector<9x9xf32>, vector<9x9xf32>, vector<9x9xf32>, vector<9x9xf32> -> vector<9x81xf32>
    %c42_399 = arith.constant 42 : index
    %c0_400 = arith.constant 0 : index
    %709 = vector.load %arg1[%c42_399, %c0_400] : memref<72x81xf32, #tpu.memory_space<vmem>>, vector<1x81xf32>
    %710 = vector.broadcast %709 : vector<1x81xf32> to vector<9x81xf32>
    %711 = arith.mulf %708, %710 : vector<9x81xf32>
    %712 = arith.addf %697, %711 : vector<9x81xf32>
    %c43_401 = arith.constant 43 : index
    %c0_402 = arith.constant 0 : index
    %713 = vector.load %arg1[%c43_401, %c0_402] : memref<72x81xf32, #tpu.memory_space<vmem>>, vector<1x81xf32>
    %714 = vector.broadcast %713 : vector<1x81xf32> to vector<9x81xf32>
    %715 = arith.mulf %708, %714 : vector<9x81xf32>
    %716 = arith.addf %701, %715 : vector<9x81xf32>
    %c3_403 = arith.constant 3 : index
    %c0_404 = arith.constant 0 : index
    %c0_405 = arith.constant 0 : index
    %717 = vector.load %arg10[%c3_403, %c0_404, %c0_405] : memref<6x10x10xf32, #tpu.memory_space<vmem>>, vector<1x9x9xf32>
    %718 = vector.shape_cast %717 : vector<1x9x9xf32> to vector<9x9xf32>
    %719 = tpu.concatenate %718, %718, %718, %718, %718, %718, %718, %718, %718 in 1 : vector<9x9xf32>, vector<9x9xf32>, vector<9x9xf32>, vector<9x9xf32>, vector<9x9xf32>, vector<9x9xf32>, vector<9x9xf32>, vector<9x9xf32>, vector<9x9xf32> -> vector<9x81xf32>
    %c45_406 = arith.constant 45 : index
    %c0_407 = arith.constant 0 : index
    %720 = vector.load %arg1[%c45_406, %c0_407] : memref<72x81xf32, #tpu.memory_space<vmem>>, vector<1x81xf32>
    %721 = vector.broadcast %720 : vector<1x81xf32> to vector<9x81xf32>
    %722 = arith.mulf %719, %721 : vector<9x81xf32>
    %723 = arith.addf %712, %722 : vector<9x81xf32>
    %c46_408 = arith.constant 46 : index
    %c0_409 = arith.constant 0 : index
    %724 = vector.load %arg1[%c46_408, %c0_409] : memref<72x81xf32, #tpu.memory_space<vmem>>, vector<1x81xf32>
    %725 = vector.broadcast %724 : vector<1x81xf32> to vector<9x81xf32>
    %726 = arith.mulf %719, %725 : vector<9x81xf32>
    %727 = arith.addf %716, %726 : vector<9x81xf32>
    %c4_410 = arith.constant 4 : index
    %c1_411 = arith.constant 1 : index
    %c1_412 = arith.constant 1 : index
    %728 = vector.load %arg10[%c4_410, %c1_411, %c1_412] : memref<6x10x10xf32, #tpu.memory_space<vmem>>, vector<1x9x9xf32>
    %729 = vector.shape_cast %728 : vector<1x9x9xf32> to vector<9x9xf32>
    %730 = tpu.concatenate %729, %729, %729, %729, %729, %729, %729, %729, %729 in 1 : vector<9x9xf32>, vector<9x9xf32>, vector<9x9xf32>, vector<9x9xf32>, vector<9x9xf32>, vector<9x9xf32>, vector<9x9xf32>, vector<9x9xf32>, vector<9x9xf32> -> vector<9x81xf32>
    %c48_413 = arith.constant 48 : index
    %c0_414 = arith.constant 0 : index
    %731 = vector.load %arg1[%c48_413, %c0_414] : memref<72x81xf32, #tpu.memory_space<vmem>>, vector<1x81xf32>
    %732 = vector.broadcast %731 : vector<1x81xf32> to vector<9x81xf32>
    %733 = arith.mulf %730, %732 : vector<9x81xf32>
    %734 = arith.addf %723, %733 : vector<9x81xf32>
    %c49_415 = arith.constant 49 : index
    %c0_416 = arith.constant 0 : index
    %735 = vector.load %arg1[%c49_415, %c0_416] : memref<72x81xf32, #tpu.memory_space<vmem>>, vector<1x81xf32>
    %736 = vector.broadcast %735 : vector<1x81xf32> to vector<9x81xf32>
    %737 = arith.mulf %730, %736 : vector<9x81xf32>
    %738 = arith.addf %727, %737 : vector<9x81xf32>
    %c50_417 = arith.constant 50 : index
    %c0_418 = arith.constant 0 : index
    %739 = vector.load %arg1[%c50_417, %c0_418] : memref<72x81xf32, #tpu.memory_space<vmem>>, vector<1x81xf32>
    %740 = vector.broadcast %739 : vector<1x81xf32> to vector<9x81xf32>
    %741 = arith.mulf %730, %740 : vector<9x81xf32>
    %742 = arith.addf %705, %741 : vector<9x81xf32>
    %c4_419 = arith.constant 4 : index
    %c1_420 = arith.constant 1 : index
    %c0_421 = arith.constant 0 : index
    %743 = vector.load %arg10[%c4_419, %c1_420, %c0_421] : memref<6x10x10xf32, #tpu.memory_space<vmem>>, vector<1x9x9xf32>
    %744 = vector.shape_cast %743 : vector<1x9x9xf32> to vector<9x9xf32>
    %745 = tpu.concatenate %744, %744, %744, %744, %744, %744, %744, %744, %744 in 1 : vector<9x9xf32>, vector<9x9xf32>, vector<9x9xf32>, vector<9x9xf32>, vector<9x9xf32>, vector<9x9xf32>, vector<9x9xf32>, vector<9x9xf32>, vector<9x9xf32> -> vector<9x81xf32>
    %c51_422 = arith.constant 51 : index
    %c0_423 = arith.constant 0 : index
    %746 = vector.load %arg1[%c51_422, %c0_423] : memref<72x81xf32, #tpu.memory_space<vmem>>, vector<1x81xf32>
    %747 = vector.broadcast %746 : vector<1x81xf32> to vector<9x81xf32>
    %748 = arith.mulf %745, %747 : vector<9x81xf32>
    %749 = arith.addf %734, %748 : vector<9x81xf32>
    %c52_424 = arith.constant 52 : index
    %c0_425 = arith.constant 0 : index
    %750 = vector.load %arg1[%c52_424, %c0_425] : memref<72x81xf32, #tpu.memory_space<vmem>>, vector<1x81xf32>
    %751 = vector.broadcast %750 : vector<1x81xf32> to vector<9x81xf32>
    %752 = arith.mulf %745, %751 : vector<9x81xf32>
    %753 = arith.addf %738, %752 : vector<9x81xf32>
    %c53_426 = arith.constant 53 : index
    %c0_427 = arith.constant 0 : index
    %754 = vector.load %arg1[%c53_426, %c0_427] : memref<72x81xf32, #tpu.memory_space<vmem>>, vector<1x81xf32>
    %755 = vector.broadcast %754 : vector<1x81xf32> to vector<9x81xf32>
    %756 = arith.mulf %745, %755 : vector<9x81xf32>
    %757 = arith.addf %742, %756 : vector<9x81xf32>
    %c4_428 = arith.constant 4 : index
    %c0_429 = arith.constant 0 : index
    %c1_430 = arith.constant 1 : index
    %758 = vector.load %arg10[%c4_428, %c0_429, %c1_430] : memref<6x10x10xf32, #tpu.memory_space<vmem>>, vector<1x9x9xf32>
    %759 = vector.shape_cast %758 : vector<1x9x9xf32> to vector<9x9xf32>
    %760 = tpu.concatenate %759, %759, %759, %759, %759, %759, %759, %759, %759 in 1 : vector<9x9xf32>, vector<9x9xf32>, vector<9x9xf32>, vector<9x9xf32>, vector<9x9xf32>, vector<9x9xf32>, vector<9x9xf32>, vector<9x9xf32>, vector<9x9xf32> -> vector<9x81xf32>
    %c54_431 = arith.constant 54 : index
    %c0_432 = arith.constant 0 : index
    %761 = vector.load %arg1[%c54_431, %c0_432] : memref<72x81xf32, #tpu.memory_space<vmem>>, vector<1x81xf32>
    %762 = vector.broadcast %761 : vector<1x81xf32> to vector<9x81xf32>
    %763 = arith.mulf %760, %762 : vector<9x81xf32>
    %764 = arith.addf %749, %763 : vector<9x81xf32>
    %c55_433 = arith.constant 55 : index
    %c0_434 = arith.constant 0 : index
    %765 = vector.load %arg1[%c55_433, %c0_434] : memref<72x81xf32, #tpu.memory_space<vmem>>, vector<1x81xf32>
    %766 = vector.broadcast %765 : vector<1x81xf32> to vector<9x81xf32>
    %767 = arith.mulf %760, %766 : vector<9x81xf32>
    %768 = arith.addf %753, %767 : vector<9x81xf32>
    %c4_435 = arith.constant 4 : index
    %c0_436 = arith.constant 0 : index
    %c0_437 = arith.constant 0 : index
    %769 = vector.load %arg10[%c4_435, %c0_436, %c0_437] : memref<6x10x10xf32, #tpu.memory_space<vmem>>, vector<1x9x9xf32>
    %770 = vector.shape_cast %769 : vector<1x9x9xf32> to vector<9x9xf32>
    %771 = tpu.concatenate %770, %770, %770, %770, %770, %770, %770, %770, %770 in 1 : vector<9x9xf32>, vector<9x9xf32>, vector<9x9xf32>, vector<9x9xf32>, vector<9x9xf32>, vector<9x9xf32>, vector<9x9xf32>, vector<9x9xf32>, vector<9x9xf32> -> vector<9x81xf32>
    %c57_438 = arith.constant 57 : index
    %c0_439 = arith.constant 0 : index
    %772 = vector.load %arg1[%c57_438, %c0_439] : memref<72x81xf32, #tpu.memory_space<vmem>>, vector<1x81xf32>
    %773 = vector.broadcast %772 : vector<1x81xf32> to vector<9x81xf32>
    %774 = arith.mulf %771, %773 : vector<9x81xf32>
    %775 = arith.addf %764, %774 : vector<9x81xf32>
    %c58_440 = arith.constant 58 : index
    %c0_441 = arith.constant 0 : index
    %776 = vector.load %arg1[%c58_440, %c0_441] : memref<72x81xf32, #tpu.memory_space<vmem>>, vector<1x81xf32>
    %777 = vector.broadcast %776 : vector<1x81xf32> to vector<9x81xf32>
    %778 = arith.mulf %771, %777 : vector<9x81xf32>
    %779 = arith.addf %768, %778 : vector<9x81xf32>
    %c5_442 = arith.constant 5 : index
    %c1_443 = arith.constant 1 : index
    %c1_444 = arith.constant 1 : index
    %780 = vector.load %arg10[%c5_442, %c1_443, %c1_444] : memref<6x10x10xf32, #tpu.memory_space<vmem>>, vector<1x9x9xf32>
    %781 = vector.shape_cast %780 : vector<1x9x9xf32> to vector<9x9xf32>
    %782 = tpu.concatenate %781, %781, %781, %781, %781, %781, %781, %781, %781 in 1 : vector<9x9xf32>, vector<9x9xf32>, vector<9x9xf32>, vector<9x9xf32>, vector<9x9xf32>, vector<9x9xf32>, vector<9x9xf32>, vector<9x9xf32>, vector<9x9xf32> -> vector<9x81xf32>
    %c60_445 = arith.constant 60 : index
    %c0_446 = arith.constant 0 : index
    %783 = vector.load %arg1[%c60_445, %c0_446] : memref<72x81xf32, #tpu.memory_space<vmem>>, vector<1x81xf32>
    %784 = vector.broadcast %783 : vector<1x81xf32> to vector<9x81xf32>
    %785 = arith.mulf %782, %784 : vector<9x81xf32>
    %786 = arith.addf %775, %785 : vector<9x81xf32>
    %c61_447 = arith.constant 61 : index
    %c0_448 = arith.constant 0 : index
    %787 = vector.load %arg1[%c61_447, %c0_448] : memref<72x81xf32, #tpu.memory_space<vmem>>, vector<1x81xf32>
    %788 = vector.broadcast %787 : vector<1x81xf32> to vector<9x81xf32>
    %789 = arith.mulf %782, %788 : vector<9x81xf32>
    %790 = arith.addf %779, %789 : vector<9x81xf32>
    %c62_449 = arith.constant 62 : index
    %c0_450 = arith.constant 0 : index
    %791 = vector.load %arg1[%c62_449, %c0_450] : memref<72x81xf32, #tpu.memory_space<vmem>>, vector<1x81xf32>
    %792 = vector.broadcast %791 : vector<1x81xf32> to vector<9x81xf32>
    %793 = arith.mulf %782, %792 : vector<9x81xf32>
    %794 = arith.addf %757, %793 : vector<9x81xf32>
    %c5_451 = arith.constant 5 : index
    %c1_452 = arith.constant 1 : index
    %c0_453 = arith.constant 0 : index
    %795 = vector.load %arg10[%c5_451, %c1_452, %c0_453] : memref<6x10x10xf32, #tpu.memory_space<vmem>>, vector<1x9x9xf32>
    %796 = vector.shape_cast %795 : vector<1x9x9xf32> to vector<9x9xf32>
    %797 = tpu.concatenate %796, %796, %796, %796, %796, %796, %796, %796, %796 in 1 : vector<9x9xf32>, vector<9x9xf32>, vector<9x9xf32>, vector<9x9xf32>, vector<9x9xf32>, vector<9x9xf32>, vector<9x9xf32>, vector<9x9xf32>, vector<9x9xf32> -> vector<9x81xf32>
    %c63_454 = arith.constant 63 : index
    %c0_455 = arith.constant 0 : index
    %798 = vector.load %arg1[%c63_454, %c0_455] : memref<72x81xf32, #tpu.memory_space<vmem>>, vector<1x81xf32>
    %799 = vector.broadcast %798 : vector<1x81xf32> to vector<9x81xf32>
    %800 = arith.mulf %797, %799 : vector<9x81xf32>
    %801 = arith.addf %786, %800 : vector<9x81xf32>
    %c64_456 = arith.constant 64 : index
    %c0_457 = arith.constant 0 : index
    %802 = vector.load %arg1[%c64_456, %c0_457] : memref<72x81xf32, #tpu.memory_space<vmem>>, vector<1x81xf32>
    %803 = vector.broadcast %802 : vector<1x81xf32> to vector<9x81xf32>
    %804 = arith.mulf %797, %803 : vector<9x81xf32>
    %805 = arith.addf %790, %804 : vector<9x81xf32>
    %c65_458 = arith.constant 65 : index
    %c0_459 = arith.constant 0 : index
    %806 = vector.load %arg1[%c65_458, %c0_459] : memref<72x81xf32, #tpu.memory_space<vmem>>, vector<1x81xf32>
    %807 = vector.broadcast %806 : vector<1x81xf32> to vector<9x81xf32>
    %808 = arith.mulf %797, %807 : vector<9x81xf32>
    %809 = arith.addf %794, %808 : vector<9x81xf32>
    %c5_460 = arith.constant 5 : index
    %c0_461 = arith.constant 0 : index
    %c1_462 = arith.constant 1 : index
    %810 = vector.load %arg10[%c5_460, %c0_461, %c1_462] : memref<6x10x10xf32, #tpu.memory_space<vmem>>, vector<1x9x9xf32>
    %811 = vector.shape_cast %810 : vector<1x9x9xf32> to vector<9x9xf32>
    %812 = tpu.concatenate %811, %811, %811, %811, %811, %811, %811, %811, %811 in 1 : vector<9x9xf32>, vector<9x9xf32>, vector<9x9xf32>, vector<9x9xf32>, vector<9x9xf32>, vector<9x9xf32>, vector<9x9xf32>, vector<9x9xf32>, vector<9x9xf32> -> vector<9x81xf32>
    %c66_463 = arith.constant 66 : index
    %c0_464 = arith.constant 0 : index
    %813 = vector.load %arg1[%c66_463, %c0_464] : memref<72x81xf32, #tpu.memory_space<vmem>>, vector<1x81xf32>
    %814 = vector.broadcast %813 : vector<1x81xf32> to vector<9x81xf32>
    %815 = arith.mulf %812, %814 : vector<9x81xf32>
    %816 = arith.addf %801, %815 : vector<9x81xf32>
    %c67_465 = arith.constant 67 : index
    %c0_466 = arith.constant 0 : index
    %817 = vector.load %arg1[%c67_465, %c0_466] : memref<72x81xf32, #tpu.memory_space<vmem>>, vector<1x81xf32>
    %818 = vector.broadcast %817 : vector<1x81xf32> to vector<9x81xf32>
    %819 = arith.mulf %812, %818 : vector<9x81xf32>
    %820 = arith.addf %805, %819 : vector<9x81xf32>
    %c5_467 = arith.constant 5 : index
    %c0_468 = arith.constant 0 : index
    %c0_469 = arith.constant 0 : index
    %821 = vector.load %arg10[%c5_467, %c0_468, %c0_469] : memref<6x10x10xf32, #tpu.memory_space<vmem>>, vector<1x9x9xf32>
    %822 = vector.shape_cast %821 : vector<1x9x9xf32> to vector<9x9xf32>
    %823 = tpu.concatenate %822, %822, %822, %822, %822, %822, %822, %822, %822 in 1 : vector<9x9xf32>, vector<9x9xf32>, vector<9x9xf32>, vector<9x9xf32>, vector<9x9xf32>, vector<9x9xf32>, vector<9x9xf32>, vector<9x9xf32>, vector<9x9xf32> -> vector<9x81xf32>
    %c69_470 = arith.constant 69 : index
    %c0_471 = arith.constant 0 : index
    %824 = vector.load %arg1[%c69_470, %c0_471] : memref<72x81xf32, #tpu.memory_space<vmem>>, vector<1x81xf32>
    %825 = vector.broadcast %824 : vector<1x81xf32> to vector<9x81xf32>
    %826 = arith.mulf %823, %825 : vector<9x81xf32>
    %827 = arith.addf %816, %826 : vector<9x81xf32>
    %c70_472 = arith.constant 70 : index
    %c0_473 = arith.constant 0 : index
    %828 = vector.load %arg1[%c70_472, %c0_473] : memref<72x81xf32, #tpu.memory_space<vmem>>, vector<1x81xf32>
    %829 = vector.broadcast %828 : vector<1x81xf32> to vector<9x81xf32>
    %830 = arith.mulf %823, %829 : vector<9x81xf32>
    %831 = arith.addf %820, %830 : vector<9x81xf32>
    %832 = vector.broadcast %2 : vector<1x81xf32> to vector<9x81xf32>
    %833 = arith.addf %827, %832 : vector<9x81xf32>
    %834 = math.tanh %833 : vector<9x81xf32>
    %c0_474 = arith.constant 0 : index
    %c0_475 = arith.constant 0 : index
    %c0_476 = arith.constant 0 : index
    %835 = vector.load %arg6[%c0_474, %c0_475, %c0_476] : memref<3x24x9xf32, #tpu.memory_space<vmem>>, vector<1x24x9xf32>
    %836 = vector.shape_cast %835 : vector<1x24x9xf32> to vector<24x9xf32>
    %cst_477 = arith.constant dense<0.000000e+00> : vector<24x81xf32>
    %837 = tpu.matmul %836, %834, %cst_477 {dimension_numbers = #tpu.dot_dimension_numbers<[1], [0], [0], [1], [0, 0, 1, 1], [], []>} : vector<24x9xf32>, vector<9x81xf32>, vector<24x81xf32> -> vector<24x81xf32>
    %838 = vector.broadcast %2 : vector<1x81xf32> to vector<9x81xf32>
    %839 = arith.addf %831, %838 : vector<9x81xf32>
    %840 = math.tanh %839 : vector<9x81xf32>
    %c1_478 = arith.constant 1 : index
    %c0_479 = arith.constant 0 : index
    %c0_480 = arith.constant 0 : index
    %841 = vector.load %arg6[%c1_478, %c0_479, %c0_480] : memref<3x24x9xf32, #tpu.memory_space<vmem>>, vector<1x24x9xf32>
    %842 = vector.shape_cast %841 : vector<1x24x9xf32> to vector<24x9xf32>
    %cst_481 = arith.constant dense<0.000000e+00> : vector<24x81xf32>
    %843 = tpu.matmul %842, %840, %cst_481 {dimension_numbers = #tpu.dot_dimension_numbers<[1], [0], [0], [1], [0, 0, 1, 1], [], []>} : vector<24x9xf32>, vector<9x81xf32>, vector<24x81xf32> -> vector<24x81xf32>
    %844 = arith.addf %837, %843 : vector<24x81xf32>
    %845 = vector.broadcast %2 : vector<1x81xf32> to vector<9x81xf32>
    %846 = arith.addf %809, %845 : vector<9x81xf32>
    %847 = math.tanh %846 : vector<9x81xf32>
    %c2_482 = arith.constant 2 : index
    %c0_483 = arith.constant 0 : index
    %c0_484 = arith.constant 0 : index
    %848 = vector.load %arg6[%c2_482, %c0_483, %c0_484] : memref<3x24x9xf32, #tpu.memory_space<vmem>>, vector<1x24x9xf32>
    %849 = vector.shape_cast %848 : vector<1x24x9xf32> to vector<24x9xf32>
    %cst_485 = arith.constant dense<0.000000e+00> : vector<24x81xf32>
    %850 = tpu.matmul %849, %847, %cst_485 {dimension_numbers = #tpu.dot_dimension_numbers<[1], [0], [0], [1], [0, 0, 1, 1], [], []>} : vector<24x9xf32>, vector<9x81xf32>, vector<24x81xf32> -> vector<24x81xf32>
    %851 = arith.addf %844, %850 : vector<24x81xf32>
    %cst_486 = arith.constant dense<0.000000e+00> : vector<24x72xf32>
    %852 = tpu.matmul %851, %0, %cst_486 {dimension_numbers = #tpu.dot_dimension_numbers<[1], [0], [0], [1], [0, 0, 1, 1], [], []>} : vector<24x81xf32>, vector<81x72xf32>, vector<24x72xf32> -> vector<24x72xf32>
    %c0_487 = arith.constant 0 : index
    %c0_488 = arith.constant 0 : index
    %853 = vector.load %arg11[%c0_487, %c0_488] : memref<24x72xf32, #tpu.memory_space<vmem>>, vector<24x72xf32>
    tpu.vector_store %arg11[%c0_487, %c0_488], %852 {strides = array<i32>} : memref<24x72xf32, #tpu.memory_space<vmem>>, vector<24x72xf32>,
    %cst_489 = arith.constant 0.000000e+00 : f32
    %854 = vector.broadcast %cst_489 : f32 to vector<23x69xf32>
    %cst_490 = arith.constant 0.000000e+00 : f32
    %855 = vector.broadcast %cst_490 : f32 to vector<23x69xf32>
    %cst_491 = arith.constant 0.000000e+00 : f32
    %856 = vector.broadcast %cst_491 : f32 to vector<23x69xf32>
    %c1_492 = arith.constant 1 : index
    %c1_493 = arith.constant 1 : index
    %857 = vector.load %arg11[%c1_492, %c1_493] : memref<24x72xf32, #tpu.memory_space<vmem>>, vector<23x23xf32>
    %858 = tpu.concatenate %857, %857, %857 in 1 : vector<23x23xf32>, vector<23x23xf32>, vector<23x23xf32> -> vector<23x69xf32>
    %c0_494 = arith.constant 0 : index
    %c0_495 = arith.constant 0 : index
    %859 = vector.load %arg3[%c0_494, %c0_495] : memref<36x69xf32, #tpu.memory_space<vmem>>, vector<1x69xf32>
    %860 = vector.broadcast %859 : vector<1x69xf32> to vector<23x69xf32>
    %861 = arith.mulf %858, %860 : vector<23x69xf32>
    %862 = arith.addf %854, %861 : vector<23x69xf32>
    %c1_496 = arith.constant 1 : index
    %c0_497 = arith.constant 0 : index
    %863 = vector.load %arg3[%c1_496, %c0_497] : memref<36x69xf32, #tpu.memory_space<vmem>>, vector<1x69xf32>
    %864 = vector.broadcast %863 : vector<1x69xf32> to vector<23x69xf32>
    %865 = arith.mulf %858, %864 : vector<23x69xf32>
    %866 = arith.addf %855, %865 : vector<23x69xf32>
    %c2_498 = arith.constant 2 : index
    %c0_499 = arith.constant 0 : index
    %867 = vector.load %arg3[%c2_498, %c0_499] : memref<36x69xf32, #tpu.memory_space<vmem>>, vector<1x69xf32>
    %868 = vector.broadcast %867 : vector<1x69xf32> to vector<23x69xf32>
    %869 = arith.mulf %858, %868 : vector<23x69xf32>
    %870 = arith.addf %856, %869 : vector<23x69xf32>
    %c1_500 = arith.constant 1 : index
    %c0_501 = arith.constant 0 : index
    %871 = vector.load %arg11[%c1_500, %c0_501] : memref<24x72xf32, #tpu.memory_space<vmem>>, vector<23x23xf32>
    %872 = tpu.concatenate %871, %871, %871 in 1 : vector<23x23xf32>, vector<23x23xf32>, vector<23x23xf32> -> vector<23x69xf32>
    %c3_502 = arith.constant 3 : index
    %c0_503 = arith.constant 0 : index
    %873 = vector.load %arg3[%c3_502, %c0_503] : memref<36x69xf32, #tpu.memory_space<vmem>>, vector<1x69xf32>
    %874 = vector.broadcast %873 : vector<1x69xf32> to vector<23x69xf32>
    %875 = arith.mulf %872, %874 : vector<23x69xf32>
    %876 = arith.addf %862, %875 : vector<23x69xf32>
    %c4_504 = arith.constant 4 : index
    %c0_505 = arith.constant 0 : index
    %877 = vector.load %arg3[%c4_504, %c0_505] : memref<36x69xf32, #tpu.memory_space<vmem>>, vector<1x69xf32>
    %878 = vector.broadcast %877 : vector<1x69xf32> to vector<23x69xf32>
    %879 = arith.mulf %872, %878 : vector<23x69xf32>
    %880 = arith.addf %866, %879 : vector<23x69xf32>
    %c5_506 = arith.constant 5 : index
    %c0_507 = arith.constant 0 : index
    %881 = vector.load %arg3[%c5_506, %c0_507] : memref<36x69xf32, #tpu.memory_space<vmem>>, vector<1x69xf32>
    %882 = vector.broadcast %881 : vector<1x69xf32> to vector<23x69xf32>
    %883 = arith.mulf %872, %882 : vector<23x69xf32>
    %884 = arith.addf %870, %883 : vector<23x69xf32>
    %c0_508 = arith.constant 0 : index
    %c1_509 = arith.constant 1 : index
    %885 = vector.load %arg11[%c0_508, %c1_509] : memref<24x72xf32, #tpu.memory_space<vmem>>, vector<23x23xf32>
    %886 = tpu.concatenate %885, %885, %885 in 1 : vector<23x23xf32>, vector<23x23xf32>, vector<23x23xf32> -> vector<23x69xf32>
    %c6_510 = arith.constant 6 : index
    %c0_511 = arith.constant 0 : index
    %887 = vector.load %arg3[%c6_510, %c0_511] : memref<36x69xf32, #tpu.memory_space<vmem>>, vector<1x69xf32>
    %888 = vector.broadcast %887 : vector<1x69xf32> to vector<23x69xf32>
    %889 = arith.mulf %886, %888 : vector<23x69xf32>
    %890 = arith.addf %876, %889 : vector<23x69xf32>
    %c7_512 = arith.constant 7 : index
    %c0_513 = arith.constant 0 : index
    %891 = vector.load %arg3[%c7_512, %c0_513] : memref<36x69xf32, #tpu.memory_space<vmem>>, vector<1x69xf32>
    %892 = vector.broadcast %891 : vector<1x69xf32> to vector<23x69xf32>
    %893 = arith.mulf %886, %892 : vector<23x69xf32>
    %894 = arith.addf %880, %893 : vector<23x69xf32>
    %c0_514 = arith.constant 0 : index
    %c0_515 = arith.constant 0 : index
    %895 = vector.load %arg11[%c0_514, %c0_515] : memref<24x72xf32, #tpu.memory_space<vmem>>, vector<23x23xf32>
    %896 = tpu.concatenate %895, %895, %895 in 1 : vector<23x23xf32>, vector<23x23xf32>, vector<23x23xf32> -> vector<23x69xf32>
    %c9_516 = arith.constant 9 : index
    %c0_517 = arith.constant 0 : index
    %897 = vector.load %arg3[%c9_516, %c0_517] : memref<36x69xf32, #tpu.memory_space<vmem>>, vector<1x69xf32>
    %898 = vector.broadcast %897 : vector<1x69xf32> to vector<23x69xf32>
    %899 = arith.mulf %896, %898 : vector<23x69xf32>
    %900 = arith.addf %890, %899 : vector<23x69xf32>
    %c10_518 = arith.constant 10 : index
    %c0_519 = arith.constant 0 : index
    %901 = vector.load %arg3[%c10_518, %c0_519] : memref<36x69xf32, #tpu.memory_space<vmem>>, vector<1x69xf32>
    %902 = vector.broadcast %901 : vector<1x69xf32> to vector<23x69xf32>
    %903 = arith.mulf %896, %902 : vector<23x69xf32>
    %904 = arith.addf %894, %903 : vector<23x69xf32>
    %c1_520 = arith.constant 1 : index
    %c25_521 = arith.constant 25 : index
    %905 = vector.load %arg11[%c1_520, %c25_521] : memref<24x72xf32, #tpu.memory_space<vmem>>, vector<23x23xf32>
    %906 = tpu.concatenate %905, %905, %905 in 1 : vector<23x23xf32>, vector<23x23xf32>, vector<23x23xf32> -> vector<23x69xf32>
    %c12_522 = arith.constant 12 : index
    %c0_523 = arith.constant 0 : index
    %907 = vector.load %arg3[%c12_522, %c0_523] : memref<36x69xf32, #tpu.memory_space<vmem>>, vector<1x69xf32>
    %908 = vector.broadcast %907 : vector<1x69xf32> to vector<23x69xf32>
    %909 = arith.mulf %906, %908 : vector<23x69xf32>
    %910 = arith.addf %900, %909 : vector<23x69xf32>
    %c13_524 = arith.constant 13 : index
    %c0_525 = arith.constant 0 : index
    %911 = vector.load %arg3[%c13_524, %c0_525] : memref<36x69xf32, #tpu.memory_space<vmem>>, vector<1x69xf32>
    %912 = vector.broadcast %911 : vector<1x69xf32> to vector<23x69xf32>
    %913 = arith.mulf %906, %912 : vector<23x69xf32>
    %914 = arith.addf %904, %913 : vector<23x69xf32>
    %c14_526 = arith.constant 14 : index
    %c0_527 = arith.constant 0 : index
    %915 = vector.load %arg3[%c14_526, %c0_527] : memref<36x69xf32, #tpu.memory_space<vmem>>, vector<1x69xf32>
    %916 = vector.broadcast %915 : vector<1x69xf32> to vector<23x69xf32>
    %917 = arith.mulf %906, %916 : vector<23x69xf32>
    %918 = arith.addf %884, %917 : vector<23x69xf32>
    %c1_528 = arith.constant 1 : index
    %c24_529 = arith.constant 24 : index
    %919 = vector.load %arg11[%c1_528, %c24_529] : memref<24x72xf32, #tpu.memory_space<vmem>>, vector<23x23xf32>
    %920 = tpu.concatenate %919, %919, %919 in 1 : vector<23x23xf32>, vector<23x23xf32>, vector<23x23xf32> -> vector<23x69xf32>
    %c15_530 = arith.constant 15 : index
    %c0_531 = arith.constant 0 : index
    %921 = vector.load %arg3[%c15_530, %c0_531] : memref<36x69xf32, #tpu.memory_space<vmem>>, vector<1x69xf32>
    %922 = vector.broadcast %921 : vector<1x69xf32> to vector<23x69xf32>
    %923 = arith.mulf %920, %922 : vector<23x69xf32>
    %924 = arith.addf %910, %923 : vector<23x69xf32>
    %c16_532 = arith.constant 16 : index
    %c0_533 = arith.constant 0 : index
    %925 = vector.load %arg3[%c16_532, %c0_533] : memref<36x69xf32, #tpu.memory_space<vmem>>, vector<1x69xf32>
    %926 = vector.broadcast %925 : vector<1x69xf32> to vector<23x69xf32>
    %927 = arith.mulf %920, %926 : vector<23x69xf32>
    %928 = arith.addf %914, %927 : vector<23x69xf32>
    %c17_534 = arith.constant 17 : index
    %c0_535 = arith.constant 0 : index
    %929 = vector.load %arg3[%c17_534, %c0_535] : memref<36x69xf32, #tpu.memory_space<vmem>>, vector<1x69xf32>
    %930 = vector.broadcast %929 : vector<1x69xf32> to vector<23x69xf32>
    %931 = arith.mulf %920, %930 : vector<23x69xf32>
    %932 = arith.addf %918, %931 : vector<23x69xf32>
    %c0_536 = arith.constant 0 : index
    %c25_537 = arith.constant 25 : index
    %933 = vector.load %arg11[%c0_536, %c25_537] : memref<24x72xf32, #tpu.memory_space<vmem>>, vector<23x23xf32>
    %934 = tpu.concatenate %933, %933, %933 in 1 : vector<23x23xf32>, vector<23x23xf32>, vector<23x23xf32> -> vector<23x69xf32>
    %c18_538 = arith.constant 18 : index
    %c0_539 = arith.constant 0 : index
    %935 = vector.load %arg3[%c18_538, %c0_539] : memref<36x69xf32, #tpu.memory_space<vmem>>, vector<1x69xf32>
    %936 = vector.broadcast %935 : vector<1x69xf32> to vector<23x69xf32>
    %937 = arith.mulf %934, %936 : vector<23x69xf32>
    %938 = arith.addf %924, %937 : vector<23x69xf32>
    %c19_540 = arith.constant 19 : index
    %c0_541 = arith.constant 0 : index
    %939 = vector.load %arg3[%c19_540, %c0_541] : memref<36x69xf32, #tpu.memory_space<vmem>>, vector<1x69xf32>
    %940 = vector.broadcast %939 : vector<1x69xf32> to vector<23x69xf32>
    %941 = arith.mulf %934, %940 : vector<23x69xf32>
    %942 = arith.addf %928, %941 : vector<23x69xf32>
    %c0_542 = arith.constant 0 : index
    %c24_543 = arith.constant 24 : index
    %943 = vector.load %arg11[%c0_542, %c24_543] : memref<24x72xf32, #tpu.memory_space<vmem>>, vector<23x23xf32>
    %944 = tpu.concatenate %943, %943, %943 in 1 : vector<23x23xf32>, vector<23x23xf32>, vector<23x23xf32> -> vector<23x69xf32>
    %c21_544 = arith.constant 21 : index
    %c0_545 = arith.constant 0 : index
    %945 = vector.load %arg3[%c21_544, %c0_545] : memref<36x69xf32, #tpu.memory_space<vmem>>, vector<1x69xf32>
    %946 = vector.broadcast %945 : vector<1x69xf32> to vector<23x69xf32>
    %947 = arith.mulf %944, %946 : vector<23x69xf32>
    %948 = arith.addf %938, %947 : vector<23x69xf32>
    %c22_546 = arith.constant 22 : index
    %c0_547 = arith.constant 0 : index
    %949 = vector.load %arg3[%c22_546, %c0_547] : memref<36x69xf32, #tpu.memory_space<vmem>>, vector<1x69xf32>
    %950 = vector.broadcast %949 : vector<1x69xf32> to vector<23x69xf32>
    %951 = arith.mulf %944, %950 : vector<23x69xf32>
    %952 = arith.addf %942, %951 : vector<23x69xf32>
    %c1_548 = arith.constant 1 : index
    %c49_549 = arith.constant 49 : index
    %953 = vector.load %arg11[%c1_548, %c49_549] : memref<24x72xf32, #tpu.memory_space<vmem>>, vector<23x23xf32>
    %954 = tpu.concatenate %953, %953, %953 in 1 : vector<23x23xf32>, vector<23x23xf32>, vector<23x23xf32> -> vector<23x69xf32>
    %c24_550 = arith.constant 24 : index
    %c0_551 = arith.constant 0 : index
    %955 = vector.load %arg3[%c24_550, %c0_551] : memref<36x69xf32, #tpu.memory_space<vmem>>, vector<1x69xf32>
    %956 = vector.broadcast %955 : vector<1x69xf32> to vector<23x69xf32>
    %957 = arith.mulf %954, %956 : vector<23x69xf32>
    %958 = arith.addf %948, %957 : vector<23x69xf32>
    %c25_552 = arith.constant 25 : index
    %c0_553 = arith.constant 0 : index
    %959 = vector.load %arg3[%c25_552, %c0_553] : memref<36x69xf32, #tpu.memory_space<vmem>>, vector<1x69xf32>
    %960 = vector.broadcast %959 : vector<1x69xf32> to vector<23x69xf32>
    %961 = arith.mulf %954, %960 : vector<23x69xf32>
    %962 = arith.addf %952, %961 : vector<23x69xf32>
    %c26_554 = arith.constant 26 : index
    %c0_555 = arith.constant 0 : index
    %963 = vector.load %arg3[%c26_554, %c0_555] : memref<36x69xf32, #tpu.memory_space<vmem>>, vector<1x69xf32>
    %964 = vector.broadcast %963 : vector<1x69xf32> to vector<23x69xf32>
    %965 = arith.mulf %954, %964 : vector<23x69xf32>
    %966 = arith.addf %932, %965 : vector<23x69xf32>
    %c1_556 = arith.constant 1 : index
    %c48_557 = arith.constant 48 : index
    %967 = vector.load %arg11[%c1_556, %c48_557] : memref<24x72xf32, #tpu.memory_space<vmem>>, vector<23x23xf32>
    %968 = tpu.concatenate %967, %967, %967 in 1 : vector<23x23xf32>, vector<23x23xf32>, vector<23x23xf32> -> vector<23x69xf32>
    %c27_558 = arith.constant 27 : index
    %c0_559 = arith.constant 0 : index
    %969 = vector.load %arg3[%c27_558, %c0_559] : memref<36x69xf32, #tpu.memory_space<vmem>>, vector<1x69xf32>
    %970 = vector.broadcast %969 : vector<1x69xf32> to vector<23x69xf32>
    %971 = arith.mulf %968, %970 : vector<23x69xf32>
    %972 = arith.addf %958, %971 : vector<23x69xf32>
    %c28_560 = arith.constant 28 : index
    %c0_561 = arith.constant 0 : index
    %973 = vector.load %arg3[%c28_560, %c0_561] : memref<36x69xf32, #tpu.memory_space<vmem>>, vector<1x69xf32>
    %974 = vector.broadcast %973 : vector<1x69xf32> to vector<23x69xf32>
    %975 = arith.mulf %968, %974 : vector<23x69xf32>
    %976 = arith.addf %962, %975 : vector<23x69xf32>
    %c29_562 = arith.constant 29 : index
    %c0_563 = arith.constant 0 : index
    %977 = vector.load %arg3[%c29_562, %c0_563] : memref<36x69xf32, #tpu.memory_space<vmem>>, vector<1x69xf32>
    %978 = vector.broadcast %977 : vector<1x69xf32> to vector<23x69xf32>
    %979 = arith.mulf %968, %978 : vector<23x69xf32>
    %980 = arith.addf %966, %979 : vector<23x69xf32>
    %c0_564 = arith.constant 0 : index
    %c49_565 = arith.constant 49 : index
    %981 = vector.load %arg11[%c0_564, %c49_565] : memref<24x72xf32, #tpu.memory_space<vmem>>, vector<23x23xf32>
    %982 = tpu.concatenate %981, %981, %981 in 1 : vector<23x23xf32>, vector<23x23xf32>, vector<23x23xf32> -> vector<23x69xf32>
    %c30_566 = arith.constant 30 : index
    %c0_567 = arith.constant 0 : index
    %983 = vector.load %arg3[%c30_566, %c0_567] : memref<36x69xf32, #tpu.memory_space<vmem>>, vector<1x69xf32>
    %984 = vector.broadcast %983 : vector<1x69xf32> to vector<23x69xf32>
    %985 = arith.mulf %982, %984 : vector<23x69xf32>
    %986 = arith.addf %972, %985 : vector<23x69xf32>
    %c31_568 = arith.constant 31 : index
    %c0_569 = arith.constant 0 : index
    %987 = vector.load %arg3[%c31_568, %c0_569] : memref<36x69xf32, #tpu.memory_space<vmem>>, vector<1x69xf32>
    %988 = vector.broadcast %987 : vector<1x69xf32> to vector<23x69xf32>
    %989 = arith.mulf %982, %988 : vector<23x69xf32>
    %990 = arith.addf %976, %989 : vector<23x69xf32>
    %c0_570 = arith.constant 0 : index
    %c48_571 = arith.constant 48 : index
    %991 = vector.load %arg11[%c0_570, %c48_571] : memref<24x72xf32, #tpu.memory_space<vmem>>, vector<23x23xf32>
    %992 = tpu.concatenate %991, %991, %991 in 1 : vector<23x23xf32>, vector<23x23xf32>, vector<23x23xf32> -> vector<23x69xf32>
    %c33_572 = arith.constant 33 : index
    %c0_573 = arith.constant 0 : index
    %993 = vector.load %arg3[%c33_572, %c0_573] : memref<36x69xf32, #tpu.memory_space<vmem>>, vector<1x69xf32>
    %994 = vector.broadcast %993 : vector<1x69xf32> to vector<23x69xf32>
    %995 = arith.mulf %992, %994 : vector<23x69xf32>
    %996 = arith.addf %986, %995 : vector<23x69xf32>
    %c34_574 = arith.constant 34 : index
    %c0_575 = arith.constant 0 : index
    %997 = vector.load %arg3[%c34_574, %c0_575] : memref<36x69xf32, #tpu.memory_space<vmem>>, vector<1x69xf32>
    %998 = vector.broadcast %997 : vector<1x69xf32> to vector<23x69xf32>
    %999 = arith.mulf %992, %998 : vector<23x69xf32>
    %1000 = arith.addf %990, %999 : vector<23x69xf32>
    %c0_576 = arith.constant 0 : index
    %c0_577 = arith.constant 0 : index
    %c0_578 = arith.constant 0 : index
    %1001 = vector.load %arg8[%c0_576, %c0_577, %c0_578] : memref<3x66x23xf32, #tpu.memory_space<vmem>>, vector<1x66x23xf32>
    %1002 = vector.shape_cast %1001 : vector<1x66x23xf32> to vector<66x23xf32>
    %1003 = vector.broadcast %3 : vector<1x69xf32> to vector<23x69xf32>
    %1004 = arith.addf %996, %1003 : vector<23x69xf32>
    %cst_579 = arith.constant dense<0.000000e+00> : vector<66x69xf32>
    %1005 = tpu.matmul %1002, %1004, %cst_579 {dimension_numbers = #tpu.dot_dimension_numbers<[1], [0], [0], [1], [0, 0, 1, 1], [], []>} : vector<66x23xf32>, vector<23x69xf32>, vector<66x69xf32> -> vector<66x69xf32>
    %c1_580 = arith.constant 1 : index
    %c0_581 = arith.constant 0 : index
    %c0_582 = arith.constant 0 : index
    %1006 = vector.load %arg8[%c1_580, %c0_581, %c0_582] : memref<3x66x23xf32, #tpu.memory_space<vmem>>, vector<1x66x23xf32>
    %1007 = vector.shape_cast %1006 : vector<1x66x23xf32> to vector<66x23xf32>
    %1008 = vector.broadcast %3 : vector<1x69xf32> to vector<23x69xf32>
    %1009 = arith.addf %1000, %1008 : vector<23x69xf32>
    %cst_583 = arith.constant dense<0.000000e+00> : vector<66x69xf32>
    %1010 = tpu.matmul %1007, %1009, %cst_583 {dimension_numbers = #tpu.dot_dimension_numbers<[1], [0], [0], [1], [0, 0, 1, 1], [], []>} : vector<66x23xf32>, vector<23x69xf32>, vector<66x69xf32> -> vector<66x69xf32>
    %1011 = arith.addf %1005, %1010 : vector<66x69xf32>
    %c2_584 = arith.constant 2 : index
    %c0_585 = arith.constant 0 : index
    %c0_586 = arith.constant 0 : index
    %1012 = vector.load %arg8[%c2_584, %c0_585, %c0_586] : memref<3x66x23xf32, #tpu.memory_space<vmem>>, vector<1x66x23xf32>
    %1013 = vector.shape_cast %1012 : vector<1x66x23xf32> to vector<66x23xf32>
    %1014 = vector.broadcast %3 : vector<1x69xf32> to vector<23x69xf32>
    %1015 = arith.addf %980, %1014 : vector<23x69xf32>
    %cst_587 = arith.constant dense<0.000000e+00> : vector<66x69xf32>
    %1016 = tpu.matmul %1013, %1015, %cst_587 {dimension_numbers = #tpu.dot_dimension_numbers<[1], [0], [0], [1], [0, 0, 1, 1], [], []>} : vector<66x23xf32>, vector<23x69xf32>, vector<66x69xf32> -> vector<66x69xf32>
    %1017 = arith.addf %1011, %1016 : vector<66x69xf32>
    %cst_588 = arith.constant dense<0.000000e+00> : vector<66x128xf32>
    %1018 = tpu.matmul %1017, %1, %cst_588 {dimension_numbers = #tpu.dot_dimension_numbers<[1], [0], [0], [1], [0, 0, 1, 1], [], []>} : vector<66x69xf32>, vector<69x128xf32>, vector<66x128xf32> -> vector<66x128xf32>
    %c1_589 = arith.constant 1 : index
    %c0_590 = arith.constant 0 : index
    %c0_591 = arith.constant 0 : index
    %c0_592 = arith.constant 0 : index
    %1019 = vector.load %arg9[%c1_589, %c0_590, %c0_591, %c0_592] : memref<2x1x66x128xf32, #tpu.memory_space<vmem>>, vector<1x1x66x128xf32>
    %1020 = vector.shape_cast %1019 : vector<1x1x66x128xf32> to vector<66x128xf32>
    %1021 = vector.shape_cast %1018 : vector<66x128xf32> to vector<1x1x66x128xf32>
    tpu.vector_store %arg9[%c1_589, %c0_590, %c0_591, %c0_592], %1021 {strides = array<i32>} : memref<2x1x66x128xf32, #tpu.memory_space<vmem>>, vector<1x1x66x128xf32>,
    return
  }
}

</mosaic_0001>

<llo_original>
// kernel: mul.5
$region0: #{mul.5}
  #allocation0 [shape = 's32[1]{0}', space=sflag, size = 0x4, scoped, tag = 'scoped memory for mul.5']
  %s0 = inlined_call_operand.vmem [shape: f32[108], index: 0, kind: input, shape index: {}]
  %s1 = inlined_call_operand.vmem [shape: f32[108], index: 1, kind: input, shape index: {}]
  %s2 = inlined_call_operand.vmem [shape: f32[108], index: 2, kind: output, shape index: {}]
  %v3 = vld [vmem:[%s0] sm:$0x1]
  %v4 = vld [vmem:[%s1] sm:$0x1]
  %5 = xla_tuple %v3, %v4
  %6 = xla_tuple %5
  %v7 = vmul.f32 %v3, %v4
  %8 = xla_tuple %v7
  %9 = vst [vmem:[%s2] sm:$0x1] %v7

// kernel: mul.4
$region0: #{mul.4}
  #allocation0 [shape = 's32[1]{0}', space=sflag, size = 0x4, scoped, tag = 'scoped memory for mul.4']
  %s0 = inlined_call_operand.vmem [shape: f32[648], index: 0, kind: input, shape index: {}]
  %s1 = inlined_call_operand.vmem [shape: f32[648], index: 1, kind: input, shape index: {}]
  %s2 = inlined_call_operand.vmem [shape: f32[648], index: 2, kind: output, shape index: {}]
  %v3 = vld [vmem:[%s0] sm:$0x3f]
  %v4 = vld [vmem:[%s1] sm:$0x3f]
  %5 = xla_tuple %v3, %v4
  %6 = xla_tuple %5
  %v7 = vmul.f32 %v3, %v4
  %8 = xla_tuple %v7
  %9 = vst [vmem:[%s2] sm:$0xff] %v7

// kernel: decoder_forward.1
$region0: #{decoder_forward.1}
  #allocation0 [shape = 'u32[]', space=smem, size = 0x4, offset = 0x4, fixed_abs, tag = 'smem constant byte address 0x4 - core index']
  #allocation1 [shape = 'u32[72,128]{1,0:T(1,128)}', space=vmem, size = 0x9000, scoped, tag = 'internal scratch']
  #allocation2 [shape = 'f32[6,10,10]{2,1,0:T(8,128)}', space=vmem, size = 0xc000, scoped, tag = 'scratch operand']
  #allocation3 [shape = 'f32[24,72]{1,0:T(8,128)}', space=vmem, size = 0x3000, scoped, tag = 'scratch operand']
  %s0 = inlined_call_operand.vmem [shape: f32[2,6,8,8], index: 0, kind: input, shape index: {}]
  %s1 = inlined_call_operand.vmem [shape: f32[72,81], index: 1, kind: input, shape index: {}]
  %s2 = inlined_call_operand.vmem [shape: f32[1,81], index: 2, kind: input, shape index: {}]
  %s3 = inlined_call_operand.vmem [shape: f32[36,69], index: 3, kind: input, shape index: {}]
  %s4 = inlined_call_operand.vmem [shape: f32[1,69], index: 4, kind: input, shape index: {}]
  %s5 = inlined_call_operand.vmem [shape: f32[81,72], index: 5, kind: input, shape index: {}]
  %s6 = inlined_call_operand.vmem [shape: f32[3,24,9], index: 6, kind: input, shape index: {}]
  %s7 = inlined_call_operand.vmem [shape: f32[69,128], index: 7, kind: input, shape index: {}]
  %s8 = inlined_call_operand.vmem [shape: f32[3,66,23], index: 8, kind: input, shape index: {}]
  %s9 = inlined_call_operand.vmem [shape: f32[2,1,66,128], index: 9, kind: output, shape index: {}]
  %s10 = sld [smem:[#allocation0]]
  $region46: #{decoder_forward.1} parent=0
    _
  %s12 = ssub.s32 1, %s10
  %s13 = scalar_select 0, %s12, %s10
  // Predicated region
  $region2: #{decoder_forward.1} parent=0 // pred_check
    _
  $region3: #{decoder_forward.1} parent=0 // pred_check_branch
    %15 = sbr.rel (0) target = $region5
  $region4: #{decoder_forward.1} parent=0 // pred_region
    _
  $region5: #{decoder_forward.1} parent=0 // pred_fallthru
    _
  // Predicated region
  $region6: #{decoder_forward.1} parent=0 // pred_check
    _
  $region7: #{decoder_forward.1} parent=0 // pred_check_branch
    %17 = sbr.rel (0) target = $region9
  $region8: #{decoder_forward.1} parent=0 // pred_region
    _
  $region9: #{decoder_forward.1} parent=0 // pred_fallthru
    _
  // Predicated region
  $region10: #{decoder_forward.1} parent=0 // pred_check
    _
  $region11: #{decoder_forward.1} parent=0 // pred_check_branch
    %19 = sbr.rel (0) target = $region13
  $region12: #{decoder_forward.1} parent=0 // pred_region
    _
  $region13: #{decoder_forward.1} parent=0 // pred_fallthru
    _
  // Predicated region
  $region14: #{decoder_forward.1} parent=0 // pred_check
    _
  $region15: #{decoder_forward.1} parent=0 // pred_check_branch
    %21 = sbr.rel (0) target = $region17
  $region16: #{decoder_forward.1} parent=0 // pred_region
    _
  $region17: #{decoder_forward.1} parent=0 // pred_fallthru
    _
  // Predicated region
  $region18: #{decoder_forward.1} parent=0 // pred_check
    _
  $region19: #{decoder_forward.1} parent=0 // pred_check_branch
    %23 = sbr.rel (0) target = $region21
  $region20: #{decoder_forward.1} parent=0 // pred_region
    _
  $region21: #{decoder_forward.1} parent=0 // pred_fallthru
    _
  // Predicated region
  $region22: #{decoder_forward.1} parent=0 // pred_check
    _
  $region23: #{decoder_forward.1} parent=0 // pred_check_branch
    %25 = sbr.rel (0) target = $region25
  $region24: #{decoder_forward.1} parent=0 // pred_region
    _
  $region25: #{decoder_forward.1} parent=0 // pred_fallthru
    _
  // Predicated region
  $region26: #{decoder_forward.1} parent=0 // pred_check
    _
  $region27: #{decoder_forward.1} parent=0 // pred_check_branch
    %27 = sbr.rel (0) target = $region29
  $region28: #{decoder_forward.1} parent=0 // pred_region
    _
  $region29: #{decoder_forward.1} parent=0 // pred_fallthru
    _
  // Predicated region
  $region30: #{decoder_forward.1} parent=0 // pred_check
    _
  $region31: #{decoder_forward.1} parent=0 // pred_check_branch
    %29 = sbr.rel (0) target = $region33
  $region32: #{decoder_forward.1} parent=0 // pred_region
    _
  $region33: #{decoder_forward.1} parent=0 // pred_fallthru
    _
  // Predicated region
  $region34: #{decoder_forward.1} parent=0 // pred_check
    _
  $region35: #{decoder_forward.1} parent=0 // pred_check_branch
    %31 = sbr.rel (0) target = $region37
  $region36: #{decoder_forward.1} parent=0 // pred_region
    _
  $region37: #{decoder_forward.1} parent=0 // pred_fallthru
    _
  %v32 = vld [vmem:[%s5] sm:$0xff]
  %v33 = vld [vmem:[%s5 + $0x8] sm:$0xff]
  %v34 = vld [vmem:[%s5 + $0x10] sm:$0xff]
  %v35 = vld [vmem:[%s5 + $0x18] sm:$0xff]
  %v36 = vld [vmem:[%s5 + $0x20] sm:$0xff]
  %v37 = vld [vmem:[%s5 + $0x28] sm:$0xff]
  %v38 = vld [vmem:[%s5 + $0x30] sm:$0xff]
  %v39 = vld [vmem:[%s5 + $0x38] sm:$0xff]
  %v40 = vld [vmem:[%s5 + $0x40] sm:$0xff]
  %v41 = vld [vmem:[%s5 + $0x48] sm:$0xff]
  %v42 = vld [vmem:[%s5 + $0x50] sm:$0x1]
  %v43 = vld [vmem:[%s7] sm:$0xff]
  %v44 = vld [vmem:[%s7 + $0x8] sm:$0xff]
  %v45 = vld [vmem:[%s7 + $0x10] sm:$0xff]
  %v46 = vld [vmem:[%s7 + $0x18] sm:$0xff]
  %v47 = vld [vmem:[%s7 + $0x20] sm:$0xff]
  %v48 = vld [vmem:[%s7 + $0x28] sm:$0xff]
  %v49 = vld [vmem:[%s7 + $0x30] sm:$0xff]
  %v50 = vld [vmem:[%s7 + $0x38] sm:$0xff]
  %v51 = vld [vmem:[%s7 + $0x40] sm:$0x1f]
  %v52 = vld [vmem:[%s2] sm:$0x1]
  %v53 = vld [vmem:[%s4] sm:$0x1]
  %vm54 = vcmask 80896
  %55 = vst.msk [vmem:[#allocation2] sm:$0xff] %vm54, 0.0
  %vm56 = vcmask 74752
  %57 = vst.msk [vmem:[#allocation2 + $0x8] sm:$0x3] %vm56, 0.0
  %58 = vst.msk [vmem:[#allocation2 + $0x10] sm:$0xff] %vm54, 0.0
  %59 = vst.msk [vmem:[#allocation2 + $0x18] sm:$0x3] %vm56, 0.0
  %60 = vst.msk [vmem:[#allocation2 + $0x20] sm:$0xff] %vm54, 0.0
  %61 = vst.msk [vmem:[#allocation2 + $0x28] sm:$0x3] %vm56, 0.0
  %62 = vst.msk [vmem:[#allocation2 + $0x30] sm:$0xff] %vm54, 0.0
  %63 = vst.msk [vmem:[#allocation2 + $0x38] sm:$0x3] %vm56, 0.0
  %64 = vst.msk [vmem:[#allocation2 + $0x40] sm:$0xff] %vm54, 0.0
  %65 = vst.msk [vmem:[#allocation2 + $0x48] sm:$0x3] %vm56, 0.0
  %66 = vst.msk [vmem:[#allocation2 + $0x50] sm:$0xff] %vm54, 0.0
  %67 = vst.msk [vmem:[#allocation2 + $0x58] sm:$0x3] %vm56, 0.0
  %v68 = vld [vmem:[%s0] sm:$0xff]
  %v69 = vld [vmem:[%s0 + $0x8] sm:$0xff]
  %v70 = vld [vmem:[%s0 + $0x10] sm:$0xff]
  %v71 = vld [vmem:[%s0 + $0x18] sm:$0xff]
  %v72 = vld [vmem:[%s0 + $0x20] sm:$0xff]
  %v73 = vld [vmem:[%s0 + $0x28] sm:$0xff]
  %80 = vrot.lane.b32.xlu0 %v68, 1
  %v81 = vpop.permute.xlu0 %80
  %82 = vrot.lane.b32.xlu0 %v69, 1
  %v83 = vpop.permute.xlu0 %82
  %84 = vrot.lane.b32.xlu0 %v70, 1
  %v85 = vpop.permute.xlu0 %84
  %86 = vrot.lane.b32.xlu0 %v71, 1
  %v87 = vpop.permute.xlu0 %86
  %88 = vrot.lane.b32.xlu0 %v72, 1
  %v89 = vpop.permute.xlu0 %88
  %90 = vrot.lane.b32.xlu0 %v73, 1
  %v91 = vpop.permute.xlu0 %90
  %vm98 = vcmask 72712
  %99 = vst.msk [vmem:[#allocation2 + $0x1] sm:$0xff] %vm98, %v81
  %100 = vst.msk [vmem:[#allocation2 + $0x11] sm:$0xff] %vm98, %v83
  %101 = vst.msk [vmem:[#allocation2 + $0x21] sm:$0xff] %vm98, %v85
  %102 = vst.msk [vmem:[#allocation2 + $0x31] sm:$0xff] %vm98, %v87
  %103 = vst.msk [vmem:[#allocation2 + $0x41] sm:$0xff] %vm98, %v89
  %104 = vst.msk [vmem:[#allocation2 + $0x51] sm:$0xff] %vm98, %v91
  %v105 = vld [vmem:[#allocation2 + $0x1] sm:$0xff]
  %v106 = vld [vmem:[#allocation2 + $0x9] sm:$0x1]
  %109 = vrot.lane.b32.xlu0 %v105, 127
  %v110 = vpop.permute.xlu0 %109
  %111 = vrot.lane.b32.xlu0 %v106, 127
  %v112 = vpop.permute.xlu0 %111
  %115 = vrot.lane.b32.xlu0 %v105, 8
  %v116 = vpop.permute.xlu0 %115
  %117 = vrot.lane.b32.xlu0 %v106, 8
  %v118 = vpop.permute.xlu0 %117
  %121 = vrot.lane.b32.xlu0 %v105, 17
  %v122 = vpop.permute.xlu0 %121
  %123 = vrot.lane.b32.xlu0 %v106, 17
  %v124 = vpop.permute.xlu0 %123
  %127 = vrot.lane.b32.xlu0 %v105, 26
  %v128 = vpop.permute.xlu0 %127
  %129 = vrot.lane.b32.xlu0 %v106, 26
  %v130 = vpop.permute.xlu0 %129
  %133 = vrot.lane.b32.xlu0 %v105, 35
  %v134 = vpop.permute.xlu0 %133
  %135 = vrot.lane.b32.xlu0 %v106, 35
  %v136 = vpop.permute.xlu0 %135
  %139 = vrot.lane.b32.xlu0 %v105, 44
  %v140 = vpop.permute.xlu0 %139
  %141 = vrot.lane.b32.xlu0 %v106, 44
  %v142 = vpop.permute.xlu0 %141
  %145 = vrot.lane.b32.xlu0 %v105, 53
  %v146 = vpop.permute.xlu0 %145
  %147 = vrot.lane.b32.xlu0 %v106, 53
  %v148 = vpop.permute.xlu0 %147
  %151 = vrot.lane.b32.xlu0 %v105, 62
  %v152 = vpop.permute.xlu0 %151
  %153 = vrot.lane.b32.xlu0 %v106, 62
  %v154 = vpop.permute.xlu0 %153
  %157 = vrot.lane.b32.xlu0 %v105, 71
  %v158 = vpop.permute.xlu0 %157
  %159 = vrot.lane.b32.xlu0 %v106, 71
  %v160 = vpop.permute.xlu0 %159
  %vm163 = vcmask 72704
  %v164 = vsel %vm163, %v110, %v116
  %v165 = vsel %vm163, %v112, %v118
  %vm166 = vcmask 146432
  %v167 = vsel %vm166, %v164, %v122
  %v168 = vsel %vm166, %v165, %v124
  %vm169 = vcmask 220160
  %v170 = vsel %vm169, %v167, %v128
  %v171 = vsel %vm169, %v168, %v130
  %vm172 = vcmask 293888
  %v173 = vsel %vm172, %v170, %v134
  %v174 = vsel %vm172, %v171, %v136
  %vm175 = vcmask 367616
  %v176 = vsel %vm175, %v173, %v140
  %v177 = vsel %vm175, %v174, %v142
  %vm178 = vcmask 441344
  %v179 = vsel %vm178, %v176, %v146
  %v180 = vsel %vm178, %v177, %v148
  %vm181 = vcmask 515072
  %v182 = vsel %vm181, %v179, %v152
  %v183 = vsel %vm181, %v180, %v154
  %vm184 = vcmask 588800
  %v185 = vsel %vm184, %v182, %v158
  %v186 = vsel %vm184, %v183, %v160
  %v187 = vld [vmem:[%s1] sm:$0x1]
  %v188 = vperm.slane %v187, 0
  %v189 = vmul.f32 %v185, %v188
  %v190 = vmul.f32 %v186, %v188
  %v191 = vadd.f32 %v189, 0.0
  %v192 = vadd.f32 %v190, 0.0
  %v193 = vld [vmem:[%s1 + $0x1] sm:$0x1]
  %v194 = vperm.slane %v193, 0
  %v195 = vmul.f32 %v185, %v194
  %v196 = vmul.f32 %v186, %v194
  %v197 = vadd.f32 %v195, 0.0
  %v198 = vadd.f32 %v196, 0.0
  %v199 = vld [vmem:[%s1 + $0x2] sm:$0x1]
  %v200 = vperm.slane %v199, 0
  %v201 = vmul.f32 %v185, %v200
  %v202 = vmul.f32 %v186, %v200
  %v203 = vadd.f32 %v201, 0.0
  %v204 = vadd.f32 %v202, 0.0
  %205 = vrot.lane.b32.xlu0 %v105, 9
  %v206 = vpop.permute.xlu0 %205
  %207 = vrot.lane.b32.xlu0 %v106, 9
  %v208 = vpop.permute.xlu0 %207
  %211 = vrot.lane.b32.xlu0 %v105, 18
  %v212 = vpop.permute.xlu0 %211
  %213 = vrot.lane.b32.xlu0 %v106, 18
  %v214 = vpop.permute.xlu0 %213
  %217 = vrot.lane.b32.xlu0 %v105, 27
  %v218 = vpop.permute.xlu0 %217
  %219 = vrot.lane.b32.xlu0 %v106, 27
  %v220 = vpop.permute.xlu0 %219
  %223 = vrot.lane.b32.xlu0 %v105, 36
  %v224 = vpop.permute.xlu0 %223
  %225 = vrot.lane.b32.xlu0 %v106, 36
  %v226 = vpop.permute.xlu0 %225
  %229 = vrot.lane.b32.xlu0 %v105, 45
  %v230 = vpop.permute.xlu0 %229
  %231 = vrot.lane.b32.xlu0 %v106, 45
  %v232 = vpop.permute.xlu0 %231
  %235 = vrot.lane.b32.xlu0 %v105, 54
  %v236 = vpop.permute.xlu0 %235
  %237 = vrot.lane.b32.xlu0 %v106, 54
  %v238 = vpop.permute.xlu0 %237
  %241 = vrot.lane.b32.xlu0 %v105, 63
  %v242 = vpop.permute.xlu0 %241
  %243 = vrot.lane.b32.xlu0 %v106, 63
  %v244 = vpop.permute.xlu0 %243
  %247 = vrot.lane.b32.xlu0 %v105, 72
  %v248 = vpop.permute.xlu0 %247
  %249 = vrot.lane.b32.xlu0 %v106, 72
  %v250 = vpop.permute.xlu0 %249
  %v253 = vsel %vm163, %v105, %v206
  %v254 = vsel %vm163, %v106, %v208
  %v255 = vsel %vm166, %v253, %v212
  %v256 = vsel %vm166, %v254, %v214
  %v257 = vsel %vm169, %v255, %v218
  %v258 = vsel %vm169, %v256, %v220
  %v259 = vsel %vm172, %v257, %v224
  %v260 = vsel %vm172, %v258, %v226
  %v261 = vsel %vm175, %v259, %v230
  %v262 = vsel %vm175, %v260, %v232
  %v263 = vsel %vm178, %v261, %v236
  %v264 = vsel %vm178, %v262, %v238
  %v265 = vsel %vm181, %v263, %v242
  %v266 = vsel %vm181, %v264, %v244
  %v267 = vsel %vm184, %v265, %v248
  %v268 = vsel %vm184, %v266, %v250
  %v269 = vld [vmem:[%s1 + $0x3] sm:$0x1]
  %v270 = vperm.slane %v269, 0
  %v271 = vmul.f32 %v267, %v270
  %v272 = vmul.f32 %v268, %v270
  %v273 = vadd.f32 %v191, %v271
  %v274 = vadd.f32 %v192, %v272
  %v275 = vld [vmem:[%s1 + $0x4] sm:$0x1]
  %v276 = vperm.slane %v275, 0
  %v277 = vmul.f32 %v267, %v276
  %v278 = vmul.f32 %v268, %v276
  %v279 = vadd.f32 %v197, %v277
  %v280 = vadd.f32 %v198, %v278
  %v281 = vld [vmem:[%s1 + $0x5] sm:$0x1]
  %v282 = vperm.slane %v281, 0
  %v283 = vmul.f32 %v267, %v282
  %v284 = vmul.f32 %v268, %v282
  %v285 = vadd.f32 %v203, %v283
  %v286 = vadd.f32 %v204, %v284
  %v287 = vld [vmem:[#allocation2] sm:$0xff]
  %v288 = vld [vmem:[#allocation2 + $0x8] sm:$0x1]
  %291 = vrot.lane.b32.xlu0 %v287, 127
  %v292 = vpop.permute.xlu0 %291
  %293 = vrot.lane.b32.xlu0 %v288, 127
  %v294 = vpop.permute.xlu0 %293
  %297 = vrot.lane.b32.xlu0 %v287, 8
  %v298 = vpop.permute.xlu0 %297
  %299 = vrot.lane.b32.xlu0 %v288, 8
  %v300 = vpop.permute.xlu0 %299
  %303 = vrot.lane.b32.xlu0 %v287, 17
  %v304 = vpop.permute.xlu0 %303
  %305 = vrot.lane.b32.xlu0 %v288, 17
  %v306 = vpop.permute.xlu0 %305
  %309 = vrot.lane.b32.xlu0 %v287, 26
  %v310 = vpop.permute.xlu0 %309
  %311 = vrot.lane.b32.xlu0 %v288, 26
  %v312 = vpop.permute.xlu0 %311
  %315 = vrot.lane.b32.xlu0 %v287, 35
  %v316 = vpop.permute.xlu0 %315
  %317 = vrot.lane.b32.xlu0 %v288, 35
  %v318 = vpop.permute.xlu0 %317
  %321 = vrot.lane.b32.xlu0 %v287, 44
  %v322 = vpop.permute.xlu0 %321
  %323 = vrot.lane.b32.xlu0 %v288, 44
  %v324 = vpop.permute.xlu0 %323
  %327 = vrot.lane.b32.xlu0 %v287, 53
  %v328 = vpop.permute.xlu0 %327
  %329 = vrot.lane.b32.xlu0 %v288, 53
  %v330 = vpop.permute.xlu0 %329
  %333 = vrot.lane.b32.xlu0 %v287, 62
  %v334 = vpop.permute.xlu0 %333
  %335 = vrot.lane.b32.xlu0 %v288, 62
  %v336 = vpop.permute.xlu0 %335
  %339 = vrot.lane.b32.xlu0 %v287, 71
  %v340 = vpop.permute.xlu0 %339
  %341 = vrot.lane.b32.xlu0 %v288, 71
  %v342 = vpop.permute.xlu0 %341
  %v345 = vsel %vm163, %v292, %v298
  %v346 = vsel %vm163, %v294, %v300
  %v347 = vsel %vm166, %v345, %v304
  %v348 = vsel %vm166, %v346, %v306
  %v349 = vsel %vm169, %v347, %v310
  %v350 = vsel %vm169, %v348, %v312
  %v351 = vsel %vm172, %v349, %v316
  %v352 = vsel %vm172, %v350, %v318
  %v353 = vsel %vm175, %v351, %v322
  %v354 = vsel %vm175, %v352, %v324
  %v355 = vsel %vm178, %v353, %v328
  %v356 = vsel %vm178, %v354, %v330
  %v357 = vsel %vm181, %v355, %v334
  %v358 = vsel %vm181, %v356, %v336
  %v359 = vsel %vm184, %v357, %v340
  %v360 = vsel %vm184, %v358, %v342
  %v361 = vld [vmem:[%s1 + $0x6] sm:$0x1]
  %v362 = vperm.slane %v361, 0
  %v363 = vmul.f32 %v359, %v362
  %v364 = vmul.f32 %v360, %v362
  %v365 = vadd.f32 %v273, %v363
  %v366 = vadd.f32 %v274, %v364
  %v367 = vld [vmem:[%s1 + $0x7] sm:$0x1]
  %v368 = vperm.slane %v367, 0
  %v369 = vmul.f32 %v359, %v368
  %v370 = vmul.f32 %v360, %v368
  %v371 = vadd.f32 %v279, %v369
  %v372 = vadd.f32 %v280, %v370
  %373 = vrot.lane.b32.xlu0 %v287, 9
  %v374 = vpop.permute.xlu0 %373
  %375 = vrot.lane.b32.xlu0 %v288, 9
  %v376 = vpop.permute.xlu0 %375
  %379 = vrot.lane.b32.xlu0 %v287, 18
  %v380 = vpop.permute.xlu0 %379
  %381 = vrot.lane.b32.xlu0 %v288, 18
  %v382 = vpop.permute.xlu0 %381
  %385 = vrot.lane.b32.xlu0 %v287, 27
  %v386 = vpop.permute.xlu0 %385
  %387 = vrot.lane.b32.xlu0 %v288, 27
  %v388 = vpop.permute.xlu0 %387
  %391 = vrot.lane.b32.xlu0 %v287, 36
  %v392 = vpop.permute.xlu0 %391
  %393 = vrot.lane.b32.xlu0 %v288, 36
  %v394 = vpop.permute.xlu0 %393
  %397 = vrot.lane.b32.xlu0 %v287, 45
  %v398 = vpop.permute.xlu0 %397
  %399 = vrot.lane.b32.xlu0 %v288, 45
  %v400 = vpop.permute.xlu0 %399
  %403 = vrot.lane.b32.xlu0 %v287, 54
  %v404 = vpop.permute.xlu0 %403
  %405 = vrot.lane.b32.xlu0 %v288, 54
  %v406 = vpop.permute.xlu0 %405
  %409 = vrot.lane.b32.xlu0 %v287, 63
  %v410 = vpop.permute.xlu0 %409
  %411 = vrot.lane.b32.xlu0 %v288, 63
  %v412 = vpop.permute.xlu0 %411
  %415 = vrot.lane.b32.xlu0 %v287, 72
  %v416 = vpop.permute.xlu0 %415
  %417 = vrot.lane.b32.xlu0 %v288, 72
  %v418 = vpop.permute.xlu0 %417
  %v421 = vsel %vm163, %v287, %v374
  %v422 = vsel %vm163, %v288, %v376
  %v423 = vsel %vm166, %v421, %v380
  %v424 = vsel %vm166, %v422, %v382
  %v425 = vsel %vm169, %v423, %v386
  %v426 = vsel %vm169, %v424, %v388
  %v427 = vsel %vm172, %v425, %v392
  %v428 = vsel %vm172, %v426, %v394
  %v429 = vsel %vm175, %v427, %v398
  %v430 = vsel %vm175, %v428, %v400
  %v431 = vsel %vm178, %v429, %v404
  %v432 = vsel %vm178, %v430, %v406
  %v433 = vsel %vm181, %v431, %v410
  %v434 = vsel %vm181, %v432, %v412
  %v435 = vsel %vm184, %v433, %v416
  %v436 = vsel %vm184, %v434, %v418
  %v437 = vld [vmem:[%s1 + $0x9] sm:$0x1]
  %v438 = vperm.slane %v437, 0
  %v439 = vmul.f32 %v435, %v438
  %v440 = vmul.f32 %v436, %v438
  %v441 = vadd.f32 %v365, %v439
  %v442 = vadd.f32 %v366, %v440
  %v443 = vld [vmem:[%s1 + $0xa] sm:$0x1]
  %v444 = vperm.slane %v443, 0
  %v445 = vmul.f32 %v435, %v444
  %v446 = vmul.f32 %v436, %v444
  %v447 = vadd.f32 %v371, %v445
  %v448 = vadd.f32 %v372, %v446
  %s449 = scalar_lea.vmem [#allocation2], 16
  %v450 = vld [vmem:[%s449 + $0x1] sm:$0xff]
  %v451 = vld [vmem:[%s449 + $0x9] sm:$0x1]
  %454 = vrot.lane.b32.xlu0 %v450, 127
  %v455 = vpop.permute.xlu0 %454
  %456 = vrot.lane.b32.xlu0 %v451, 127
  %v457 = vpop.permute.xlu0 %456
  %460 = vrot.lane.b32.xlu0 %v450, 8
  %v461 = vpop.permute.xlu0 %460
  %462 = vrot.lane.b32.xlu0 %v451, 8
  %v463 = vpop.permute.xlu0 %462
  %466 = vrot.lane.b32.xlu0 %v450, 17
  %v467 = vpop.permute.xlu0 %466
  %468 = vrot.lane.b32.xlu0 %v451, 17
  %v469 = vpop.permute.xlu0 %468
  %472 = vrot.lane.b32.xlu0 %v450, 26
  %v473 = vpop.permute.xlu0 %472
  %474 = vrot.lane.b32.xlu0 %v451, 26
  %v475 = vpop.permute.xlu0 %474
  %478 = vrot.lane.b32.xlu0 %v450, 35
  %v479 = vpop.permute.xlu0 %478
  %480 = vrot.lane.b32.xlu0 %v451, 35
  %v481 = vpop.permute.xlu0 %480
  %484 = vrot.lane.b32.xlu0 %v450, 44
  %v485 = vpop.permute.xlu0 %484
  %486 = vrot.lane.b32.xlu0 %v451, 44
  %v487 = vpop.permute.xlu0 %486
  %490 = vrot.lane.b32.xlu0 %v450, 53
  %v491 = vpop.permute.xlu0 %490
  %492 = vrot.lane.b32.xlu0 %v451, 53
  %v493 = vpop.permute.xlu0 %492
  %496 = vrot.lane.b32.xlu0 %v450, 62
  %v497 = vpop.permute.xlu0 %496
  %498 = vrot.lane.b32.xlu0 %v451, 62
  %v499 = vpop.permute.xlu0 %498
  %502 = vrot.lane.b32.xlu0 %v450, 71
  %v503 = vpop.permute.xlu0 %502
  %504 = vrot.lane.b32.xlu0 %v451, 71
  %v505 = vpop.permute.xlu0 %504
  %v508 = vsel %vm163, %v455, %v461
  %v509 = vsel %vm163, %v457, %v463
  %v510 = vsel %vm166, %v508, %v467
  %v511 = vsel %vm166, %v509, %v469
  %v512 = vsel %vm169, %v510, %v473
  %v513 = vsel %vm169, %v511, %v475
  %v514 = vsel %vm172, %v512, %v479
  %v515 = vsel %vm172, %v513, %v481
  %v516 = vsel %vm175, %v514, %v485
  %v517 = vsel %vm175, %v515, %v487
  %v518 = vsel %vm178, %v516, %v491
  %v519 = vsel %vm178, %v517, %v493
  %v520 = vsel %vm181, %v518, %v497
  %v521 = vsel %vm181, %v519, %v499
  %v522 = vsel %vm184, %v520, %v503
  %v523 = vsel %vm184, %v521, %v505
  %v524 = vld [vmem:[%s1 + $0xc] sm:$0x1]
  %v525 = vperm.slane %v524, 0
  %v526 = vmul.f32 %v522, %v525
  %v527 = vmul.f32 %v523, %v525
  %v528 = vadd.f32 %v441, %v526
  %v529 = vadd.f32 %v442, %v527
  %v530 = vld [vmem:[%s1 + $0xd] sm:$0x1]
  %v531 = vperm.slane %v530, 0
  %v532 = vmul.f32 %v522, %v531
  %v533 = vmul.f32 %v523, %v531
  %v534 = vadd.f32 %v447, %v532
  %v535 = vadd.f32 %v448, %v533
  %v536 = vld [vmem:[%s1 + $0xe] sm:$0x1]
  %v537 = vperm.slane %v536, 0
  %v538 = vmul.f32 %v522, %v537
  %v539 = vmul.f32 %v523, %v537
  %v540 = vadd.f32 %v285, %v538
  %v541 = vadd.f32 %v286, %v539
  %542 = vrot.lane.b32.xlu0 %v450, 9
  %v543 = vpop.permute.xlu0 %542
  %544 = vrot.lane.b32.xlu0 %v451, 9
  %v545 = vpop.permute.xlu0 %544
  %548 = vrot.lane.b32.xlu0 %v450, 18
  %v549 = vpop.permute.xlu0 %548
  %550 = vrot.lane.b32.xlu0 %v451, 18
  %v551 = vpop.permute.xlu0 %550
  %554 = vrot.lane.b32.xlu0 %v450, 27
  %v555 = vpop.permute.xlu0 %554
  %556 = vrot.lane.b32.xlu0 %v451, 27
  %v557 = vpop.permute.xlu0 %556
  %560 = vrot.lane.b32.xlu0 %v450, 36
  %v561 = vpop.permute.xlu0 %560
  %562 = vrot.lane.b32.xlu0 %v451, 36
  %v563 = vpop.permute.xlu0 %562
  %566 = vrot.lane.b32.xlu0 %v450, 45
  %v567 = vpop.permute.xlu0 %566
  %568 = vrot.lane.b32.xlu0 %v451, 45
  %v569 = vpop.permute.xlu0 %568
  %572 = vrot.lane.b32.xlu0 %v450, 54
  %v573 = vpop.permute.xlu0 %572
  %574 = vrot.lane.b32.xlu0 %v451, 54
  %v575 = vpop.permute.xlu0 %574
  %578 = vrot.lane.b32.xlu0 %v450, 63
  %v579 = vpop.permute.xlu0 %578
  %580 = vrot.lane.b32.xlu0 %v451, 63
  %v581 = vpop.permute.xlu0 %580
  %584 = vrot.lane.b32.xlu0 %v450, 72
  %v585 = vpop.permute.xlu0 %584
  %586 = vrot.lane.b32.xlu0 %v451, 72
  %v587 = vpop.permute.xlu0 %586
  %v590 = vsel %vm163, %v450, %v543
  %v591 = vsel %vm163, %v451, %v545
  %v592 = vsel %vm166, %v590, %v549
  %v593 = vsel %vm166, %v591, %v551
  %v594 = vsel %vm169, %v592, %v555
  %v595 = vsel %vm169, %v593, %v557
  %v596 = vsel %vm172, %v594, %v561
  %v597 = vsel %vm172, %v595, %v563
  %v598 = vsel %vm175, %v596, %v567
  %v599 = vsel %vm175, %v597, %v569
  %v600 = vsel %vm178, %v598, %v573
  %v601 = vsel %vm178, %v599, %v575
  %v602 = vsel %vm181, %v600, %v579
  %v603 = vsel %vm181, %v601, %v581
  %v604 = vsel %vm184, %v602, %v585
  %v605 = vsel %vm184, %v603, %v587
  %v606 = vld [vmem:[%s1 + $0xf] sm:$0x1]
  %v607 = vperm.slane %v606, 0
  %v608 = vmul.f32 %v604, %v607
  %v609 = vmul.f32 %v605, %v607
  %v610 = vadd.f32 %v528, %v608
  %v611 = vadd.f32 %v529, %v609
  %v612 = vld [vmem:[%s1 + $0x10] sm:$0x1]
  %v613 = vperm.slane %v612, 0
  %v614 = vmul.f32 %v604, %v613
  %v615 = vmul.f32 %v605, %v613
  %v616 = vadd.f32 %v534, %v614
  %v617 = vadd.f32 %v535, %v615
  %v618 = vld [vmem:[%s1 + $0x11] sm:$0x1]
  %v619 = vperm.slane %v618, 0
  %v620 = vmul.f32 %v604, %v619
  %v621 = vmul.f32 %v605, %v619
  %v622 = vadd.f32 %v540, %v620
  %v623 = vadd.f32 %v541, %v621
  %v624 = vld [vmem:[%s449] sm:$0xff]
  %v625 = vld [vmem:[%s449 + $0x8] sm:$0x1]
  %628 = vrot.lane.b32.xlu0 %v624, 127
  %v629 = vpop.permute.xlu0 %628
  %630 = vrot.lane.b32.xlu0 %v625, 127
  %v631 = vpop.permute.xlu0 %630
  %634 = vrot.lane.b32.xlu0 %v624, 8
  %v635 = vpop.permute.xlu0 %634
  %636 = vrot.lane.b32.xlu0 %v625, 8
  %v637 = vpop.permute.xlu0 %636
  %640 = vrot.lane.b32.xlu0 %v624, 17
  %v641 = vpop.permute.xlu0 %640
  %642 = vrot.lane.b32.xlu0 %v625, 17
  %v643 = vpop.permute.xlu0 %642
  %646 = vrot.lane.b32.xlu0 %v624, 26
  %v647 = vpop.permute.xlu0 %646
  %648 = vrot.lane.b32.xlu0 %v625, 26
  %v649 = vpop.permute.xlu0 %648
  %652 = vrot.lane.b32.xlu0 %v624, 35
  %v653 = vpop.permute.xlu0 %652
  %654 = vrot.lane.b32.xlu0 %v625, 35
  %v655 = vpop.permute.xlu0 %654
  %658 = vrot.lane.b32.xlu0 %v624, 44
  %v659 = vpop.permute.xlu0 %658
  %660 = vrot.lane.b32.xlu0 %v625, 44
  %v661 = vpop.permute.xlu0 %660
  %664 = vrot.lane.b32.xlu0 %v624, 53
  %v665 = vpop.permute.xlu0 %664
  %666 = vrot.lane.b32.xlu0 %v625, 53
  %v667 = vpop.permute.xlu0 %666
  %670 = vrot.lane.b32.xlu0 %v624, 62
  %v671 = vpop.permute.xlu0 %670
  %672 = vrot.lane.b32.xlu0 %v625, 62
  %v673 = vpop.permute.xlu0 %672
  %676 = vrot.lane.b32.xlu0 %v624, 71
  %v677 = vpop.permute.xlu0 %676
  %678 = vrot.lane.b32.xlu0 %v625, 71
  %v679 = vpop.permute.xlu0 %678
  %v682 = vsel %vm163, %v629, %v635
  %v683 = vsel %vm163, %v631, %v637
  %v684 = vsel %vm166, %v682, %v641
  %v685 = vsel %vm166, %v683, %v643
  %v686 = vsel %vm169, %v684, %v647
  %v687 = vsel %vm169, %v685, %v649
  %v688 = vsel %vm172, %v686, %v653
  %v689 = vsel %vm172, %v687, %v655
  %v690 = vsel %vm175, %v688, %v659
  %v691 = vsel %vm175, %v689, %v661
  %v692 = vsel %vm178, %v690, %v665
  %v693 = vsel %vm178, %v691, %v667
  %v694 = vsel %vm181, %v692, %v671
  %v695 = vsel %vm181, %v693, %v673
  %v696 = vsel %vm184, %v694, %v677
  %v697 = vsel %vm184, %v695, %v679
  %v698 = vld [vmem:[%s1 + $0x12] sm:$0x1]
  %v699 = vperm.slane %v698, 0
  %v700 = vmul.f32 %v696, %v699
  %v701 = vmul.f32 %v697, %v699
  %v702 = vadd.f32 %v610, %v700
  %v703 = vadd.f32 %v611, %v701
  %v704 = vld [vmem:[%s1 + $0x13] sm:$0x1]
  %v705 = vperm.slane %v704, 0
  %v706 = vmul.f32 %v696, %v705
  %v707 = vmul.f32 %v697, %v705
  %v708 = vadd.f32 %v616, %v706
  %v709 = vadd.f32 %v617, %v707
  %710 = vrot.lane.b32.xlu0 %v624, 9
  %v711 = vpop.permute.xlu0 %710
  %712 = vrot.lane.b32.xlu0 %v625, 9
  %v713 = vpop.permute.xlu0 %712
  %716 = vrot.lane.b32.xlu0 %v624, 18
  %v717 = vpop.permute.xlu0 %716
  %718 = vrot.lane.b32.xlu0 %v625, 18
  %v719 = vpop.permute.xlu0 %718
  %722 = vrot.lane.b32.xlu0 %v624, 27
  %v723 = vpop.permute.xlu0 %722
  %724 = vrot.lane.b32.xlu0 %v625, 27
  %v725 = vpop.permute.xlu0 %724
  %728 = vrot.lane.b32.xlu0 %v624, 36
  %v729 = vpop.permute.xlu0 %728
  %730 = vrot.lane.b32.xlu0 %v625, 36
  %v731 = vpop.permute.xlu0 %730
  %734 = vrot.lane.b32.xlu0 %v624, 45
  %v735 = vpop.permute.xlu0 %734
  %736 = vrot.lane.b32.xlu0 %v625, 45
  %v737 = vpop.permute.xlu0 %736
  %740 = vrot.lane.b32.xlu0 %v624, 54
  %v741 = vpop.permute.xlu0 %740
  %742 = vrot.lane.b32.xlu0 %v625, 54
  %v743 = vpop.permute.xlu0 %742
  %746 = vrot.lane.b32.xlu0 %v624, 63
  %v747 = vpop.permute.xlu0 %746
  %748 = vrot.lane.b32.xlu0 %v625, 63
  %v749 = vpop.permute.xlu0 %748
  %752 = vrot.lane.b32.xlu0 %v624, 72
  %v753 = vpop.permute.xlu0 %752
  %754 = vrot.lane.b32.xlu0 %v625, 72
  %v755 = vpop.permute.xlu0 %754
  %v758 = vsel %vm163, %v624, %v711
  %v759 = vsel %vm163, %v625, %v713
  %v760 = vsel %vm166, %v758, %v717
  %v761 = vsel %vm166, %v759, %v719
  %v762 = vsel %vm169, %v760, %v723
  %v763 = vsel %vm169, %v761, %v725
  %v764 = vsel %vm172, %v762, %v729
  %v765 = vsel %vm172, %v763, %v731
  %v766 = vsel %vm175, %v764, %v735
  %v767 = vsel %vm175, %v765, %v737
  %v768 = vsel %vm178, %v766, %v741
  %v769 = vsel %vm178, %v767, %v743
  %v770 = vsel %vm181, %v768, %v747
  %v771 = vsel %vm181, %v769, %v749
  %v772 = vsel %vm184, %v770, %v753
  %v773 = vsel %vm184, %v771, %v755
  %v774 = vld [vmem:[%s1 + $0x15] sm:$0x1]
  %v775 = vperm.slane %v774, 0
  %v776 = vmul.f32 %v772, %v775
  %v777 = vmul.f32 %v773, %v775
  %v778 = vadd.f32 %v702, %v776
  %v779 = vadd.f32 %v703, %v777
  %v780 = vld [vmem:[%s1 + $0x16] sm:$0x1]
  %v781 = vperm.slane %v780, 0
  %v782 = vmul.f32 %v772, %v781
  %v783 = vmul.f32 %v773, %v781
  %v784 = vadd.f32 %v708, %v782
  %v785 = vadd.f32 %v709, %v783
  %s786 = scalar_lea.vmem [#allocation2], 32
  %v787 = vld [vmem:[%s786 + $0x1] sm:$0xff]
  %v788 = vld [vmem:[%s786 + $0x9] sm:$0x1]
  %791 = vrot.lane.b32.xlu0 %v787, 127
  %v792 = vpop.permute.xlu0 %791
  %793 = vrot.lane.b32.xlu0 %v788, 127
  %v794 = vpop.permute.xlu0 %793
  %797 = vrot.lane.b32.xlu0 %v787, 8
  %v798 = vpop.permute.xlu0 %797
  %799 = vrot.lane.b32.xlu0 %v788, 8
  %v800 = vpop.permute.xlu0 %799
  %803 = vrot.lane.b32.xlu0 %v787, 17
  %v804 = vpop.permute.xlu0 %803
  %805 = vrot.lane.b32.xlu0 %v788, 17
  %v806 = vpop.permute.xlu0 %805
  %809 = vrot.lane.b32.xlu0 %v787, 26
  %v810 = vpop.permute.xlu0 %809
  %811 = vrot.lane.b32.xlu0 %v788, 26
  %v812 = vpop.permute.xlu0 %811
  %815 = vrot.lane.b32.xlu0 %v787, 35
  %v816 = vpop.permute.xlu0 %815
  %817 = vrot.lane.b32.xlu0 %v788, 35
  %v818 = vpop.permute.xlu0 %817
  %821 = vrot.lane.b32.xlu0 %v787, 44
  %v822 = vpop.permute.xlu0 %821
  %823 = vrot.lane.b32.xlu0 %v788, 44
  %v824 = vpop.permute.xlu0 %823
  %827 = vrot.lane.b32.xlu0 %v787, 53
  %v828 = vpop.permute.xlu0 %827
  %829 = vrot.lane.b32.xlu0 %v788, 53
  %v830 = vpop.permute.xlu0 %829
  %833 = vrot.lane.b32.xlu0 %v787, 62
  %v834 = vpop.permute.xlu0 %833
  %835 = vrot.lane.b32.xlu0 %v788, 62
  %v836 = vpop.permute.xlu0 %835
  %839 = vrot.lane.b32.xlu0 %v787, 71
  %v840 = vpop.permute.xlu0 %839
  %841 = vrot.lane.b32.xlu0 %v788, 71
  %v842 = vpop.permute.xlu0 %841
  %v845 = vsel %vm163, %v792, %v798
  %v846 = vsel %vm163, %v794, %v800
  %v847 = vsel %vm166, %v845, %v804
  %v848 = vsel %vm166, %v846, %v806
  %v849 = vsel %vm169, %v847, %v810
  %v850 = vsel %vm169, %v848, %v812
  %v851 = vsel %vm172, %v849, %v816
  %v852 = vsel %vm172, %v850, %v818
  %v853 = vsel %vm175, %v851, %v822
  %v854 = vsel %vm175, %v852, %v824
  %v855 = vsel %vm178, %v853, %v828
  %v856 = vsel %vm178, %v854, %v830
  %v857 = vsel %vm181, %v855, %v834
  %v858 = vsel %vm181, %v856, %v836
  %v859 = vsel %vm184, %v857, %v840
  %v860 = vsel %vm184, %v858, %v842
  %v861 = vld [vmem:[%s1 + $0x18] sm:$0x1]
  %v862 = vperm.slane %v861, 0
  %v863 = vmul.f32 %v859, %v862
  %v864 = vmul.f32 %v860, %v862
  %v865 = vadd.f32 %v778, %v863
  %v866 = vadd.f32 %v779, %v864
  %v867 = vld [vmem:[%s1 + $0x19] sm:$0x1]
  %v868 = vperm.slane %v867, 0
  %v869 = vmul.f32 %v859, %v868
  %v870 = vmul.f32 %v860, %v868
  %v871 = vadd.f32 %v784, %v869
  %v872 = vadd.f32 %v785, %v870
  %v873 = vld [vmem:[%s1 + $0x1a] sm:$0x1]
  %v874 = vperm.slane %v873, 0
  %v875 = vmul.f32 %v859, %v874
  %v876 = vmul.f32 %v860, %v874
  %v877 = vadd.f32 %v622, %v875
  %v878 = vadd.f32 %v623, %v876
  %879 = vrot.lane.b32.xlu0 %v787, 9
  %v880 = vpop.permute.xlu0 %879
  %881 = vrot.lane.b32.xlu0 %v788, 9
  %v882 = vpop.permute.xlu0 %881
  %885 = vrot.lane.b32.xlu0 %v787, 18
  %v886 = vpop.permute.xlu0 %885
  %887 = vrot.lane.b32.xlu0 %v788, 18
  %v888 = vpop.permute.xlu0 %887
  %891 = vrot.lane.b32.xlu0 %v787, 27
  %v892 = vpop.permute.xlu0 %891
  %893 = vrot.lane.b32.xlu0 %v788, 27
  %v894 = vpop.permute.xlu0 %893
  %897 = vrot.lane.b32.xlu0 %v787, 36
  %v898 = vpop.permute.xlu0 %897
  %899 = vrot.lane.b32.xlu0 %v788, 36
  %v900 = vpop.permute.xlu0 %899
  %903 = vrot.lane.b32.xlu0 %v787, 45
  %v904 = vpop.permute.xlu0 %903
  %905 = vrot.lane.b32.xlu0 %v788, 45
  %v906 = vpop.permute.xlu0 %905
  %909 = vrot.lane.b32.xlu0 %v787, 54
  %v910 = vpop.permute.xlu0 %909
  %911 = vrot.lane.b32.xlu0 %v788, 54
  %v912 = vpop.permute.xlu0 %911
  %915 = vrot.lane.b32.xlu0 %v787, 63
  %v916 = vpop.permute.xlu0 %915
  %917 = vrot.lane.b32.xlu0 %v788, 63
  %v918 = vpop.permute.xlu0 %917
  %921 = vrot.lane.b32.xlu0 %v787, 72
  %v922 = vpop.permute.xlu0 %921
  %923 = vrot.lane.b32.xlu0 %v788, 72
  %v924 = vpop.permute.xlu0 %923
  %v927 = vsel %vm163, %v787, %v880
  %v928 = vsel %vm163, %v788, %v882
  %v929 = vsel %vm166, %v927, %v886
  %v930 = vsel %vm166, %v928, %v888
  %v931 = vsel %vm169, %v929, %v892
  %v932 = vsel %vm169, %v930, %v894
  %v933 = vsel %vm172, %v931, %v898
  %v934 = vsel %vm172, %v932, %v900
  %v935 = vsel %vm175, %v933, %v904
  %v936 = vsel %vm175, %v934, %v906
  %v937 = vsel %vm178, %v935, %v910
  %v938 = vsel %vm178, %v936, %v912
  %v939 = vsel %vm181, %v937, %v916
  %v940 = vsel %vm181, %v938, %v918
  %v941 = vsel %vm184, %v939, %v922
  %v942 = vsel %vm184, %v940, %v924
  %v943 = vld [vmem:[%s1 + $0x1b] sm:$0x1]
  %v944 = vperm.slane %v943, 0
  %v945 = vmul.f32 %v941, %v944
  %v946 = vmul.f32 %v942, %v944
  %v947 = vadd.f32 %v865, %v945
  %v948 = vadd.f32 %v866, %v946
  %v949 = vld [vmem:[%s1 + $0x1c] sm:$0x1]
  %v950 = vperm.slane %v949, 0
  %v951 = vmul.f32 %v941, %v950
  %v952 = vmul.f32 %v942, %v950
  %v953 = vadd.f32 %v871, %v951
  %v954 = vadd.f32 %v872, %v952
  %v955 = vld [vmem:[%s1 + $0x1d] sm:$0x1]
  %v956 = vperm.slane %v955, 0
  %v957 = vmul.f32 %v941, %v956
  %v958 = vmul.f32 %v942, %v956
  %v959 = vadd.f32 %v877, %v957
  %v960 = vadd.f32 %v878, %v958
  %v961 = vld [vmem:[%s786] sm:$0xff]
  %v962 = vld [vmem:[%s786 + $0x8] sm:$0x1]
  %965 = vrot.lane.b32.xlu0 %v961, 127
  %v966 = vpop.permute.xlu0 %965
  %967 = vrot.lane.b32.xlu0 %v962, 127
  %v968 = vpop.permute.xlu0 %967
  %971 = vrot.lane.b32.xlu0 %v961, 8
  %v972 = vpop.permute.xlu0 %971
  %973 = vrot.lane.b32.xlu0 %v962, 8
  %v974 = vpop.permute.xlu0 %973
  %977 = vrot.lane.b32.xlu0 %v961, 17
  %v978 = vpop.permute.xlu0 %977
  %979 = vrot.lane.b32.xlu0 %v962, 17
  %v980 = vpop.permute.xlu0 %979
  %983 = vrot.lane.b32.xlu0 %v961, 26
  %v984 = vpop.permute.xlu0 %983
  %985 = vrot.lane.b32.xlu0 %v962, 26
  %v986 = vpop.permute.xlu0 %985
  %989 = vrot.lane.b32.xlu0 %v961, 35
  %v990 = vpop.permute.xlu0 %989
  %991 = vrot.lane.b32.xlu0 %v962, 35
  %v992 = vpop.permute.xlu0 %991
  %995 = vrot.lane.b32.xlu0 %v961, 44
  %v996 = vpop.permute.xlu0 %995
  %997 = vrot.lane.b32.xlu0 %v962, 44
  %v998 = vpop.permute.xlu0 %997
  %1001 = vrot.lane.b32.xlu0 %v961, 53
  %v1002 = vpop.permute.xlu0 %1001
  %1003 = vrot.lane.b32.xlu0 %v962, 53
  %v1004 = vpop.permute.xlu0 %1003
  %1007 = vrot.lane.b32.xlu0 %v961, 62
  %v1008 = vpop.permute.xlu0 %1007
  %1009 = vrot.lane.b32.xlu0 %v962, 62
  %v1010 = vpop.permute.xlu0 %1009
  %1013 = vrot.lane.b32.xlu0 %v961, 71
  %v1014 = vpop.permute.xlu0 %1013
  %1015 = vrot.lane.b32.xlu0 %v962, 71
  %v1016 = vpop.permute.xlu0 %1015
  %v1019 = vsel %vm163, %v966, %v972
  %v1020 = vsel %vm163, %v968, %v974
  %v1021 = vsel %vm166, %v1019, %v978
  %v1022 = vsel %vm166, %v1020, %v980
  %v1023 = vsel %vm169, %v1021, %v984
  %v1024 = vsel %vm169, %v1022, %v986
  %v1025 = vsel %vm172, %v1023, %v990
  %v1026 = vsel %vm172, %v1024, %v992
  %v1027 = vsel %vm175, %v1025, %v996
  %v1028 = vsel %vm175, %v1026, %v998
  %v1029 = vsel %vm178, %v1027, %v1002
  %v1030 = vsel %vm178, %v1028, %v1004
  %v1031 = vsel %vm181, %v1029, %v1008
  %v1032 = vsel %vm181, %v1030, %v1010
  %v1033 = vsel %vm184, %v1031, %v1014
  %v1034 = vsel %vm184, %v1032, %v1016
  %v1035 = vld [vmem:[%s1 + $0x1e] sm:$0x1]
  %v1036 = vperm.slane %v1035, 0
  %v1037 = vmul.f32 %v1033, %v1036
  %v1038 = vmul.f32 %v1034, %v1036
  %v1039 = vadd.f32 %v947, %v1037
  %v1040 = vadd.f32 %v948, %v1038
  %v1041 = vld [vmem:[%s1 + $0x1f] sm:$0x1]
  %v1042 = vperm.slane %v1041, 0
  %v1043 = vmul.f32 %v1033, %v1042
  %v1044 = vmul.f32 %v1034, %v1042
  %v1045 = vadd.f32 %v953, %v1043
  %v1046 = vadd.f32 %v954, %v1044
  %1047 = vrot.lane.b32.xlu0 %v961, 9
  %v1048 = vpop.permute.xlu0 %1047
  %1049 = vrot.lane.b32.xlu0 %v962, 9
  %v1050 = vpop.permute.xlu0 %1049
  %1053 = vrot.lane.b32.xlu0 %v961, 18
  %v1054 = vpop.permute.xlu0 %1053
  %1055 = vrot.lane.b32.xlu0 %v962, 18
  %v1056 = vpop.permute.xlu0 %1055
  %1059 = vrot.lane.b32.xlu0 %v961, 27
  %v1060 = vpop.permute.xlu0 %1059
  %1061 = vrot.lane.b32.xlu0 %v962, 27
  %v1062 = vpop.permute.xlu0 %1061
  %1065 = vrot.lane.b32.xlu0 %v961, 36
  %v1066 = vpop.permute.xlu0 %1065
  %1067 = vrot.lane.b32.xlu0 %v962, 36
  %v1068 = vpop.permute.xlu0 %1067
  %1071 = vrot.lane.b32.xlu0 %v961, 45
  %v1072 = vpop.permute.xlu0 %1071
  %1073 = vrot.lane.b32.xlu0 %v962, 45
  %v1074 = vpop.permute.xlu0 %1073
  %1077 = vrot.lane.b32.xlu0 %v961, 54
  %v1078 = vpop.permute.xlu0 %1077
  %1079 = vrot.lane.b32.xlu0 %v962, 54
  %v1080 = vpop.permute.xlu0 %1079
  %1083 = vrot.lane.b32.xlu0 %v961, 63
  %v1084 = vpop.permute.xlu0 %1083
  %1085 = vrot.lane.b32.xlu0 %v962, 63
  %v1086 = vpop.permute.xlu0 %1085
  %1089 = vrot.lane.b32.xlu0 %v961, 72
  %v1090 = vpop.permute.xlu0 %1089
  %1091 = vrot.lane.b32.xlu0 %v962, 72
  %v1092 = vpop.permute.xlu0 %1091
  %v1095 = vsel %vm163, %v961, %v1048
  %v1096 = vsel %vm163, %v962, %v1050
  %v1097 = vsel %vm166, %v1095, %v1054
  %v1098 = vsel %vm166, %v1096, %v1056
  %v1099 = vsel %vm169, %v1097, %v1060
  %v1100 = vsel %vm169, %v1098, %v1062
  %v1101 = vsel %vm172, %v1099, %v1066
  %v1102 = vsel %vm172, %v1100, %v1068
  %v1103 = vsel %vm175, %v1101, %v1072
  %v1104 = vsel %vm175, %v1102, %v1074
  %v1105 = vsel %vm178, %v1103, %v1078
  %v1106 = vsel %vm178, %v1104, %v1080
  %v1107 = vsel %vm181, %v1105, %v1084
  %v1108 = vsel %vm181, %v1106, %v1086
  %v1109 = vsel %vm184, %v1107, %v1090
  %v1110 = vsel %vm184, %v1108, %v1092
  %v1111 = vld [vmem:[%s1 + $0x21] sm:$0x1]
  %v1112 = vperm.slane %v1111, 0
  %v1113 = vmul.f32 %v1109, %v1112
  %v1114 = vmul.f32 %v1110, %v1112
  %v1115 = vadd.f32 %v1039, %v1113
  %v1116 = vadd.f32 %v1040, %v1114
  %v1117 = vld [vmem:[%s1 + $0x22] sm:$0x1]
  %v1118 = vperm.slane %v1117, 0
  %v1119 = vmul.f32 %v1109, %v1118
  %v1120 = vmul.f32 %v1110, %v1118
  %v1121 = vadd.f32 %v1045, %v1119
  %v1122 = vadd.f32 %v1046, %v1120
  %s1123 = scalar_lea.vmem [#allocation2], 48
  %v1124 = vld [vmem:[%s1123 + $0x1] sm:$0xff]
  %v1125 = vld [vmem:[%s1123 + $0x9] sm:$0x1]
  %1128 = vrot.lane.b32.xlu0 %v1124, 127
  %v1129 = vpop.permute.xlu0 %1128
  %1130 = vrot.lane.b32.xlu0 %v1125, 127
  %v1131 = vpop.permute.xlu0 %1130
  %1134 = vrot.lane.b32.xlu0 %v1124, 8
  %v1135 = vpop.permute.xlu0 %1134
  %1136 = vrot.lane.b32.xlu0 %v1125, 8
  %v1137 = vpop.permute.xlu0 %1136
  %1140 = vrot.lane.b32.xlu0 %v1124, 17
  %v1141 = vpop.permute.xlu0 %1140
  %1142 = vrot.lane.b32.xlu0 %v1125, 17
  %v1143 = vpop.permute.xlu0 %1142
  %1146 = vrot.lane.b32.xlu0 %v1124, 26
  %v1147 = vpop.permute.xlu0 %1146
  %1148 = vrot.lane.b32.xlu0 %v1125, 26
  %v1149 = vpop.permute.xlu0 %1148
  %1152 = vrot.lane.b32.xlu0 %v1124, 35
  %v1153 = vpop.permute.xlu0 %1152
  %1154 = vrot.lane.b32.xlu0 %v1125, 35
  %v1155 = vpop.permute.xlu0 %1154
  %1158 = vrot.lane.b32.xlu0 %v1124, 44
  %v1159 = vpop.permute.xlu0 %1158
  %1160 = vrot.lane.b32.xlu0 %v1125, 44
  %v1161 = vpop.permute.xlu0 %1160
  %1164 = vrot.lane.b32.xlu0 %v1124, 53
  %v1165 = vpop.permute.xlu0 %1164
  %1166 = vrot.lane.b32.xlu0 %v1125, 53
  %v1167 = vpop.permute.xlu0 %1166
  %1170 = vrot.lane.b32.xlu0 %v1124, 62
  %v1171 = vpop.permute.xlu0 %1170
  %1172 = vrot.lane.b32.xlu0 %v1125, 62
  %v1173 = vpop.permute.xlu0 %1172
  %1176 = vrot.lane.b32.xlu0 %v1124, 71
  %v1177 = vpop.permute.xlu0 %1176
  %1178 = vrot.lane.b32.xlu0 %v1125, 71
  %v1179 = vpop.permute.xlu0 %1178
  %v1182 = vsel %vm163, %v1129, %v1135
  %v1183 = vsel %vm163, %v1131, %v1137
  %v1184 = vsel %vm166, %v1182, %v1141
  %v1185 = vsel %vm166, %v1183, %v1143
  %v1186 = vsel %vm169, %v1184, %v1147
  %v1187 = vsel %vm169, %v1185, %v1149
  %v1188 = vsel %vm172, %v1186, %v1153
  %v1189 = vsel %vm172, %v1187, %v1155
  %v1190 = vsel %vm175, %v1188, %v1159
  %v1191 = vsel %vm175, %v1189, %v1161
  %v1192 = vsel %vm178, %v1190, %v1165
  %v1193 = vsel %vm178, %v1191, %v1167
  %v1194 = vsel %vm181, %v1192, %v1171
  %v1195 = vsel %vm181, %v1193, %v1173
  %v1196 = vsel %vm184, %v1194, %v1177
  %v1197 = vsel %vm184, %v1195, %v1179
  %v1198 = vld [vmem:[%s1 + $0x24] sm:$0x1]
  %v1199 = vperm.slane %v1198, 0
  %v1200 = vmul.f32 %v1196, %v1199
  %v1201 = vmul.f32 %v1197, %v1199
  %v1202 = vadd.f32 %v1115, %v1200
  %v1203 = vadd.f32 %v1116, %v1201
  %v1204 = vld [vmem:[%s1 + $0x25] sm:$0x1]
  %v1205 = vperm.slane %v1204, 0
  %v1206 = vmul.f32 %v1196, %v1205
  %v1207 = vmul.f32 %v1197, %v1205
  %v1208 = vadd.f32 %v1121, %v1206
  %v1209 = vadd.f32 %v1122, %v1207
  %v1210 = vld [vmem:[%s1 + $0x26] sm:$0x1]
  %v1211 = vperm.slane %v1210, 0
  %v1212 = vmul.f32 %v1196, %v1211
  %v1213 = vmul.f32 %v1197, %v1211
  %v1214 = vadd.f32 %v959, %v1212
  %v1215 = vadd.f32 %v960, %v1213
  %1216 = vrot.lane.b32.xlu0 %v1124, 9
  %v1217 = vpop.permute.xlu0 %1216
  %1218 = vrot.lane.b32.xlu0 %v1125, 9
  %v1219 = vpop.permute.xlu0 %1218
  %1222 = vrot.lane.b32.xlu0 %v1124, 18
  %v1223 = vpop.permute.xlu0 %1222
  %1224 = vrot.lane.b32.xlu0 %v1125, 18
  %v1225 = vpop.permute.xlu0 %1224
  %1228 = vrot.lane.b32.xlu0 %v1124, 27
  %v1229 = vpop.permute.xlu0 %1228
  %1230 = vrot.lane.b32.xlu0 %v1125, 27
  %v1231 = vpop.permute.xlu0 %1230
  %1234 = vrot.lane.b32.xlu0 %v1124, 36
  %v1235 = vpop.permute.xlu0 %1234
  %1236 = vrot.lane.b32.xlu0 %v1125, 36
  %v1237 = vpop.permute.xlu0 %1236
  %1240 = vrot.lane.b32.xlu0 %v1124, 45
  %v1241 = vpop.permute.xlu0 %1240
  %1242 = vrot.lane.b32.xlu0 %v1125, 45
  %v1243 = vpop.permute.xlu0 %1242
  %1246 = vrot.lane.b32.xlu0 %v1124, 54
  %v1247 = vpop.permute.xlu0 %1246
  %1248 = vrot.lane.b32.xlu0 %v1125, 54
  %v1249 = vpop.permute.xlu0 %1248
  %1252 = vrot.lane.b32.xlu0 %v1124, 63
  %v1253 = vpop.permute.xlu0 %1252
  %1254 = vrot.lane.b32.xlu0 %v1125, 63
  %v1255 = vpop.permute.xlu0 %1254
  %1258 = vrot.lane.b32.xlu0 %v1124, 72
  %v1259 = vpop.permute.xlu0 %1258
  %1260 = vrot.lane.b32.xlu0 %v1125, 72
  %v1261 = vpop.permute.xlu0 %1260
  %v1264 = vsel %vm163, %v1124, %v1217
  %v1265 = vsel %vm163, %v1125, %v1219
  %v1266 = vsel %vm166, %v1264, %v1223
  %v1267 = vsel %vm166, %v1265, %v1225
  %v1268 = vsel %vm169, %v1266, %v1229
  %v1269 = vsel %vm169, %v1267, %v1231
  %v1270 = vsel %vm172, %v1268, %v1235
  %v1271 = vsel %vm172, %v1269, %v1237
  %v1272 = vsel %vm175, %v1270, %v1241
  %v1273 = vsel %vm175, %v1271, %v1243
  %v1274 = vsel %vm178, %v1272, %v1247
  %v1275 = vsel %vm178, %v1273, %v1249
  %v1276 = vsel %vm181, %v1274, %v1253
  %v1277 = vsel %vm181, %v1275, %v1255
  %v1278 = vsel %vm184, %v1276, %v1259
  %v1279 = vsel %vm184, %v1277, %v1261
  %v1280 = vld [vmem:[%s1 + $0x27] sm:$0x1]
  %v1281 = vperm.slane %v1280, 0
  %v1282 = vmul.f32 %v1278, %v1281
  %v1283 = vmul.f32 %v1279, %v1281
  %v1284 = vadd.f32 %v1202, %v1282
  %v1285 = vadd.f32 %v1203, %v1283
  %v1286 = vld [vmem:[%s1 + $0x28] sm:$0x1]
  %v1287 = vperm.slane %v1286, 0
  %v1288 = vmul.f32 %v1278, %v1287
  %v1289 = vmul.f32 %v1279, %v1287
  %v1290 = vadd.f32 %v1208, %v1288
  %v1291 = vadd.f32 %v1209, %v1289
  %v1292 = vld [vmem:[%s1 + $0x29] sm:$0x1]
  %v1293 = vperm.slane %v1292, 0
  %v1294 = vmul.f32 %v1278, %v1293
  %v1295 = vmul.f32 %v1279, %v1293
  %v1296 = vadd.f32 %v1214, %v1294
  %v1297 = vadd.f32 %v1215, %v1295
  %v1298 = vld [vmem:[%s1123] sm:$0xff]
  %v1299 = vld [vmem:[%s1123 + $0x8] sm:$0x1]
  %1302 = vrot.lane.b32.xlu0 %v1298, 127
  %v1303 = vpop.permute.xlu0 %1302
  %1304 = vrot.lane.b32.xlu0 %v1299, 127
  %v1305 = vpop.permute.xlu0 %1304
  %1308 = vrot.lane.b32.xlu0 %v1298, 8
  %v1309 = vpop.permute.xlu0 %1308
  %1310 = vrot.lane.b32.xlu0 %v1299, 8
  %v1311 = vpop.permute.xlu0 %1310
  %1314 = vrot.lane.b32.xlu0 %v1298, 17
  %v1315 = vpop.permute.xlu0 %1314
  %1316 = vrot.lane.b32.xlu0 %v1299, 17
  %v1317 = vpop.permute.xlu0 %1316
  %1320 = vrot.lane.b32.xlu0 %v1298, 26
  %v1321 = vpop.permute.xlu0 %1320
  %1322 = vrot.lane.b32.xlu0 %v1299, 26
  %v1323 = vpop.permute.xlu0 %1322
  %1326 = vrot.lane.b32.xlu0 %v1298, 35
  %v1327 = vpop.permute.xlu0 %1326
  %1328 = vrot.lane.b32.xlu0 %v1299, 35
  %v1329 = vpop.permute.xlu0 %1328
  %1332 = vrot.lane.b32.xlu0 %v1298, 44
  %v1333 = vpop.permute.xlu0 %1332
  %1334 = vrot.lane.b32.xlu0 %v1299, 44
  %v1335 = vpop.permute.xlu0 %1334
  %1338 = vrot.lane.b32.xlu0 %v1298, 53
  %v1339 = vpop.permute.xlu0 %1338
  %1340 = vrot.lane.b32.xlu0 %v1299, 53
  %v1341 = vpop.permute.xlu0 %1340
  %1344 = vrot.lane.b32.xlu0 %v1298, 62
  %v1345 = vpop.permute.xlu0 %1344
  %1346 = vrot.lane.b32.xlu0 %v1299, 62
  %v1347 = vpop.permute.xlu0 %1346
  %1350 = vrot.lane.b32.xlu0 %v1298, 71
  %v1351 = vpop.permute.xlu0 %1350
  %1352 = vrot.lane.b32.xlu0 %v1299, 71
  %v1353 = vpop.permute.xlu0 %1352
  %v1356 = vsel %vm163, %v1303, %v1309
  %v1357 = vsel %vm163, %v1305, %v1311
  %v1358 = vsel %vm166, %v1356, %v1315
  %v1359 = vsel %vm166, %v1357, %v1317
  %v1360 = vsel %vm169, %v1358, %v1321
  %v1361 = vsel %vm169, %v1359, %v1323
  %v1362 = vsel %vm172, %v1360, %v1327
  %v1363 = vsel %vm172, %v1361, %v1329
  %v1364 = vsel %vm175, %v1362, %v1333
  %v1365 = vsel %vm175, %v1363, %v1335
  %v1366 = vsel %vm178, %v1364, %v1339
  %v1367 = vsel %vm178, %v1365, %v1341
  %v1368 = vsel %vm181, %v1366, %v1345
  %v1369 = vsel %vm181, %v1367, %v1347
  %v1370 = vsel %vm184, %v1368, %v1351
  %v1371 = vsel %vm184, %v1369, %v1353
  %v1372 = vld [vmem:[%s1 + $0x2a] sm:$0x1]
  %v1373 = vperm.slane %v1372, 0
  %v1374 = vmul.f32 %v1370, %v1373
  %v1375 = vmul.f32 %v1371, %v1373
  %v1376 = vadd.f32 %v1284, %v1374
  %v1377 = vadd.f32 %v1285, %v1375
  %v1378 = vld [vmem:[%s1 + $0x2b] sm:$0x1]
  %v1379 = vperm.slane %v1378, 0
  %v1380 = vmul.f32 %v1370, %v1379
  %v1381 = vmul.f32 %v1371, %v1379
  %v1382 = vadd.f32 %v1290, %v1380
  %v1383 = vadd.f32 %v1291, %v1381
  %1384 = vrot.lane.b32.xlu0 %v1298, 9
  %v1385 = vpop.permute.xlu0 %1384
  %1386 = vrot.lane.b32.xlu0 %v1299, 9
  %v1387 = vpop.permute.xlu0 %1386
  %1390 = vrot.lane.b32.xlu0 %v1298, 18
  %v1391 = vpop.permute.xlu0 %1390
  %1392 = vrot.lane.b32.xlu0 %v1299, 18
  %v1393 = vpop.permute.xlu0 %1392
  %1396 = vrot.lane.b32.xlu0 %v1298, 27
  %v1397 = vpop.permute.xlu0 %1396
  %1398 = vrot.lane.b32.xlu0 %v1299, 27
  %v1399 = vpop.permute.xlu0 %1398
  %1402 = vrot.lane.b32.xlu0 %v1298, 36
  %v1403 = vpop.permute.xlu0 %1402
  %1404 = vrot.lane.b32.xlu0 %v1299, 36
  %v1405 = vpop.permute.xlu0 %1404
  %1408 = vrot.lane.b32.xlu0 %v1298, 45
  %v1409 = vpop.permute.xlu0 %1408
  %1410 = vrot.lane.b32.xlu0 %v1299, 45
  %v1411 = vpop.permute.xlu0 %1410
  %1414 = vrot.lane.b32.xlu0 %v1298, 54
  %v1415 = vpop.permute.xlu0 %1414
  %1416 = vrot.lane.b32.xlu0 %v1299, 54
  %v1417 = vpop.permute.xlu0 %1416
  %1420 = vrot.lane.b32.xlu0 %v1298, 63
  %v1421 = vpop.permute.xlu0 %1420
  %1422 = vrot.lane.b32.xlu0 %v1299, 63
  %v1423 = vpop.permute.xlu0 %1422
  %1426 = vrot.lane.b32.xlu0 %v1298, 72
  %v1427 = vpop.permute.xlu0 %1426
  %1428 = vrot.lane.b32.xlu0 %v1299, 72
  %v1429 = vpop.permute.xlu0 %1428
  %v1432 = vsel %vm163, %v1298, %v1385
  %v1433 = vsel %vm163, %v1299, %v1387
  %v1434 = vsel %vm166, %v1432, %v1391
  %v1435 = vsel %vm166, %v1433, %v1393
  %v1436 = vsel %vm169, %v1434, %v1397
  %v1437 = vsel %vm169, %v1435, %v1399
  %v1438 = vsel %vm172, %v1436, %v1403
  %v1439 = vsel %vm172, %v1437, %v1405
  %v1440 = vsel %vm175, %v1438, %v1409
  %v1441 = vsel %vm175, %v1439, %v1411
  %v1442 = vsel %vm178, %v1440, %v1415
  %v1443 = vsel %vm178, %v1441, %v1417
  %v1444 = vsel %vm181, %v1442, %v1421
  %v1445 = vsel %vm181, %v1443, %v1423
  %v1446 = vsel %vm184, %v1444, %v1427
  %v1447 = vsel %vm184, %v1445, %v1429
  %v1448 = vld [vmem:[%s1 + $0x2d] sm:$0x1]
  %v1449 = vperm.slane %v1448, 0
  %v1450 = vmul.f32 %v1446, %v1449
  %v1451 = vmul.f32 %v1447, %v1449
  %v1452 = vadd.f32 %v1376, %v1450
  %v1453 = vadd.f32 %v1377, %v1451
  %v1454 = vld [vmem:[%s1 + $0x2e] sm:$0x1]
  %v1455 = vperm.slane %v1454, 0
  %v1456 = vmul.f32 %v1446, %v1455
  %v1457 = vmul.f32 %v1447, %v1455
  %v1458 = vadd.f32 %v1382, %v1456
  %v1459 = vadd.f32 %v1383, %v1457
  %s1460 = scalar_lea.vmem [#allocation2], 64
  %v1461 = vld [vmem:[%s1460 + $0x1] sm:$0xff]
  %v1462 = vld [vmem:[%s1460 + $0x9] sm:$0x1]
  %1465 = vrot.lane.b32.xlu0 %v1461, 127
  %v1466 = vpop.permute.xlu0 %1465
  %1467 = vrot.lane.b32.xlu0 %v1462, 127
  %v1468 = vpop.permute.xlu0 %1467
  %1471 = vrot.lane.b32.xlu0 %v1461, 8
  %v1472 = vpop.permute.xlu0 %1471
  %1473 = vrot.lane.b32.xlu0 %v1462, 8
  %v1474 = vpop.permute.xlu0 %1473
  %1477 = vrot.lane.b32.xlu0 %v1461, 17
  %v1478 = vpop.permute.xlu0 %1477
  %1479 = vrot.lane.b32.xlu0 %v1462, 17
  %v1480 = vpop.permute.xlu0 %1479
  %1483 = vrot.lane.b32.xlu0 %v1461, 26
  %v1484 = vpop.permute.xlu0 %1483
  %1485 = vrot.lane.b32.xlu0 %v1462, 26
  %v1486 = vpop.permute.xlu0 %1485
  %1489 = vrot.lane.b32.xlu0 %v1461, 35
  %v1490 = vpop.permute.xlu0 %1489
  %1491 = vrot.lane.b32.xlu0 %v1462, 35
  %v1492 = vpop.permute.xlu0 %1491
  %1495 = vrot.lane.b32.xlu0 %v1461, 44
  %v1496 = vpop.permute.xlu0 %1495
  %1497 = vrot.lane.b32.xlu0 %v1462, 44
  %v1498 = vpop.permute.xlu0 %1497
  %1501 = vrot.lane.b32.xlu0 %v1461, 53
  %v1502 = vpop.permute.xlu0 %1501
  %1503 = vrot.lane.b32.xlu0 %v1462, 53
  %v1504 = vpop.permute.xlu0 %1503
  %1507 = vrot.lane.b32.xlu0 %v1461, 62
  %v1508 = vpop.permute.xlu0 %1507
  %1509 = vrot.lane.b32.xlu0 %v1462, 62
  %v1510 = vpop.permute.xlu0 %1509
  %1513 = vrot.lane.b32.xlu0 %v1461, 71
  %v1514 = vpop.permute.xlu0 %1513
  %1515 = vrot.lane.b32.xlu0 %v1462, 71
  %v1516 = vpop.permute.xlu0 %1515
  %v1519 = vsel %vm163, %v1466, %v1472
  %v1520 = vsel %vm163, %v1468, %v1474
  %v1521 = vsel %vm166, %v1519, %v1478
  %v1522 = vsel %vm166, %v1520, %v1480
  %v1523 = vsel %vm169, %v1521, %v1484
  %v1524 = vsel %vm169, %v1522, %v1486
  %v1525 = vsel %vm172, %v1523, %v1490
  %v1526 = vsel %vm172, %v1524, %v1492
  %v1527 = vsel %vm175, %v1525, %v1496
  %v1528 = vsel %vm175, %v1526, %v1498
  %v1529 = vsel %vm178, %v1527, %v1502
  %v1530 = vsel %vm178, %v1528, %v1504
  %v1531 = vsel %vm181, %v1529, %v1508
  %v1532 = vsel %vm181, %v1530, %v1510
  %v1533 = vsel %vm184, %v1531, %v1514
  %v1534 = vsel %vm184, %v1532, %v1516
  %v1535 = vld [vmem:[%s1 + $0x30] sm:$0x1]
  %v1536 = vperm.slane %v1535, 0
  %v1537 = vmul.f32 %v1533, %v1536
  %v1538 = vmul.f32 %v1534, %v1536
  %v1539 = vadd.f32 %v1452, %v1537
  %v1540 = vadd.f32 %v1453, %v1538
  %v1541 = vld [vmem:[%s1 + $0x31] sm:$0x1]
  %v1542 = vperm.slane %v1541, 0
  %v1543 = vmul.f32 %v1533, %v1542
  %v1544 = vmul.f32 %v1534, %v1542
  %v1545 = vadd.f32 %v1458, %v1543
  %v1546 = vadd.f32 %v1459, %v1544
  %v1547 = vld [vmem:[%s1 + $0x32] sm:$0x1]
  %v1548 = vperm.slane %v1547, 0
  %v1549 = vmul.f32 %v1533, %v1548
  %v1550 = vmul.f32 %v1534, %v1548
  %v1551 = vadd.f32 %v1296, %v1549
  %v1552 = vadd.f32 %v1297, %v1550
  %1553 = vrot.lane.b32.xlu0 %v1461, 9
  %v1554 = vpop.permute.xlu0 %1553
  %1555 = vrot.lane.b32.xlu0 %v1462, 9
  %v1556 = vpop.permute.xlu0 %1555
  %1559 = vrot.lane.b32.xlu0 %v1461, 18
  %v1560 = vpop.permute.xlu0 %1559
  %1561 = vrot.lane.b32.xlu0 %v1462, 18
  %v1562 = vpop.permute.xlu0 %1561
  %1565 = vrot.lane.b32.xlu0 %v1461, 27
  %v1566 = vpop.permute.xlu0 %1565
  %1567 = vrot.lane.b32.xlu0 %v1462, 27
  %v1568 = vpop.permute.xlu0 %1567
  %1571 = vrot.lane.b32.xlu0 %v1461, 36
  %v1572 = vpop.permute.xlu0 %1571
  %1573 = vrot.lane.b32.xlu0 %v1462, 36
  %v1574 = vpop.permute.xlu0 %1573
  %1577 = vrot.lane.b32.xlu0 %v1461, 45
  %v1578 = vpop.permute.xlu0 %1577
  %1579 = vrot.lane.b32.xlu0 %v1462, 45
  %v1580 = vpop.permute.xlu0 %1579
  %1583 = vrot.lane.b32.xlu0 %v1461, 54
  %v1584 = vpop.permute.xlu0 %1583
  %1585 = vrot.lane.b32.xlu0 %v1462, 54
  %v1586 = vpop.permute.xlu0 %1585
  %1589 = vrot.lane.b32.xlu0 %v1461, 63
  %v1590 = vpop.permute.xlu0 %1589
  %1591 = vrot.lane.b32.xlu0 %v1462, 63
  %v1592 = vpop.permute.xlu0 %1591
  %1595 = vrot.lane.b32.xlu0 %v1461, 72
  %v1596 = vpop.permute.xlu0 %1595
  %1597 = vrot.lane.b32.xlu0 %v1462, 72
  %v1598 = vpop.permute.xlu0 %1597
  %v1601 = vsel %vm163, %v1461, %v1554
  %v1602 = vsel %vm163, %v1462, %v1556
  %v1603 = vsel %vm166, %v1601, %v1560
  %v1604 = vsel %vm166, %v1602, %v1562
  %v1605 = vsel %vm169, %v1603, %v1566
  %v1606 = vsel %vm169, %v1604, %v1568
  %v1607 = vsel %vm172, %v1605, %v1572
  %v1608 = vsel %vm172, %v1606, %v1574
  %v1609 = vsel %vm175, %v1607, %v1578
  %v1610 = vsel %vm175, %v1608, %v1580
  %v1611 = vsel %vm178, %v1609, %v1584
  %v1612 = vsel %vm178, %v1610, %v1586
  %v1613 = vsel %vm181, %v1611, %v1590
  %v1614 = vsel %vm181, %v1612, %v1592
  %v1615 = vsel %vm184, %v1613, %v1596
  %v1616 = vsel %vm184, %v1614, %v1598
  %v1617 = vld [vmem:[%s1 + $0x33] sm:$0x1]
  %v1618 = vperm.slane %v1617, 0
  %v1619 = vmul.f32 %v1615, %v1618
  %v1620 = vmul.f32 %v1616, %v1618
  %v1621 = vadd.f32 %v1539, %v1619
  %v1622 = vadd.f32 %v1540, %v1620
  %v1623 = vld [vmem:[%s1 + $0x34] sm:$0x1]
  %v1624 = vperm.slane %v1623, 0
  %v1625 = vmul.f32 %v1615, %v1624
  %v1626 = vmul.f32 %v1616, %v1624
  %v1627 = vadd.f32 %v1545, %v1625
  %v1628 = vadd.f32 %v1546, %v1626
  %v1629 = vld [vmem:[%s1 + $0x35] sm:$0x1]
  %v1630 = vperm.slane %v1629, 0
  %v1631 = vmul.f32 %v1615, %v1630
  %v1632 = vmul.f32 %v1616, %v1630
  %v1633 = vadd.f32 %v1551, %v1631
  %v1634 = vadd.f32 %v1552, %v1632
  %v1635 = vld [vmem:[%s1460] sm:$0xff]
  %v1636 = vld [vmem:[%s1460 + $0x8] sm:$0x1]
  %1639 = vrot.lane.b32.xlu0 %v1635, 127
  %v1640 = vpop.permute.xlu0 %1639
  %1641 = vrot.lane.b32.xlu0 %v1636, 127
  %v1642 = vpop.permute.xlu0 %1641
  %1645 = vrot.lane.b32.xlu0 %v1635, 8
  %v1646 = vpop.permute.xlu0 %1645
  %1647 = vrot.lane.b32.xlu0 %v1636, 8
  %v1648 = vpop.permute.xlu0 %1647
  %1651 = vrot.lane.b32.xlu0 %v1635, 17
  %v1652 = vpop.permute.xlu0 %1651
  %1653 = vrot.lane.b32.xlu0 %v1636, 17
  %v1654 = vpop.permute.xlu0 %1653
  %1657 = vrot.lane.b32.xlu0 %v1635, 26
  %v1658 = vpop.permute.xlu0 %1657
  %1659 = vrot.lane.b32.xlu0 %v1636, 26
  %v1660 = vpop.permute.xlu0 %1659
  %1663 = vrot.lane.b32.xlu0 %v1635, 35
  %v1664 = vpop.permute.xlu0 %1663
  %1665 = vrot.lane.b32.xlu0 %v1636, 35
  %v1666 = vpop.permute.xlu0 %1665
  %1669 = vrot.lane.b32.xlu0 %v1635, 44
  %v1670 = vpop.permute.xlu0 %1669
  %1671 = vrot.lane.b32.xlu0 %v1636, 44
  %v1672 = vpop.permute.xlu0 %1671
  %1675 = vrot.lane.b32.xlu0 %v1635, 53
  %v1676 = vpop.permute.xlu0 %1675
  %1677 = vrot.lane.b32.xlu0 %v1636, 53
  %v1678 = vpop.permute.xlu0 %1677
  %1681 = vrot.lane.b32.xlu0 %v1635, 62
  %v1682 = vpop.permute.xlu0 %1681
  %1683 = vrot.lane.b32.xlu0 %v1636, 62
  %v1684 = vpop.permute.xlu0 %1683
  %1687 = vrot.lane.b32.xlu0 %v1635, 71
  %v1688 = vpop.permute.xlu0 %1687
  %1689 = vrot.lane.b32.xlu0 %v1636, 71
  %v1690 = vpop.permute.xlu0 %1689
  %v1693 = vsel %vm163, %v1640, %v1646
  %v1694 = vsel %vm163, %v1642, %v1648
  %v1695 = vsel %vm166, %v1693, %v1652
  %v1696 = vsel %vm166, %v1694, %v1654
  %v1697 = vsel %vm169, %v1695, %v1658
  %v1698 = vsel %vm169, %v1696, %v1660
  %v1699 = vsel %vm172, %v1697, %v1664
  %v1700 = vsel %vm172, %v1698, %v1666
  %v1701 = vsel %vm175, %v1699, %v1670
  %v1702 = vsel %vm175, %v1700, %v1672
  %v1703 = vsel %vm178, %v1701, %v1676
  %v1704 = vsel %vm178, %v1702, %v1678
  %v1705 = vsel %vm181, %v1703, %v1682
  %v1706 = vsel %vm181, %v1704, %v1684
  %v1707 = vsel %vm184, %v1705, %v1688
  %v1708 = vsel %vm184, %v1706, %v1690
  %v1709 = vld [vmem:[%s1 + $0x36] sm:$0x1]
  %v1710 = vperm.slane %v1709, 0
  %v1711 = vmul.f32 %v1707, %v1710
  %v1712 = vmul.f32 %v1708, %v1710
  %v1713 = vadd.f32 %v1621, %v1711
  %v1714 = vadd.f32 %v1622, %v1712
  %v1715 = vld [vmem:[%s1 + $0x37] sm:$0x1]
  %v1716 = vperm.slane %v1715, 0
  %v1717 = vmul.f32 %v1707, %v1716
  %v1718 = vmul.f32 %v1708, %v1716
  %v1719 = vadd.f32 %v1627, %v1717
  %v1720 = vadd.f32 %v1628, %v1718
  %1721 = vrot.lane.b32.xlu0 %v1635, 9
  %v1722 = vpop.permute.xlu0 %1721
  %1723 = vrot.lane.b32.xlu0 %v1636, 9
  %v1724 = vpop.permute.xlu0 %1723
  %1727 = vrot.lane.b32.xlu0 %v1635, 18
  %v1728 = vpop.permute.xlu0 %1727
  %1729 = vrot.lane.b32.xlu0 %v1636, 18
  %v1730 = vpop.permute.xlu0 %1729
  %1733 = vrot.lane.b32.xlu0 %v1635, 27
  %v1734 = vpop.permute.xlu0 %1733
  %1735 = vrot.lane.b32.xlu0 %v1636, 27
  %v1736 = vpop.permute.xlu0 %1735
  %1739 = vrot.lane.b32.xlu0 %v1635, 36
  %v1740 = vpop.permute.xlu0 %1739
  %1741 = vrot.lane.b32.xlu0 %v1636, 36
  %v1742 = vpop.permute.xlu0 %1741
  %1745 = vrot.lane.b32.xlu0 %v1635, 45
  %v1746 = vpop.permute.xlu0 %1745
  %1747 = vrot.lane.b32.xlu0 %v1636, 45
  %v1748 = vpop.permute.xlu0 %1747
  %1751 = vrot.lane.b32.xlu0 %v1635, 54
  %v1752 = vpop.permute.xlu0 %1751
  %1753 = vrot.lane.b32.xlu0 %v1636, 54
  %v1754 = vpop.permute.xlu0 %1753
  %1757 = vrot.lane.b32.xlu0 %v1635, 63
  %v1758 = vpop.permute.xlu0 %1757
  %1759 = vrot.lane.b32.xlu0 %v1636, 63
  %v1760 = vpop.permute.xlu0 %1759
  %1763 = vrot.lane.b32.xlu0 %v1635, 72
  %v1764 = vpop.permute.xlu0 %1763
  %1765 = vrot.lane.b32.xlu0 %v1636, 72
  %v1766 = vpop.permute.xlu0 %1765
  %v1769 = vsel %vm163, %v1635, %v1722
  %v1770 = vsel %vm163, %v1636, %v1724
  %v1771 = vsel %vm166, %v1769, %v1728
  %v1772 = vsel %vm166, %v1770, %v1730
  %v1773 = vsel %vm169, %v1771, %v1734
  %v1774 = vsel %vm169, %v1772, %v1736
  %v1775 = vsel %vm172, %v1773, %v1740
  %v1776 = vsel %vm172, %v1774, %v1742
  %v1777 = vsel %vm175, %v1775, %v1746
  %v1778 = vsel %vm175, %v1776, %v1748
  %v1779 = vsel %vm178, %v1777, %v1752
  %v1780 = vsel %vm178, %v1778, %v1754
  %v1781 = vsel %vm181, %v1779, %v1758
  %v1782 = vsel %vm181, %v1780, %v1760
  %v1783 = vsel %vm184, %v1781, %v1764
  %v1784 = vsel %vm184, %v1782, %v1766
  %v1785 = vld [vmem:[%s1 + $0x39] sm:$0x1]
  %v1786 = vperm.slane %v1785, 0
  %v1787 = vmul.f32 %v1783, %v1786
  %v1788 = vmul.f32 %v1784, %v1786
  %v1789 = vadd.f32 %v1713, %v1787
  %v1790 = vadd.f32 %v1714, %v1788
  %v1791 = vld [vmem:[%s1 + $0x3a] sm:$0x1]
  %v1792 = vperm.slane %v1791, 0
  %v1793 = vmul.f32 %v1783, %v1792
  %v1794 = vmul.f32 %v1784, %v1792
  %v1795 = vadd.f32 %v1719, %v1793
  %v1796 = vadd.f32 %v1720, %v1794
  %s1797 = scalar_lea.vmem [#allocation2], 80
  %v1798 = vld [vmem:[%s1797 + $0x1] sm:$0xff]
  %v1799 = vld [vmem:[%s1797 + $0x9] sm:$0x1]
  %1802 = vrot.lane.b32.xlu0 %v1798, 127
  %v1803 = vpop.permute.xlu0 %1802
  %1804 = vrot.lane.b32.xlu0 %v1799, 127
  %v1805 = vpop.permute.xlu0 %1804
  %1808 = vrot.lane.b32.xlu0 %v1798, 8
  %v1809 = vpop.permute.xlu0 %1808
  %1810 = vrot.lane.b32.xlu0 %v1799, 8
  %v1811 = vpop.permute.xlu0 %1810
  %1814 = vrot.lane.b32.xlu0 %v1798, 17
  %v1815 = vpop.permute.xlu0 %1814
  %1816 = vrot.lane.b32.xlu0 %v1799, 17
  %v1817 = vpop.permute.xlu0 %1816
  %1820 = vrot.lane.b32.xlu0 %v1798, 26
  %v1821 = vpop.permute.xlu0 %1820
  %1822 = vrot.lane.b32.xlu0 %v1799, 26
  %v1823 = vpop.permute.xlu0 %1822
  %1826 = vrot.lane.b32.xlu0 %v1798, 35
  %v1827 = vpop.permute.xlu0 %1826
  %1828 = vrot.lane.b32.xlu0 %v1799, 35
  %v1829 = vpop.permute.xlu0 %1828
  %1832 = vrot.lane.b32.xlu0 %v1798, 44
  %v1833 = vpop.permute.xlu0 %1832
  %1834 = vrot.lane.b32.xlu0 %v1799, 44
  %v1835 = vpop.permute.xlu0 %1834
  %1838 = vrot.lane.b32.xlu0 %v1798, 53
  %v1839 = vpop.permute.xlu0 %1838
  %1840 = vrot.lane.b32.xlu0 %v1799, 53
  %v1841 = vpop.permute.xlu0 %1840
  %1844 = vrot.lane.b32.xlu0 %v1798, 62
  %v1845 = vpop.permute.xlu0 %1844
  %1846 = vrot.lane.b32.xlu0 %v1799, 62
  %v1847 = vpop.permute.xlu0 %1846
  %1850 = vrot.lane.b32.xlu0 %v1798, 71
  %v1851 = vpop.permute.xlu0 %1850
  %1852 = vrot.lane.b32.xlu0 %v1799, 71
  %v1853 = vpop.permute.xlu0 %1852
  %v1856 = vsel %vm163, %v1803, %v1809
  %v1857 = vsel %vm163, %v1805, %v1811
  %v1858 = vsel %vm166, %v1856, %v1815
  %v1859 = vsel %vm166, %v1857, %v1817
  %v1860 = vsel %vm169, %v1858, %v1821
  %v1861 = vsel %vm169, %v1859, %v1823
  %v1862 = vsel %vm172, %v1860, %v1827
  %v1863 = vsel %vm172, %v1861, %v1829
  %v1864 = vsel %vm175, %v1862, %v1833
  %v1865 = vsel %vm175, %v1863, %v1835
  %v1866 = vsel %vm178, %v1864, %v1839
  %v1867 = vsel %vm178, %v1865, %v1841
  %v1868 = vsel %vm181, %v1866, %v1845
  %v1869 = vsel %vm181, %v1867, %v1847
  %v1870 = vsel %vm184, %v1868, %v1851
  %v1871 = vsel %vm184, %v1869, %v1853
  %v1872 = vld [vmem:[%s1 + $0x3c] sm:$0x1]
  %v1873 = vperm.slane %v1872, 0
  %v1874 = vmul.f32 %v1870, %v1873
  %v1875 = vmul.f32 %v1871, %v1873
  %v1876 = vadd.f32 %v1789, %v1874
  %v1877 = vadd.f32 %v1790, %v1875
  %v1878 = vld [vmem:[%s1 + $0x3d] sm:$0x1]
  %v1879 = vperm.slane %v1878, 0
  %v1880 = vmul.f32 %v1870, %v1879
  %v1881 = vmul.f32 %v1871, %v1879
  %v1882 = vadd.f32 %v1795, %v1880
  %v1883 = vadd.f32 %v1796, %v1881
  %v1884 = vld [vmem:[%s1 + $0x3e] sm:$0x1]
  %v1885 = vperm.slane %v1884, 0
  %v1886 = vmul.f32 %v1870, %v1885
  %v1887 = vmul.f32 %v1871, %v1885
  %v1888 = vadd.f32 %v1633, %v1886
  %v1889 = vadd.f32 %v1634, %v1887
  %1890 = vrot.lane.b32.xlu0 %v1798, 9
  %v1891 = vpop.permute.xlu0 %1890
  %1892 = vrot.lane.b32.xlu0 %v1799, 9
  %v1893 = vpop.permute.xlu0 %1892
  %1896 = vrot.lane.b32.xlu0 %v1798, 18
  %v1897 = vpop.permute.xlu0 %1896
  %1898 = vrot.lane.b32.xlu0 %v1799, 18
  %v1899 = vpop.permute.xlu0 %1898
  %1902 = vrot.lane.b32.xlu0 %v1798, 27
  %v1903 = vpop.permute.xlu0 %1902
  %1904 = vrot.lane.b32.xlu0 %v1799, 27
  %v1905 = vpop.permute.xlu0 %1904
  %1908 = vrot.lane.b32.xlu0 %v1798, 36
  %v1909 = vpop.permute.xlu0 %1908
  %1910 = vrot.lane.b32.xlu0 %v1799, 36
  %v1911 = vpop.permute.xlu0 %1910
  %1914 = vrot.lane.b32.xlu0 %v1798, 45
  %v1915 = vpop.permute.xlu0 %1914
  %1916 = vrot.lane.b32.xlu0 %v1799, 45
  %v1917 = vpop.permute.xlu0 %1916
  %1920 = vrot.lane.b32.xlu0 %v1798, 54
  %v1921 = vpop.permute.xlu0 %1920
  %1922 = vrot.lane.b32.xlu0 %v1799, 54
  %v1923 = vpop.permute.xlu0 %1922
  %1926 = vrot.lane.b32.xlu0 %v1798, 63
  %v1927 = vpop.permute.xlu0 %1926
  %1928 = vrot.lane.b32.xlu0 %v1799, 63
  %v1929 = vpop.permute.xlu0 %1928
  %1932 = vrot.lane.b32.xlu0 %v1798, 72
  %v1933 = vpop.permute.xlu0 %1932
  %1934 = vrot.lane.b32.xlu0 %v1799, 72
  %v1935 = vpop.permute.xlu0 %1934
  %v1938 = vsel %vm163, %v1798, %v1891
  %v1939 = vsel %vm163, %v1799, %v1893
  %v1940 = vsel %vm166, %v1938, %v1897
  %v1941 = vsel %vm166, %v1939, %v1899
  %v1942 = vsel %vm169, %v1940, %v1903
  %v1943 = vsel %vm169, %v1941, %v1905
  %v1944 = vsel %vm172, %v1942, %v1909
  %v1945 = vsel %vm172, %v1943, %v1911
  %v1946 = vsel %vm175, %v1944, %v1915
  %v1947 = vsel %vm175, %v1945, %v1917
  %v1948 = vsel %vm178, %v1946, %v1921
  %v1949 = vsel %vm178, %v1947, %v1923
  %v1950 = vsel %vm181, %v1948, %v1927
  %v1951 = vsel %vm181, %v1949, %v1929
  %v1952 = vsel %vm184, %v1950, %v1933
  %v1953 = vsel %vm184, %v1951, %v1935
  %v1954 = vld [vmem:[%s1 + $0x3f] sm:$0x1]
  %v1955 = vperm.slane %v1954, 0
  %v1956 = vmul.f32 %v1952, %v1955
  %v1957 = vmul.f32 %v1953, %v1955
  %v1958 = vadd.f32 %v1876, %v1956
  %v1959 = vadd.f32 %v1877, %v1957
  %v1960 = vld [vmem:[%s1 + $0x40] sm:$0x1]
  %v1961 = vperm.slane %v1960, 0
  %v1962 = vmul.f32 %v1952, %v1961
  %v1963 = vmul.f32 %v1953, %v1961
  %v1964 = vadd.f32 %v1882, %v1962
  %v1965 = vadd.f32 %v1883, %v1963
  %v1966 = vld [vmem:[%s1 + $0x41] sm:$0x1]
  %v1967 = vperm.slane %v1966, 0
  %v1968 = vmul.f32 %v1952, %v1967
  %v1969 = vmul.f32 %v1953, %v1967
  %v1970 = vadd.f32 %v1888, %v1968
  %v1971 = vadd.f32 %v1889, %v1969
  %v1972 = vld [vmem:[%s1797] sm:$0xff]
  %v1973 = vld [vmem:[%s1797 + $0x8] sm:$0x1]
  %1976 = vrot.lane.b32.xlu0 %v1972, 127
  %v1977 = vpop.permute.xlu0 %1976
  %1978 = vrot.lane.b32.xlu0 %v1973, 127
  %v1979 = vpop.permute.xlu0 %1978
  %1982 = vrot.lane.b32.xlu0 %v1972, 8
  %v1983 = vpop.permute.xlu0 %1982
  %1984 = vrot.lane.b32.xlu0 %v1973, 8
  %v1985 = vpop.permute.xlu0 %1984
  %1988 = vrot.lane.b32.xlu0 %v1972, 17
  %v1989 = vpop.permute.xlu0 %1988
  %1990 = vrot.lane.b32.xlu0 %v1973, 17
  %v1991 = vpop.permute.xlu0 %1990
  %1994 = vrot.lane.b32.xlu0 %v1972, 26
  %v1995 = vpop.permute.xlu0 %1994
  %1996 = vrot.lane.b32.xlu0 %v1973, 26
  %v1997 = vpop.permute.xlu0 %1996
  %2000 = vrot.lane.b32.xlu0 %v1972, 35
  %v2001 = vpop.permute.xlu0 %2000
  %2002 = vrot.lane.b32.xlu0 %v1973, 35
  %v2003 = vpop.permute.xlu0 %2002
  %2006 = vrot.lane.b32.xlu0 %v1972, 44
  %v2007 = vpop.permute.xlu0 %2006
  %2008 = vrot.lane.b32.xlu0 %v1973, 44
  %v2009 = vpop.permute.xlu0 %2008
  %2012 = vrot.lane.b32.xlu0 %v1972, 53
  %v2013 = vpop.permute.xlu0 %2012
  %2014 = vrot.lane.b32.xlu0 %v1973, 53
  %v2015 = vpop.permute.xlu0 %2014
  %2018 = vrot.lane.b32.xlu0 %v1972, 62
  %v2019 = vpop.permute.xlu0 %2018
  %2020 = vrot.lane.b32.xlu0 %v1973, 62
  %v2021 = vpop.permute.xlu0 %2020
  %2024 = vrot.lane.b32.xlu0 %v1972, 71
  %v2025 = vpop.permute.xlu0 %2024
  %2026 = vrot.lane.b32.xlu0 %v1973, 71
  %v2027 = vpop.permute.xlu0 %2026
  %v2030 = vsel %vm163, %v1977, %v1983
  %v2031 = vsel %vm163, %v1979, %v1985
  %v2032 = vsel %vm166, %v2030, %v1989
  %v2033 = vsel %vm166, %v2031, %v1991
  %v2034 = vsel %vm169, %v2032, %v1995
  %v2035 = vsel %vm169, %v2033, %v1997
  %v2036 = vsel %vm172, %v2034, %v2001
  %v2037 = vsel %vm172, %v2035, %v2003
  %v2038 = vsel %vm175, %v2036, %v2007
  %v2039 = vsel %vm175, %v2037, %v2009
  %v2040 = vsel %vm178, %v2038, %v2013
  %v2041 = vsel %vm178, %v2039, %v2015
  %v2042 = vsel %vm181, %v2040, %v2019
  %v2043 = vsel %vm181, %v2041, %v2021
  %v2044 = vsel %vm184, %v2042, %v2025
  %v2045 = vsel %vm184, %v2043, %v2027
  %v2046 = vld [vmem:[%s1 + $0x42] sm:$0x1]
  %v2047 = vperm.slane %v2046, 0
  %v2048 = vmul.f32 %v2044, %v2047
  %v2049 = vmul.f32 %v2045, %v2047
  %v2050 = vadd.f32 %v1958, %v2048
  %v2051 = vadd.f32 %v1959, %v2049
  %v2052 = vld [vmem:[%s1 + $0x43] sm:$0x1]
  %v2053 = vperm.slane %v2052, 0
  %v2054 = vmul.f32 %v2044, %v2053
  %v2055 = vmul.f32 %v2045, %v2053
  %v2056 = vadd.f32 %v1964, %v2054
  %v2057 = vadd.f32 %v1965, %v2055
  %2058 = vrot.lane.b32.xlu0 %v1972, 9
  %v2059 = vpop.permute.xlu0 %2058
  %2060 = vrot.lane.b32.xlu0 %v1973, 9
  %v2061 = vpop.permute.xlu0 %2060
  %2064 = vrot.lane.b32.xlu0 %v1972, 18
  %v2065 = vpop.permute.xlu0 %2064
  %2066 = vrot.lane.b32.xlu0 %v1973, 18
  %v2067 = vpop.permute.xlu0 %2066
  %2070 = vrot.lane.b32.xlu0 %v1972, 27
  %v2071 = vpop.permute.xlu0 %2070
  %2072 = vrot.lane.b32.xlu0 %v1973, 27
  %v2073 = vpop.permute.xlu0 %2072
  %2076 = vrot.lane.b32.xlu0 %v1972, 36
  %v2077 = vpop.permute.xlu0 %2076
  %2078 = vrot.lane.b32.xlu0 %v1973, 36
  %v2079 = vpop.permute.xlu0 %2078
  %2082 = vrot.lane.b32.xlu0 %v1972, 45
  %v2083 = vpop.permute.xlu0 %2082
  %2084 = vrot.lane.b32.xlu0 %v1973, 45
  %v2085 = vpop.permute.xlu0 %2084
  %2088 = vrot.lane.b32.xlu0 %v1972, 54
  %v2089 = vpop.permute.xlu0 %2088
  %2090 = vrot.lane.b32.xlu0 %v1973, 54
  %v2091 = vpop.permute.xlu0 %2090
  %2094 = vrot.lane.b32.xlu0 %v1972, 63
  %v2095 = vpop.permute.xlu0 %2094
  %2096 = vrot.lane.b32.xlu0 %v1973, 63
  %v2097 = vpop.permute.xlu0 %2096
  %2100 = vrot.lane.b32.xlu0 %v1972, 72
  %v2101 = vpop.permute.xlu0 %2100
  %2102 = vrot.lane.b32.xlu0 %v1973, 72
  %v2103 = vpop.permute.xlu0 %2102
  %v2106 = vsel %vm163, %v1972, %v2059
  %v2107 = vsel %vm163, %v1973, %v2061
  %v2108 = vsel %vm166, %v2106, %v2065
  %v2109 = vsel %vm166, %v2107, %v2067
  %v2110 = vsel %vm169, %v2108, %v2071
  %v2111 = vsel %vm169, %v2109, %v2073
  %v2112 = vsel %vm172, %v2110, %v2077
  %v2113 = vsel %vm172, %v2111, %v2079
  %v2114 = vsel %vm175, %v2112, %v2083
  %v2115 = vsel %vm175, %v2113, %v2085
  %v2116 = vsel %vm178, %v2114, %v2089
  %v2117 = vsel %vm178, %v2115, %v2091
  %v2118 = vsel %vm181, %v2116, %v2095
  %v2119 = vsel %vm181, %v2117, %v2097
  %v2120 = vsel %vm184, %v2118, %v2101
  %v2121 = vsel %vm184, %v2119, %v2103
  %v2122 = vld [vmem:[%s1 + $0x45] sm:$0x1]
  %v2123 = vperm.slane %v2122, 0
  %v2124 = vmul.f32 %v2120, %v2123
  %v2125 = vmul.f32 %v2121, %v2123
  %v2126 = vadd.f32 %v2050, %v2124
  %v2127 = vadd.f32 %v2051, %v2125
  %v2128 = vld [vmem:[%s1 + $0x46] sm:$0x1]
  %v2129 = vperm.slane %v2128, 0
  %v2130 = vmul.f32 %v2120, %v2129
  %v2131 = vmul.f32 %v2121, %v2129
  %v2132 = vadd.f32 %v2056, %v2130
  %v2133 = vadd.f32 %v2057, %v2131
  %v2135 = vperm.slane %v52, 0
  %v2137 = vadd.f32 %v2126, %v2135
  %v2138 = vadd.f32 %v2127, %v2135
  %v2139 = vtanh.pop %v2137
  %v2140 = vtanh.pop %v2138
  %v2141 = vld [vmem:[%s6] sm:$0xff]
  %v2142 = vld [vmem:[%s6 + $0x8] sm:$0xff]
  %v2143 = vld [vmem:[%s6 + $0x10] sm:$0xff]
  %v2144 = vadd.f32 %v2132, %v2135
  %v2145 = vadd.f32 %v2133, %v2135
  %v2146 = vtanh.pop %v2144
  %v2147 = vtanh.pop %v2145
  %s2148 = scalar_lea.vmem %s6, 24
  %v2149 = vld [vmem:[%s2148] sm:$0xff]
  %v2150 = vld [vmem:[%s2148 + $0x8] sm:$0xff]
  %v2151 = vld [vmem:[%s2148 + $0x10] sm:$0xff]
  %v2153 = vsel %vm163, %v2149, 0
  %v2156 = vsel %vm163, %v2150, 0
  %v2159 = vsel %vm163, %v2151, 0
  %vm2161 = vcmask 1040384
  %v2163 = vsel %vm2161, %v2147, 0
  %2165 = vmatpush.msra.mxu0 0.0
  %2166 = vmatpush.msra.mxu0 0.0
  %2167 = vmatpush.msra.mxu0 0.0
  %2168 = vmatpush.msra.mxu0 0.0
  %2169 = vmatpush.msra.mxu0 0.0
  %2170 = vmatpush.msra.mxu0 0.0
  %2171 = vmatpush.msra.mxu0 0.0
  %2172 = vmatpush.msra.mxu0 0.0
  %2173 = vmatpush.msra.mxu0 0.0
  %2174 = vmatpush.msra.mxu0 0.0
  %2175 = vmatpush.msra.mxu0 0.0
  %2176 = vmatpush.msra.mxu0 0.0
  %2177 = vmatpush.msra.mxu0 0.0
  %2178 = vmatpush.msra.mxu0 0.0
  %2179 = vmatpush.msra.mxu0 %v2163
  %2180 = vmatpush.msra.mxu0 %v2146
  %2181 = vmatmul.f32.gmra.mxu0 %v2153
  %v2182 = vpop.f32.mrf.mxu0
  %v2183 = vadd.f32 0.0, %v2182
  %2184 = vmatmul.f32.gmra.mxu0 %v2156
  %v2185 = vpop.f32.mrf.mxu0
  %v2186 = vadd.f32 0.0, %v2185
  %2187 = vmatmul.f32.gmra.mxu0 %v2159
  %v2188 = vpop.f32.mrf.mxu0
  %v2189 = vadd.f32 0.0, %v2188
  %2190 = vdwg.mxu0
  %v2192 = vsel %vm163, %v2141, 0
  %v2195 = vsel %vm163, %v2142, 0
  %v2198 = vsel %vm163, %v2143, 0
  %v2201 = vsel %vm2161, %v2140, 0
  %2203 = vmatpush.msra.mxu0 0.0
  %2204 = vmatpush.msra.mxu0 0.0
  %2205 = vmatpush.msra.mxu0 0.0
  %2206 = vmatpush.msra.mxu0 0.0
  %2207 = vmatpush.msra.mxu0 0.0
  %2208 = vmatpush.msra.mxu0 0.0
  %2209 = vmatpush.msra.mxu0 0.0
  %2210 = vmatpush.msra.mxu0 0.0
  %2211 = vmatpush.msra.mxu0 0.0
  %2212 = vmatpush.msra.mxu0 0.0
  %2213 = vmatpush.msra.mxu0 0.0
  %2214 = vmatpush.msra.mxu0 0.0
  %2215 = vmatpush.msra.mxu0 0.0
  %2216 = vmatpush.msra.mxu0 0.0
  %2217 = vmatpush.msra.mxu0 %v2201
  %2218 = vmatpush.msra.mxu0 %v2139
  %2219 = vmatmul.f32.gmra.mxu0 %v2192
  %v2220 = vpop.f32.mrf.mxu0
  %v2221 = vadd.f32 %v2183, %v2220
  %2222 = vmatmul.f32.gmra.mxu0 %v2195
  %v2223 = vpop.f32.mrf.mxu0
  %v2224 = vadd.f32 %v2186, %v2223
  %2225 = vmatmul.f32.gmra.mxu0 %v2198
  %v2226 = vpop.f32.mrf.mxu0
  %v2227 = vadd.f32 %v2189, %v2226
  %2228 = vdwg.mxu0
  %v2229 = vadd.f32 %v1970, %v2135
  %v2230 = vadd.f32 %v1971, %v2135
  %v2231 = vtanh.pop %v2229
  %v2232 = vtanh.pop %v2230
  %s2233 = scalar_lea.vmem %s6, 48
  %v2234 = vld [vmem:[%s2233] sm:$0xff]
  %v2235 = vld [vmem:[%s2233 + $0x8] sm:$0xff]
  %v2236 = vld [vmem:[%s2233 + $0x10] sm:$0xff]
  %v2238 = vsel %vm163, %v2234, 0
  %v2241 = vsel %vm163, %v2235, 0
  %v2244 = vsel %vm163, %v2236, 0
  %v2247 = vsel %vm2161, %v2232, 0
  %2249 = vmatpush.msra.mxu0 0.0
  %2250 = vmatpush.msra.mxu0 0.0
  %2251 = vmatpush.msra.mxu0 0.0
  %2252 = vmatpush.msra.mxu0 0.0
  %2253 = vmatpush.msra.mxu0 0.0
  %2254 = vmatpush.msra.mxu0 0.0
  %2255 = vmatpush.msra.mxu0 0.0
  %2256 = vmatpush.msra.mxu0 0.0
  %2257 = vmatpush.msra.mxu0 0.0
  %2258 = vmatpush.msra.mxu0 0.0
  %2259 = vmatpush.msra.mxu0 0.0
  %2260 = vmatpush.msra.mxu0 0.0
  %2261 = vmatpush.msra.mxu0 0.0
  %2262 = vmatpush.msra.mxu0 0.0
  %2263 = vmatpush.msra.mxu0 %v2247
  %2264 = vmatpush.msra.mxu0 %v2231
  %2265 = vmatmul.f32.gmra.mxu0 %v2238
  %v2266 = vpop.f32.mrf.mxu0
  %v2267 = vadd.f32 0.0, %v2266
  %2268 = vmatmul.f32.gmra.mxu0 %v2241
  %v2269 = vpop.f32.mrf.mxu0
  %v2270 = vadd.f32 0.0, %v2269
  %2271 = vmatmul.f32.gmra.mxu0 %v2244
  %v2272 = vpop.f32.mrf.mxu0
  %v2273 = vadd.f32 0.0, %v2272
  %2274 = vdwg.mxu0
  %v2275 = vadd.f32 %v2221, %v2267
  %v2276 = vadd.f32 %v2224, %v2270
  %v2277 = vadd.f32 %v2227, %v2273
  %vm2278 = vcmask 662528
  %v2280 = vsel %vm2278, %v2275, 0
  %v2283 = vsel %vm2278, %v2276, 0
  %v2286 = vsel %vm2278, %v2277, 0
  %v2289 = vsel %vm2161, %v42, 0
  %2291 = vmatpush.msra.mxu0 0.0
  %2292 = vmatpush.msra.mxu0 0.0
  %2293 = vmatpush.msra.mxu0 0.0
  %2294 = vmatpush.msra.mxu0 0.0
  %2295 = vmatpush.msra.mxu0 0.0
  %2296 = vmatpush.msra.mxu0 %v2289
  %2297 = vmatpush.msra.mxu0 %v41
  %2298 = vmatpush.msra.mxu0 %v40
  %2299 = vmatpush.msra.mxu0 %v39
  %2300 = vmatpush.msra.mxu0 %v38
  %2301 = vmatpush.msra.mxu0 %v37
  %2302 = vmatpush.msra.mxu0 %v36
  %2303 = vmatpush.msra.mxu0 %v35
  %2304 = vmatpush.msra.mxu0 %v34
  %2305 = vmatpush.msra.mxu0 %v33
  %2306 = vmatpush.msra.mxu0 %v32
  %2307 = vmatmul.f32.gmra.mxu0 %v2280
  %v2308 = vpop.f32.mrf.mxu0
  %v2309 = vadd.f32 0.0, %v2308
  %2310 = vmatmul.f32.gmra.mxu0 %v2283
  %v2311 = vpop.f32.mrf.mxu0
  %v2312 = vadd.f32 0.0, %v2311
  %2313 = vmatmul.f32.gmra.mxu0 %v2286
  %v2314 = vpop.f32.mrf.mxu0
  %v2315 = vadd.f32 0.0, %v2314
  %2316 = vdwg.mxu0
  %2317 = vst.msk [vmem:[#allocation3] sm:$0xff] %vm184, %v2309
  %2318 = vst.msk [vmem:[#allocation3 + $0x8] sm:$0xff] %vm184, %v2312
  %2319 = vst.msk [vmem:[#allocation3 + $0x10] sm:$0xff] %vm184, %v2315
  %v2320 = vld [vmem:[#allocation3 + $0x1] sm:$0xff]
  %v2321 = vld [vmem:[#allocation3 + $0x9] sm:$0xff]
  %v2322 = vld [vmem:[#allocation3 + $0x11] sm:$0x7f]
  %2326 = vrot.lane.b32.xlu0 %v2320, 127
  %v2327 = vpop.permute.xlu0 %2326
  %2328 = vrot.lane.b32.xlu0 %v2321, 127
  %v2329 = vpop.permute.xlu0 %2328
  %2330 = vrot.lane.b32.xlu0 %v2322, 127
  %v2331 = vpop.permute.xlu0 %2330
  %2335 = vrot.lane.b32.xlu0 %v2320, 22
  %v2336 = vpop.permute.xlu0 %2335
  %2337 = vrot.lane.b32.xlu0 %v2321, 22
  %v2338 = vpop.permute.xlu0 %2337
  %2339 = vrot.lane.b32.xlu0 %v2322, 22
  %v2340 = vpop.permute.xlu0 %2339
  %2344 = vrot.lane.b32.xlu0 %v2320, 45
  %v2345 = vpop.permute.xlu0 %2344
  %2346 = vrot.lane.b32.xlu0 %v2321, 45
  %v2347 = vpop.permute.xlu0 %2346
  %2348 = vrot.lane.b32.xlu0 %v2322, 45
  %v2349 = vpop.permute.xlu0 %2348
  %vm2353 = vcmask 187392
  %v2354 = vsel %vm2353, %v2327, %v2336
  %v2355 = vsel %vm2353, %v2329, %v2338
  %v2356 = vsel %vm2353, %v2331, %v2340
  %vm2357 = vcmask 375808
  %v2358 = vsel %vm2357, %v2354, %v2345
  %v2359 = vsel %vm2357, %v2355, %v2347
  %v2360 = vsel %vm2357, %v2356, %v2349
  %v2361 = vld [vmem:[%s3] sm:$0x1]
  %v2362 = vperm.slane %v2361, 0
  %v2363 = vmul.f32 %v2358, %v2362
  %v2364 = vmul.f32 %v2359, %v2362
  %v2365 = vmul.f32 %v2360, %v2362
  %v2366 = vadd.f32 %v2363, 0.0
  %v2367 = vadd.f32 %v2364, 0.0
  %v2368 = vadd.f32 %v2365, 0.0
  %v2369 = vld [vmem:[%s3 + $0x1] sm:$0x1]
  %v2370 = vperm.slane %v2369, 0
  %v2371 = vmul.f32 %v2358, %v2370
  %v2372 = vmul.f32 %v2359, %v2370
  %v2373 = vmul.f32 %v2360, %v2370
  %v2374 = vadd.f32 %v2371, 0.0
  %v2375 = vadd.f32 %v2372, 0.0
  %v2376 = vadd.f32 %v2373, 0.0
  %v2377 = vld [vmem:[%s3 + $0x2] sm:$0x1]
  %v2378 = vperm.slane %v2377, 0
  %v2379 = vmul.f32 %v2358, %v2378
  %v2380 = vmul.f32 %v2359, %v2378
  %v2381 = vmul.f32 %v2360, %v2378
  %v2382 = vadd.f32 %v2379, 0.0
  %v2383 = vadd.f32 %v2380, 0.0
  %v2384 = vadd.f32 %v2381, 0.0
  %2385 = vrot.lane.b32.xlu0 %v2320, 23
  %v2386 = vpop.permute.xlu0 %2385
  %2387 = vrot.lane.b32.xlu0 %v2321, 23
  %v2388 = vpop.permute.xlu0 %2387
  %2389 = vrot.lane.b32.xlu0 %v2322, 23
  %v2390 = vpop.permute.xlu0 %2389
  %2394 = vrot.lane.b32.xlu0 %v2320, 46
  %v2395 = vpop.permute.xlu0 %2394
  %2396 = vrot.lane.b32.xlu0 %v2321, 46
  %v2397 = vpop.permute.xlu0 %2396
  %2398 = vrot.lane.b32.xlu0 %v2322, 46
  %v2399 = vpop.permute.xlu0 %2398
  %v2403 = vsel %vm2353, %v2320, %v2386
  %v2404 = vsel %vm2353, %v2321, %v2388
  %v2405 = vsel %vm2353, %v2322, %v2390
  %v2406 = vsel %vm2357, %v2403, %v2395
  %v2407 = vsel %vm2357, %v2404, %v2397
  %v2408 = vsel %vm2357, %v2405, %v2399
  %v2409 = vld [vmem:[%s3 + $0x3] sm:$0x1]
  %v2410 = vperm.slane %v2409, 0
  %v2411 = vmul.f32 %v2406, %v2410
  %v2412 = vmul.f32 %v2407, %v2410
  %v2413 = vmul.f32 %v2408, %v2410
  %v2414 = vadd.f32 %v2366, %v2411
  %v2415 = vadd.f32 %v2367, %v2412
  %v2416 = vadd.f32 %v2368, %v2413
  %v2417 = vld [vmem:[%s3 + $0x4] sm:$0x1]
  %v2418 = vperm.slane %v2417, 0
  %v2419 = vmul.f32 %v2406, %v2418
  %v2420 = vmul.f32 %v2407, %v2418
  %v2421 = vmul.f32 %v2408, %v2418
  %v2422 = vadd.f32 %v2374, %v2419
  %v2423 = vadd.f32 %v2375, %v2420
  %v2424 = vadd.f32 %v2376, %v2421
  %v2425 = vld [vmem:[%s3 + $0x5] sm:$0x1]
  %v2426 = vperm.slane %v2425, 0
  %v2427 = vmul.f32 %v2406, %v2426
  %v2428 = vmul.f32 %v2407, %v2426
  %v2429 = vmul.f32 %v2408, %v2426
  %v2430 = vadd.f32 %v2382, %v2427
  %v2431 = vadd.f32 %v2383, %v2428
  %v2432 = vadd.f32 %v2384, %v2429
  %v2433 = vld [vmem:[#allocation3] sm:$0xff]
  %v2434 = vld [vmem:[#allocation3 + $0x8] sm:$0xff]
  %v2435 = vld [vmem:[#allocation3 + $0x10] sm:$0x7f]
  %2439 = vrot.lane.b32.xlu0 %v2433, 127
  %v2440 = vpop.permute.xlu0 %2439
  %2441 = vrot.lane.b32.xlu0 %v2434, 127
  %v2442 = vpop.permute.xlu0 %2441
  %2443 = vrot.lane.b32.xlu0 %v2435, 127
  %v2444 = vpop.permute.xlu0 %2443
  %2448 = vrot.lane.b32.xlu0 %v2433, 22
  %v2449 = vpop.permute.xlu0 %2448
  %2450 = vrot.lane.b32.xlu0 %v2434, 22
  %v2451 = vpop.permute.xlu0 %2450
  %2452 = vrot.lane.b32.xlu0 %v2435, 22
  %v2453 = vpop.permute.xlu0 %2452
  %2457 = vrot.lane.b32.xlu0 %v2433, 45
  %v2458 = vpop.permute.xlu0 %2457
  %2459 = vrot.lane.b32.xlu0 %v2434, 45
  %v2460 = vpop.permute.xlu0 %2459
  %2461 = vrot.lane.b32.xlu0 %v2435, 45
  %v2462 = vpop.permute.xlu0 %2461
  %v2466 = vsel %vm2353, %v2440, %v2449
  %v2467 = vsel %vm2353, %v2442, %v2451
  %v2468 = vsel %vm2353, %v2444, %v2453
  %v2469 = vsel %vm2357, %v2466, %v2458
  %v2470 = vsel %vm2357, %v2467, %v2460
  %v2471 = vsel %vm2357, %v2468, %v2462
  %v2472 = vld [vmem:[%s3 + $0x6] sm:$0x1]
  %v2473 = vperm.slane %v2472, 0
  %v2474 = vmul.f32 %v2469, %v2473
  %v2475 = vmul.f32 %v2470, %v2473
  %v2476 = vmul.f32 %v2471, %v2473
  %v2477 = vadd.f32 %v2414, %v2474
  %v2478 = vadd.f32 %v2415, %v2475
  %v2479 = vadd.f32 %v2416, %v2476
  %v2480 = vld [vmem:[%s3 + $0x7] sm:$0x1]
  %v2481 = vperm.slane %v2480, 0
  %v2482 = vmul.f32 %v2469, %v2481
  %v2483 = vmul.f32 %v2470, %v2481
  %v2484 = vmul.f32 %v2471, %v2481
  %v2485 = vadd.f32 %v2422, %v2482
  %v2486 = vadd.f32 %v2423, %v2483
  %v2487 = vadd.f32 %v2424, %v2484
  %2488 = vrot.lane.b32.xlu0 %v2433, 23
  %v2489 = vpop.permute.xlu0 %2488
  %2490 = vrot.lane.b32.xlu0 %v2434, 23
  %v2491 = vpop.permute.xlu0 %2490
  %2492 = vrot.lane.b32.xlu0 %v2435, 23
  %v2493 = vpop.permute.xlu0 %2492
  %2497 = vrot.lane.b32.xlu0 %v2433, 46
  %v2498 = vpop.permute.xlu0 %2497
  %2499 = vrot.lane.b32.xlu0 %v2434, 46
  %v2500 = vpop.permute.xlu0 %2499
  %2501 = vrot.lane.b32.xlu0 %v2435, 46
  %v2502 = vpop.permute.xlu0 %2501
  %v2506 = vsel %vm2353, %v2433, %v2489
  %v2507 = vsel %vm2353, %v2434, %v2491
  %v2508 = vsel %vm2353, %v2435, %v2493
  %v2509 = vsel %vm2357, %v2506, %v2498
  %v2510 = vsel %vm2357, %v2507, %v2500
  %v2511 = vsel %vm2357, %v2508, %v2502
  %v2512 = vld [vmem:[%s3 + $0x9] sm:$0x1]
  %v2513 = vperm.slane %v2512, 0
  %v2514 = vmul.f32 %v2509, %v2513
  %v2515 = vmul.f32 %v2510, %v2513
  %v2516 = vmul.f32 %v2511, %v2513
  %v2517 = vadd.f32 %v2477, %v2514
  %v2518 = vadd.f32 %v2478, %v2515
  %v2519 = vadd.f32 %v2479, %v2516
  %v2520 = vld [vmem:[%s3 + $0xa] sm:$0x1]
  %v2521 = vperm.slane %v2520, 0
  %v2522 = vmul.f32 %v2509, %v2521
  %v2523 = vmul.f32 %v2510, %v2521
  %v2524 = vmul.f32 %v2511, %v2521
  %v2525 = vadd.f32 %v2485, %v2522
  %v2526 = vadd.f32 %v2486, %v2523
  %v2527 = vadd.f32 %v2487, %v2524
  %2528 = vrot.lane.b32.xlu0 %v2320, 103
  %v2529 = vpop.permute.xlu0 %2528
  %2530 = vrot.lane.b32.xlu0 %v2321, 103
  %v2531 = vpop.permute.xlu0 %2530
  %2532 = vrot.lane.b32.xlu0 %v2322, 103
  %v2533 = vpop.permute.xlu0 %2532
  %2537 = vrot.lane.b32.xlu0 %v2320, 126
  %v2538 = vpop.permute.xlu0 %2537
  %2539 = vrot.lane.b32.xlu0 %v2321, 126
  %v2540 = vpop.permute.xlu0 %2539
  %2541 = vrot.lane.b32.xlu0 %v2322, 126
  %v2542 = vpop.permute.xlu0 %2541
  %2546 = vrot.lane.b32.xlu0 %v2320, 21
  %v2547 = vpop.permute.xlu0 %2546
  %2548 = vrot.lane.b32.xlu0 %v2321, 21
  %v2549 = vpop.permute.xlu0 %2548
  %2550 = vrot.lane.b32.xlu0 %v2322, 21
  %v2551 = vpop.permute.xlu0 %2550
  %v2555 = vsel %vm2353, %v2529, %v2538
  %v2556 = vsel %vm2353, %v2531, %v2540
  %v2557 = vsel %vm2353, %v2533, %v2542
  %v2558 = vsel %vm2357, %v2555, %v2547
  %v2559 = vsel %vm2357, %v2556, %v2549
  %v2560 = vsel %vm2357, %v2557, %v2551
  %v2561 = vld [vmem:[%s3 + $0xc] sm:$0x1]
  %v2562 = vperm.slane %v2561, 0
  %v2563 = vmul.f32 %v2558, %v2562
  %v2564 = vmul.f32 %v2559, %v2562
  %v2565 = vmul.f32 %v2560, %v2562
  %v2566 = vadd.f32 %v2517, %v2563
  %v2567 = vadd.f32 %v2518, %v2564
  %v2568 = vadd.f32 %v2519, %v2565
  %v2569 = vld [vmem:[%s3 + $0xd] sm:$0x1]
  %v2570 = vperm.slane %v2569, 0
  %v2571 = vmul.f32 %v2558, %v2570
  %v2572 = vmul.f32 %v2559, %v2570
  %v2573 = vmul.f32 %v2560, %v2570
  %v2574 = vadd.f32 %v2525, %v2571
  %v2575 = vadd.f32 %v2526, %v2572
  %v2576 = vadd.f32 %v2527, %v2573
  %v2577 = vld [vmem:[%s3 + $0xe] sm:$0x1]
  %v2578 = vperm.slane %v2577, 0
  %v2579 = vmul.f32 %v2558, %v2578
  %v2580 = vmul.f32 %v2559, %v2578
  %v2581 = vmul.f32 %v2560, %v2578
  %v2582 = vadd.f32 %v2430, %v2579
  %v2583 = vadd.f32 %v2431, %v2580
  %v2584 = vadd.f32 %v2432, %v2581
  %2585 = vrot.lane.b32.xlu0 %v2320, 104
  %v2586 = vpop.permute.xlu0 %2585
  %2587 = vrot.lane.b32.xlu0 %v2321, 104
  %v2588 = vpop.permute.xlu0 %2587
  %2589 = vrot.lane.b32.xlu0 %v2322, 104
  %v2590 = vpop.permute.xlu0 %2589
  %v2594 = vsel %vm2353, %v2586, %v2327
  %v2595 = vsel %vm2353, %v2588, %v2329
  %v2596 = vsel %vm2353, %v2590, %v2331
  %v2597 = vsel %vm2357, %v2594, %v2336
  %v2598 = vsel %vm2357, %v2595, %v2338
  %v2599 = vsel %vm2357, %v2596, %v2340
  %v2600 = vld [vmem:[%s3 + $0xf] sm:$0x1]
  %v2601 = vperm.slane %v2600, 0
  %v2602 = vmul.f32 %v2597, %v2601
  %v2603 = vmul.f32 %v2598, %v2601
  %v2604 = vmul.f32 %v2599, %v2601
  %v2605 = vadd.f32 %v2566, %v2602
  %v2606 = vadd.f32 %v2567, %v2603
  %v2607 = vadd.f32 %v2568, %v2604
  %v2608 = vld [vmem:[%s3 + $0x10] sm:$0x1]
  %v2609 = vperm.slane %v2608, 0
  %v2610 = vmul.f32 %v2597, %v2609
  %v2611 = vmul.f32 %v2598, %v2609
  %v2612 = vmul.f32 %v2599, %v2609
  %v2613 = vadd.f32 %v2574, %v2610
  %v2614 = vadd.f32 %v2575, %v2611
  %v2615 = vadd.f32 %v2576, %v2612
  %v2616 = vld [vmem:[%s3 + $0x11] sm:$0x1]
  %v2617 = vperm.slane %v2616, 0
  %v2618 = vmul.f32 %v2597, %v2617
  %v2619 = vmul.f32 %v2598, %v2617
  %v2620 = vmul.f32 %v2599, %v2617
  %v2621 = vadd.f32 %v2582, %v2618
  %v2622 = vadd.f32 %v2583, %v2619
  %v2623 = vadd.f32 %v2584, %v2620
  %2624 = vrot.lane.b32.xlu0 %v2433, 103
  %v2625 = vpop.permute.xlu0 %2624
  %2626 = vrot.lane.b32.xlu0 %v2434, 103
  %v2627 = vpop.permute.xlu0 %2626
  %2628 = vrot.lane.b32.xlu0 %v2435, 103
  %v2629 = vpop.permute.xlu0 %2628
  %2633 = vrot.lane.b32.xlu0 %v2433, 126
  %v2634 = vpop.permute.xlu0 %2633
  %2635 = vrot.lane.b32.xlu0 %v2434, 126
  %v2636 = vpop.permute.xlu0 %2635
  %2637 = vrot.lane.b32.xlu0 %v2435, 126
  %v2638 = vpop.permute.xlu0 %2637
  %2642 = vrot.lane.b32.xlu0 %v2433, 21
  %v2643 = vpop.permute.xlu0 %2642
  %2644 = vrot.lane.b32.xlu0 %v2434, 21
  %v2645 = vpop.permute.xlu0 %2644
  %2646 = vrot.lane.b32.xlu0 %v2435, 21
  %v2647 = vpop.permute.xlu0 %2646
  %v2651 = vsel %vm2353, %v2625, %v2634
  %v2652 = vsel %vm2353, %v2627, %v2636
  %v2653 = vsel %vm2353, %v2629, %v2638
  %v2654 = vsel %vm2357, %v2651, %v2643
  %v2655 = vsel %vm2357, %v2652, %v2645
  %v2656 = vsel %vm2357, %v2653, %v2647
  %v2657 = vld [vmem:[%s3 + $0x12] sm:$0x1]
  %v2658 = vperm.slane %v2657, 0
  %v2659 = vmul.f32 %v2654, %v2658
  %v2660 = vmul.f32 %v2655, %v2658
  %v2661 = vmul.f32 %v2656, %v2658
  %v2662 = vadd.f32 %v2605, %v2659
  %v2663 = vadd.f32 %v2606, %v2660
  %v2664 = vadd.f32 %v2607, %v2661
  %v2665 = vld [vmem:[%s3 + $0x13] sm:$0x1]
  %v2666 = vperm.slane %v2665, 0
  %v2667 = vmul.f32 %v2654, %v2666
  %v2668 = vmul.f32 %v2655, %v2666
  %v2669 = vmul.f32 %v2656, %v2666
  %v2670 = vadd.f32 %v2613, %v2667
  %v2671 = vadd.f32 %v2614, %v2668
  %v2672 = vadd.f32 %v2615, %v2669
  %2673 = vrot.lane.b32.xlu0 %v2433, 104
  %v2674 = vpop.permute.xlu0 %2673
  %2675 = vrot.lane.b32.xlu0 %v2434, 104
  %v2676 = vpop.permute.xlu0 %2675
  %2677 = vrot.lane.b32.xlu0 %v2435, 104
  %v2678 = vpop.permute.xlu0 %2677
  %v2682 = vsel %vm2353, %v2674, %v2440
  %v2683 = vsel %vm2353, %v2676, %v2442
  %v2684 = vsel %vm2353, %v2678, %v2444
  %v2685 = vsel %vm2357, %v2682, %v2449
  %v2686 = vsel %vm2357, %v2683, %v2451
  %v2687 = vsel %vm2357, %v2684, %v2453
  %v2688 = vld [vmem:[%s3 + $0x15] sm:$0x1]
  %v2689 = vperm.slane %v2688, 0
  %v2690 = vmul.f32 %v2685, %v2689
  %v2691 = vmul.f32 %v2686, %v2689
  %v2692 = vmul.f32 %v2687, %v2689
  %v2693 = vadd.f32 %v2662, %v2690
  %v2694 = vadd.f32 %v2663, %v2691
  %v2695 = vadd.f32 %v2664, %v2692
  %v2696 = vld [vmem:[%s3 + $0x16] sm:$0x1]
  %v2697 = vperm.slane %v2696, 0
  %v2698 = vmul.f32 %v2685, %v2697
  %v2699 = vmul.f32 %v2686, %v2697
  %v2700 = vmul.f32 %v2687, %v2697
  %v2701 = vadd.f32 %v2670, %v2698
  %v2702 = vadd.f32 %v2671, %v2699
  %v2703 = vadd.f32 %v2672, %v2700
  %2704 = vrot.lane.b32.xlu0 %v2320, 79
  %v2705 = vpop.permute.xlu0 %2704
  %2706 = vrot.lane.b32.xlu0 %v2321, 79
  %v2707 = vpop.permute.xlu0 %2706
  %2708 = vrot.lane.b32.xlu0 %v2322, 79
  %v2709 = vpop.permute.xlu0 %2708
  %2713 = vrot.lane.b32.xlu0 %v2320, 102
  %v2714 = vpop.permute.xlu0 %2713
  %2715 = vrot.lane.b32.xlu0 %v2321, 102
  %v2716 = vpop.permute.xlu0 %2715
  %2717 = vrot.lane.b32.xlu0 %v2322, 102
  %v2718 = vpop.permute.xlu0 %2717
  %2722 = vrot.lane.b32.xlu0 %v2320, 125
  %v2723 = vpop.permute.xlu0 %2722
  %2724 = vrot.lane.b32.xlu0 %v2321, 125
  %v2725 = vpop.permute.xlu0 %2724
  %2726 = vrot.lane.b32.xlu0 %v2322, 125
  %v2727 = vpop.permute.xlu0 %2726
  %v2731 = vsel %vm2353, %v2705, %v2714
  %v2732 = vsel %vm2353, %v2707, %v2716
  %v2733 = vsel %vm2353, %v2709, %v2718
  %v2734 = vsel %vm2357, %v2731, %v2723
  %v2735 = vsel %vm2357, %v2732, %v2725
  %v2736 = vsel %vm2357, %v2733, %v2727
  %v2737 = vld [vmem:[%s3 + $0x18] sm:$0x1]
  %v2738 = vperm.slane %v2737, 0
  %v2739 = vmul.f32 %v2734, %v2738
  %v2740 = vmul.f32 %v2735, %v2738
  %v2741 = vmul.f32 %v2736, %v2738
  %v2742 = vadd.f32 %v2693, %v2739
  %v2743 = vadd.f32 %v2694, %v2740
  %v2744 = vadd.f32 %v2695, %v2741
  %v2745 = vld [vmem:[%s3 + $0x19] sm:$0x1]
  %v2746 = vperm.slane %v2745, 0
  %v2747 = vmul.f32 %v2734, %v2746
  %v2748 = vmul.f32 %v2735, %v2746
  %v2749 = vmul.f32 %v2736, %v2746
  %v2750 = vadd.f32 %v2701, %v2747
  %v2751 = vadd.f32 %v2702, %v2748
  %v2752 = vadd.f32 %v2703, %v2749
  %v2753 = vld [vmem:[%s3 + $0x1a] sm:$0x1]
  %v2754 = vperm.slane %v2753, 0
  %v2755 = vmul.f32 %v2734, %v2754
  %v2756 = vmul.f32 %v2735, %v2754
  %v2757 = vmul.f32 %v2736, %v2754
  %v2758 = vadd.f32 %v2621, %v2755
  %v2759 = vadd.f32 %v2622, %v2756
  %v2760 = vadd.f32 %v2623, %v2757
  %2761 = vrot.lane.b32.xlu0 %v2320, 80
  %v2762 = vpop.permute.xlu0 %2761
  %2763 = vrot.lane.b32.xlu0 %v2321, 80
  %v2764 = vpop.permute.xlu0 %2763
  %2765 = vrot.lane.b32.xlu0 %v2322, 80
  %v2766 = vpop.permute.xlu0 %2765
  %v2770 = vsel %vm2353, %v2762, %v2529
  %v2771 = vsel %vm2353, %v2764, %v2531
  %v2772 = vsel %vm2353, %v2766, %v2533
  %v2773 = vsel %vm2357, %v2770, %v2538
  %v2774 = vsel %vm2357, %v2771, %v2540
  %v2775 = vsel %vm2357, %v2772, %v2542
  %v2776 = vld [vmem:[%s3 + $0x1b] sm:$0x1]
  %v2777 = vperm.slane %v2776, 0
  %v2778 = vmul.f32 %v2773, %v2777
  %v2779 = vmul.f32 %v2774, %v2777
  %v2780 = vmul.f32 %v2775, %v2777
  %v2781 = vadd.f32 %v2742, %v2778
  %v2782 = vadd.f32 %v2743, %v2779
  %v2783 = vadd.f32 %v2744, %v2780
  %v2784 = vld [vmem:[%s3 + $0x1c] sm:$0x1]
  %v2785 = vperm.slane %v2784, 0
  %v2786 = vmul.f32 %v2773, %v2785
  %v2787 = vmul.f32 %v2774, %v2785
  %v2788 = vmul.f32 %v2775, %v2785
  %v2789 = vadd.f32 %v2750, %v2786
  %v2790 = vadd.f32 %v2751, %v2787
  %v2791 = vadd.f32 %v2752, %v2788
  %v2792 = vld [vmem:[%s3 + $0x1d] sm:$0x1]
  %v2793 = vperm.slane %v2792, 0
  %v2794 = vmul.f32 %v2773, %v2793
  %v2795 = vmul.f32 %v2774, %v2793
  %v2796 = vmul.f32 %v2775, %v2793
  %v2797 = vadd.f32 %v2758, %v2794
  %v2798 = vadd.f32 %v2759, %v2795
  %v2799 = vadd.f32 %v2760, %v2796
  %2800 = vrot.lane.b32.xlu0 %v2433, 79
  %v2801 = vpop.permute.xlu0 %2800
  %2802 = vrot.lane.b32.xlu0 %v2434, 79
  %v2803 = vpop.permute.xlu0 %2802
  %2804 = vrot.lane.b32.xlu0 %v2435, 79
  %v2805 = vpop.permute.xlu0 %2804
  %2809 = vrot.lane.b32.xlu0 %v2433, 102
  %v2810 = vpop.permute.xlu0 %2809
  %2811 = vrot.lane.b32.xlu0 %v2434, 102
  %v2812 = vpop.permute.xlu0 %2811
  %2813 = vrot.lane.b32.xlu0 %v2435, 102
  %v2814 = vpop.permute.xlu0 %2813
  %2818 = vrot.lane.b32.xlu0 %v2433, 125
  %v2819 = vpop.permute.xlu0 %2818
  %2820 = vrot.lane.b32.xlu0 %v2434, 125
  %v2821 = vpop.permute.xlu0 %2820
  %2822 = vrot.lane.b32.xlu0 %v2435, 125
  %v2823 = vpop.permute.xlu0 %2822
  %v2827 = vsel %vm2353, %v2801, %v2810
  %v2828 = vsel %vm2353, %v2803, %v2812
  %v2829 = vsel %vm2353, %v2805, %v2814
  %v2830 = vsel %vm2357, %v2827, %v2819
  %v2831 = vsel %vm2357, %v2828, %v2821
  %v2832 = vsel %vm2357, %v2829, %v2823
  %v2833 = vld [vmem:[%s3 + $0x1e] sm:$0x1]
  %v2834 = vperm.slane %v2833, 0
  %v2835 = vmul.f32 %v2830, %v2834
  %v2836 = vmul.f32 %v2831, %v2834
  %v2837 = vmul.f32 %v2832, %v2834
  %v2838 = vadd.f32 %v2781, %v2835
  %v2839 = vadd.f32 %v2782, %v2836
  %v2840 = vadd.f32 %v2783, %v2837
  %v2841 = vld [vmem:[%s3 + $0x1f] sm:$0x1]
  %v2842 = vperm.slane %v2841, 0
  %v2843 = vmul.f32 %v2830, %v2842
  %v2844 = vmul.f32 %v2831, %v2842
  %v2845 = vmul.f32 %v2832, %v2842
  %v2846 = vadd.f32 %v2789, %v2843
  %v2847 = vadd.f32 %v2790, %v2844
  %v2848 = vadd.f32 %v2791, %v2845
  %2849 = vrot.lane.b32.xlu0 %v2433, 80
  %v2850 = vpop.permute.xlu0 %2849
  %2851 = vrot.lane.b32.xlu0 %v2434, 80
  %v2852 = vpop.permute.xlu0 %2851
  %2853 = vrot.lane.b32.xlu0 %v2435, 80
  %v2854 = vpop.permute.xlu0 %2853
  %v2858 = vsel %vm2353, %v2850, %v2625
  %v2859 = vsel %vm2353, %v2852, %v2627
  %v2860 = vsel %vm2353, %v2854, %v2629
  %v2861 = vsel %vm2357, %v2858, %v2634
  %v2862 = vsel %vm2357, %v2859, %v2636
  %v2863 = vsel %vm2357, %v2860, %v2638
  %v2864 = vld [vmem:[%s3 + $0x21] sm:$0x1]
  %v2865 = vperm.slane %v2864, 0
  %v2866 = vmul.f32 %v2861, %v2865
  %v2867 = vmul.f32 %v2862, %v2865
  %v2868 = vmul.f32 %v2863, %v2865
  %v2869 = vadd.f32 %v2838, %v2866
  %v2870 = vadd.f32 %v2839, %v2867
  %v2871 = vadd.f32 %v2840, %v2868
  %v2872 = vld [vmem:[%s3 + $0x22] sm:$0x1]
  %v2873 = vperm.slane %v2872, 0
  %v2874 = vmul.f32 %v2861, %v2873
  %v2875 = vmul.f32 %v2862, %v2873
  %v2876 = vmul.f32 %v2863, %v2873
  %v2877 = vadd.f32 %v2846, %v2874
  %v2878 = vadd.f32 %v2847, %v2875
  %v2879 = vadd.f32 %v2848, %v2876
  %v2880 = vld [vmem:[%s8] sm:$0xff]
  %v2881 = vld [vmem:[%s8 + $0x8] sm:$0xff]
  %v2882 = vld [vmem:[%s8 + $0x10] sm:$0xff]
  %v2883 = vld [vmem:[%s8 + $0x18] sm:$0xff]
  %v2884 = vld [vmem:[%s8 + $0x20] sm:$0xff]
  %v2885 = vld [vmem:[%s8 + $0x28] sm:$0xff]
  %v2886 = vld [vmem:[%s8 + $0x30] sm:$0xff]
  %v2887 = vld [vmem:[%s8 + $0x38] sm:$0xff]
  %v2888 = vld [vmem:[%s8 + $0x40] sm:$0x3]
  %v2890 = vperm.slane %v53, 0
  %v2892 = vadd.f32 %v2869, %v2890
  %v2893 = vadd.f32 %v2870, %v2890
  %v2894 = vadd.f32 %v2871, %v2890
  %s2895 = scalar_lea.vmem %s8, 72
  %v2896 = vld [vmem:[%s2895] sm:$0xff]
  %v2897 = vld [vmem:[%s2895 + $0x8] sm:$0xff]
  %v2898 = vld [vmem:[%s2895 + $0x10] sm:$0xff]
  %v2899 = vld [vmem:[%s2895 + $0x18] sm:$0xff]
  %v2900 = vld [vmem:[%s2895 + $0x20] sm:$0xff]
  %v2901 = vld [vmem:[%s2895 + $0x28] sm:$0xff]
  %v2902 = vld [vmem:[%s2895 + $0x30] sm:$0xff]
  %v2903 = vld [vmem:[%s2895 + $0x38] sm:$0xff]
  %v2904 = vld [vmem:[%s2895 + $0x40] sm:$0x3]
  %v2905 = vadd.f32 %v2877, %v2890
  %v2906 = vadd.f32 %v2878, %v2890
  %v2907 = vadd.f32 %v2879, %v2890
  %v2909 = vsel %vm2353, %v2896, 0
  %v2912 = vsel %vm2353, %v2897, 0
  %v2915 = vsel %vm2353, %v2898, 0
  %v2918 = vsel %vm2353, %v2899, 0
  %v2921 = vsel %vm2353, %v2900, 0
  %v2924 = vsel %vm2353, %v2901, 0
  %v2927 = vsel %vm2353, %v2902, 0
  %v2930 = vsel %vm2353, %v2903, 0
  %v2933 = vsel %vm2353, %v2904, 0
  %vm2935 = vcmask 1046528
  %v2937 = vsel %vm2935, %v2907, 0
  %2939 = vmatpush.msra.mxu0 0.0
  %2940 = vmatpush.msra.mxu0 0.0
  %2941 = vmatpush.msra.mxu0 0.0
  %2942 = vmatpush.msra.mxu0 0.0
  %2943 = vmatpush.msra.mxu0 0.0
  %2944 = vmatpush.msra.mxu0 0.0
  %2945 = vmatpush.msra.mxu0 0.0
  %2946 = vmatpush.msra.mxu0 0.0
  %2947 = vmatpush.msra.mxu0 0.0
  %2948 = vmatpush.msra.mxu0 0.0
  %2949 = vmatpush.msra.mxu0 0.0
  %2950 = vmatpush.msra.mxu0 0.0
  %2951 = vmatpush.msra.mxu0 0.0
  %2952 = vmatpush.msra.mxu0 %v2937
  %2953 = vmatpush.msra.mxu0 %v2906
  %2954 = vmatpush.msra.mxu0 %v2905
  %2955 = vmatmul.f32.gmra.mxu0 %v2909
  %v2956 = vpop.f32.mrf.mxu0
  %v2957 = vadd.f32 0.0, %v2956
  %2958 = vmatmul.f32.gmra.mxu0 %v2912
  %v2959 = vpop.f32.mrf.mxu0
  %v2960 = vadd.f32 0.0, %v2959
  %2961 = vmatmul.f32.gmra.mxu0 %v2915
  %v2962 = vpop.f32.mrf.mxu0
  %v2963 = vadd.f32 0.0, %v2962
  %2964 = vmatmul.f32.gmra.mxu0 %v2918
  %v2965 = vpop.f32.mrf.mxu0
  %v2966 = vadd.f32 0.0, %v2965
  %2967 = vmatmul.f32.gmra.mxu0 %v2921
  %v2968 = vpop.f32.mrf.mxu0
  %v2969 = vadd.f32 0.0, %v2968
  %2970 = vmatmul.f32.gmra.mxu0 %v2924
  %v2971 = vpop.f32.mrf.mxu0
  %v2972 = vadd.f32 0.0, %v2971
  %2973 = vmatmul.f32.gmra.mxu0 %v2927
  %v2974 = vpop.f32.mrf.mxu0
  %v2975 = vadd.f32 0.0, %v2974
  %2976 = vmatmul.f32.gmra.mxu0 %v2930
  %v2977 = vpop.f32.mrf.mxu0
  %v2978 = vadd.f32 0.0, %v2977
  %2979 = vmatmul.f32.gmra.mxu0 %v2933
  %v2980 = vpop.f32.mrf.mxu0
  %v2981 = vadd.f32 0.0, %v2980
  %2982 = vdwg.mxu0
  %v2984 = vsel %vm2353, %v2880, 0
  %v2987 = vsel %vm2353, %v2881, 0
  %v2990 = vsel %vm2353, %v2882, 0
  %v2993 = vsel %vm2353, %v2883, 0
  %v2996 = vsel %vm2353, %v2884, 0
  %v2999 = vsel %vm2353, %v2885, 0
  %v3002 = vsel %vm2353, %v2886, 0
  %v3005 = vsel %vm2353, %v2887, 0
  %v3008 = vsel %vm2353, %v2888, 0
  %v3011 = vsel %vm2935, %v2894, 0
  %3013 = vmatpush.msra.mxu0 0.0
  %3014 = vmatpush.msra.mxu0 0.0
  %3015 = vmatpush.msra.mxu0 0.0
  %3016 = vmatpush.msra.mxu0 0.0
  %3017 = vmatpush.msra.mxu0 0.0
  %3018 = vmatpush.msra.mxu0 0.0
  %3019 = vmatpush.msra.mxu0 0.0
  %3020 = vmatpush.msra.mxu0 0.0
  %3021 = vmatpush.msra.mxu0 0.0
  %3022 = vmatpush.msra.mxu0 0.0
  %3023 = vmatpush.msra.mxu0 0.0
  %3024 = vmatpush.msra.mxu0 0.0
  %3025 = vmatpush.msra.mxu0 0.0
  %3026 = vmatpush.msra.mxu0 %v3011
  %3027 = vmatpush.msra.mxu0 %v2893
  %3028 = vmatpush.msra.mxu0 %v2892
  %3029 = vmatmul.f32.gmra.mxu0 %v2984
  %v3030 = vpop.f32.mrf.mxu0
  %v3031 = vadd.f32 %v2957, %v3030
  %3032 = vmatmul.f32.gmra.mxu0 %v2987
  %v3033 = vpop.f32.mrf.mxu0
  %v3034 = vadd.f32 %v2960, %v3033
  %3035 = vmatmul.f32.gmra.mxu0 %v2990
  %v3036 = vpop.f32.mrf.mxu0
  %v3037 = vadd.f32 %v2963, %v3036
  %3038 = vmatmul.f32.gmra.mxu0 %v2993
  %v3039 = vpop.f32.mrf.mxu0
  %v3040 = vadd.f32 %v2966, %v3039
  %3041 = vmatmul.f32.gmra.mxu0 %v2996
  %v3042 = vpop.f32.mrf.mxu0
  %v3043 = vadd.f32 %v2969, %v3042
  %3044 = vmatmul.f32.gmra.mxu0 %v2999
  %v3045 = vpop.f32.mrf.mxu0
  %v3046 = vadd.f32 %v2972, %v3045
  %3047 = vmatmul.f32.gmra.mxu0 %v3002
  %v3048 = vpop.f32.mrf.mxu0
  %v3049 = vadd.f32 %v2975, %v3048
  %3050 = vmatmul.f32.gmra.mxu0 %v3005
  %v3051 = vpop.f32.mrf.mxu0
  %v3052 = vadd.f32 %v2978, %v3051
  %3053 = vmatmul.f32.gmra.mxu0 %v3008
  %v3054 = vpop.f32.mrf.mxu0
  %v3055 = vadd.f32 %v2981, %v3054
  %3056 = vdwg.mxu0
  %s3057 = scalar_lea.vmem %s8, 144
  %v3058 = vld [vmem:[%s3057] sm:$0xff]
  %v3059 = vld [vmem:[%s3057 + $0x8] sm:$0xff]
  %v3060 = vld [vmem:[%s3057 + $0x10] sm:$0xff]
  %v3061 = vld [vmem:[%s3057 + $0x18] sm:$0xff]
  %v3062 = vld [vmem:[%s3057 + $0x20] sm:$0xff]
  %v3063 = vld [vmem:[%s3057 + $0x28] sm:$0xff]
  %v3064 = vld [vmem:[%s3057 + $0x30] sm:$0xff]
  %v3065 = vld [vmem:[%s3057 + $0x38] sm:$0xff]
  %v3066 = vld [vmem:[%s3057 + $0x40] sm:$0x3]
  %v3067 = vadd.f32 %v2797, %v2890
  %v3068 = vadd.f32 %v2798, %v2890
  %v3069 = vadd.f32 %v2799, %v2890
  %v3071 = vsel %vm2353, %v3058, 0
  %v3074 = vsel %vm2353, %v3059, 0
  %v3077 = vsel %vm2353, %v3060, 0
  %v3080 = vsel %vm2353, %v3061, 0
  %v3083 = vsel %vm2353, %v3062, 0
  %v3086 = vsel %vm2353, %v3063, 0
  %v3089 = vsel %vm2353, %v3064, 0
  %v3092 = vsel %vm2353, %v3065, 0
  %v3095 = vsel %vm2353, %v3066, 0
  %v3098 = vsel %vm2935, %v3069, 0
  %3100 = vmatpush.msra.mxu0 0.0
  %3101 = vmatpush.msra.mxu0 0.0
  %3102 = vmatpush.msra.mxu0 0.0
  %3103 = vmatpush.msra.mxu0 0.0
  %3104 = vmatpush.msra.mxu0 0.0
  %3105 = vmatpush.msra.mxu0 0.0
  %3106 = vmatpush.msra.mxu0 0.0
  %3107 = vmatpush.msra.mxu0 0.0
  %3108 = vmatpush.msra.mxu0 0.0
  %3109 = vmatpush.msra.mxu0 0.0
  %3110 = vmatpush.msra.mxu0 0.0
  %3111 = vmatpush.msra.mxu0 0.0
  %3112 = vmatpush.msra.mxu0 0.0
  %3113 = vmatpush.msra.mxu0 %v3098
  %3114 = vmatpush.msra.mxu0 %v3068
  %3115 = vmatpush.msra.mxu0 %v3067
  %3116 = vmatmul.f32.gmra.mxu0 %v3071
  %v3117 = vpop.f32.mrf.mxu0
  %v3118 = vadd.f32 0.0, %v3117
  %3119 = vmatmul.f32.gmra.mxu0 %v3074
  %v3120 = vpop.f32.mrf.mxu0
  %v3121 = vadd.f32 0.0, %v3120
  %3122 = vmatmul.f32.gmra.mxu0 %v3077
  %v3123 = vpop.f32.mrf.mxu0
  %v3124 = vadd.f32 0.0, %v3123
  %3125 = vmatmul.f32.gmra.mxu0 %v3080
  %v3126 = vpop.f32.mrf.mxu0
  %v3127 = vadd.f32 0.0, %v3126
  %3128 = vmatmul.f32.gmra.mxu0 %v3083
  %v3129 = vpop.f32.mrf.mxu0
  %v3130 = vadd.f32 0.0, %v3129
  %3131 = vmatmul.f32.gmra.mxu0 %v3086
  %v3132 = vpop.f32.mrf.mxu0
  %v3133 = vadd.f32 0.0, %v3132
  %3134 = vmatmul.f32.gmra.mxu0 %v3089
  %v3135 = vpop.f32.mrf.mxu0
  %v3136 = vadd.f32 0.0, %v3135
  %3137 = vmatmul.f32.gmra.mxu0 %v3092
  %v3138 = vpop.f32.mrf.mxu0
  %v3139 = vadd.f32 0.0, %v3138
  %3140 = vmatmul.f32.gmra.mxu0 %v3095
  %v3141 = vpop.f32.mrf.mxu0
  %v3142 = vadd.f32 0.0, %v3141
  %3143 = vdwg.mxu0
  %v3144 = vadd.f32 %v3031, %v3118
  %v3145 = vadd.f32 %v3034, %v3121
  %v3146 = vadd.f32 %v3037, %v3124
  %v3147 = vadd.f32 %v3040, %v3127
  %v3148 = vadd.f32 %v3043, %v3130
  %v3149 = vadd.f32 %v3046, %v3133
  %v3150 = vadd.f32 %v3049, %v3136
  %v3151 = vadd.f32 %v3052, %v3139
  %v3152 = vadd.f32 %v3055, %v3142
  %vm3153 = vcmask 564224
  %v3155 = vsel %vm3153, %v3144, 0
  %v3158 = vsel %vm3153, %v3145, 0
  %v3161 = vsel %vm3153, %v3146, 0
  %v3164 = vsel %vm3153, %v3147, 0
  %v3167 = vsel %vm3153, %v3148, 0
  %v3170 = vsel %vm3153, %v3149, 0
  %v3173 = vsel %vm3153, %v3150, 0
  %v3176 = vsel %vm3153, %v3151, 0
  %v3179 = vsel %vm3153, %v3152, 0
  %vm3181 = vcmask 1044480
  %v3183 = vsel %vm3181, %v51, 0
  %3185 = vmatpush.msra.mxu0 0.0
  %3186 = vmatpush.msra.mxu0 0.0
  %3187 = vmatpush.msra.mxu0 0.0
  %3188 = vmatpush.msra.mxu0 0.0
  %3189 = vmatpush.msra.mxu0 0.0
  %3190 = vmatpush.msra.mxu0 0.0
  %3191 = vmatpush.msra.mxu0 0.0
  %3192 = vmatpush.msra.mxu0 %v3183
  %3193 = vmatpush.msra.mxu0 %v50
  %3194 = vmatpush.msra.mxu0 %v49
  %3195 = vmatpush.msra.mxu0 %v48
  %3196 = vmatpush.msra.mxu0 %v47
  %3197 = vmatpush.msra.mxu0 %v46
  %3198 = vmatpush.msra.mxu0 %v45
  %3199 = vmatpush.msra.mxu0 %v44
  %3200 = vmatpush.msra.mxu0 %v43
  %3201 = vmatmul.f32.gmra.mxu0 %v3155
  %v3202 = vpop.f32.mrf.mxu0
  %v3203 = vadd.f32 0.0, %v3202
  %3204 = vmatmul.f32.gmra.mxu0 %v3158
  %v3205 = vpop.f32.mrf.mxu0
  %v3206 = vadd.f32 0.0, %v3205
  %3207 = vmatmul.f32.gmra.mxu0 %v3161
  %v3208 = vpop.f32.mrf.mxu0
  %v3209 = vadd.f32 0.0, %v3208
  %3210 = vmatmul.f32.gmra.mxu0 %v3164
  %v3211 = vpop.f32.mrf.mxu0
  %v3212 = vadd.f32 0.0, %v3211
  %3213 = vmatmul.f32.gmra.mxu0 %v3167
  %v3214 = vpop.f32.mrf.mxu0
  %v3215 = vadd.f32 0.0, %v3214
  %3216 = vmatmul.f32.gmra.mxu0 %v3170
  %v3217 = vpop.f32.mrf.mxu0
  %v3218 = vadd.f32 0.0, %v3217
  %3219 = vmatmul.f32.gmra.mxu0 %v3173
  %v3220 = vpop.f32.mrf.mxu0
  %v3221 = vadd.f32 0.0, %v3220
  %3222 = vmatmul.f32.gmra.mxu0 %v3176
  %v3223 = vpop.f32.mrf.mxu0
  %v3224 = vadd.f32 0.0, %v3223
  %3225 = vmatmul.f32.gmra.mxu0 %v3179
  %v3226 = vpop.f32.mrf.mxu0
  %v3227 = vadd.f32 0.0, %v3226
  %3228 = vdwg.mxu0
  %3229 = vst [vmem:[%s9] sm:$0xff] %v3203
  %3230 = vst [vmem:[%s9 + $0x8] sm:$0xff] %v3206
  %3231 = vst [vmem:[%s9 + $0x10] sm:$0xff] %v3209
  %3232 = vst [vmem:[%s9 + $0x18] sm:$0xff] %v3212
  %3233 = vst [vmem:[%s9 + $0x20] sm:$0xff] %v3215
  %3234 = vst [vmem:[%s9 + $0x28] sm:$0xff] %v3218
  %3235 = vst [vmem:[%s9 + $0x30] sm:$0xff] %v3221
  %3236 = vst [vmem:[%s9 + $0x38] sm:$0xff] %v3224
  %3237 = vst [vmem:[%s9 + $0x40] sm:$0x3] %v3227
  %s3238 = scalar_lea.vmem %s0, 48
  %v3239 = vld [vmem:[%s3238] sm:$0xff]
  %v3240 = vld [vmem:[%s3238 + $0x8] sm:$0xff]
  %v3241 = vld [vmem:[%s3238 + $0x10] sm:$0xff]
  %v3242 = vld [vmem:[%s3238 + $0x18] sm:$0xff]
  %v3243 = vld [vmem:[%s3238 + $0x20] sm:$0xff]
  %v3244 = vld [vmem:[%s3238 + $0x28] sm:$0xff]
  %3251 = vrot.lane.b32.xlu0 %v3239, 1
  %v3252 = vpop.permute.xlu0 %3251
  %3253 = vrot.lane.b32.xlu0 %v3240, 1
  %v3254 = vpop.permute.xlu0 %3253
  %3255 = vrot.lane.b32.xlu0 %v3241, 1
  %v3256 = vpop.permute.xlu0 %3255
  %3257 = vrot.lane.b32.xlu0 %v3242, 1
  %v3258 = vpop.permute.xlu0 %3257
  %3259 = vrot.lane.b32.xlu0 %v3243, 1
  %v3260 = vpop.permute.xlu0 %3259
  %3261 = vrot.lane.b32.xlu0 %v3244, 1
  %v3262 = vpop.permute.xlu0 %3261
  %3269 = vst.msk [vmem:[#allocation2 + $0x1] sm:$0xff] %vm98, %v3252
  %3270 = vst.msk [vmem:[#allocation2 + $0x11] sm:$0xff] %vm98, %v3254
  %3271 = vst.msk [vmem:[#allocation2 + $0x21] sm:$0xff] %vm98, %v3256
  %3272 = vst.msk [vmem:[#allocation2 + $0x31] sm:$0xff] %vm98, %v3258
  %3273 = vst.msk [vmem:[#allocation2 + $0x41] sm:$0xff] %vm98, %v3260
  %3274 = vst.msk [vmem:[#allocation2 + $0x51] sm:$0xff] %vm98, %v3262
  %v3275 = vld [vmem:[#allocation2 + $0x1] sm:$0xff]
  %v3276 = vld [vmem:[#allocation2 + $0x9] sm:$0x1]
  %3279 = vrot.lane.b32.xlu0 %v3275, 127
  %v3280 = vpop.permute.xlu0 %3279
  %3281 = vrot.lane.b32.xlu0 %v3276, 127
  %v3282 = vpop.permute.xlu0 %3281
  %3285 = vrot.lane.b32.xlu0 %v3275, 8
  %v3286 = vpop.permute.xlu0 %3285
  %3287 = vrot.lane.b32.xlu0 %v3276, 8
  %v3288 = vpop.permute.xlu0 %3287
  %3291 = vrot.lane.b32.xlu0 %v3275, 17
  %v3292 = vpop.permute.xlu0 %3291
  %3293 = vrot.lane.b32.xlu0 %v3276, 17
  %v3294 = vpop.permute.xlu0 %3293
  %3297 = vrot.lane.b32.xlu0 %v3275, 26
  %v3298 = vpop.permute.xlu0 %3297
  %3299 = vrot.lane.b32.xlu0 %v3276, 26
  %v3300 = vpop.permute.xlu0 %3299
  %3303 = vrot.lane.b32.xlu0 %v3275, 35
  %v3304 = vpop.permute.xlu0 %3303
  %3305 = vrot.lane.b32.xlu0 %v3276, 35
  %v3306 = vpop.permute.xlu0 %3305
  %3309 = vrot.lane.b32.xlu0 %v3275, 44
  %v3310 = vpop.permute.xlu0 %3309
  %3311 = vrot.lane.b32.xlu0 %v3276, 44
  %v3312 = vpop.permute.xlu0 %3311
  %3315 = vrot.lane.b32.xlu0 %v3275, 53
  %v3316 = vpop.permute.xlu0 %3315
  %3317 = vrot.lane.b32.xlu0 %v3276, 53
  %v3318 = vpop.permute.xlu0 %3317
  %3321 = vrot.lane.b32.xlu0 %v3275, 62
  %v3322 = vpop.permute.xlu0 %3321
  %3323 = vrot.lane.b32.xlu0 %v3276, 62
  %v3324 = vpop.permute.xlu0 %3323
  %3327 = vrot.lane.b32.xlu0 %v3275, 71
  %v3328 = vpop.permute.xlu0 %3327
  %3329 = vrot.lane.b32.xlu0 %v3276, 71
  %v3330 = vpop.permute.xlu0 %3329
  %v3333 = vsel %vm163, %v3280, %v3286
  %v3334 = vsel %vm163, %v3282, %v3288
  %v3335 = vsel %vm166, %v3333, %v3292
  %v3336 = vsel %vm166, %v3334, %v3294
  %v3337 = vsel %vm169, %v3335, %v3298
  %v3338 = vsel %vm169, %v3336, %v3300
  %v3339 = vsel %vm172, %v3337, %v3304
  %v3340 = vsel %vm172, %v3338, %v3306
  %v3341 = vsel %vm175, %v3339, %v3310
  %v3342 = vsel %vm175, %v3340, %v3312
  %v3343 = vsel %vm178, %v3341, %v3316
  %v3344 = vsel %vm178, %v3342, %v3318
  %v3345 = vsel %vm181, %v3343, %v3322
  %v3346 = vsel %vm181, %v3344, %v3324
  %v3347 = vsel %vm184, %v3345, %v3328
  %v3348 = vsel %vm184, %v3346, %v3330
  %v3349 = vld [vmem:[%s1] sm:$0x1]
  %v3350 = vperm.slane %v3349, 0
  %v3351 = vmul.f32 %v3347, %v3350
  %v3352 = vmul.f32 %v3348, %v3350
  %v3353 = vadd.f32 %v3351, 0.0
  %v3354 = vadd.f32 %v3352, 0.0
  %v3355 = vld [vmem:[%s1 + $0x1] sm:$0x1]
  %v3356 = vperm.slane %v3355, 0
  %v3357 = vmul.f32 %v3347, %v3356
  %v3358 = vmul.f32 %v3348, %v3356
  %v3359 = vadd.f32 %v3357, 0.0
  %v3360 = vadd.f32 %v3358, 0.0
  %v3361 = vld [vmem:[%s1 + $0x2] sm:$0x1]
  %v3362 = vperm.slane %v3361, 0
  %v3363 = vmul.f32 %v3347, %v3362
  %v3364 = vmul.f32 %v3348, %v3362
  %v3365 = vadd.f32 %v3363, 0.0
  %v3366 = vadd.f32 %v3364, 0.0
  %3367 = vrot.lane.b32.xlu0 %v3275, 9
  %v3368 = vpop.permute.xlu0 %3367
  %3369 = vrot.lane.b32.xlu0 %v3276, 9
  %v3370 = vpop.permute.xlu0 %3369
  %3373 = vrot.lane.b32.xlu0 %v3275, 18
  %v3374 = vpop.permute.xlu0 %3373
  %3375 = vrot.lane.b32.xlu0 %v3276, 18
  %v3376 = vpop.permute.xlu0 %3375
  %3379 = vrot.lane.b32.xlu0 %v3275, 27
  %v3380 = vpop.permute.xlu0 %3379
  %3381 = vrot.lane.b32.xlu0 %v3276, 27
  %v3382 = vpop.permute.xlu0 %3381
  %3385 = vrot.lane.b32.xlu0 %v3275, 36
  %v3386 = vpop.permute.xlu0 %3385
  %3387 = vrot.lane.b32.xlu0 %v3276, 36
  %v3388 = vpop.permute.xlu0 %3387
  %3391 = vrot.lane.b32.xlu0 %v3275, 45
  %v3392 = vpop.permute.xlu0 %3391
  %3393 = vrot.lane.b32.xlu0 %v3276, 45
  %v3394 = vpop.permute.xlu0 %3393
  %3397 = vrot.lane.b32.xlu0 %v3275, 54
  %v3398 = vpop.permute.xlu0 %3397
  %3399 = vrot.lane.b32.xlu0 %v3276, 54
  %v3400 = vpop.permute.xlu0 %3399
  %3403 = vrot.lane.b32.xlu0 %v3275, 63
  %v3404 = vpop.permute.xlu0 %3403
  %3405 = vrot.lane.b32.xlu0 %v3276, 63
  %v3406 = vpop.permute.xlu0 %3405
  %3409 = vrot.lane.b32.xlu0 %v3275, 72
  %v3410 = vpop.permute.xlu0 %3409
  %3411 = vrot.lane.b32.xlu0 %v3276, 72
  %v3412 = vpop.permute.xlu0 %3411
  %v3415 = vsel %vm163, %v3275, %v3368
  %v3416 = vsel %vm163, %v3276, %v3370
  %v3417 = vsel %vm166, %v3415, %v3374
  %v3418 = vsel %vm166, %v3416, %v3376
  %v3419 = vsel %vm169, %v3417, %v3380
  %v3420 = vsel %vm169, %v3418, %v3382
  %v3421 = vsel %vm172, %v3419, %v3386
  %v3422 = vsel %vm172, %v3420, %v3388
  %v3423 = vsel %vm175, %v3421, %v3392
  %v3424 = vsel %vm175, %v3422, %v3394
  %v3425 = vsel %vm178, %v3423, %v3398
  %v3426 = vsel %vm178, %v3424, %v3400
  %v3427 = vsel %vm181, %v3425, %v3404
  %v3428 = vsel %vm181, %v3426, %v3406
  %v3429 = vsel %vm184, %v3427, %v3410
  %v3430 = vsel %vm184, %v3428, %v3412
  %v3431 = vld [vmem:[%s1 + $0x3] sm:$0x1]
  %v3432 = vperm.slane %v3431, 0
  %v3433 = vmul.f32 %v3429, %v3432
  %v3434 = vmul.f32 %v3430, %v3432
  %v3435 = vadd.f32 %v3353, %v3433
  %v3436 = vadd.f32 %v3354, %v3434
  %v3437 = vld [vmem:[%s1 + $0x4] sm:$0x1]
  %v3438 = vperm.slane %v3437, 0
  %v3439 = vmul.f32 %v3429, %v3438
  %v3440 = vmul.f32 %v3430, %v3438
  %v3441 = vadd.f32 %v3359, %v3439
  %v3442 = vadd.f32 %v3360, %v3440
  %v3443 = vld [vmem:[%s1 + $0x5] sm:$0x1]
  %v3444 = vperm.slane %v3443, 0
  %v3445 = vmul.f32 %v3429, %v3444
  %v3446 = vmul.f32 %v3430, %v3444
  %v3447 = vadd.f32 %v3365, %v3445
  %v3448 = vadd.f32 %v3366, %v3446
  %v3449 = vld [vmem:[#allocation2] sm:$0xff]
  %v3450 = vld [vmem:[#allocation2 + $0x8] sm:$0x1]
  %3453 = vrot.lane.b32.xlu0 %v3449, 127
  %v3454 = vpop.permute.xlu0 %3453
  %3455 = vrot.lane.b32.xlu0 %v3450, 127
  %v3456 = vpop.permute.xlu0 %3455
  %3459 = vrot.lane.b32.xlu0 %v3449, 8
  %v3460 = vpop.permute.xlu0 %3459
  %3461 = vrot.lane.b32.xlu0 %v3450, 8
  %v3462 = vpop.permute.xlu0 %3461
  %3465 = vrot.lane.b32.xlu0 %v3449, 17
  %v3466 = vpop.permute.xlu0 %3465
  %3467 = vrot.lane.b32.xlu0 %v3450, 17
  %v3468 = vpop.permute.xlu0 %3467
  %3471 = vrot.lane.b32.xlu0 %v3449, 26
  %v3472 = vpop.permute.xlu0 %3471
  %3473 = vrot.lane.b32.xlu0 %v3450, 26
  %v3474 = vpop.permute.xlu0 %3473
  %3477 = vrot.lane.b32.xlu0 %v3449, 35
  %v3478 = vpop.permute.xlu0 %3477
  %3479 = vrot.lane.b32.xlu0 %v3450, 35
  %v3480 = vpop.permute.xlu0 %3479
  %3483 = vrot.lane.b32.xlu0 %v3449, 44
  %v3484 = vpop.permute.xlu0 %3483
  %3485 = vrot.lane.b32.xlu0 %v3450, 44
  %v3486 = vpop.permute.xlu0 %3485
  %3489 = vrot.lane.b32.xlu0 %v3449, 53
  %v3490 = vpop.permute.xlu0 %3489
  %3491 = vrot.lane.b32.xlu0 %v3450, 53
  %v3492 = vpop.permute.xlu0 %3491
  %3495 = vrot.lane.b32.xlu0 %v3449, 62
  %v3496 = vpop.permute.xlu0 %3495
  %3497 = vrot.lane.b32.xlu0 %v3450, 62
  %v3498 = vpop.permute.xlu0 %3497
  %3501 = vrot.lane.b32.xlu0 %v3449, 71
  %v3502 = vpop.permute.xlu0 %3501
  %3503 = vrot.lane.b32.xlu0 %v3450, 71
  %v3504 = vpop.permute.xlu0 %3503
  %v3507 = vsel %vm163, %v3454, %v3460
  %v3508 = vsel %vm163, %v3456, %v3462
  %v3509 = vsel %vm166, %v3507, %v3466
  %v3510 = vsel %vm166, %v3508, %v3468
  %v3511 = vsel %vm169, %v3509, %v3472
  %v3512 = vsel %vm169, %v3510, %v3474
  %v3513 = vsel %vm172, %v3511, %v3478
  %v3514 = vsel %vm172, %v3512, %v3480
  %v3515 = vsel %vm175, %v3513, %v3484
  %v3516 = vsel %vm175, %v3514, %v3486
  %v3517 = vsel %vm178, %v3515, %v3490
  %v3518 = vsel %vm178, %v3516, %v3492
  %v3519 = vsel %vm181, %v3517, %v3496
  %v3520 = vsel %vm181, %v3518, %v3498
  %v3521 = vsel %vm184, %v3519, %v3502
  %v3522 = vsel %vm184, %v3520, %v3504
  %v3523 = vld [vmem:[%s1 + $0x6] sm:$0x1]
  %v3524 = vperm.slane %v3523, 0
  %v3525 = vmul.f32 %v3521, %v3524
  %v3526 = vmul.f32 %v3522, %v3524
  %v3527 = vadd.f32 %v3435, %v3525
  %v3528 = vadd.f32 %v3436, %v3526
  %v3529 = vld [vmem:[%s1 + $0x7] sm:$0x1]
  %v3530 = vperm.slane %v3529, 0
  %v3531 = vmul.f32 %v3521, %v3530
  %v3532 = vmul.f32 %v3522, %v3530
  %v3533 = vadd.f32 %v3441, %v3531
  %v3534 = vadd.f32 %v3442, %v3532
  %3535 = vrot.lane.b32.xlu0 %v3449, 9
  %v3536 = vpop.permute.xlu0 %3535
  %3537 = vrot.lane.b32.xlu0 %v3450, 9
  %v3538 = vpop.permute.xlu0 %3537
  %3541 = vrot.lane.b32.xlu0 %v3449, 18
  %v3542 = vpop.permute.xlu0 %3541
  %3543 = vrot.lane.b32.xlu0 %v3450, 18
  %v3544 = vpop.permute.xlu0 %3543
  %3547 = vrot.lane.b32.xlu0 %v3449, 27
  %v3548 = vpop.permute.xlu0 %3547
  %3549 = vrot.lane.b32.xlu0 %v3450, 27
  %v3550 = vpop.permute.xlu0 %3549
  %3553 = vrot.lane.b32.xlu0 %v3449, 36
  %v3554 = vpop.permute.xlu0 %3553
  %3555 = vrot.lane.b32.xlu0 %v3450, 36
  %v3556 = vpop.permute.xlu0 %3555
  %3559 = vrot.lane.b32.xlu0 %v3449, 45
  %v3560 = vpop.permute.xlu0 %3559
  %3561 = vrot.lane.b32.xlu0 %v3450, 45
  %v3562 = vpop.permute.xlu0 %3561
  %3565 = vrot.lane.b32.xlu0 %v3449, 54
  %v3566 = vpop.permute.xlu0 %3565
  %3567 = vrot.lane.b32.xlu0 %v3450, 54
  %v3568 = vpop.permute.xlu0 %3567
  %3571 = vrot.lane.b32.xlu0 %v3449, 63
  %v3572 = vpop.permute.xlu0 %3571
  %3573 = vrot.lane.b32.xlu0 %v3450, 63
  %v3574 = vpop.permute.xlu0 %3573
  %3577 = vrot.lane.b32.xlu0 %v3449, 72
  %v3578 = vpop.permute.xlu0 %3577
  %3579 = vrot.lane.b32.xlu0 %v3450, 72
  %v3580 = vpop.permute.xlu0 %3579
  %v3583 = vsel %vm163, %v3449, %v3536
  %v3584 = vsel %vm163, %v3450, %v3538
  %v3585 = vsel %vm166, %v3583, %v3542
  %v3586 = vsel %vm166, %v3584, %v3544
  %v3587 = vsel %vm169, %v3585, %v3548
  %v3588 = vsel %vm169, %v3586, %v3550
  %v3589 = vsel %vm172, %v3587, %v3554
  %v3590 = vsel %vm172, %v3588, %v3556
  %v3591 = vsel %vm175, %v3589, %v3560
  %v3592 = vsel %vm175, %v3590, %v3562
  %v3593 = vsel %vm178, %v3591, %v3566
  %v3594 = vsel %vm178, %v3592, %v3568
  %v3595 = vsel %vm181, %v3593, %v3572
  %v3596 = vsel %vm181, %v3594, %v3574
  %v3597 = vsel %vm184, %v3595, %v3578
  %v3598 = vsel %vm184, %v3596, %v3580
  %v3599 = vld [vmem:[%s1 + $0x9] sm:$0x1]
  %v3600 = vperm.slane %v3599, 0
  %v3601 = vmul.f32 %v3597, %v3600
  %v3602 = vmul.f32 %v3598, %v3600
  %v3603 = vadd.f32 %v3527, %v3601
  %v3604 = vadd.f32 %v3528, %v3602
  %v3605 = vld [vmem:[%s1 + $0xa] sm:$0x1]
  %v3606 = vperm.slane %v3605, 0
  %v3607 = vmul.f32 %v3597, %v3606
  %v3608 = vmul.f32 %v3598, %v3606
  %v3609 = vadd.f32 %v3533, %v3607
  %v3610 = vadd.f32 %v3534, %v3608
  %v3611 = vld [vmem:[%s449 + $0x1] sm:$0xff]
  %v3612 = vld [vmem:[%s449 + $0x9] sm:$0x1]
  %3615 = vrot.lane.b32.xlu0 %v3611, 127
  %v3616 = vpop.permute.xlu0 %3615
  %3617 = vrot.lane.b32.xlu0 %v3612, 127
  %v3618 = vpop.permute.xlu0 %3617
  %3621 = vrot.lane.b32.xlu0 %v3611, 8
  %v3622 = vpop.permute.xlu0 %3621
  %3623 = vrot.lane.b32.xlu0 %v3612, 8
  %v3624 = vpop.permute.xlu0 %3623
  %3627 = vrot.lane.b32.xlu0 %v3611, 17
  %v3628 = vpop.permute.xlu0 %3627
  %3629 = vrot.lane.b32.xlu0 %v3612, 17
  %v3630 = vpop.permute.xlu0 %3629
  %3633 = vrot.lane.b32.xlu0 %v3611, 26
  %v3634 = vpop.permute.xlu0 %3633
  %3635 = vrot.lane.b32.xlu0 %v3612, 26
  %v3636 = vpop.permute.xlu0 %3635
  %3639 = vrot.lane.b32.xlu0 %v3611, 35
  %v3640 = vpop.permute.xlu0 %3639
  %3641 = vrot.lane.b32.xlu0 %v3612, 35
  %v3642 = vpop.permute.xlu0 %3641
  %3645 = vrot.lane.b32.xlu0 %v3611, 44
  %v3646 = vpop.permute.xlu0 %3645
  %3647 = vrot.lane.b32.xlu0 %v3612, 44
  %v3648 = vpop.permute.xlu0 %3647
  %3651 = vrot.lane.b32.xlu0 %v3611, 53
  %v3652 = vpop.permute.xlu0 %3651
  %3653 = vrot.lane.b32.xlu0 %v3612, 53
  %v3654 = vpop.permute.xlu0 %3653
  %3657 = vrot.lane.b32.xlu0 %v3611, 62
  %v3658 = vpop.permute.xlu0 %3657
  %3659 = vrot.lane.b32.xlu0 %v3612, 62
  %v3660 = vpop.permute.xlu0 %3659
  %3663 = vrot.lane.b32.xlu0 %v3611, 71
  %v3664 = vpop.permute.xlu0 %3663
  %3665 = vrot.lane.b32.xlu0 %v3612, 71
  %v3666 = vpop.permute.xlu0 %3665
  %v3669 = vsel %vm163, %v3616, %v3622
  %v3670 = vsel %vm163, %v3618, %v3624
  %v3671 = vsel %vm166, %v3669, %v3628
  %v3672 = vsel %vm166, %v3670, %v3630
  %v3673 = vsel %vm169, %v3671, %v3634
  %v3674 = vsel %vm169, %v3672, %v3636
  %v3675 = vsel %vm172, %v3673, %v3640
  %v3676 = vsel %vm172, %v3674, %v3642
  %v3677 = vsel %vm175, %v3675, %v3646
  %v3678 = vsel %vm175, %v3676, %v3648
  %v3679 = vsel %vm178, %v3677, %v3652
  %v3680 = vsel %vm178, %v3678, %v3654
  %v3681 = vsel %vm181, %v3679, %v3658
  %v3682 = vsel %vm181, %v3680, %v3660
  %v3683 = vsel %vm184, %v3681, %v3664
  %v3684 = vsel %vm184, %v3682, %v3666
  %v3685 = vld [vmem:[%s1 + $0xc] sm:$0x1]
  %v3686 = vperm.slane %v3685, 0
  %v3687 = vmul.f32 %v3683, %v3686
  %v3688 = vmul.f32 %v3684, %v3686
  %v3689 = vadd.f32 %v3603, %v3687
  %v3690 = vadd.f32 %v3604, %v3688
  %v3691 = vld [vmem:[%s1 + $0xd] sm:$0x1]
  %v3692 = vperm.slane %v3691, 0
  %v3693 = vmul.f32 %v3683, %v3692
  %v3694 = vmul.f32 %v3684, %v3692
  %v3695 = vadd.f32 %v3609, %v3693
  %v3696 = vadd.f32 %v3610, %v3694
  %v3697 = vld [vmem:[%s1 + $0xe] sm:$0x1]
  %v3698 = vperm.slane %v3697, 0
  %v3699 = vmul.f32 %v3683, %v3698
  %v3700 = vmul.f32 %v3684, %v3698
  %v3701 = vadd.f32 %v3447, %v3699
  %v3702 = vadd.f32 %v3448, %v3700
  %3703 = vrot.lane.b32.xlu0 %v3611, 9
  %v3704 = vpop.permute.xlu0 %3703
  %3705 = vrot.lane.b32.xlu0 %v3612, 9
  %v3706 = vpop.permute.xlu0 %3705
  %3709 = vrot.lane.b32.xlu0 %v3611, 18
  %v3710 = vpop.permute.xlu0 %3709
  %3711 = vrot.lane.b32.xlu0 %v3612, 18
  %v3712 = vpop.permute.xlu0 %3711
  %3715 = vrot.lane.b32.xlu0 %v3611, 27
  %v3716 = vpop.permute.xlu0 %3715
  %3717 = vrot.lane.b32.xlu0 %v3612, 27
  %v3718 = vpop.permute.xlu0 %3717
  %3721 = vrot.lane.b32.xlu0 %v3611, 36
  %v3722 = vpop.permute.xlu0 %3721
  %3723 = vrot.lane.b32.xlu0 %v3612, 36
  %v3724 = vpop.permute.xlu0 %3723
  %3727 = vrot.lane.b32.xlu0 %v3611, 45
  %v3728 = vpop.permute.xlu0 %3727
  %3729 = vrot.lane.b32.xlu0 %v3612, 45
  %v3730 = vpop.permute.xlu0 %3729
  %3733 = vrot.lane.b32.xlu0 %v3611, 54
  %v3734 = vpop.permute.xlu0 %3733
  %3735 = vrot.lane.b32.xlu0 %v3612, 54
  %v3736 = vpop.permute.xlu0 %3735
  %3739 = vrot.lane.b32.xlu0 %v3611, 63
  %v3740 = vpop.permute.xlu0 %3739
  %3741 = vrot.lane.b32.xlu0 %v3612, 63
  %v3742 = vpop.permute.xlu0 %3741
  %3745 = vrot.lane.b32.xlu0 %v3611, 72
  %v3746 = vpop.permute.xlu0 %3745
  %3747 = vrot.lane.b32.xlu0 %v3612, 72
  %v3748 = vpop.permute.xlu0 %3747
  %v3751 = vsel %vm163, %v3611, %v3704
  %v3752 = vsel %vm163, %v3612, %v3706
  %v3753 = vsel %vm166, %v3751, %v3710
  %v3754 = vsel %vm166, %v3752, %v3712
  %v3755 = vsel %vm169, %v3753, %v3716
  %v3756 = vsel %vm169, %v3754, %v3718
  %v3757 = vsel %vm172, %v3755, %v3722
  %v3758 = vsel %vm172, %v3756, %v3724
  %v3759 = vsel %vm175, %v3757, %v3728
  %v3760 = vsel %vm175, %v3758, %v3730
  %v3761 = vsel %vm178, %v3759, %v3734
  %v3762 = vsel %vm178, %v3760, %v3736
  %v3763 = vsel %vm181, %v3761, %v3740
  %v3764 = vsel %vm181, %v3762, %v3742
  %v3765 = vsel %vm184, %v3763, %v3746
  %v3766 = vsel %vm184, %v3764, %v3748
  %v3767 = vld [vmem:[%s1 + $0xf] sm:$0x1]
  %v3768 = vperm.slane %v3767, 0
  %v3769 = vmul.f32 %v3765, %v3768
  %v3770 = vmul.f32 %v3766, %v3768
  %v3771 = vadd.f32 %v3689, %v3769
  %v3772 = vadd.f32 %v3690, %v3770
  %v3773 = vld [vmem:[%s1 + $0x10] sm:$0x1]
  %v3774 = vperm.slane %v3773, 0
  %v3775 = vmul.f32 %v3765, %v3774
  %v3776 = vmul.f32 %v3766, %v3774
  %v3777 = vadd.f32 %v3695, %v3775
  %v3778 = vadd.f32 %v3696, %v3776
  %v3779 = vld [vmem:[%s1 + $0x11] sm:$0x1]
  %v3780 = vperm.slane %v3779, 0
  %v3781 = vmul.f32 %v3765, %v3780
  %v3782 = vmul.f32 %v3766, %v3780
  %v3783 = vadd.f32 %v3701, %v3781
  %v3784 = vadd.f32 %v3702, %v3782
  %v3785 = vld [vmem:[%s449] sm:$0xff]
  %v3786 = vld [vmem:[%s449 + $0x8] sm:$0x1]
  %3789 = vrot.lane.b32.xlu0 %v3785, 127
  %v3790 = vpop.permute.xlu0 %3789
  %3791 = vrot.lane.b32.xlu0 %v3786, 127
  %v3792 = vpop.permute.xlu0 %3791
  %3795 = vrot.lane.b32.xlu0 %v3785, 8
  %v3796 = vpop.permute.xlu0 %3795
  %3797 = vrot.lane.b32.xlu0 %v3786, 8
  %v3798 = vpop.permute.xlu0 %3797
  %3801 = vrot.lane.b32.xlu0 %v3785, 17
  %v3802 = vpop.permute.xlu0 %3801
  %3803 = vrot.lane.b32.xlu0 %v3786, 17
  %v3804 = vpop.permute.xlu0 %3803
  %3807 = vrot.lane.b32.xlu0 %v3785, 26
  %v3808 = vpop.permute.xlu0 %3807
  %3809 = vrot.lane.b32.xlu0 %v3786, 26
  %v3810 = vpop.permute.xlu0 %3809
  %3813 = vrot.lane.b32.xlu0 %v3785, 35
  %v3814 = vpop.permute.xlu0 %3813
  %3815 = vrot.lane.b32.xlu0 %v3786, 35
  %v3816 = vpop.permute.xlu0 %3815
  %3819 = vrot.lane.b32.xlu0 %v3785, 44
  %v3820 = vpop.permute.xlu0 %3819
  %3821 = vrot.lane.b32.xlu0 %v3786, 44
  %v3822 = vpop.permute.xlu0 %3821
  %3825 = vrot.lane.b32.xlu0 %v3785, 53
  %v3826 = vpop.permute.xlu0 %3825
  %3827 = vrot.lane.b32.xlu0 %v3786, 53
  %v3828 = vpop.permute.xlu0 %3827
  %3831 = vrot.lane.b32.xlu0 %v3785, 62
  %v3832 = vpop.permute.xlu0 %3831
  %3833 = vrot.lane.b32.xlu0 %v3786, 62
  %v3834 = vpop.permute.xlu0 %3833
  %3837 = vrot.lane.b32.xlu0 %v3785, 71
  %v3838 = vpop.permute.xlu0 %3837
  %3839 = vrot.lane.b32.xlu0 %v3786, 71
  %v3840 = vpop.permute.xlu0 %3839
  %v3843 = vsel %vm163, %v3790, %v3796
  %v3844 = vsel %vm163, %v3792, %v3798
  %v3845 = vsel %vm166, %v3843, %v3802
  %v3846 = vsel %vm166, %v3844, %v3804
  %v3847 = vsel %vm169, %v3845, %v3808
  %v3848 = vsel %vm169, %v3846, %v3810
  %v3849 = vsel %vm172, %v3847, %v3814
  %v3850 = vsel %vm172, %v3848, %v3816
  %v3851 = vsel %vm175, %v3849, %v3820
  %v3852 = vsel %vm175, %v3850, %v3822
  %v3853 = vsel %vm178, %v3851, %v3826
  %v3854 = vsel %vm178, %v3852, %v3828
  %v3855 = vsel %vm181, %v3853, %v3832
  %v3856 = vsel %vm181, %v3854, %v3834
  %v3857 = vsel %vm184, %v3855, %v3838
  %v3858 = vsel %vm184, %v3856, %v3840
  %v3859 = vld [vmem:[%s1 + $0x12] sm:$0x1]
  %v3860 = vperm.slane %v3859, 0
  %v3861 = vmul.f32 %v3857, %v3860
  %v3862 = vmul.f32 %v3858, %v3860
  %v3863 = vadd.f32 %v3771, %v3861
  %v3864 = vadd.f32 %v3772, %v3862
  %v3865 = vld [vmem:[%s1 + $0x13] sm:$0x1]
  %v3866 = vperm.slane %v3865, 0
  %v3867 = vmul.f32 %v3857, %v3866
  %v3868 = vmul.f32 %v3858, %v3866
  %v3869 = vadd.f32 %v3777, %v3867
  %v3870 = vadd.f32 %v3778, %v3868
  %3871 = vrot.lane.b32.xlu0 %v3785, 9
  %v3872 = vpop.permute.xlu0 %3871
  %3873 = vrot.lane.b32.xlu0 %v3786, 9
  %v3874 = vpop.permute.xlu0 %3873
  %3877 = vrot.lane.b32.xlu0 %v3785, 18
  %v3878 = vpop.permute.xlu0 %3877
  %3879 = vrot.lane.b32.xlu0 %v3786, 18
  %v3880 = vpop.permute.xlu0 %3879
  %3883 = vrot.lane.b32.xlu0 %v3785, 27
  %v3884 = vpop.permute.xlu0 %3883
  %3885 = vrot.lane.b32.xlu0 %v3786, 27
  %v3886 = vpop.permute.xlu0 %3885
  %3889 = vrot.lane.b32.xlu0 %v3785, 36
  %v3890 = vpop.permute.xlu0 %3889
  %3891 = vrot.lane.b32.xlu0 %v3786, 36
  %v3892 = vpop.permute.xlu0 %3891
  %3895 = vrot.lane.b32.xlu0 %v3785, 45
  %v3896 = vpop.permute.xlu0 %3895
  %3897 = vrot.lane.b32.xlu0 %v3786, 45
  %v3898 = vpop.permute.xlu0 %3897
  %3901 = vrot.lane.b32.xlu0 %v3785, 54
  %v3902 = vpop.permute.xlu0 %3901
  %3903 = vrot.lane.b32.xlu0 %v3786, 54
  %v3904 = vpop.permute.xlu0 %3903
  %3907 = vrot.lane.b32.xlu0 %v3785, 63
  %v3908 = vpop.permute.xlu0 %3907
  %3909 = vrot.lane.b32.xlu0 %v3786, 63
  %v3910 = vpop.permute.xlu0 %3909
  %3913 = vrot.lane.b32.xlu0 %v3785, 72
  %v3914 = vpop.permute.xlu0 %3913
  %3915 = vrot.lane.b32.xlu0 %v3786, 72
  %v3916 = vpop.permute.xlu0 %3915
  %v3919 = vsel %vm163, %v3785, %v3872
  %v3920 = vsel %vm163, %v3786, %v3874
  %v3921 = vsel %vm166, %v3919, %v3878
  %v3922 = vsel %vm166, %v3920, %v3880
  %v3923 = vsel %vm169, %v3921, %v3884
  %v3924 = vsel %vm169, %v3922, %v3886
  %v3925 = vsel %vm172, %v3923, %v3890
  %v3926 = vsel %vm172, %v3924, %v3892
  %v3927 = vsel %vm175, %v3925, %v3896
  %v3928 = vsel %vm175, %v3926, %v3898
  %v3929 = vsel %vm178, %v3927, %v3902
  %v3930 = vsel %vm178, %v3928, %v3904
  %v3931 = vsel %vm181, %v3929, %v3908
  %v3932 = vsel %vm181, %v3930, %v3910
  %v3933 = vsel %vm184, %v3931, %v3914
  %v3934 = vsel %vm184, %v3932, %v3916
  %v3935 = vld [vmem:[%s1 + $0x15] sm:$0x1]
  %v3936 = vperm.slane %v3935, 0
  %v3937 = vmul.f32 %v3933, %v3936
  %v3938 = vmul.f32 %v3934, %v3936
  %v3939 = vadd.f32 %v3863, %v3937
  %v3940 = vadd.f32 %v3864, %v3938
  %v3941 = vld [vmem:[%s1 + $0x16] sm:$0x1]
  %v3942 = vperm.slane %v3941, 0
  %v3943 = vmul.f32 %v3933, %v3942
  %v3944 = vmul.f32 %v3934, %v3942
  %v3945 = vadd.f32 %v3869, %v3943
  %v3946 = vadd.f32 %v3870, %v3944
  %v3947 = vld [vmem:[%s786 + $0x1] sm:$0xff]
  %v3948 = vld [vmem:[%s786 + $0x9] sm:$0x1]
  %3951 = vrot.lane.b32.xlu0 %v3947, 127
  %v3952 = vpop.permute.xlu0 %3951
  %3953 = vrot.lane.b32.xlu0 %v3948, 127
  %v3954 = vpop.permute.xlu0 %3953
  %3957 = vrot.lane.b32.xlu0 %v3947, 8
  %v3958 = vpop.permute.xlu0 %3957
  %3959 = vrot.lane.b32.xlu0 %v3948, 8
  %v3960 = vpop.permute.xlu0 %3959
  %3963 = vrot.lane.b32.xlu0 %v3947, 17
  %v3964 = vpop.permute.xlu0 %3963
  %3965 = vrot.lane.b32.xlu0 %v3948, 17
  %v3966 = vpop.permute.xlu0 %3965
  %3969 = vrot.lane.b32.xlu0 %v3947, 26
  %v3970 = vpop.permute.xlu0 %3969
  %3971 = vrot.lane.b32.xlu0 %v3948, 26
  %v3972 = vpop.permute.xlu0 %3971
  %3975 = vrot.lane.b32.xlu0 %v3947, 35
  %v3976 = vpop.permute.xlu0 %3975
  %3977 = vrot.lane.b32.xlu0 %v3948, 35
  %v3978 = vpop.permute.xlu0 %3977
  %3981 = vrot.lane.b32.xlu0 %v3947, 44
  %v3982 = vpop.permute.xlu0 %3981
  %3983 = vrot.lane.b32.xlu0 %v3948, 44
  %v3984 = vpop.permute.xlu0 %3983
  %3987 = vrot.lane.b32.xlu0 %v3947, 53
  %v3988 = vpop.permute.xlu0 %3987
  %3989 = vrot.lane.b32.xlu0 %v3948, 53
  %v3990 = vpop.permute.xlu0 %3989
  %3993 = vrot.lane.b32.xlu0 %v3947, 62
  %v3994 = vpop.permute.xlu0 %3993
  %3995 = vrot.lane.b32.xlu0 %v3948, 62
  %v3996 = vpop.permute.xlu0 %3995
  %3999 = vrot.lane.b32.xlu0 %v3947, 71
  %v4000 = vpop.permute.xlu0 %3999
  %4001 = vrot.lane.b32.xlu0 %v3948, 71
  %v4002 = vpop.permute.xlu0 %4001
  %v4005 = vsel %vm163, %v3952, %v3958
  %v4006 = vsel %vm163, %v3954, %v3960
  %v4007 = vsel %vm166, %v4005, %v3964
  %v4008 = vsel %vm166, %v4006, %v3966
  %v4009 = vsel %vm169, %v4007, %v3970
  %v4010 = vsel %vm169, %v4008, %v3972
  %v4011 = vsel %vm172, %v4009, %v3976
  %v4012 = vsel %vm172, %v4010, %v3978
  %v4013 = vsel %vm175, %v4011, %v3982
  %v4014 = vsel %vm175, %v4012, %v3984
  %v4015 = vsel %vm178, %v4013, %v3988
  %v4016 = vsel %vm178, %v4014, %v3990
  %v4017 = vsel %vm181, %v4015, %v3994
  %v4018 = vsel %vm181, %v4016, %v3996
  %v4019 = vsel %vm184, %v4017, %v4000
  %v4020 = vsel %vm184, %v4018, %v4002
  %v4021 = vld [vmem:[%s1 + $0x18] sm:$0x1]
  %v4022 = vperm.slane %v4021, 0
  %v4023 = vmul.f32 %v4019, %v4022
  %v4024 = vmul.f32 %v4020, %v4022
  %v4025 = vadd.f32 %v3939, %v4023
  %v4026 = vadd.f32 %v3940, %v4024
  %v4027 = vld [vmem:[%s1 + $0x19] sm:$0x1]
  %v4028 = vperm.slane %v4027, 0
  %v4029 = vmul.f32 %v4019, %v4028
  %v4030 = vmul.f32 %v4020, %v4028
  %v4031 = vadd.f32 %v3945, %v4029
  %v4032 = vadd.f32 %v3946, %v4030
  %v4033 = vld [vmem:[%s1 + $0x1a] sm:$0x1]
  %v4034 = vperm.slane %v4033, 0
  %v4035 = vmul.f32 %v4019, %v4034
  %v4036 = vmul.f32 %v4020, %v4034
  %v4037 = vadd.f32 %v3783, %v4035
  %v4038 = vadd.f32 %v3784, %v4036
  %4039 = vrot.lane.b32.xlu0 %v3947, 9
  %v4040 = vpop.permute.xlu0 %4039
  %4041 = vrot.lane.b32.xlu0 %v3948, 9
  %v4042 = vpop.permute.xlu0 %4041
  %4045 = vrot.lane.b32.xlu0 %v3947, 18
  %v4046 = vpop.permute.xlu0 %4045
  %4047 = vrot.lane.b32.xlu0 %v3948, 18
  %v4048 = vpop.permute.xlu0 %4047
  %4051 = vrot.lane.b32.xlu0 %v3947, 27
  %v4052 = vpop.permute.xlu0 %4051
  %4053 = vrot.lane.b32.xlu0 %v3948, 27
  %v4054 = vpop.permute.xlu0 %4053
  %4057 = vrot.lane.b32.xlu0 %v3947, 36
  %v4058 = vpop.permute.xlu0 %4057
  %4059 = vrot.lane.b32.xlu0 %v3948, 36
  %v4060 = vpop.permute.xlu0 %4059
  %4063 = vrot.lane.b32.xlu0 %v3947, 45
  %v4064 = vpop.permute.xlu0 %4063
  %4065 = vrot.lane.b32.xlu0 %v3948, 45
  %v4066 = vpop.permute.xlu0 %4065
  %4069 = vrot.lane.b32.xlu0 %v3947, 54
  %v4070 = vpop.permute.xlu0 %4069
  %4071 = vrot.lane.b32.xlu0 %v3948, 54
  %v4072 = vpop.permute.xlu0 %4071
  %4075 = vrot.lane.b32.xlu0 %v3947, 63
  %v4076 = vpop.permute.xlu0 %4075
  %4077 = vrot.lane.b32.xlu0 %v3948, 63
  %v4078 = vpop.permute.xlu0 %4077
  %4081 = vrot.lane.b32.xlu0 %v3947, 72
  %v4082 = vpop.permute.xlu0 %4081
  %4083 = vrot.lane.b32.xlu0 %v3948, 72
  %v4084 = vpop.permute.xlu0 %4083
  %v4087 = vsel %vm163, %v3947, %v4040
  %v4088 = vsel %vm163, %v3948, %v4042
  %v4089 = vsel %vm166, %v4087, %v4046
  %v4090 = vsel %vm166, %v4088, %v4048
  %v4091 = vsel %vm169, %v4089, %v4052
  %v4092 = vsel %vm169, %v4090, %v4054
  %v4093 = vsel %vm172, %v4091, %v4058
  %v4094 = vsel %vm172, %v4092, %v4060
  %v4095 = vsel %vm175, %v4093, %v4064
  %v4096 = vsel %vm175, %v4094, %v4066
  %v4097 = vsel %vm178, %v4095, %v4070
  %v4098 = vsel %vm178, %v4096, %v4072
  %v4099 = vsel %vm181, %v4097, %v4076
  %v4100 = vsel %vm181, %v4098, %v4078
  %v4101 = vsel %vm184, %v4099, %v4082
  %v4102 = vsel %vm184, %v4100, %v4084
  %v4103 = vld [vmem:[%s1 + $0x1b] sm:$0x1]
  %v4104 = vperm.slane %v4103, 0
  %v4105 = vmul.f32 %v4101, %v4104
  %v4106 = vmul.f32 %v4102, %v4104
  %v4107 = vadd.f32 %v4025, %v4105
  %v4108 = vadd.f32 %v4026, %v4106
  %v4109 = vld [vmem:[%s1 + $0x1c] sm:$0x1]
  %v4110 = vperm.slane %v4109, 0
  %v4111 = vmul.f32 %v4101, %v4110
  %v4112 = vmul.f32 %v4102, %v4110
  %v4113 = vadd.f32 %v4031, %v4111
  %v4114 = vadd.f32 %v4032, %v4112
  %v4115 = vld [vmem:[%s1 + $0x1d] sm:$0x1]
  %v4116 = vperm.slane %v4115, 0
  %v4117 = vmul.f32 %v4101, %v4116
  %v4118 = vmul.f32 %v4102, %v4116
  %v4119 = vadd.f32 %v4037, %v4117
  %v4120 = vadd.f32 %v4038, %v4118
  %v4121 = vld [vmem:[%s786] sm:$0xff]
  %v4122 = vld [vmem:[%s786 + $0x8] sm:$0x1]
  %4125 = vrot.lane.b32.xlu0 %v4121, 127
  %v4126 = vpop.permute.xlu0 %4125
  %4127 = vrot.lane.b32.xlu0 %v4122, 127
  %v4128 = vpop.permute.xlu0 %4127
  %4131 = vrot.lane.b32.xlu0 %v4121, 8
  %v4132 = vpop.permute.xlu0 %4131
  %4133 = vrot.lane.b32.xlu0 %v4122, 8
  %v4134 = vpop.permute.xlu0 %4133
  %4137 = vrot.lane.b32.xlu0 %v4121, 17
  %v4138 = vpop.permute.xlu0 %4137
  %4139 = vrot.lane.b32.xlu0 %v4122, 17
  %v4140 = vpop.permute.xlu0 %4139
  %4143 = vrot.lane.b32.xlu0 %v4121, 26
  %v4144 = vpop.permute.xlu0 %4143
  %4145 = vrot.lane.b32.xlu0 %v4122, 26
  %v4146 = vpop.permute.xlu0 %4145
  %4149 = vrot.lane.b32.xlu0 %v4121, 35
  %v4150 = vpop.permute.xlu0 %4149
  %4151 = vrot.lane.b32.xlu0 %v4122, 35
  %v4152 = vpop.permute.xlu0 %4151
  %4155 = vrot.lane.b32.xlu0 %v4121, 44
  %v4156 = vpop.permute.xlu0 %4155
  %4157 = vrot.lane.b32.xlu0 %v4122, 44
  %v4158 = vpop.permute.xlu0 %4157
  %4161 = vrot.lane.b32.xlu0 %v4121, 53
  %v4162 = vpop.permute.xlu0 %4161
  %4163 = vrot.lane.b32.xlu0 %v4122, 53
  %v4164 = vpop.permute.xlu0 %4163
  %4167 = vrot.lane.b32.xlu0 %v4121, 62
  %v4168 = vpop.permute.xlu0 %4167
  %4169 = vrot.lane.b32.xlu0 %v4122, 62
  %v4170 = vpop.permute.xlu0 %4169
  %4173 = vrot.lane.b32.xlu0 %v4121, 71
  %v4174 = vpop.permute.xlu0 %4173
  %4175 = vrot.lane.b32.xlu0 %v4122, 71
  %v4176 = vpop.permute.xlu0 %4175
  %v4179 = vsel %vm163, %v4126, %v4132
  %v4180 = vsel %vm163, %v4128, %v4134
  %v4181 = vsel %vm166, %v4179, %v4138
  %v4182 = vsel %vm166, %v4180, %v4140
  %v4183 = vsel %vm169, %v4181, %v4144
  %v4184 = vsel %vm169, %v4182, %v4146
  %v4185 = vsel %vm172, %v4183, %v4150
  %v4186 = vsel %vm172, %v4184, %v4152
  %v4187 = vsel %vm175, %v4185, %v4156
  %v4188 = vsel %vm175, %v4186, %v4158
  %v4189 = vsel %vm178, %v4187, %v4162
  %v4190 = vsel %vm178, %v4188, %v4164
  %v4191 = vsel %vm181, %v4189, %v4168
  %v4192 = vsel %vm181, %v4190, %v4170
  %v4193 = vsel %vm184, %v4191, %v4174
  %v4194 = vsel %vm184, %v4192, %v4176
  %v4195 = vld [vmem:[%s1 + $0x1e] sm:$0x1]
  %v4196 = vperm.slane %v4195, 0
  %v4197 = vmul.f32 %v4193, %v4196
  %v4198 = vmul.f32 %v4194, %v4196
  %v4199 = vadd.f32 %v4107, %v4197
  %v4200 = vadd.f32 %v4108, %v4198
  %v4201 = vld [vmem:[%s1 + $0x1f] sm:$0x1]
  %v4202 = vperm.slane %v4201, 0
  %v4203 = vmul.f32 %v4193, %v4202
  %v4204 = vmul.f32 %v4194, %v4202
  %v4205 = vadd.f32 %v4113, %v4203
  %v4206 = vadd.f32 %v4114, %v4204
  %4207 = vrot.lane.b32.xlu0 %v4121, 9
  %v4208 = vpop.permute.xlu0 %4207
  %4209 = vrot.lane.b32.xlu0 %v4122, 9
  %v4210 = vpop.permute.xlu0 %4209
  %4213 = vrot.lane.b32.xlu0 %v4121, 18
  %v4214 = vpop.permute.xlu0 %4213
  %4215 = vrot.lane.b32.xlu0 %v4122, 18
  %v4216 = vpop.permute.xlu0 %4215
  %4219 = vrot.lane.b32.xlu0 %v4121, 27
  %v4220 = vpop.permute.xlu0 %4219
  %4221 = vrot.lane.b32.xlu0 %v4122, 27
  %v4222 = vpop.permute.xlu0 %4221
  %4225 = vrot.lane.b32.xlu0 %v4121, 36
  %v4226 = vpop.permute.xlu0 %4225
  %4227 = vrot.lane.b32.xlu0 %v4122, 36
  %v4228 = vpop.permute.xlu0 %4227
  %4231 = vrot.lane.b32.xlu0 %v4121, 45
  %v4232 = vpop.permute.xlu0 %4231
  %4233 = vrot.lane.b32.xlu0 %v4122, 45
  %v4234 = vpop.permute.xlu0 %4233
  %4237 = vrot.lane.b32.xlu0 %v4121, 54
  %v4238 = vpop.permute.xlu0 %4237
  %4239 = vrot.lane.b32.xlu0 %v4122, 54
  %v4240 = vpop.permute.xlu0 %4239
  %4243 = vrot.lane.b32.xlu0 %v4121, 63
  %v4244 = vpop.permute.xlu0 %4243
  %4245 = vrot.lane.b32.xlu0 %v4122, 63
  %v4246 = vpop.permute.xlu0 %4245
  %4249 = vrot.lane.b32.xlu0 %v4121, 72
  %v4250 = vpop.permute.xlu0 %4249
  %4251 = vrot.lane.b32.xlu0 %v4122, 72
  %v4252 = vpop.permute.xlu0 %4251
  %v4255 = vsel %vm163, %v4121, %v4208
  %v4256 = vsel %vm163, %v4122, %v4210
  %v4257 = vsel %vm166, %v4255, %v4214
  %v4258 = vsel %vm166, %v4256, %v4216
  %v4259 = vsel %vm169, %v4257, %v4220
  %v4260 = vsel %vm169, %v4258, %v4222
  %v4261 = vsel %vm172, %v4259, %v4226
  %v4262 = vsel %vm172, %v4260, %v4228
  %v4263 = vsel %vm175, %v4261, %v4232
  %v4264 = vsel %vm175, %v4262, %v4234
  %v4265 = vsel %vm178, %v4263, %v4238
  %v4266 = vsel %vm178, %v4264, %v4240
  %v4267 = vsel %vm181, %v4265, %v4244
  %v4268 = vsel %vm181, %v4266, %v4246
  %v4269 = vsel %vm184, %v4267, %v4250
  %v4270 = vsel %vm184, %v4268, %v4252
  %v4271 = vld [vmem:[%s1 + $0x21] sm:$0x1]
  %v4272 = vperm.slane %v4271, 0
  %v4273 = vmul.f32 %v4269, %v4272
  %v4274 = vmul.f32 %v4270, %v4272
  %v4275 = vadd.f32 %v4199, %v4273
  %v4276 = vadd.f32 %v4200, %v4274
  %v4277 = vld [vmem:[%s1 + $0x22] sm:$0x1]
  %v4278 = vperm.slane %v4277, 0
  %v4279 = vmul.f32 %v4269, %v4278
  %v4280 = vmul.f32 %v4270, %v4278
  %v4281 = vadd.f32 %v4205, %v4279
  %v4282 = vadd.f32 %v4206, %v4280
  %v4283 = vld [vmem:[%s1123 + $0x1] sm:$0xff]
  %v4284 = vld [vmem:[%s1123 + $0x9] sm:$0x1]
  %4287 = vrot.lane.b32.xlu0 %v4283, 127
  %v4288 = vpop.permute.xlu0 %4287
  %4289 = vrot.lane.b32.xlu0 %v4284, 127
  %v4290 = vpop.permute.xlu0 %4289
  %4293 = vrot.lane.b32.xlu0 %v4283, 8
  %v4294 = vpop.permute.xlu0 %4293
  %4295 = vrot.lane.b32.xlu0 %v4284, 8
  %v4296 = vpop.permute.xlu0 %4295
  %4299 = vrot.lane.b32.xlu0 %v4283, 17
  %v4300 = vpop.permute.xlu0 %4299
  %4301 = vrot.lane.b32.xlu0 %v4284, 17
  %v4302 = vpop.permute.xlu0 %4301
  %4305 = vrot.lane.b32.xlu0 %v4283, 26
  %v4306 = vpop.permute.xlu0 %4305
  %4307 = vrot.lane.b32.xlu0 %v4284, 26
  %v4308 = vpop.permute.xlu0 %4307
  %4311 = vrot.lane.b32.xlu0 %v4283, 35
  %v4312 = vpop.permute.xlu0 %4311
  %4313 = vrot.lane.b32.xlu0 %v4284, 35
  %v4314 = vpop.permute.xlu0 %4313
  %4317 = vrot.lane.b32.xlu0 %v4283, 44
  %v4318 = vpop.permute.xlu0 %4317
  %4319 = vrot.lane.b32.xlu0 %v4284, 44
  %v4320 = vpop.permute.xlu0 %4319
  %4323 = vrot.lane.b32.xlu0 %v4283, 53
  %v4324 = vpop.permute.xlu0 %4323
  %4325 = vrot.lane.b32.xlu0 %v4284, 53
  %v4326 = vpop.permute.xlu0 %4325
  %4329 = vrot.lane.b32.xlu0 %v4283, 62
  %v4330 = vpop.permute.xlu0 %4329
  %4331 = vrot.lane.b32.xlu0 %v4284, 62
  %v4332 = vpop.permute.xlu0 %4331
  %4335 = vrot.lane.b32.xlu0 %v4283, 71
  %v4336 = vpop.permute.xlu0 %4335
  %4337 = vrot.lane.b32.xlu0 %v4284, 71
  %v4338 = vpop.permute.xlu0 %4337
  %v4341 = vsel %vm163, %v4288, %v4294
  %v4342 = vsel %vm163, %v4290, %v4296
  %v4343 = vsel %vm166, %v4341, %v4300
  %v4344 = vsel %vm166, %v4342, %v4302
  %v4345 = vsel %vm169, %v4343, %v4306
  %v4346 = vsel %vm169, %v4344, %v4308
  %v4347 = vsel %vm172, %v4345, %v4312
  %v4348 = vsel %vm172, %v4346, %v4314
  %v4349 = vsel %vm175, %v4347, %v4318
  %v4350 = vsel %vm175, %v4348, %v4320
  %v4351 = vsel %vm178, %v4349, %v4324
  %v4352 = vsel %vm178, %v4350, %v4326
  %v4353 = vsel %vm181, %v4351, %v4330
  %v4354 = vsel %vm181, %v4352, %v4332
  %v4355 = vsel %vm184, %v4353, %v4336
  %v4356 = vsel %vm184, %v4354, %v4338
  %v4357 = vld [vmem:[%s1 + $0x24] sm:$0x1]
  %v4358 = vperm.slane %v4357, 0
  %v4359 = vmul.f32 %v4355, %v4358
  %v4360 = vmul.f32 %v4356, %v4358
  %v4361 = vadd.f32 %v4275, %v4359
  %v4362 = vadd.f32 %v4276, %v4360
  %v4363 = vld [vmem:[%s1 + $0x25] sm:$0x1]
  %v4364 = vperm.slane %v4363, 0
  %v4365 = vmul.f32 %v4355, %v4364
  %v4366 = vmul.f32 %v4356, %v4364
  %v4367 = vadd.f32 %v4281, %v4365
  %v4368 = vadd.f32 %v4282, %v4366
  %v4369 = vld [vmem:[%s1 + $0x26] sm:$0x1]
  %v4370 = vperm.slane %v4369, 0
  %v4371 = vmul.f32 %v4355, %v4370
  %v4372 = vmul.f32 %v4356, %v4370
  %v4373 = vadd.f32 %v4119, %v4371
  %v4374 = vadd.f32 %v4120, %v4372
  %4375 = vrot.lane.b32.xlu0 %v4283, 9
  %v4376 = vpop.permute.xlu0 %4375
  %4377 = vrot.lane.b32.xlu0 %v4284, 9
  %v4378 = vpop.permute.xlu0 %4377
  %4381 = vrot.lane.b32.xlu0 %v4283, 18
  %v4382 = vpop.permute.xlu0 %4381
  %4383 = vrot.lane.b32.xlu0 %v4284, 18
  %v4384 = vpop.permute.xlu0 %4383
  %4387 = vrot.lane.b32.xlu0 %v4283, 27
  %v4388 = vpop.permute.xlu0 %4387
  %4389 = vrot.lane.b32.xlu0 %v4284, 27
  %v4390 = vpop.permute.xlu0 %4389
  %4393 = vrot.lane.b32.xlu0 %v4283, 36
  %v4394 = vpop.permute.xlu0 %4393
  %4395 = vrot.lane.b32.xlu0 %v4284, 36
  %v4396 = vpop.permute.xlu0 %4395
  %4399 = vrot.lane.b32.xlu0 %v4283, 45
  %v4400 = vpop.permute.xlu0 %4399
  %4401 = vrot.lane.b32.xlu0 %v4284, 45
  %v4402 = vpop.permute.xlu0 %4401
  %4405 = vrot.lane.b32.xlu0 %v4283, 54
  %v4406 = vpop.permute.xlu0 %4405
  %4407 = vrot.lane.b32.xlu0 %v4284, 54
  %v4408 = vpop.permute.xlu0 %4407
  %4411 = vrot.lane.b32.xlu0 %v4283, 63
  %v4412 = vpop.permute.xlu0 %4411
  %4413 = vrot.lane.b32.xlu0 %v4284, 63
  %v4414 = vpop.permute.xlu0 %4413
  %4417 = vrot.lane.b32.xlu0 %v4283, 72
  %v4418 = vpop.permute.xlu0 %4417
  %4419 = vrot.lane.b32.xlu0 %v4284, 72
  %v4420 = vpop.permute.xlu0 %4419
  %v4423 = vsel %vm163, %v4283, %v4376
  %v4424 = vsel %vm163, %v4284, %v4378
  %v4425 = vsel %vm166, %v4423, %v4382
  %v4426 = vsel %vm166, %v4424, %v4384
  %v4427 = vsel %vm169, %v4425, %v4388
  %v4428 = vsel %vm169, %v4426, %v4390
  %v4429 = vsel %vm172, %v4427, %v4394
  %v4430 = vsel %vm172, %v4428, %v4396
  %v4431 = vsel %vm175, %v4429, %v4400
  %v4432 = vsel %vm175, %v4430, %v4402
  %v4433 = vsel %vm178, %v4431, %v4406
  %v4434 = vsel %vm178, %v4432, %v4408
  %v4435 = vsel %vm181, %v4433, %v4412
  %v4436 = vsel %vm181, %v4434, %v4414
  %v4437 = vsel %vm184, %v4435, %v4418
  %v4438 = vsel %vm184, %v4436, %v4420
  %v4439 = vld [vmem:[%s1 + $0x27] sm:$0x1]
  %v4440 = vperm.slane %v4439, 0
  %v4441 = vmul.f32 %v4437, %v4440
  %v4442 = vmul.f32 %v4438, %v4440
  %v4443 = vadd.f32 %v4361, %v4441
  %v4444 = vadd.f32 %v4362, %v4442
  %v4445 = vld [vmem:[%s1 + $0x28] sm:$0x1]
  %v4446 = vperm.slane %v4445, 0
  %v4447 = vmul.f32 %v4437, %v4446
  %v4448 = vmul.f32 %v4438, %v4446
  %v4449 = vadd.f32 %v4367, %v4447
  %v4450 = vadd.f32 %v4368, %v4448
  %v4451 = vld [vmem:[%s1 + $0x29] sm:$0x1]
  %v4452 = vperm.slane %v4451, 0
  %v4453 = vmul.f32 %v4437, %v4452
  %v4454 = vmul.f32 %v4438, %v4452
  %v4455 = vadd.f32 %v4373, %v4453
  %v4456 = vadd.f32 %v4374, %v4454
  %v4457 = vld [vmem:[%s1123] sm:$0xff]
  %v4458 = vld [vmem:[%s1123 + $0x8] sm:$0x1]
  %4461 = vrot.lane.b32.xlu0 %v4457, 127
  %v4462 = vpop.permute.xlu0 %4461
  %4463 = vrot.lane.b32.xlu0 %v4458, 127
  %v4464 = vpop.permute.xlu0 %4463
  %4467 = vrot.lane.b32.xlu0 %v4457, 8
  %v4468 = vpop.permute.xlu0 %4467
  %4469 = vrot.lane.b32.xlu0 %v4458, 8
  %v4470 = vpop.permute.xlu0 %4469
  %4473 = vrot.lane.b32.xlu0 %v4457, 17
  %v4474 = vpop.permute.xlu0 %4473
  %4475 = vrot.lane.b32.xlu0 %v4458, 17
  %v4476 = vpop.permute.xlu0 %4475
  %4479 = vrot.lane.b32.xlu0 %v4457, 26
  %v4480 = vpop.permute.xlu0 %4479
  %4481 = vrot.lane.b32.xlu0 %v4458, 26
  %v4482 = vpop.permute.xlu0 %4481
  %4485 = vrot.lane.b32.xlu0 %v4457, 35
  %v4486 = vpop.permute.xlu0 %4485
  %4487 = vrot.lane.b32.xlu0 %v4458, 35
  %v4488 = vpop.permute.xlu0 %4487
  %4491 = vrot.lane.b32.xlu0 %v4457, 44
  %v4492 = vpop.permute.xlu0 %4491
  %4493 = vrot.lane.b32.xlu0 %v4458, 44
  %v4494 = vpop.permute.xlu0 %4493
  %4497 = vrot.lane.b32.xlu0 %v4457, 53
  %v4498 = vpop.permute.xlu0 %4497
  %4499 = vrot.lane.b32.xlu0 %v4458, 53
  %v4500 = vpop.permute.xlu0 %4499
  %4503 = vrot.lane.b32.xlu0 %v4457, 62
  %v4504 = vpop.permute.xlu0 %4503
  %4505 = vrot.lane.b32.xlu0 %v4458, 62
  %v4506 = vpop.permute.xlu0 %4505
  %4509 = vrot.lane.b32.xlu0 %v4457, 71
  %v4510 = vpop.permute.xlu0 %4509
  %4511 = vrot.lane.b32.xlu0 %v4458, 71
  %v4512 = vpop.permute.xlu0 %4511
  %v4515 = vsel %vm163, %v4462, %v4468
  %v4516 = vsel %vm163, %v4464, %v4470
  %v4517 = vsel %vm166, %v4515, %v4474
  %v4518 = vsel %vm166, %v4516, %v4476
  %v4519 = vsel %vm169, %v4517, %v4480
  %v4520 = vsel %vm169, %v4518, %v4482
  %v4521 = vsel %vm172, %v4519, %v4486
  %v4522 = vsel %vm172, %v4520, %v4488
  %v4523 = vsel %vm175, %v4521, %v4492
  %v4524 = vsel %vm175, %v4522, %v4494
  %v4525 = vsel %vm178, %v4523, %v4498
  %v4526 = vsel %vm178, %v4524, %v4500
  %v4527 = vsel %vm181, %v4525, %v4504
  %v4528 = vsel %vm181, %v4526, %v4506
  %v4529 = vsel %vm184, %v4527, %v4510
  %v4530 = vsel %vm184, %v4528, %v4512
  %v4531 = vld [vmem:[%s1 + $0x2a] sm:$0x1]
  %v4532 = vperm.slane %v4531, 0
  %v4533 = vmul.f32 %v4529, %v4532
  %v4534 = vmul.f32 %v4530, %v4532
  %v4535 = vadd.f32 %v4443, %v4533
  %v4536 = vadd.f32 %v4444, %v4534
  %v4537 = vld [vmem:[%s1 + $0x2b] sm:$0x1]
  %v4538 = vperm.slane %v4537, 0
  %v4539 = vmul.f32 %v4529, %v4538
  %v4540 = vmul.f32 %v4530, %v4538
  %v4541 = vadd.f32 %v4449, %v4539
  %v4542 = vadd.f32 %v4450, %v4540
  %4543 = vrot.lane.b32.xlu0 %v4457, 9
  %v4544 = vpop.permute.xlu0 %4543
  %4545 = vrot.lane.b32.xlu0 %v4458, 9
  %v4546 = vpop.permute.xlu0 %4545
  %4549 = vrot.lane.b32.xlu0 %v4457, 18
  %v4550 = vpop.permute.xlu0 %4549
  %4551 = vrot.lane.b32.xlu0 %v4458, 18
  %v4552 = vpop.permute.xlu0 %4551
  %4555 = vrot.lane.b32.xlu0 %v4457, 27
  %v4556 = vpop.permute.xlu0 %4555
  %4557 = vrot.lane.b32.xlu0 %v4458, 27
  %v4558 = vpop.permute.xlu0 %4557
  %4561 = vrot.lane.b32.xlu0 %v4457, 36
  %v4562 = vpop.permute.xlu0 %4561
  %4563 = vrot.lane.b32.xlu0 %v4458, 36
  %v4564 = vpop.permute.xlu0 %4563
  %4567 = vrot.lane.b32.xlu0 %v4457, 45
  %v4568 = vpop.permute.xlu0 %4567
  %4569 = vrot.lane.b32.xlu0 %v4458, 45
  %v4570 = vpop.permute.xlu0 %4569
  %4573 = vrot.lane.b32.xlu0 %v4457, 54
  %v4574 = vpop.permute.xlu0 %4573
  %4575 = vrot.lane.b32.xlu0 %v4458, 54
  %v4576 = vpop.permute.xlu0 %4575
  %4579 = vrot.lane.b32.xlu0 %v4457, 63
  %v4580 = vpop.permute.xlu0 %4579
  %4581 = vrot.lane.b32.xlu0 %v4458, 63
  %v4582 = vpop.permute.xlu0 %4581
  %4585 = vrot.lane.b32.xlu0 %v4457, 72
  %v4586 = vpop.permute.xlu0 %4585
  %4587 = vrot.lane.b32.xlu0 %v4458, 72
  %v4588 = vpop.permute.xlu0 %4587
  %v4591 = vsel %vm163, %v4457, %v4544
  %v4592 = vsel %vm163, %v4458, %v4546
  %v4593 = vsel %vm166, %v4591, %v4550
  %v4594 = vsel %vm166, %v4592, %v4552
  %v4595 = vsel %vm169, %v4593, %v4556
  %v4596 = vsel %vm169, %v4594, %v4558
  %v4597 = vsel %vm172, %v4595, %v4562
  %v4598 = vsel %vm172, %v4596, %v4564
  %v4599 = vsel %vm175, %v4597, %v4568
  %v4600 = vsel %vm175, %v4598, %v4570
  %v4601 = vsel %vm178, %v4599, %v4574
  %v4602 = vsel %vm178, %v4600, %v4576
  %v4603 = vsel %vm181, %v4601, %v4580
  %v4604 = vsel %vm181, %v4602, %v4582
  %v4605 = vsel %vm184, %v4603, %v4586
  %v4606 = vsel %vm184, %v4604, %v4588
  %v4607 = vld [vmem:[%s1 + $0x2d] sm:$0x1]
  %v4608 = vperm.slane %v4607, 0
  %v4609 = vmul.f32 %v4605, %v4608
  %v4610 = vmul.f32 %v4606, %v4608
  %v4611 = vadd.f32 %v4535, %v4609
  %v4612 = vadd.f32 %v4536, %v4610
  %v4613 = vld [vmem:[%s1 + $0x2e] sm:$0x1]
  %v4614 = vperm.slane %v4613, 0
  %v4615 = vmul.f32 %v4605, %v4614
  %v4616 = vmul.f32 %v4606, %v4614
  %v4617 = vadd.f32 %v4541, %v4615
  %v4618 = vadd.f32 %v4542, %v4616
  %v4619 = vld [vmem:[%s1460 + $0x1] sm:$0xff]
  %v4620 = vld [vmem:[%s1460 + $0x9] sm:$0x1]
  %4623 = vrot.lane.b32.xlu0 %v4619, 127
  %v4624 = vpop.permute.xlu0 %4623
  %4625 = vrot.lane.b32.xlu0 %v4620, 127
  %v4626 = vpop.permute.xlu0 %4625
  %4629 = vrot.lane.b32.xlu0 %v4619, 8
  %v4630 = vpop.permute.xlu0 %4629
  %4631 = vrot.lane.b32.xlu0 %v4620, 8
  %v4632 = vpop.permute.xlu0 %4631
  %4635 = vrot.lane.b32.xlu0 %v4619, 17
  %v4636 = vpop.permute.xlu0 %4635
  %4637 = vrot.lane.b32.xlu0 %v4620, 17
  %v4638 = vpop.permute.xlu0 %4637
  %4641 = vrot.lane.b32.xlu0 %v4619, 26
  %v4642 = vpop.permute.xlu0 %4641
  %4643 = vrot.lane.b32.xlu0 %v4620, 26
  %v4644 = vpop.permute.xlu0 %4643
  %4647 = vrot.lane.b32.xlu0 %v4619, 35
  %v4648 = vpop.permute.xlu0 %4647
  %4649 = vrot.lane.b32.xlu0 %v4620, 35
  %v4650 = vpop.permute.xlu0 %4649
  %4653 = vrot.lane.b32.xlu0 %v4619, 44
  %v4654 = vpop.permute.xlu0 %4653
  %4655 = vrot.lane.b32.xlu0 %v4620, 44
  %v4656 = vpop.permute.xlu0 %4655
  %4659 = vrot.lane.b32.xlu0 %v4619, 53
  %v4660 = vpop.permute.xlu0 %4659
  %4661 = vrot.lane.b32.xlu0 %v4620, 53
  %v4662 = vpop.permute.xlu0 %4661
  %4665 = vrot.lane.b32.xlu0 %v4619, 62
  %v4666 = vpop.permute.xlu0 %4665
  %4667 = vrot.lane.b32.xlu0 %v4620, 62
  %v4668 = vpop.permute.xlu0 %4667
  %4671 = vrot.lane.b32.xlu0 %v4619, 71
  %v4672 = vpop.permute.xlu0 %4671
  %4673 = vrot.lane.b32.xlu0 %v4620, 71
  %v4674 = vpop.permute.xlu0 %4673
  %v4677 = vsel %vm163, %v4624, %v4630
  %v4678 = vsel %vm163, %v4626, %v4632
  %v4679 = vsel %vm166, %v4677, %v4636
  %v4680 = vsel %vm166, %v4678, %v4638
  %v4681 = vsel %vm169, %v4679, %v4642
  %v4682 = vsel %vm169, %v4680, %v4644
  %v4683 = vsel %vm172, %v4681, %v4648
  %v4684 = vsel %vm172, %v4682, %v4650
  %v4685 = vsel %vm175, %v4683, %v4654
  %v4686 = vsel %vm175, %v4684, %v4656
  %v4687 = vsel %vm178, %v4685, %v4660
  %v4688 = vsel %vm178, %v4686, %v4662
  %v4689 = vsel %vm181, %v4687, %v4666
  %v4690 = vsel %vm181, %v4688, %v4668
  %v4691 = vsel %vm184, %v4689, %v4672
  %v4692 = vsel %vm184, %v4690, %v4674
  %v4693 = vld [vmem:[%s1 + $0x30] sm:$0x1]
  %v4694 = vperm.slane %v4693, 0
  %v4695 = vmul.f32 %v4691, %v4694
  %v4696 = vmul.f32 %v4692, %v4694
  %v4697 = vadd.f32 %v4611, %v4695
  %v4698 = vadd.f32 %v4612, %v4696
  %v4699 = vld [vmem:[%s1 + $0x31] sm:$0x1]
  %v4700 = vperm.slane %v4699, 0
  %v4701 = vmul.f32 %v4691, %v4700
  %v4702 = vmul.f32 %v4692, %v4700
  %v4703 = vadd.f32 %v4617, %v4701
  %v4704 = vadd.f32 %v4618, %v4702
  %v4705 = vld [vmem:[%s1 + $0x32] sm:$0x1]
  %v4706 = vperm.slane %v4705, 0
  %v4707 = vmul.f32 %v4691, %v4706
  %v4708 = vmul.f32 %v4692, %v4706
  %v4709 = vadd.f32 %v4455, %v4707
  %v4710 = vadd.f32 %v4456, %v4708
  %4711 = vrot.lane.b32.xlu0 %v4619, 9
  %v4712 = vpop.permute.xlu0 %4711
  %4713 = vrot.lane.b32.xlu0 %v4620, 9
  %v4714 = vpop.permute.xlu0 %4713
  %4717 = vrot.lane.b32.xlu0 %v4619, 18
  %v4718 = vpop.permute.xlu0 %4717
  %4719 = vrot.lane.b32.xlu0 %v4620, 18
  %v4720 = vpop.permute.xlu0 %4719
  %4723 = vrot.lane.b32.xlu0 %v4619, 27
  %v4724 = vpop.permute.xlu0 %4723
  %4725 = vrot.lane.b32.xlu0 %v4620, 27
  %v4726 = vpop.permute.xlu0 %4725
  %4729 = vrot.lane.b32.xlu0 %v4619, 36
  %v4730 = vpop.permute.xlu0 %4729
  %4731 = vrot.lane.b32.xlu0 %v4620, 36
  %v4732 = vpop.permute.xlu0 %4731
  %4735 = vrot.lane.b32.xlu0 %v4619, 45
  %v4736 = vpop.permute.xlu0 %4735
  %4737 = vrot.lane.b32.xlu0 %v4620, 45
  %v4738 = vpop.permute.xlu0 %4737
  %4741 = vrot.lane.b32.xlu0 %v4619, 54
  %v4742 = vpop.permute.xlu0 %4741
  %4743 = vrot.lane.b32.xlu0 %v4620, 54
  %v4744 = vpop.permute.xlu0 %4743
  %4747 = vrot.lane.b32.xlu0 %v4619, 63
  %v4748 = vpop.permute.xlu0 %4747
  %4749 = vrot.lane.b32.xlu0 %v4620, 63
  %v4750 = vpop.permute.xlu0 %4749
  %4753 = vrot.lane.b32.xlu0 %v4619, 72
  %v4754 = vpop.permute.xlu0 %4753
  %4755 = vrot.lane.b32.xlu0 %v4620, 72
  %v4756 = vpop.permute.xlu0 %4755
  %v4759 = vsel %vm163, %v4619, %v4712
  %v4760 = vsel %vm163, %v4620, %v4714
  %v4761 = vsel %vm166, %v4759, %v4718
  %v4762 = vsel %vm166, %v4760, %v4720
  %v4763 = vsel %vm169, %v4761, %v4724
  %v4764 = vsel %vm169, %v4762, %v4726
  %v4765 = vsel %vm172, %v4763, %v4730
  %v4766 = vsel %vm172, %v4764, %v4732
  %v4767 = vsel %vm175, %v4765, %v4736
  %v4768 = vsel %vm175, %v4766, %v4738
  %v4769 = vsel %vm178, %v4767, %v4742
  %v4770 = vsel %vm178, %v4768, %v4744
  %v4771 = vsel %vm181, %v4769, %v4748
  %v4772 = vsel %vm181, %v4770, %v4750
  %v4773 = vsel %vm184, %v4771, %v4754
  %v4774 = vsel %vm184, %v4772, %v4756
  %v4775 = vld [vmem:[%s1 + $0x33] sm:$0x1]
  %v4776 = vperm.slane %v4775, 0
  %v4777 = vmul.f32 %v4773, %v4776
  %v4778 = vmul.f32 %v4774, %v4776
  %v4779 = vadd.f32 %v4697, %v4777
  %v4780 = vadd.f32 %v4698, %v4778
  %v4781 = vld [vmem:[%s1 + $0x34] sm:$0x1]
  %v4782 = vperm.slane %v4781, 0
  %v4783 = vmul.f32 %v4773, %v4782
  %v4784 = vmul.f32 %v4774, %v4782
  %v4785 = vadd.f32 %v4703, %v4783
  %v4786 = vadd.f32 %v4704, %v4784
  %v4787 = vld [vmem:[%s1 + $0x35] sm:$0x1]
  %v4788 = vperm.slane %v4787, 0
  %v4789 = vmul.f32 %v4773, %v4788
  %v4790 = vmul.f32 %v4774, %v4788
  %v4791 = vadd.f32 %v4709, %v4789
  %v4792 = vadd.f32 %v4710, %v4790
  %v4793 = vld [vmem:[%s1460] sm:$0xff]
  %v4794 = vld [vmem:[%s1460 + $0x8] sm:$0x1]
  %4797 = vrot.lane.b32.xlu0 %v4793, 127
  %v4798 = vpop.permute.xlu0 %4797
  %4799 = vrot.lane.b32.xlu0 %v4794, 127
  %v4800 = vpop.permute.xlu0 %4799
  %4803 = vrot.lane.b32.xlu0 %v4793, 8
  %v4804 = vpop.permute.xlu0 %4803
  %4805 = vrot.lane.b32.xlu0 %v4794, 8
  %v4806 = vpop.permute.xlu0 %4805
  %4809 = vrot.lane.b32.xlu0 %v4793, 17
  %v4810 = vpop.permute.xlu0 %4809
  %4811 = vrot.lane.b32.xlu0 %v4794, 17
  %v4812 = vpop.permute.xlu0 %4811
  %4815 = vrot.lane.b32.xlu0 %v4793, 26
  %v4816 = vpop.permute.xlu0 %4815
  %4817 = vrot.lane.b32.xlu0 %v4794, 26
  %v4818 = vpop.permute.xlu0 %4817
  %4821 = vrot.lane.b32.xlu0 %v4793, 35
  %v4822 = vpop.permute.xlu0 %4821
  %4823 = vrot.lane.b32.xlu0 %v4794, 35
  %v4824 = vpop.permute.xlu0 %4823
  %4827 = vrot.lane.b32.xlu0 %v4793, 44
  %v4828 = vpop.permute.xlu0 %4827
  %4829 = vrot.lane.b32.xlu0 %v4794, 44
  %v4830 = vpop.permute.xlu0 %4829
  %4833 = vrot.lane.b32.xlu0 %v4793, 53
  %v4834 = vpop.permute.xlu0 %4833
  %4835 = vrot.lane.b32.xlu0 %v4794, 53
  %v4836 = vpop.permute.xlu0 %4835
  %4839 = vrot.lane.b32.xlu0 %v4793, 62
  %v4840 = vpop.permute.xlu0 %4839
  %4841 = vrot.lane.b32.xlu0 %v4794, 62
  %v4842 = vpop.permute.xlu0 %4841
  %4845 = vrot.lane.b32.xlu0 %v4793, 71
  %v4846 = vpop.permute.xlu0 %4845
  %4847 = vrot.lane.b32.xlu0 %v4794, 71
  %v4848 = vpop.permute.xlu0 %4847
  %v4851 = vsel %vm163, %v4798, %v4804
  %v4852 = vsel %vm163, %v4800, %v4806
  %v4853 = vsel %vm166, %v4851, %v4810
  %v4854 = vsel %vm166, %v4852, %v4812
  %v4855 = vsel %vm169, %v4853, %v4816
  %v4856 = vsel %vm169, %v4854, %v4818
  %v4857 = vsel %vm172, %v4855, %v4822
  %v4858 = vsel %vm172, %v4856, %v4824
  %v4859 = vsel %vm175, %v4857, %v4828
  %v4860 = vsel %vm175, %v4858, %v4830
  %v4861 = vsel %vm178, %v4859, %v4834
  %v4862 = vsel %vm178, %v4860, %v4836
  %v4863 = vsel %vm181, %v4861, %v4840
  %v4864 = vsel %vm181, %v4862, %v4842
  %v4865 = vsel %vm184, %v4863, %v4846
  %v4866 = vsel %vm184, %v4864, %v4848
  %v4867 = vld [vmem:[%s1 + $0x36] sm:$0x1]
  %v4868 = vperm.slane %v4867, 0
  %v4869 = vmul.f32 %v4865, %v4868
  %v4870 = vmul.f32 %v4866, %v4868
  %v4871 = vadd.f32 %v4779, %v4869
  %v4872 = vadd.f32 %v4780, %v4870
  %v4873 = vld [vmem:[%s1 + $0x37] sm:$0x1]
  %v4874 = vperm.slane %v4873, 0
  %v4875 = vmul.f32 %v4865, %v4874
  %v4876 = vmul.f32 %v4866, %v4874
  %v4877 = vadd.f32 %v4785, %v4875
  %v4878 = vadd.f32 %v4786, %v4876
  %4879 = vrot.lane.b32.xlu0 %v4793, 9
  %v4880 = vpop.permute.xlu0 %4879
  %4881 = vrot.lane.b32.xlu0 %v4794, 9
  %v4882 = vpop.permute.xlu0 %4881
  %4885 = vrot.lane.b32.xlu0 %v4793, 18
  %v4886 = vpop.permute.xlu0 %4885
  %4887 = vrot.lane.b32.xlu0 %v4794, 18
  %v4888 = vpop.permute.xlu0 %4887
  %4891 = vrot.lane.b32.xlu0 %v4793, 27
  %v4892 = vpop.permute.xlu0 %4891
  %4893 = vrot.lane.b32.xlu0 %v4794, 27
  %v4894 = vpop.permute.xlu0 %4893
  %4897 = vrot.lane.b32.xlu0 %v4793, 36
  %v4898 = vpop.permute.xlu0 %4897
  %4899 = vrot.lane.b32.xlu0 %v4794, 36
  %v4900 = vpop.permute.xlu0 %4899
  %4903 = vrot.lane.b32.xlu0 %v4793, 45
  %v4904 = vpop.permute.xlu0 %4903
  %4905 = vrot.lane.b32.xlu0 %v4794, 45
  %v4906 = vpop.permute.xlu0 %4905
  %4909 = vrot.lane.b32.xlu0 %v4793, 54
  %v4910 = vpop.permute.xlu0 %4909
  %4911 = vrot.lane.b32.xlu0 %v4794, 54
  %v4912 = vpop.permute.xlu0 %4911
  %4915 = vrot.lane.b32.xlu0 %v4793, 63
  %v4916 = vpop.permute.xlu0 %4915
  %4917 = vrot.lane.b32.xlu0 %v4794, 63
  %v4918 = vpop.permute.xlu0 %4917
  %4921 = vrot.lane.b32.xlu0 %v4793, 72
  %v4922 = vpop.permute.xlu0 %4921
  %4923 = vrot.lane.b32.xlu0 %v4794, 72
  %v4924 = vpop.permute.xlu0 %4923
  %v4927 = vsel %vm163, %v4793, %v4880
  %v4928 = vsel %vm163, %v4794, %v4882
  %v4929 = vsel %vm166, %v4927, %v4886
  %v4930 = vsel %vm166, %v4928, %v4888
  %v4931 = vsel %vm169, %v4929, %v4892
  %v4932 = vsel %vm169, %v4930, %v4894
  %v4933 = vsel %vm172, %v4931, %v4898
  %v4934 = vsel %vm172, %v4932, %v4900
  %v4935 = vsel %vm175, %v4933, %v4904
  %v4936 = vsel %vm175, %v4934, %v4906
  %v4937 = vsel %vm178, %v4935, %v4910
  %v4938 = vsel %vm178, %v4936, %v4912
  %v4939 = vsel %vm181, %v4937, %v4916
  %v4940 = vsel %vm181, %v4938, %v4918
  %v4941 = vsel %vm184, %v4939, %v4922
  %v4942 = vsel %vm184, %v4940, %v4924
  %v4943 = vld [vmem:[%s1 + $0x39] sm:$0x1]
  %v4944 = vperm.slane %v4943, 0
  %v4945 = vmul.f32 %v4941, %v4944
  %v4946 = vmul.f32 %v4942, %v4944
  %v4947 = vadd.f32 %v4871, %v4945
  %v4948 = vadd.f32 %v4872, %v4946
  %v4949 = vld [vmem:[%s1 + $0x3a] sm:$0x1]
  %v4950 = vperm.slane %v4949, 0
  %v4951 = vmul.f32 %v4941, %v4950
  %v4952 = vmul.f32 %v4942, %v4950
  %v4953 = vadd.f32 %v4877, %v4951
  %v4954 = vadd.f32 %v4878, %v4952
  %v4955 = vld [vmem:[%s1797 + $0x1] sm:$0xff]
  %v4956 = vld [vmem:[%s1797 + $0x9] sm:$0x1]
  %4959 = vrot.lane.b32.xlu0 %v4955, 127
  %v4960 = vpop.permute.xlu0 %4959
  %4961 = vrot.lane.b32.xlu0 %v4956, 127
  %v4962 = vpop.permute.xlu0 %4961
  %4965 = vrot.lane.b32.xlu0 %v4955, 8
  %v4966 = vpop.permute.xlu0 %4965
  %4967 = vrot.lane.b32.xlu0 %v4956, 8
  %v4968 = vpop.permute.xlu0 %4967
  %4971 = vrot.lane.b32.xlu0 %v4955, 17
  %v4972 = vpop.permute.xlu0 %4971
  %4973 = vrot.lane.b32.xlu0 %v4956, 17
  %v4974 = vpop.permute.xlu0 %4973
  %4977 = vrot.lane.b32.xlu0 %v4955, 26
  %v4978 = vpop.permute.xlu0 %4977
  %4979 = vrot.lane.b32.xlu0 %v4956, 26
  %v4980 = vpop.permute.xlu0 %4979
  %4983 = vrot.lane.b32.xlu0 %v4955, 35
  %v4984 = vpop.permute.xlu0 %4983
  %4985 = vrot.lane.b32.xlu0 %v4956, 35
  %v4986 = vpop.permute.xlu0 %4985
  %4989 = vrot.lane.b32.xlu0 %v4955, 44
  %v4990 = vpop.permute.xlu0 %4989
  %4991 = vrot.lane.b32.xlu0 %v4956, 44
  %v4992 = vpop.permute.xlu0 %4991
  %4995 = vrot.lane.b32.xlu0 %v4955, 53
  %v4996 = vpop.permute.xlu0 %4995
  %4997 = vrot.lane.b32.xlu0 %v4956, 53
  %v4998 = vpop.permute.xlu0 %4997
  %5001 = vrot.lane.b32.xlu0 %v4955, 62
  %v5002 = vpop.permute.xlu0 %5001
  %5003 = vrot.lane.b32.xlu0 %v4956, 62
  %v5004 = vpop.permute.xlu0 %5003
  %5007 = vrot.lane.b32.xlu0 %v4955, 71
  %v5008 = vpop.permute.xlu0 %5007
  %5009 = vrot.lane.b32.xlu0 %v4956, 71
  %v5010 = vpop.permute.xlu0 %5009
  %v5013 = vsel %vm163, %v4960, %v4966
  %v5014 = vsel %vm163, %v4962, %v4968
  %v5015 = vsel %vm166, %v5013, %v4972
  %v5016 = vsel %vm166, %v5014, %v4974
  %v5017 = vsel %vm169, %v5015, %v4978
  %v5018 = vsel %vm169, %v5016, %v4980
  %v5019 = vsel %vm172, %v5017, %v4984
  %v5020 = vsel %vm172, %v5018, %v4986
  %v5021 = vsel %vm175, %v5019, %v4990
  %v5022 = vsel %vm175, %v5020, %v4992
  %v5023 = vsel %vm178, %v5021, %v4996
  %v5024 = vsel %vm178, %v5022, %v4998
  %v5025 = vsel %vm181, %v5023, %v5002
  %v5026 = vsel %vm181, %v5024, %v5004
  %v5027 = vsel %vm184, %v5025, %v5008
  %v5028 = vsel %vm184, %v5026, %v5010
  %v5029 = vld [vmem:[%s1 + $0x3c] sm:$0x1]
  %v5030 = vperm.slane %v5029, 0
  %v5031 = vmul.f32 %v5027, %v5030
  %v5032 = vmul.f32 %v5028, %v5030
  %v5033 = vadd.f32 %v4947, %v5031
  %v5034 = vadd.f32 %v4948, %v5032
  %v5035 = vld [vmem:[%s1 + $0x3d] sm:$0x1]
  %v5036 = vperm.slane %v5035, 0
  %v5037 = vmul.f32 %v5027, %v5036
  %v5038 = vmul.f32 %v5028, %v5036
  %v5039 = vadd.f32 %v4953, %v5037
  %v5040 = vadd.f32 %v4954, %v5038
  %v5041 = vld [vmem:[%s1 + $0x3e] sm:$0x1]
  %v5042 = vperm.slane %v5041, 0
  %v5043 = vmul.f32 %v5027, %v5042
  %v5044 = vmul.f32 %v5028, %v5042
  %v5045 = vadd.f32 %v4791, %v5043
  %v5046 = vadd.f32 %v4792, %v5044
  %5047 = vrot.lane.b32.xlu0 %v4955, 9
  %v5048 = vpop.permute.xlu0 %5047
  %5049 = vrot.lane.b32.xlu0 %v4956, 9
  %v5050 = vpop.permute.xlu0 %5049
  %5053 = vrot.lane.b32.xlu0 %v4955, 18
  %v5054 = vpop.permute.xlu0 %5053
  %5055 = vrot.lane.b32.xlu0 %v4956, 18
  %v5056 = vpop.permute.xlu0 %5055
  %5059 = vrot.lane.b32.xlu0 %v4955, 27
  %v5060 = vpop.permute.xlu0 %5059
  %5061 = vrot.lane.b32.xlu0 %v4956, 27
  %v5062 = vpop.permute.xlu0 %5061
  %5065 = vrot.lane.b32.xlu0 %v4955, 36
  %v5066 = vpop.permute.xlu0 %5065
  %5067 = vrot.lane.b32.xlu0 %v4956, 36
  %v5068 = vpop.permute.xlu0 %5067
  %5071 = vrot.lane.b32.xlu0 %v4955, 45
  %v5072 = vpop.permute.xlu0 %5071
  %5073 = vrot.lane.b32.xlu0 %v4956, 45
  %v5074 = vpop.permute.xlu0 %5073
  %5077 = vrot.lane.b32.xlu0 %v4955, 54
  %v5078 = vpop.permute.xlu0 %5077
  %5079 = vrot.lane.b32.xlu0 %v4956, 54
  %v5080 = vpop.permute.xlu0 %5079
  %5083 = vrot.lane.b32.xlu0 %v4955, 63
  %v5084 = vpop.permute.xlu0 %5083
  %5085 = vrot.lane.b32.xlu0 %v4956, 63
  %v5086 = vpop.permute.xlu0 %5085
  %5089 = vrot.lane.b32.xlu0 %v4955, 72
  %v5090 = vpop.permute.xlu0 %5089
  %5091 = vrot.lane.b32.xlu0 %v4956, 72
  %v5092 = vpop.permute.xlu0 %5091
  %v5095 = vsel %vm163, %v4955, %v5048
  %v5096 = vsel %vm163, %v4956, %v5050
  %v5097 = vsel %vm166, %v5095, %v5054
  %v5098 = vsel %vm166, %v5096, %v5056
  %v5099 = vsel %vm169, %v5097, %v5060
  %v5100 = vsel %vm169, %v5098, %v5062
  %v5101 = vsel %vm172, %v5099, %v5066
  %v5102 = vsel %vm172, %v5100, %v5068
  %v5103 = vsel %vm175, %v5101, %v5072
  %v5104 = vsel %vm175, %v5102, %v5074
  %v5105 = vsel %vm178, %v5103, %v5078
  %v5106 = vsel %vm178, %v5104, %v5080
  %v5107 = vsel %vm181, %v5105, %v5084
  %v5108 = vsel %vm181, %v5106, %v5086
  %v5109 = vsel %vm184, %v5107, %v5090
  %v5110 = vsel %vm184, %v5108, %v5092
  %v5111 = vld [vmem:[%s1 + $0x3f] sm:$0x1]
  %v5112 = vperm.slane %v5111, 0
  %v5113 = vmul.f32 %v5109, %v5112
  %v5114 = vmul.f32 %v5110, %v5112
  %v5115 = vadd.f32 %v5033, %v5113
  %v5116 = vadd.f32 %v5034, %v5114
  %v5117 = vld [vmem:[%s1 + $0x40] sm:$0x1]
  %v5118 = vperm.slane %v5117, 0
  %v5119 = vmul.f32 %v5109, %v5118
  %v5120 = vmul.f32 %v5110, %v5118
  %v5121 = vadd.f32 %v5039, %v5119
  %v5122 = vadd.f32 %v5040, %v5120
  %v5123 = vld [vmem:[%s1 + $0x41] sm:$0x1]
  %v5124 = vperm.slane %v5123, 0
  %v5125 = vmul.f32 %v5109, %v5124
  %v5126 = vmul.f32 %v5110, %v5124
  %v5127 = vadd.f32 %v5045, %v5125
  %v5128 = vadd.f32 %v5046, %v5126
  %v5129 = vld [vmem:[%s1797] sm:$0xff]
  %v5130 = vld [vmem:[%s1797 + $0x8] sm:$0x1]
  %5133 = vrot.lane.b32.xlu0 %v5129, 127
  %v5134 = vpop.permute.xlu0 %5133
  %5135 = vrot.lane.b32.xlu0 %v5130, 127
  %v5136 = vpop.permute.xlu0 %5135
  %5139 = vrot.lane.b32.xlu0 %v5129, 8
  %v5140 = vpop.permute.xlu0 %5139
  %5141 = vrot.lane.b32.xlu0 %v5130, 8
  %v5142 = vpop.permute.xlu0 %5141
  %5145 = vrot.lane.b32.xlu0 %v5129, 17
  %v5146 = vpop.permute.xlu0 %5145
  %5147 = vrot.lane.b32.xlu0 %v5130, 17
  %v5148 = vpop.permute.xlu0 %5147
  %5151 = vrot.lane.b32.xlu0 %v5129, 26
  %v5152 = vpop.permute.xlu0 %5151
  %5153 = vrot.lane.b32.xlu0 %v5130, 26
  %v5154 = vpop.permute.xlu0 %5153
  %5157 = vrot.lane.b32.xlu0 %v5129, 35
  %v5158 = vpop.permute.xlu0 %5157
  %5159 = vrot.lane.b32.xlu0 %v5130, 35
  %v5160 = vpop.permute.xlu0 %5159
  %5163 = vrot.lane.b32.xlu0 %v5129, 44
  %v5164 = vpop.permute.xlu0 %5163
  %5165 = vrot.lane.b32.xlu0 %v5130, 44
  %v5166 = vpop.permute.xlu0 %5165
  %5169 = vrot.lane.b32.xlu0 %v5129, 53
  %v5170 = vpop.permute.xlu0 %5169
  %5171 = vrot.lane.b32.xlu0 %v5130, 53
  %v5172 = vpop.permute.xlu0 %5171
  %5175 = vrot.lane.b32.xlu0 %v5129, 62
  %v5176 = vpop.permute.xlu0 %5175
  %5177 = vrot.lane.b32.xlu0 %v5130, 62
  %v5178 = vpop.permute.xlu0 %5177
  %5181 = vrot.lane.b32.xlu0 %v5129, 71
  %v5182 = vpop.permute.xlu0 %5181
  %5183 = vrot.lane.b32.xlu0 %v5130, 71
  %v5184 = vpop.permute.xlu0 %5183
  %v5187 = vsel %vm163, %v5134, %v5140
  %v5188 = vsel %vm163, %v5136, %v5142
  %v5189 = vsel %vm166, %v5187, %v5146
  %v5190 = vsel %vm166, %v5188, %v5148
  %v5191 = vsel %vm169, %v5189, %v5152
  %v5192 = vsel %vm169, %v5190, %v5154
  %v5193 = vsel %vm172, %v5191, %v5158
  %v5194 = vsel %vm172, %v5192, %v5160
  %v5195 = vsel %vm175, %v5193, %v5164
  %v5196 = vsel %vm175, %v5194, %v5166
  %v5197 = vsel %vm178, %v5195, %v5170
  %v5198 = vsel %vm178, %v5196, %v5172
  %v5199 = vsel %vm181, %v5197, %v5176
  %v5200 = vsel %vm181, %v5198, %v5178
  %v5201 = vsel %vm184, %v5199, %v5182
  %v5202 = vsel %vm184, %v5200, %v5184
  %v5203 = vld [vmem:[%s1 + $0x42] sm:$0x1]
  %v5204 = vperm.slane %v5203, 0
  %v5205 = vmul.f32 %v5201, %v5204
  %v5206 = vmul.f32 %v5202, %v5204
  %v5207 = vadd.f32 %v5115, %v5205
  %v5208 = vadd.f32 %v5116, %v5206
  %v5209 = vld [vmem:[%s1 + $0x43] sm:$0x1]
  %v5210 = vperm.slane %v5209, 0
  %v5211 = vmul.f32 %v5201, %v5210
  %v5212 = vmul.f32 %v5202, %v5210
  %v5213 = vadd.f32 %v5121, %v5211
  %v5214 = vadd.f32 %v5122, %v5212
  %5215 = vrot.lane.b32.xlu0 %v5129, 9
  %v5216 = vpop.permute.xlu0 %5215
  %5217 = vrot.lane.b32.xlu0 %v5130, 9
  %v5218 = vpop.permute.xlu0 %5217
  %5221 = vrot.lane.b32.xlu0 %v5129, 18
  %v5222 = vpop.permute.xlu0 %5221
  %5223 = vrot.lane.b32.xlu0 %v5130, 18
  %v5224 = vpop.permute.xlu0 %5223
  %5227 = vrot.lane.b32.xlu0 %v5129, 27
  %v5228 = vpop.permute.xlu0 %5227
  %5229 = vrot.lane.b32.xlu0 %v5130, 27
  %v5230 = vpop.permute.xlu0 %5229
  %5233 = vrot.lane.b32.xlu0 %v5129, 36
  %v5234 = vpop.permute.xlu0 %5233
  %5235 = vrot.lane.b32.xlu0 %v5130, 36
  %v5236 = vpop.permute.xlu0 %5235
  %5239 = vrot.lane.b32.xlu0 %v5129, 45
  %v5240 = vpop.permute.xlu0 %5239
  %5241 = vrot.lane.b32.xlu0 %v5130, 45
  %v5242 = vpop.permute.xlu0 %5241
  %5245 = vrot.lane.b32.xlu0 %v5129, 54
  %v5246 = vpop.permute.xlu0 %5245
  %5247 = vrot.lane.b32.xlu0 %v5130, 54
  %v5248 = vpop.permute.xlu0 %5247
  %5251 = vrot.lane.b32.xlu0 %v5129, 63
  %v5252 = vpop.permute.xlu0 %5251
  %5253 = vrot.lane.b32.xlu0 %v5130, 63
  %v5254 = vpop.permute.xlu0 %5253
  %5257 = vrot.lane.b32.xlu0 %v5129, 72
  %v5258 = vpop.permute.xlu0 %5257
  %5259 = vrot.lane.b32.xlu0 %v5130, 72
  %v5260 = vpop.permute.xlu0 %5259
  %v5263 = vsel %vm163, %v5129, %v5216
  %v5264 = vsel %vm163, %v5130, %v5218
  %v5265 = vsel %vm166, %v5263, %v5222
  %v5266 = vsel %vm166, %v5264, %v5224
  %v5267 = vsel %vm169, %v5265, %v5228
  %v5268 = vsel %vm169, %v5266, %v5230
  %v5269 = vsel %vm172, %v5267, %v5234
  %v5270 = vsel %vm172, %v5268, %v5236
  %v5271 = vsel %vm175, %v5269, %v5240
  %v5272 = vsel %vm175, %v5270, %v5242
  %v5273 = vsel %vm178, %v5271, %v5246
  %v5274 = vsel %vm178, %v5272, %v5248
  %v5275 = vsel %vm181, %v5273, %v5252
  %v5276 = vsel %vm181, %v5274, %v5254
  %v5277 = vsel %vm184, %v5275, %v5258
  %v5278 = vsel %vm184, %v5276, %v5260
  %v5279 = vld [vmem:[%s1 + $0x45] sm:$0x1]
  %v5280 = vperm.slane %v5279, 0
  %v5281 = vmul.f32 %v5277, %v5280
  %v5282 = vmul.f32 %v5278, %v5280
  %v5283 = vadd.f32 %v5207, %v5281
  %v5284 = vadd.f32 %v5208, %v5282
  %v5285 = vld [vmem:[%s1 + $0x46] sm:$0x1]
  %v5286 = vperm.slane %v5285, 0
  %v5287 = vmul.f32 %v5277, %v5286
  %v5288 = vmul.f32 %v5278, %v5286
  %v5289 = vadd.f32 %v5213, %v5287
  %v5290 = vadd.f32 %v5214, %v5288
  %v5291 = vadd.f32 %v5283, %v2135
  %v5292 = vadd.f32 %v5284, %v2135
  %v5293 = vtanh.pop %v5291
  %v5294 = vtanh.pop %v5292
  %v5295 = vld [vmem:[%s6] sm:$0xff]
  %v5296 = vld [vmem:[%s6 + $0x8] sm:$0xff]
  %v5297 = vld [vmem:[%s6 + $0x10] sm:$0xff]
  %v5298 = vadd.f32 %v5289, %v2135
  %v5299 = vadd.f32 %v5290, %v2135
  %v5300 = vtanh.pop %v5298
  %v5301 = vtanh.pop %v5299
  %v5302 = vld [vmem:[%s2148] sm:$0xff]
  %v5303 = vld [vmem:[%s2148 + $0x8] sm:$0xff]
  %v5304 = vld [vmem:[%s2148 + $0x10] sm:$0xff]
  %v5306 = vsel %vm163, %v5302, 0
  %v5309 = vsel %vm163, %v5303, 0
  %v5312 = vsel %vm163, %v5304, 0
  %v5315 = vsel %vm2161, %v5301, 0
  %5317 = vmatpush.msra.mxu0 0.0
  %5318 = vmatpush.msra.mxu0 0.0
  %5319 = vmatpush.msra.mxu0 0.0
  %5320 = vmatpush.msra.mxu0 0.0
  %5321 = vmatpush.msra.mxu0 0.0
  %5322 = vmatpush.msra.mxu0 0.0
  %5323 = vmatpush.msra.mxu0 0.0
  %5324 = vmatpush.msra.mxu0 0.0
  %5325 = vmatpush.msra.mxu0 0.0
  %5326 = vmatpush.msra.mxu0 0.0
  %5327 = vmatpush.msra.mxu0 0.0
  %5328 = vmatpush.msra.mxu0 0.0
  %5329 = vmatpush.msra.mxu0 0.0
  %5330 = vmatpush.msra.mxu0 0.0
  %5331 = vmatpush.msra.mxu0 %v5315
  %5332 = vmatpush.msra.mxu0 %v5300
  %5333 = vmatmul.f32.gmra.mxu0 %v5306
  %v5334 = vpop.f32.mrf.mxu0
  %v5335 = vadd.f32 0.0, %v5334
  %5336 = vmatmul.f32.gmra.mxu0 %v5309
  %v5337 = vpop.f32.mrf.mxu0
  %v5338 = vadd.f32 0.0, %v5337
  %5339 = vmatmul.f32.gmra.mxu0 %v5312
  %v5340 = vpop.f32.mrf.mxu0
  %v5341 = vadd.f32 0.0, %v5340
  %5342 = vdwg.mxu0
  %v5344 = vsel %vm163, %v5295, 0
  %v5347 = vsel %vm163, %v5296, 0
  %v5350 = vsel %vm163, %v5297, 0
  %v5353 = vsel %vm2161, %v5294, 0
  %5355 = vmatpush.msra.mxu0 0.0
  %5356 = vmatpush.msra.mxu0 0.0
  %5357 = vmatpush.msra.mxu0 0.0
  %5358 = vmatpush.msra.mxu0 0.0
  %5359 = vmatpush.msra.mxu0 0.0
  %5360 = vmatpush.msra.mxu0 0.0
  %5361 = vmatpush.msra.mxu0 0.0
  %5362 = vmatpush.msra.mxu0 0.0
  %5363 = vmatpush.msra.mxu0 0.0
  %5364 = vmatpush.msra.mxu0 0.0
  %5365 = vmatpush.msra.mxu0 0.0
  %5366 = vmatpush.msra.mxu0 0.0
  %5367 = vmatpush.msra.mxu0 0.0
  %5368 = vmatpush.msra.mxu0 0.0
  %5369 = vmatpush.msra.mxu0 %v5353
  %5370 = vmatpush.msra.mxu0 %v5293
  %5371 = vmatmul.f32.gmra.mxu0 %v5344
  %v5372 = vpop.f32.mrf.mxu0
  %v5373 = vadd.f32 %v5335, %v5372
  %5374 = vmatmul.f32.gmra.mxu0 %v5347
  %v5375 = vpop.f32.mrf.mxu0
  %v5376 = vadd.f32 %v5338, %v5375
  %5377 = vmatmul.f32.gmra.mxu0 %v5350
  %v5378 = vpop.f32.mrf.mxu0
  %v5379 = vadd.f32 %v5341, %v5378
  %5380 = vdwg.mxu0
  %v5381 = vadd.f32 %v5127, %v2135
  %v5382 = vadd.f32 %v5128, %v2135
  %v5383 = vtanh.pop %v5381
  %v5384 = vtanh.pop %v5382
  %v5385 = vld [vmem:[%s2233] sm:$0xff]
  %v5386 = vld [vmem:[%s2233 + $0x8] sm:$0xff]
  %v5387 = vld [vmem:[%s2233 + $0x10] sm:$0xff]
  %v5389 = vsel %vm163, %v5385, 0
  %v5392 = vsel %vm163, %v5386, 0
  %v5395 = vsel %vm163, %v5387, 0
  %v5398 = vsel %vm2161, %v5384, 0
  %5400 = vmatpush.msra.mxu0 0.0
  %5401 = vmatpush.msra.mxu0 0.0
  %5402 = vmatpush.msra.mxu0 0.0
  %5403 = vmatpush.msra.mxu0 0.0
  %5404 = vmatpush.msra.mxu0 0.0
  %5405 = vmatpush.msra.mxu0 0.0
  %5406 = vmatpush.msra.mxu0 0.0
  %5407 = vmatpush.msra.mxu0 0.0
  %5408 = vmatpush.msra.mxu0 0.0
  %5409 = vmatpush.msra.mxu0 0.0
  %5410 = vmatpush.msra.mxu0 0.0
  %5411 = vmatpush.msra.mxu0 0.0
  %5412 = vmatpush.msra.mxu0 0.0
  %5413 = vmatpush.msra.mxu0 0.0
  %5414 = vmatpush.msra.mxu0 %v5398
  %5415 = vmatpush.msra.mxu0 %v5383
  %5416 = vmatmul.f32.gmra.mxu0 %v5389
  %v5417 = vpop.f32.mrf.mxu0
  %v5418 = vadd.f32 0.0, %v5417
  %5419 = vmatmul.f32.gmra.mxu0 %v5392
  %v5420 = vpop.f32.mrf.mxu0
  %v5421 = vadd.f32 0.0, %v5420
  %5422 = vmatmul.f32.gmra.mxu0 %v5395
  %v5423 = vpop.f32.mrf.mxu0
  %v5424 = vadd.f32 0.0, %v5423
  %5425 = vdwg.mxu0
  %v5426 = vadd.f32 %v5373, %v5418
  %v5427 = vadd.f32 %v5376, %v5421
  %v5428 = vadd.f32 %v5379, %v5424
  %v5430 = vsel %vm2278, %v5426, 0
  %v5433 = vsel %vm2278, %v5427, 0
  %v5436 = vsel %vm2278, %v5428, 0
  %5438 = vmatpush.msra.mxu0 0.0
  %5439 = vmatpush.msra.mxu0 0.0
  %5440 = vmatpush.msra.mxu0 0.0
  %5441 = vmatpush.msra.mxu0 0.0
  %5442 = vmatpush.msra.mxu0 0.0
  %5443 = vmatpush.msra.mxu0 %v2289
  %5444 = vmatpush.msra.mxu0 %v41
  %5445 = vmatpush.msra.mxu0 %v40
  %5446 = vmatpush.msra.mxu0 %v39
  %5447 = vmatpush.msra.mxu0 %v38
  %5448 = vmatpush.msra.mxu0 %v37
  %5449 = vmatpush.msra.mxu0 %v36
  %5450 = vmatpush.msra.mxu0 %v35
  %5451 = vmatpush.msra.mxu0 %v34
  %5452 = vmatpush.msra.mxu0 %v33
  %5453 = vmatpush.msra.mxu0 %v32
  %5454 = vmatmul.f32.gmra.mxu0 %v5430
  %v5455 = vpop.f32.mrf.mxu0
  %v5456 = vadd.f32 0.0, %v5455
  %5457 = vmatmul.f32.gmra.mxu0 %v5433
  %v5458 = vpop.f32.mrf.mxu0
  %v5459 = vadd.f32 0.0, %v5458
  %5460 = vmatmul.f32.gmra.mxu0 %v5436
  %v5461 = vpop.f32.mrf.mxu0
  %v5462 = vadd.f32 0.0, %v5461
  %5463 = vdwg.mxu0
  %5464 = vst.msk [vmem:[#allocation3] sm:$0xff] %vm184, %v5456
  %5465 = vst.msk [vmem:[#allocation3 + $0x8] sm:$0xff] %vm184, %v5459
  %5466 = vst.msk [vmem:[#allocation3 + $0x10] sm:$0xff] %vm184, %v5462
  %v5467 = vld [vmem:[#allocation3 + $0x1] sm:$0xff]
  %v5468 = vld [vmem:[#allocation3 + $0x9] sm:$0xff]
  %v5469 = vld [vmem:[#allocation3 + $0x11] sm:$0x7f]
  %5473 = vrot.lane.b32.xlu0 %v5467, 127
  %v5474 = vpop.permute.xlu0 %5473
  %5475 = vrot.lane.b32.xlu0 %v5468, 127
  %v5476 = vpop.permute.xlu0 %5475
  %5477 = vrot.lane.b32.xlu0 %v5469, 127
  %v5478 = vpop.permute.xlu0 %5477
  %5482 = vrot.lane.b32.xlu0 %v5467, 22
  %v5483 = vpop.permute.xlu0 %5482
  %5484 = vrot.lane.b32.xlu0 %v5468, 22
  %v5485 = vpop.permute.xlu0 %5484
  %5486 = vrot.lane.b32.xlu0 %v5469, 22
  %v5487 = vpop.permute.xlu0 %5486
  %5491 = vrot.lane.b32.xlu0 %v5467, 45
  %v5492 = vpop.permute.xlu0 %5491
  %5493 = vrot.lane.b32.xlu0 %v5468, 45
  %v5494 = vpop.permute.xlu0 %5493
  %5495 = vrot.lane.b32.xlu0 %v5469, 45
  %v5496 = vpop.permute.xlu0 %5495
  %v5500 = vsel %vm2353, %v5474, %v5483
  %v5501 = vsel %vm2353, %v5476, %v5485
  %v5502 = vsel %vm2353, %v5478, %v5487
  %v5503 = vsel %vm2357, %v5500, %v5492
  %v5504 = vsel %vm2357, %v5501, %v5494
  %v5505 = vsel %vm2357, %v5502, %v5496
  %v5506 = vld [vmem:[%s3] sm:$0x1]
  %v5507 = vperm.slane %v5506, 0
  %v5508 = vmul.f32 %v5503, %v5507
  %v5509 = vmul.f32 %v5504, %v5507
  %v5510 = vmul.f32 %v5505, %v5507
  %v5511 = vadd.f32 %v5508, 0.0
  %v5512 = vadd.f32 %v5509, 0.0
  %v5513 = vadd.f32 %v5510, 0.0
  %v5514 = vld [vmem:[%s3 + $0x1] sm:$0x1]
  %v5515 = vperm.slane %v5514, 0
  %v5516 = vmul.f32 %v5503, %v5515
  %v5517 = vmul.f32 %v5504, %v5515
  %v5518 = vmul.f32 %v5505, %v5515
  %v5519 = vadd.f32 %v5516, 0.0
  %v5520 = vadd.f32 %v5517, 0.0
  %v5521 = vadd.f32 %v5518, 0.0
  %v5522 = vld [vmem:[%s3 + $0x2] sm:$0x1]
  %v5523 = vperm.slane %v5522, 0
  %v5524 = vmul.f32 %v5503, %v5523
  %v5525 = vmul.f32 %v5504, %v5523
  %v5526 = vmul.f32 %v5505, %v5523
  %v5527 = vadd.f32 %v5524, 0.0
  %v5528 = vadd.f32 %v5525, 0.0
  %v5529 = vadd.f32 %v5526, 0.0
  %5530 = vrot.lane.b32.xlu0 %v5467, 23
  %v5531 = vpop.permute.xlu0 %5530
  %5532 = vrot.lane.b32.xlu0 %v5468, 23
  %v5533 = vpop.permute.xlu0 %5532
  %5534 = vrot.lane.b32.xlu0 %v5469, 23
  %v5535 = vpop.permute.xlu0 %5534
  %5539 = vrot.lane.b32.xlu0 %v5467, 46
  %v5540 = vpop.permute.xlu0 %5539
  %5541 = vrot.lane.b32.xlu0 %v5468, 46
  %v5542 = vpop.permute.xlu0 %5541
  %5543 = vrot.lane.b32.xlu0 %v5469, 46
  %v5544 = vpop.permute.xlu0 %5543
  %v5548 = vsel %vm2353, %v5467, %v5531
  %v5549 = vsel %vm2353, %v5468, %v5533
  %v5550 = vsel %vm2353, %v5469, %v5535
  %v5551 = vsel %vm2357, %v5548, %v5540
  %v5552 = vsel %vm2357, %v5549, %v5542
  %v5553 = vsel %vm2357, %v5550, %v5544
  %v5554 = vld [vmem:[%s3 + $0x3] sm:$0x1]
  %v5555 = vperm.slane %v5554, 0
  %v5556 = vmul.f32 %v5551, %v5555
  %v5557 = vmul.f32 %v5552, %v5555
  %v5558 = vmul.f32 %v5553, %v5555
  %v5559 = vadd.f32 %v5511, %v5556
  %v5560 = vadd.f32 %v5512, %v5557
  %v5561 = vadd.f32 %v5513, %v5558
  %v5562 = vld [vmem:[%s3 + $0x4] sm:$0x1]
  %v5563 = vperm.slane %v5562, 0
  %v5564 = vmul.f32 %v5551, %v5563
  %v5565 = vmul.f32 %v5552, %v5563
  %v5566 = vmul.f32 %v5553, %v5563
  %v5567 = vadd.f32 %v5519, %v5564
  %v5568 = vadd.f32 %v5520, %v5565
  %v5569 = vadd.f32 %v5521, %v5566
  %v5570 = vld [vmem:[%s3 + $0x5] sm:$0x1]
  %v5571 = vperm.slane %v5570, 0
  %v5572 = vmul.f32 %v5551, %v5571
  %v5573 = vmul.f32 %v5552, %v5571
  %v5574 = vmul.f32 %v5553, %v5571
  %v5575 = vadd.f32 %v5527, %v5572
  %v5576 = vadd.f32 %v5528, %v5573
  %v5577 = vadd.f32 %v5529, %v5574
  %v5578 = vld [vmem:[#allocation3] sm:$0xff]
  %v5579 = vld [vmem:[#allocation3 + $0x8] sm:$0xff]
  %v5580 = vld [vmem:[#allocation3 + $0x10] sm:$0x7f]
  %5584 = vrot.lane.b32.xlu0 %v5578, 127
  %v5585 = vpop.permute.xlu0 %5584
  %5586 = vrot.lane.b32.xlu0 %v5579, 127
  %v5587 = vpop.permute.xlu0 %5586
  %5588 = vrot.lane.b32.xlu0 %v5580, 127
  %v5589 = vpop.permute.xlu0 %5588
  %5593 = vrot.lane.b32.xlu0 %v5578, 22
  %v5594 = vpop.permute.xlu0 %5593
  %5595 = vrot.lane.b32.xlu0 %v5579, 22
  %v5596 = vpop.permute.xlu0 %5595
  %5597 = vrot.lane.b32.xlu0 %v5580, 22
  %v5598 = vpop.permute.xlu0 %5597
  %5602 = vrot.lane.b32.xlu0 %v5578, 45
  %v5603 = vpop.permute.xlu0 %5602
  %5604 = vrot.lane.b32.xlu0 %v5579, 45
  %v5605 = vpop.permute.xlu0 %5604
  %5606 = vrot.lane.b32.xlu0 %v5580, 45
  %v5607 = vpop.permute.xlu0 %5606
  %v5611 = vsel %vm2353, %v5585, %v5594
  %v5612 = vsel %vm2353, %v5587, %v5596
  %v5613 = vsel %vm2353, %v5589, %v5598
  %v5614 = vsel %vm2357, %v5611, %v5603
  %v5615 = vsel %vm2357, %v5612, %v5605
  %v5616 = vsel %vm2357, %v5613, %v5607
  %v5617 = vld [vmem:[%s3 + $0x6] sm:$0x1]
  %v5618 = vperm.slane %v5617, 0
  %v5619 = vmul.f32 %v5614, %v5618
  %v5620 = vmul.f32 %v5615, %v5618
  %v5621 = vmul.f32 %v5616, %v5618
  %v5622 = vadd.f32 %v5559, %v5619
  %v5623 = vadd.f32 %v5560, %v5620
  %v5624 = vadd.f32 %v5561, %v5621
  %v5625 = vld [vmem:[%s3 + $0x7] sm:$0x1]
  %v5626 = vperm.slane %v5625, 0
  %v5627 = vmul.f32 %v5614, %v5626
  %v5628 = vmul.f32 %v5615, %v5626
  %v5629 = vmul.f32 %v5616, %v5626
  %v5630 = vadd.f32 %v5567, %v5627
  %v5631 = vadd.f32 %v5568, %v5628
  %v5632 = vadd.f32 %v5569, %v5629
  %5633 = vrot.lane.b32.xlu0 %v5578, 23
  %v5634 = vpop.permute.xlu0 %5633
  %5635 = vrot.lane.b32.xlu0 %v5579, 23
  %v5636 = vpop.permute.xlu0 %5635
  %5637 = vrot.lane.b32.xlu0 %v5580, 23
  %v5638 = vpop.permute.xlu0 %5637
  %5642 = vrot.lane.b32.xlu0 %v5578, 46
  %v5643 = vpop.permute.xlu0 %5642
  %5644 = vrot.lane.b32.xlu0 %v5579, 46
  %v5645 = vpop.permute.xlu0 %5644
  %5646 = vrot.lane.b32.xlu0 %v5580, 46
  %v5647 = vpop.permute.xlu0 %5646
  %v5651 = vsel %vm2353, %v5578, %v5634
  %v5652 = vsel %vm2353, %v5579, %v5636
  %v5653 = vsel %vm2353, %v5580, %v5638
  %v5654 = vsel %vm2357, %v5651, %v5643
  %v5655 = vsel %vm2357, %v5652, %v5645
  %v5656 = vsel %vm2357, %v5653, %v5647
  %v5657 = vld [vmem:[%s3 + $0x9] sm:$0x1]
  %v5658 = vperm.slane %v5657, 0
  %v5659 = vmul.f32 %v5654, %v5658
  %v5660 = vmul.f32 %v5655, %v5658
  %v5661 = vmul.f32 %v5656, %v5658
  %v5662 = vadd.f32 %v5622, %v5659
  %v5663 = vadd.f32 %v5623, %v5660
  %v5664 = vadd.f32 %v5624, %v5661
  %v5665 = vld [vmem:[%s3 + $0xa] sm:$0x1]
  %v5666 = vperm.slane %v5665, 0
  %v5667 = vmul.f32 %v5654, %v5666
  %v5668 = vmul.f32 %v5655, %v5666
  %v5669 = vmul.f32 %v5656, %v5666
  %v5670 = vadd.f32 %v5630, %v5667
  %v5671 = vadd.f32 %v5631, %v5668
  %v5672 = vadd.f32 %v5632, %v5669
  %5673 = vrot.lane.b32.xlu0 %v5467, 103
  %v5674 = vpop.permute.xlu0 %5673
  %5675 = vrot.lane.b32.xlu0 %v5468, 103
  %v5676 = vpop.permute.xlu0 %5675
  %5677 = vrot.lane.b32.xlu0 %v5469, 103
  %v5678 = vpop.permute.xlu0 %5677
  %5682 = vrot.lane.b32.xlu0 %v5467, 126
  %v5683 = vpop.permute.xlu0 %5682
  %5684 = vrot.lane.b32.xlu0 %v5468, 126
  %v5685 = vpop.permute.xlu0 %5684
  %5686 = vrot.lane.b32.xlu0 %v5469, 126
  %v5687 = vpop.permute.xlu0 %5686
  %5691 = vrot.lane.b32.xlu0 %v5467, 21
  %v5692 = vpop.permute.xlu0 %5691
  %5693 = vrot.lane.b32.xlu0 %v5468, 21
  %v5694 = vpop.permute.xlu0 %5693
  %5695 = vrot.lane.b32.xlu0 %v5469, 21
  %v5696 = vpop.permute.xlu0 %5695
  %v5700 = vsel %vm2353, %v5674, %v5683
  %v5701 = vsel %vm2353, %v5676, %v5685
  %v5702 = vsel %vm2353, %v5678, %v5687
  %v5703 = vsel %vm2357, %v5700, %v5692
  %v5704 = vsel %vm2357, %v5701, %v5694
  %v5705 = vsel %vm2357, %v5702, %v5696
  %v5706 = vld [vmem:[%s3 + $0xc] sm:$0x1]
  %v5707 = vperm.slane %v5706, 0
  %v5708 = vmul.f32 %v5703, %v5707
  %v5709 = vmul.f32 %v5704, %v5707
  %v5710 = vmul.f32 %v5705, %v5707
  %v5711 = vadd.f32 %v5662, %v5708
  %v5712 = vadd.f32 %v5663, %v5709
  %v5713 = vadd.f32 %v5664, %v5710
  %v5714 = vld [vmem:[%s3 + $0xd] sm:$0x1]
  %v5715 = vperm.slane %v5714, 0
  %v5716 = vmul.f32 %v5703, %v5715
  %v5717 = vmul.f32 %v5704, %v5715
  %v5718 = vmul.f32 %v5705, %v5715
  %v5719 = vadd.f32 %v5670, %v5716
  %v5720 = vadd.f32 %v5671, %v5717
  %v5721 = vadd.f32 %v5672, %v5718
  %v5722 = vld [vmem:[%s3 + $0xe] sm:$0x1]
  %v5723 = vperm.slane %v5722, 0
  %v5724 = vmul.f32 %v5703, %v5723
  %v5725 = vmul.f32 %v5704, %v5723
  %v5726 = vmul.f32 %v5705, %v5723
  %v5727 = vadd.f32 %v5575, %v5724
  %v5728 = vadd.f32 %v5576, %v5725
  %v5729 = vadd.f32 %v5577, %v5726
  %5730 = vrot.lane.b32.xlu0 %v5467, 104
  %v5731 = vpop.permute.xlu0 %5730
  %5732 = vrot.lane.b32.xlu0 %v5468, 104
  %v5733 = vpop.permute.xlu0 %5732
  %5734 = vrot.lane.b32.xlu0 %v5469, 104
  %v5735 = vpop.permute.xlu0 %5734
  %v5739 = vsel %vm2353, %v5731, %v5474
  %v5740 = vsel %vm2353, %v5733, %v5476
  %v5741 = vsel %vm2353, %v5735, %v5478
  %v5742 = vsel %vm2357, %v5739, %v5483
  %v5743 = vsel %vm2357, %v5740, %v5485
  %v5744 = vsel %vm2357, %v5741, %v5487
  %v5745 = vld [vmem:[%s3 + $0xf] sm:$0x1]
  %v5746 = vperm.slane %v5745, 0
  %v5747 = vmul.f32 %v5742, %v5746
  %v5748 = vmul.f32 %v5743, %v5746
  %v5749 = vmul.f32 %v5744, %v5746
  %v5750 = vadd.f32 %v5711, %v5747
  %v5751 = vadd.f32 %v5712, %v5748
  %v5752 = vadd.f32 %v5713, %v5749
  %v5753 = vld [vmem:[%s3 + $0x10] sm:$0x1]
  %v5754 = vperm.slane %v5753, 0
  %v5755 = vmul.f32 %v5742, %v5754
  %v5756 = vmul.f32 %v5743, %v5754
  %v5757 = vmul.f32 %v5744, %v5754
  %v5758 = vadd.f32 %v5719, %v5755
  %v5759 = vadd.f32 %v5720, %v5756
  %v5760 = vadd.f32 %v5721, %v5757
  %v5761 = vld [vmem:[%s3 + $0x11] sm:$0x1]
  %v5762 = vperm.slane %v5761, 0
  %v5763 = vmul.f32 %v5742, %v5762
  %v5764 = vmul.f32 %v5743, %v5762
  %v5765 = vmul.f32 %v5744, %v5762
  %v5766 = vadd.f32 %v5727, %v5763
  %v5767 = vadd.f32 %v5728, %v5764
  %v5768 = vadd.f32 %v5729, %v5765
  %5769 = vrot.lane.b32.xlu0 %v5578, 103
  %v5770 = vpop.permute.xlu0 %5769
  %5771 = vrot.lane.b32.xlu0 %v5579, 103
  %v5772 = vpop.permute.xlu0 %5771
  %5773 = vrot.lane.b32.xlu0 %v5580, 103
  %v5774 = vpop.permute.xlu0 %5773
  %5778 = vrot.lane.b32.xlu0 %v5578, 126
  %v5779 = vpop.permute.xlu0 %5778
  %5780 = vrot.lane.b32.xlu0 %v5579, 126
  %v5781 = vpop.permute.xlu0 %5780
  %5782 = vrot.lane.b32.xlu0 %v5580, 126
  %v5783 = vpop.permute.xlu0 %5782
  %5787 = vrot.lane.b32.xlu0 %v5578, 21
  %v5788 = vpop.permute.xlu0 %5787
  %5789 = vrot.lane.b32.xlu0 %v5579, 21
  %v5790 = vpop.permute.xlu0 %5789
  %5791 = vrot.lane.b32.xlu0 %v5580, 21
  %v5792 = vpop.permute.xlu0 %5791
  %v5796 = vsel %vm2353, %v5770, %v5779
  %v5797 = vsel %vm2353, %v5772, %v5781
  %v5798 = vsel %vm2353, %v5774, %v5783
  %v5799 = vsel %vm2357, %v5796, %v5788
  %v5800 = vsel %vm2357, %v5797, %v5790
  %v5801 = vsel %vm2357, %v5798, %v5792
  %v5802 = vld [vmem:[%s3 + $0x12] sm:$0x1]
  %v5803 = vperm.slane %v5802, 0
  %v5804 = vmul.f32 %v5799, %v5803
  %v5805 = vmul.f32 %v5800, %v5803
  %v5806 = vmul.f32 %v5801, %v5803
  %v5807 = vadd.f32 %v5750, %v5804
  %v5808 = vadd.f32 %v5751, %v5805
  %v5809 = vadd.f32 %v5752, %v5806
  %v5810 = vld [vmem:[%s3 + $0x13] sm:$0x1]
  %v5811 = vperm.slane %v5810, 0
  %v5812 = vmul.f32 %v5799, %v5811
  %v5813 = vmul.f32 %v5800, %v5811
  %v5814 = vmul.f32 %v5801, %v5811
  %v5815 = vadd.f32 %v5758, %v5812
  %v5816 = vadd.f32 %v5759, %v5813
  %v5817 = vadd.f32 %v5760, %v5814
  %5818 = vrot.lane.b32.xlu0 %v5578, 104
  %v5819 = vpop.permute.xlu0 %5818
  %5820 = vrot.lane.b32.xlu0 %v5579, 104
  %v5821 = vpop.permute.xlu0 %5820
  %5822 = vrot.lane.b32.xlu0 %v5580, 104
  %v5823 = vpop.permute.xlu0 %5822
  %v5827 = vsel %vm2353, %v5819, %v5585
  %v5828 = vsel %vm2353, %v5821, %v5587
  %v5829 = vsel %vm2353, %v5823, %v5589
  %v5830 = vsel %vm2357, %v5827, %v5594
  %v5831 = vsel %vm2357, %v5828, %v5596
  %v5832 = vsel %vm2357, %v5829, %v5598
  %v5833 = vld [vmem:[%s3 + $0x15] sm:$0x1]
  %v5834 = vperm.slane %v5833, 0
  %v5835 = vmul.f32 %v5830, %v5834
  %v5836 = vmul.f32 %v5831, %v5834
  %v5837 = vmul.f32 %v5832, %v5834
  %v5838 = vadd.f32 %v5807, %v5835
  %v5839 = vadd.f32 %v5808, %v5836
  %v5840 = vadd.f32 %v5809, %v5837
  %v5841 = vld [vmem:[%s3 + $0x16] sm:$0x1]
  %v5842 = vperm.slane %v5841, 0
  %v5843 = vmul.f32 %v5830, %v5842
  %v5844 = vmul.f32 %v5831, %v5842
  %v5845 = vmul.f32 %v5832, %v5842
  %v5846 = vadd.f32 %v5815, %v5843
  %v5847 = vadd.f32 %v5816, %v5844
  %v5848 = vadd.f32 %v5817, %v5845
  %5849 = vrot.lane.b32.xlu0 %v5467, 79
  %v5850 = vpop.permute.xlu0 %5849
  %5851 = vrot.lane.b32.xlu0 %v5468, 79
  %v5852 = vpop.permute.xlu0 %5851
  %5853 = vrot.lane.b32.xlu0 %v5469, 79
  %v5854 = vpop.permute.xlu0 %5853
  %5858 = vrot.lane.b32.xlu0 %v5467, 102
  %v5859 = vpop.permute.xlu0 %5858
  %5860 = vrot.lane.b32.xlu0 %v5468, 102
  %v5861 = vpop.permute.xlu0 %5860
  %5862 = vrot.lane.b32.xlu0 %v5469, 102
  %v5863 = vpop.permute.xlu0 %5862
  %5867 = vrot.lane.b32.xlu0 %v5467, 125
  %v5868 = vpop.permute.xlu0 %5867
  %5869 = vrot.lane.b32.xlu0 %v5468, 125
  %v5870 = vpop.permute.xlu0 %5869
  %5871 = vrot.lane.b32.xlu0 %v5469, 125
  %v5872 = vpop.permute.xlu0 %5871
  %v5876 = vsel %vm2353, %v5850, %v5859
  %v5877 = vsel %vm2353, %v5852, %v5861
  %v5878 = vsel %vm2353, %v5854, %v5863
  %v5879 = vsel %vm2357, %v5876, %v5868
  %v5880 = vsel %vm2357, %v5877, %v5870
  %v5881 = vsel %vm2357, %v5878, %v5872
  %v5882 = vld [vmem:[%s3 + $0x18] sm:$0x1]
  %v5883 = vperm.slane %v5882, 0
  %v5884 = vmul.f32 %v5879, %v5883
  %v5885 = vmul.f32 %v5880, %v5883
  %v5886 = vmul.f32 %v5881, %v5883
  %v5887 = vadd.f32 %v5838, %v5884
  %v5888 = vadd.f32 %v5839, %v5885
  %v5889 = vadd.f32 %v5840, %v5886
  %v5890 = vld [vmem:[%s3 + $0x19] sm:$0x1]
  %v5891 = vperm.slane %v5890, 0
  %v5892 = vmul.f32 %v5879, %v5891
  %v5893 = vmul.f32 %v5880, %v5891
  %v5894 = vmul.f32 %v5881, %v5891
  %v5895 = vadd.f32 %v5846, %v5892
  %v5896 = vadd.f32 %v5847, %v5893
  %v5897 = vadd.f32 %v5848, %v5894
  %v5898 = vld [vmem:[%s3 + $0x1a] sm:$0x1]
  %v5899 = vperm.slane %v5898, 0
  %v5900 = vmul.f32 %v5879, %v5899
  %v5901 = vmul.f32 %v5880, %v5899
  %v5902 = vmul.f32 %v5881, %v5899
  %v5903 = vadd.f32 %v5766, %v5900
  %v5904 = vadd.f32 %v5767, %v5901
  %v5905 = vadd.f32 %v5768, %v5902
  %5906 = vrot.lane.b32.xlu0 %v5467, 80
  %v5907 = vpop.permute.xlu0 %5906
  %5908 = vrot.lane.b32.xlu0 %v5468, 80
  %v5909 = vpop.permute.xlu0 %5908
  %5910 = vrot.lane.b32.xlu0 %v5469, 80
  %v5911 = vpop.permute.xlu0 %5910
  %v5915 = vsel %vm2353, %v5907, %v5674
  %v5916 = vsel %vm2353, %v5909, %v5676
  %v5917 = vsel %vm2353, %v5911, %v5678
  %v5918 = vsel %vm2357, %v5915, %v5683
  %v5919 = vsel %vm2357, %v5916, %v5685
  %v5920 = vsel %vm2357, %v5917, %v5687
  %v5921 = vld [vmem:[%s3 + $0x1b] sm:$0x1]
  %v5922 = vperm.slane %v5921, 0
  %v5923 = vmul.f32 %v5918, %v5922
  %v5924 = vmul.f32 %v5919, %v5922
  %v5925 = vmul.f32 %v5920, %v5922
  %v5926 = vadd.f32 %v5887, %v5923
  %v5927 = vadd.f32 %v5888, %v5924
  %v5928 = vadd.f32 %v5889, %v5925
  %v5929 = vld [vmem:[%s3 + $0x1c] sm:$0x1]
  %v5930 = vperm.slane %v5929, 0
  %v5931 = vmul.f32 %v5918, %v5930
  %v5932 = vmul.f32 %v5919, %v5930
  %v5933 = vmul.f32 %v5920, %v5930
  %v5934 = vadd.f32 %v5895, %v5931
  %v5935 = vadd.f32 %v5896, %v5932
  %v5936 = vadd.f32 %v5897, %v5933
  %v5937 = vld [vmem:[%s3 + $0x1d] sm:$0x1]
  %v5938 = vperm.slane %v5937, 0
  %v5939 = vmul.f32 %v5918, %v5938
  %v5940 = vmul.f32 %v5919, %v5938
  %v5941 = vmul.f32 %v5920, %v5938
  %v5942 = vadd.f32 %v5903, %v5939
  %v5943 = vadd.f32 %v5904, %v5940
  %v5944 = vadd.f32 %v5905, %v5941
  %5945 = vrot.lane.b32.xlu0 %v5578, 79
  %v5946 = vpop.permute.xlu0 %5945
  %5947 = vrot.lane.b32.xlu0 %v5579, 79
  %v5948 = vpop.permute.xlu0 %5947
  %5949 = vrot.lane.b32.xlu0 %v5580, 79
  %v5950 = vpop.permute.xlu0 %5949
  %5954 = vrot.lane.b32.xlu0 %v5578, 102
  %v5955 = vpop.permute.xlu0 %5954
  %5956 = vrot.lane.b32.xlu0 %v5579, 102
  %v5957 = vpop.permute.xlu0 %5956
  %5958 = vrot.lane.b32.xlu0 %v5580, 102
  %v5959 = vpop.permute.xlu0 %5958
  %5963 = vrot.lane.b32.xlu0 %v5578, 125
  %v5964 = vpop.permute.xlu0 %5963
  %5965 = vrot.lane.b32.xlu0 %v5579, 125
  %v5966 = vpop.permute.xlu0 %5965
  %5967 = vrot.lane.b32.xlu0 %v5580, 125
  %v5968 = vpop.permute.xlu0 %5967
  %v5972 = vsel %vm2353, %v5946, %v5955
  %v5973 = vsel %vm2353, %v5948, %v5957
  %v5974 = vsel %vm2353, %v5950, %v5959
  %v5975 = vsel %vm2357, %v5972, %v5964
  %v5976 = vsel %vm2357, %v5973, %v5966
  %v5977 = vsel %vm2357, %v5974, %v5968
  %v5978 = vld [vmem:[%s3 + $0x1e] sm:$0x1]
  %v5979 = vperm.slane %v5978, 0
  %v5980 = vmul.f32 %v5975, %v5979
  %v5981 = vmul.f32 %v5976, %v5979
  %v5982 = vmul.f32 %v5977, %v5979
  %v5983 = vadd.f32 %v5926, %v5980
  %v5984 = vadd.f32 %v5927, %v5981
  %v5985 = vadd.f32 %v5928, %v5982
  %v5986 = vld [vmem:[%s3 + $0x1f] sm:$0x1]
  %v5987 = vperm.slane %v5986, 0
  %v5988 = vmul.f32 %v5975, %v5987
  %v5989 = vmul.f32 %v5976, %v5987
  %v5990 = vmul.f32 %v5977, %v5987
  %v5991 = vadd.f32 %v5934, %v5988
  %v5992 = vadd.f32 %v5935, %v5989
  %v5993 = vadd.f32 %v5936, %v5990
  %5994 = vrot.lane.b32.xlu0 %v5578, 80
  %v5995 = vpop.permute.xlu0 %5994
  %5996 = vrot.lane.b32.xlu0 %v5579, 80
  %v5997 = vpop.permute.xlu0 %5996
  %5998 = vrot.lane.b32.xlu0 %v5580, 80
  %v5999 = vpop.permute.xlu0 %5998
  %v6003 = vsel %vm2353, %v5995, %v5770
  %v6004 = vsel %vm2353, %v5997, %v5772
  %v6005 = vsel %vm2353, %v5999, %v5774
  %v6006 = vsel %vm2357, %v6003, %v5779
  %v6007 = vsel %vm2357, %v6004, %v5781
  %v6008 = vsel %vm2357, %v6005, %v5783
  %v6009 = vld [vmem:[%s3 + $0x21] sm:$0x1]
  %v6010 = vperm.slane %v6009, 0
  %v6011 = vmul.f32 %v6006, %v6010
  %v6012 = vmul.f32 %v6007, %v6010
  %v6013 = vmul.f32 %v6008, %v6010
  %v6014 = vadd.f32 %v5983, %v6011
  %v6015 = vadd.f32 %v5984, %v6012
  %v6016 = vadd.f32 %v5985, %v6013
  %v6017 = vld [vmem:[%s3 + $0x22] sm:$0x1]
  %v6018 = vperm.slane %v6017, 0
  %v6019 = vmul.f32 %v6006, %v6018
  %v6020 = vmul.f32 %v6007, %v6018
  %v6021 = vmul.f32 %v6008, %v6018
  %v6022 = vadd.f32 %v5991, %v6019
  %v6023 = vadd.f32 %v5992, %v6020
  %v6024 = vadd.f32 %v5993, %v6021
  %v6025 = vld [vmem:[%s8] sm:$0xff]
  %v6026 = vld [vmem:[%s8 + $0x8] sm:$0xff]
  %v6027 = vld [vmem:[%s8 + $0x10] sm:$0xff]
  %v6028 = vld [vmem:[%s8 + $0x18] sm:$0xff]
  %v6029 = vld [vmem:[%s8 + $0x20] sm:$0xff]
  %v6030 = vld [vmem:[%s8 + $0x28] sm:$0xff]
  %v6031 = vld [vmem:[%s8 + $0x30] sm:$0xff]
  %v6032 = vld [vmem:[%s8 + $0x38] sm:$0xff]
  %v6033 = vld [vmem:[%s8 + $0x40] sm:$0x3]
  %v6034 = vadd.f32 %v6014, %v2890
  %v6035 = vadd.f32 %v6015, %v2890
  %v6036 = vadd.f32 %v6016, %v2890
  %v6037 = vld [vmem:[%s2895] sm:$0xff]
  %v6038 = vld [vmem:[%s2895 + $0x8] sm:$0xff]
  %v6039 = vld [vmem:[%s2895 + $0x10] sm:$0xff]
  %v6040 = vld [vmem:[%s2895 + $0x18] sm:$0xff]
  %v6041 = vld [vmem:[%s2895 + $0x20] sm:$0xff]
  %v6042 = vld [vmem:[%s2895 + $0x28] sm:$0xff]
  %v6043 = vld [vmem:[%s2895 + $0x30] sm:$0xff]
  %v6044 = vld [vmem:[%s2895 + $0x38] sm:$0xff]
  %v6045 = vld [vmem:[%s2895 + $0x40] sm:$0x3]
  %v6046 = vadd.f32 %v6022, %v2890
  %v6047 = vadd.f32 %v6023, %v2890
  %v6048 = vadd.f32 %v6024, %v2890
  %v6050 = vsel %vm2353, %v6037, 0
  %v6053 = vsel %vm2353, %v6038, 0
  %v6056 = vsel %vm2353, %v6039, 0
  %v6059 = vsel %vm2353, %v6040, 0
  %v6062 = vsel %vm2353, %v6041, 0
  %v6065 = vsel %vm2353, %v6042, 0
  %v6068 = vsel %vm2353, %v6043, 0
  %v6071 = vsel %vm2353, %v6044, 0
  %v6074 = vsel %vm2353, %v6045, 0
  %v6077 = vsel %vm2935, %v6048, 0
  %6079 = vmatpush.msra.mxu0 0.0
  %6080 = vmatpush.msra.mxu0 0.0
  %6081 = vmatpush.msra.mxu0 0.0
  %6082 = vmatpush.msra.mxu0 0.0
  %6083 = vmatpush.msra.mxu0 0.0
  %6084 = vmatpush.msra.mxu0 0.0
  %6085 = vmatpush.msra.mxu0 0.0
  %6086 = vmatpush.msra.mxu0 0.0
  %6087 = vmatpush.msra.mxu0 0.0
  %6088 = vmatpush.msra.mxu0 0.0
  %6089 = vmatpush.msra.mxu0 0.0
  %6090 = vmatpush.msra.mxu0 0.0
  %6091 = vmatpush.msra.mxu0 0.0
  %6092 = vmatpush.msra.mxu0 %v6077
  %6093 = vmatpush.msra.mxu0 %v6047
  %6094 = vmatpush.msra.mxu0 %v6046
  %6095 = vmatmul.f32.gmra.mxu0 %v6050
  %v6096 = vpop.f32.mrf.mxu0
  %v6097 = vadd.f32 0.0, %v6096
  %6098 = vmatmul.f32.gmra.mxu0 %v6053
  %v6099 = vpop.f32.mrf.mxu0
  %v6100 = vadd.f32 0.0, %v6099
  %6101 = vmatmul.f32.gmra.mxu0 %v6056
  %v6102 = vpop.f32.mrf.mxu0
  %v6103 = vadd.f32 0.0, %v6102
  %6104 = vmatmul.f32.gmra.mxu0 %v6059
  %v6105 = vpop.f32.mrf.mxu0
  %v6106 = vadd.f32 0.0, %v6105
  %6107 = vmatmul.f32.gmra.mxu0 %v6062
  %v6108 = vpop.f32.mrf.mxu0
  %v6109 = vadd.f32 0.0, %v6108
  %6110 = vmatmul.f32.gmra.mxu0 %v6065
  %v6111 = vpop.f32.mrf.mxu0
  %v6112 = vadd.f32 0.0, %v6111
  %6113 = vmatmul.f32.gmra.mxu0 %v6068
  %v6114 = vpop.f32.mrf.mxu0
  %v6115 = vadd.f32 0.0, %v6114
  %6116 = vmatmul.f32.gmra.mxu0 %v6071
  %v6117 = vpop.f32.mrf.mxu0
  %v6118 = vadd.f32 0.0, %v6117
  %6119 = vmatmul.f32.gmra.mxu0 %v6074
  %v6120 = vpop.f32.mrf.mxu0
  %v6121 = vadd.f32 0.0, %v6120
  %6122 = vdwg.mxu0
  %v6124 = vsel %vm2353, %v6025, 0
  %v6127 = vsel %vm2353, %v6026, 0
  %v6130 = vsel %vm2353, %v6027, 0
  %v6133 = vsel %vm2353, %v6028, 0
  %v6136 = vsel %vm2353, %v6029, 0
  %v6139 = vsel %vm2353, %v6030, 0
  %v6142 = vsel %vm2353, %v6031, 0
  %v6145 = vsel %vm2353, %v6032, 0
  %v6148 = vsel %vm2353, %v6033, 0
  %v6151 = vsel %vm2935, %v6036, 0
  %6153 = vmatpush.msra.mxu0 0.0
  %6154 = vmatpush.msra.mxu0 0.0
  %6155 = vmatpush.msra.mxu0 0.0
  %6156 = vmatpush.msra.mxu0 0.0
  %6157 = vmatpush.msra.mxu0 0.0
  %6158 = vmatpush.msra.mxu0 0.0
  %6159 = vmatpush.msra.mxu0 0.0
  %6160 = vmatpush.msra.mxu0 0.0
  %6161 = vmatpush.msra.mxu0 0.0
  %6162 = vmatpush.msra.mxu0 0.0
  %6163 = vmatpush.msra.mxu0 0.0
  %6164 = vmatpush.msra.mxu0 0.0
  %6165 = vmatpush.msra.mxu0 0.0
  %6166 = vmatpush.msra.mxu0 %v6151
  %6167 = vmatpush.msra.mxu0 %v6035
  %6168 = vmatpush.msra.mxu0 %v6034
  %6169 = vmatmul.f32.gmra.mxu0 %v6124
  %v6170 = vpop.f32.mrf.mxu0
  %v6171 = vadd.f32 %v6097, %v6170
  %6172 = vmatmul.f32.gmra.mxu0 %v6127
  %v6173 = vpop.f32.mrf.mxu0
  %v6174 = vadd.f32 %v6100, %v6173
  %6175 = vmatmul.f32.gmra.mxu0 %v6130
  %v6176 = vpop.f32.mrf.mxu0
  %v6177 = vadd.f32 %v6103, %v6176
  %6178 = vmatmul.f32.gmra.mxu0 %v6133
  %v6179 = vpop.f32.mrf.mxu0
  %v6180 = vadd.f32 %v6106, %v6179
  %6181 = vmatmul.f32.gmra.mxu0 %v6136
  %v6182 = vpop.f32.mrf.mxu0
  %v6183 = vadd.f32 %v6109, %v6182
  %6184 = vmatmul.f32.gmra.mxu0 %v6139
  %v6185 = vpop.f32.mrf.mxu0
  %v6186 = vadd.f32 %v6112, %v6185
  %6187 = vmatmul.f32.gmra.mxu0 %v6142
  %v6188 = vpop.f32.mrf.mxu0
  %v6189 = vadd.f32 %v6115, %v6188
  %6190 = vmatmul.f32.gmra.mxu0 %v6145
  %v6191 = vpop.f32.mrf.mxu0
  %v6192 = vadd.f32 %v6118, %v6191
  %6193 = vmatmul.f32.gmra.mxu0 %v6148
  %v6194 = vpop.f32.mrf.mxu0
  %v6195 = vadd.f32 %v6121, %v6194
  %6196 = vdwg.mxu0
  %v6197 = vld [vmem:[%s3057] sm:$0xff]
  %v6198 = vld [vmem:[%s3057 + $0x8] sm:$0xff]
  %v6199 = vld [vmem:[%s3057 + $0x10] sm:$0xff]
  %v6200 = vld [vmem:[%s3057 + $0x18] sm:$0xff]
  %v6201 = vld [vmem:[%s3057 + $0x20] sm:$0xff]
  %v6202 = vld [vmem:[%s3057 + $0x28] sm:$0xff]
  %v6203 = vld [vmem:[%s3057 + $0x30] sm:$0xff]
  %v6204 = vld [vmem:[%s3057 + $0x38] sm:$0xff]
  %v6205 = vld [vmem:[%s3057 + $0x40] sm:$0x3]
  %v6206 = vadd.f32 %v5942, %v2890
  %v6207 = vadd.f32 %v5943, %v2890
  %v6208 = vadd.f32 %v5944, %v2890
  %v6210 = vsel %vm2353, %v6197, 0
  %v6213 = vsel %vm2353, %v6198, 0
  %v6216 = vsel %vm2353, %v6199, 0
  %v6219 = vsel %vm2353, %v6200, 0
  %v6222 = vsel %vm2353, %v6201, 0
  %v6225 = vsel %vm2353, %v6202, 0
  %v6228 = vsel %vm2353, %v6203, 0
  %v6231 = vsel %vm2353, %v6204, 0
  %v6234 = vsel %vm2353, %v6205, 0
  %v6237 = vsel %vm2935, %v6208, 0
  %6239 = vmatpush.msra.mxu0 0.0
  %6240 = vmatpush.msra.mxu0 0.0
  %6241 = vmatpush.msra.mxu0 0.0
  %6242 = vmatpush.msra.mxu0 0.0
  %6243 = vmatpush.msra.mxu0 0.0
  %6244 = vmatpush.msra.mxu0 0.0
  %6245 = vmatpush.msra.mxu0 0.0
  %6246 = vmatpush.msra.mxu0 0.0
  %6247 = vmatpush.msra.mxu0 0.0
  %6248 = vmatpush.msra.mxu0 0.0
  %6249 = vmatpush.msra.mxu0 0.0
  %6250 = vmatpush.msra.mxu0 0.0
  %6251 = vmatpush.msra.mxu0 0.0
  %6252 = vmatpush.msra.mxu0 %v6237
  %6253 = vmatpush.msra.mxu0 %v6207
  %6254 = vmatpush.msra.mxu0 %v6206
  %6255 = vmatmul.f32.gmra.mxu0 %v6210
  %v6256 = vpop.f32.mrf.mxu0
  %v6257 = vadd.f32 0.0, %v6256
  %6258 = vmatmul.f32.gmra.mxu0 %v6213
  %v6259 = vpop.f32.mrf.mxu0
  %v6260 = vadd.f32 0.0, %v6259
  %6261 = vmatmul.f32.gmra.mxu0 %v6216
  %v6262 = vpop.f32.mrf.mxu0
  %v6263 = vadd.f32 0.0, %v6262
  %6264 = vmatmul.f32.gmra.mxu0 %v6219
  %v6265 = vpop.f32.mrf.mxu0
  %v6266 = vadd.f32 0.0, %v6265
  %6267 = vmatmul.f32.gmra.mxu0 %v6222
  %v6268 = vpop.f32.mrf.mxu0
  %v6269 = vadd.f32 0.0, %v6268
  %6270 = vmatmul.f32.gmra.mxu0 %v6225
  %v6271 = vpop.f32.mrf.mxu0
  %v6272 = vadd.f32 0.0, %v6271
  %6273 = vmatmul.f32.gmra.mxu0 %v6228
  %v6274 = vpop.f32.mrf.mxu0
  %v6275 = vadd.f32 0.0, %v6274
  %6276 = vmatmul.f32.gmra.mxu0 %v6231
  %v6277 = vpop.f32.mrf.mxu0
  %v6278 = vadd.f32 0.0, %v6277
  %6279 = vmatmul.f32.gmra.mxu0 %v6234
  %v6280 = vpop.f32.mrf.mxu0
  %v6281 = vadd.f32 0.0, %v6280
  %6282 = vdwg.mxu0
  %v6283 = vadd.f32 %v6171, %v6257
  %v6284 = vadd.f32 %v6174, %v6260
  %v6285 = vadd.f32 %v6177, %v6263
  %v6286 = vadd.f32 %v6180, %v6266
  %v6287 = vadd.f32 %v6183, %v6269
  %v6288 = vadd.f32 %v6186, %v6272
  %v6289 = vadd.f32 %v6189, %v6275
  %v6290 = vadd.f32 %v6192, %v6278
  %v6291 = vadd.f32 %v6195, %v6281
  %v6293 = vsel %vm3153, %v6283, 0
  %v6296 = vsel %vm3153, %v6284, 0
  %v6299 = vsel %vm3153, %v6285, 0
  %v6302 = vsel %vm3153, %v6286, 0
  %v6305 = vsel %vm3153, %v6287, 0
  %v6308 = vsel %vm3153, %v6288, 0
  %v6311 = vsel %vm3153, %v6289, 0
  %v6314 = vsel %vm3153, %v6290, 0
  %v6317 = vsel %vm3153, %v6291, 0
  %6319 = vmatpush.msra.mxu0 0.0
  %6320 = vmatpush.msra.mxu0 0.0
  %6321 = vmatpush.msra.mxu0 0.0
  %6322 = vmatpush.msra.mxu0 0.0
  %6323 = vmatpush.msra.mxu0 0.0
  %6324 = vmatpush.msra.mxu0 0.0
  %6325 = vmatpush.msra.mxu0 0.0
  %6326 = vmatpush.msra.mxu0 %v3183
  %6327 = vmatpush.msra.mxu0 %v50
  %6328 = vmatpush.msra.mxu0 %v49
  %6329 = vmatpush.msra.mxu0 %v48
  %6330 = vmatpush.msra.mxu0 %v47
  %6331 = vmatpush.msra.mxu0 %v46
  %6332 = vmatpush.msra.mxu0 %v45
  %6333 = vmatpush.msra.mxu0 %v44
  %6334 = vmatpush.msra.mxu0 %v43
  %6335 = vmatmul.f32.gmra.mxu0 %v6293
  %v6336 = vpop.f32.mrf.mxu0
  %v6337 = vadd.f32 0.0, %v6336
  %6338 = vmatmul.f32.gmra.mxu0 %v6296
  %v6339 = vpop.f32.mrf.mxu0
  %v6340 = vadd.f32 0.0, %v6339
  %6341 = vmatmul.f32.gmra.mxu0 %v6299
  %v6342 = vpop.f32.mrf.mxu0
  %v6343 = vadd.f32 0.0, %v6342
  %6344 = vmatmul.f32.gmra.mxu0 %v6302
  %v6345 = vpop.f32.mrf.mxu0
  %v6346 = vadd.f32 0.0, %v6345
  %6347 = vmatmul.f32.gmra.mxu0 %v6305
  %v6348 = vpop.f32.mrf.mxu0
  %v6349 = vadd.f32 0.0, %v6348
  %6350 = vmatmul.f32.gmra.mxu0 %v6308
  %v6351 = vpop.f32.mrf.mxu0
  %v6352 = vadd.f32 0.0, %v6351
  %6353 = vmatmul.f32.gmra.mxu0 %v6311
  %v6354 = vpop.f32.mrf.mxu0
  %v6355 = vadd.f32 0.0, %v6354
  %6356 = vmatmul.f32.gmra.mxu0 %v6314
  %v6357 = vpop.f32.mrf.mxu0
  %v6358 = vadd.f32 0.0, %v6357
  %6359 = vmatmul.f32.gmra.mxu0 %v6317
  %v6360 = vpop.f32.mrf.mxu0
  %v6361 = vadd.f32 0.0, %v6360
  %6362 = vdwg.mxu0
  %s6363 = scalar_lea.vmem %s9, 72
  %6364 = vst [vmem:[%s6363] sm:$0xff] %v6337
  %6365 = vst [vmem:[%s6363 + $0x8] sm:$0xff] %v6340
  %6366 = vst [vmem:[%s6363 + $0x10] sm:$0xff] %v6343
  %6367 = vst [vmem:[%s6363 + $0x18] sm:$0xff] %v6346
  %6368 = vst [vmem:[%s6363 + $0x20] sm:$0xff] %v6349
  %6369 = vst [vmem:[%s6363 + $0x28] sm:$0xff] %v6352
  %6370 = vst [vmem:[%s6363 + $0x30] sm:$0xff] %v6355
  %6371 = vst [vmem:[%s6363 + $0x38] sm:$0xff] %v6358
  %6372 = vst [vmem:[%s6363 + $0x40] sm:$0x3] %v6361
  // Predicated region
  $region38: #{decoder_forward.1} parent=0 // pred_check
    _
  $region39: #{decoder_forward.1} parent=0 // pred_check_branch
    %6374 = sbr.rel (0) target = $region41
  $region40: #{decoder_forward.1} parent=0 // pred_region
    _
  $region41: #{decoder_forward.1} parent=0 // pred_fallthru
    _
  // Predicated region
  $region42: #{decoder_forward.1} parent=0 // pred_check
    _
  $region43: #{decoder_forward.1} parent=0 // pred_check_branch
    %6376 = sbr.rel (0) target = $region45
  $region44: #{decoder_forward.1} parent=0 // pred_region
    _
  $region45: #{decoder_forward.1} parent=0 // pred_fallthru
    _

</llo_original>
